<compile_context>
chip_gen: v7x
topology: tpu7x:2x2x1
jax: 0.10.0
libtpu: 0.0.40
codegen_flags: <defaults>
</compile_context>

<pallas_src>
import functools

import jax
import jax.numpy as jnp
from jax import lax
from jax.experimental import pallas as pl
from jax.experimental.pallas import tpu as pltpu


# ----------------------------------------------------------------------------
# Pallas kernels
# ----------------------------------------------------------------------------

def _head_kernel(x_ref, pmask_ref, wm_ref, bm_ref, wf_ref, bf_ref,
                 wpack_ref, bpack_ref, s1_ref, sh1_ref, w1_ref, b1_ref, o_ref):
    """Fused: time_trans -> PoI scale -> block-diag 1x1 convs -> relu -> bn1 -> conv1."""
    x = x_ref[...]                                                    # (tm, Ctot) f32
    t_in = wm_ref.shape[0]
    t = x[:, x.shape[1] - t_in:]                                      # time columns (in-kernel slice)

    # Time_trans: convm -> relu -> convf -> relu  (per-pixel scalar feature)
    h = jnp.maximum(
        jnp.dot(t, wm_ref[...], preferred_element_type=jnp.float32) + bm_ref[...], 0.0)
    tx = jnp.maximum(
        jnp.dot(h, wf_ref[...], preferred_element_type=jnp.float32) + bf_ref[...], 0.0)

    # Scale only the PoI columns of x by tx (poi_time = T_x * poi), leave the rest alone.
    scale = 1.0 + pmask_ref[...] * (tx - 1.0)                         # (tm, Ctot)
    xs = x * scale

    # Block-diagonal packed weight -> concatenated [convc|convp|convt|poiconv] features.
    feat = jnp.dot(xs, wpack_ref[...],
                   preferred_element_type=jnp.float32) + bpack_ref[...]
    feat = jnp.maximum(feat, 0.0) * s1_ref[...] + sh1_ref[...]        # relu -> bn1
    o_ref[...] = jnp.dot(feat, w1_ref[...],
                         preferred_element_type=jnp.float32) + b1_ref[...]


def _plus_kernel(x_ref, s_ref, sh_ref, w_ref, b_ref, o_ref):
    """plus_conv as a K-tiled matmul: out += (bn1(relu(x)))[k-tile] @ W[k-tile] (bf16 MXU)."""
    k = pl.program_id(1)

    @pl.when(k == 0)
    def _():
        o_ref[...] = jnp.broadcast_to(b_ref[...], o_ref.shape)        # init with bias

    lhs = jnp.maximum(x_ref[...], 0.0) * s_ref[...] + sh_ref[...]     # relu -> bn1 prologue
    o_ref[...] += jnp.dot(lhs.astype(jnp.bfloat16), w_ref[...],
                          preferred_element_type=jnp.float32)


def _resplus_kernel(x_ref, z2_ref, mask_ref, w1_ref, b1_ref, w2_ref, b2_ref,
                    s1_ref, sh1_ref, s2_ref, sh2_ref, o_ref, *, W):
    """Spatial part of ResPlus on G flattened images (G*HW rows).

    Both 3x3 convs are done as a single im2col matmul: the 9 taps are built in VMEM with
    pltpu.roll + per-row validity masks (masks also kill cross-image contamination when
    several images share one block), concatenated to a (rows, 9*Cin) bf16 LHS and
    contracted against the flattened (9*Cin, Cout) tap weights in ONE MXU dot.
    """
    R = x_ref.shape[0]                                                # G*HW rows
    x = x_ref[...]                                                    # (R, 64) f32
    masks = mask_ref[...]                                             # (R, 9) f32

    def im2col(act):                                                  # (R, C) f32 -> (R, 9C) bf16
        cols = []
        for kh in range(3):
            for kw in range(3):
                tap = kh * 3 + kw
                d = (kh - 1) * W + (kw - 1)                           # row offset of this tap
                src = act if d == 0 else pltpu.roll(act, (-d) % R, axis=0)
                cols.append((src * masks[:, tap:tap + 1]).astype(jnp.bfloat16))
        return jnp.concatenate(cols, axis=-1)

    # z1 = conv1(drop(relu(bn1(x))))                                   (R, 56)
    a1 = jnp.maximum(x * s1_ref[...] + sh1_ref[...], 0.0)             # bn1 -> relu
    z1 = jnp.dot(im2col(a1), w1_ref[...],
                 preferred_element_type=jnp.float32) + b1_ref[...]

    # z3 = conv2(drop(relu(bn2([z1 | z2])))) + x  (merged 64-channel conv2)
    zcat = jnp.concatenate([z1, z2_ref[...]], axis=-1)                # (R, 64)
    g = jnp.maximum(zcat * s2_ref[...] + sh2_ref[...], 0.0)
    out = jnp.dot(im2col(g), w2_ref[...],
                  preferred_element_type=jnp.float32) + b2_ref[...]
    o_ref[...] = out + x                                              # residual


def _tail_kernel(x_ref, s_ref, sh_ref, w_ref, b_ref, o_ref):
    """Fused: relu -> bn2 -> conv2 (64->2) -> tanh."""
    z = jnp.maximum(x_ref[...], 0.0) * s_ref[...] + sh_ref[...]
    y = jnp.dot(z, w_ref[...], preferred_element_type=jnp.float32) + b_ref[...]
    o_ref[...] = jnp.tanh(y)


# ----------------------------------------------------------------------------
# Tiling helpers
# ----------------------------------------------------------------------------

def _pick_rows(n, cap, mult=8):
    """Largest divisor of n that is a multiple of `mult` and <= cap, preferring >= 2 grid
    steps (so v7x's two TensorCores both get work).  Falls back to the full dimension."""
    divs = [d for d in range(mult, min(n, cap) + 1, mult) if n % d == 0]
    if not divs:
        return n
    two = [d for d in divs if n // d >= 2]
    return max(two) if two else max(divs)


def _pick_cols(n, cap=2048, mult=128):
    """Largest lane-aligned divisor of n <= cap, preferring >= 2 grid steps."""
    divs = [d for d in range(mult, min(n, cap) + 1, mult) if n % d == 0]
    if not divs:
        return n
    two = [d for d in divs if n // d >= 2]
    return max(two) if two else max(divs)


def _pick_group(B, HW, target_rows=512):
    """Images per spatial-kernel grid step: as many as fit target_rows while keeping
    >= 2 grid steps when possible and a sublane-aligned row count."""
    divs = [g for g in range(1, B + 1) if B % g == 0 and (g * HW) % 8 == 0]
    ok = [g for g in divs if g * HW <= target_rows and B // g >= 2]
    if ok:
        return max(ok)
    ok = [g for g in divs if g * HW <= target_rows]
    if ok:
        return max(ok)
    if divs:
        return min(divs)      # smallest aligned group (may exceed target_rows)
    return B                  # full batch in one block (block == full array is always legal)


# ----------------------------------------------------------------------------
# pallas_call wrappers
# ----------------------------------------------------------------------------

def head_forward(x_rows, hp):
    M, Ctot = x_rows.shape
    Tin, Tf = hp['convm_w'].shape
    F = hp['w_pack'].shape[1]
    tm = _pick_rows(M, 2048)
    c0 = lambda i: (0, 0)
    return pl.pallas_call(
        _head_kernel,
        out_shape=jax.ShapeDtypeStruct((M, 64), jnp.float32),
        grid=(M // tm,),
        in_specs=[
            pl.BlockSpec((tm, Ctot), lambda i: (i, 0)),
            pl.BlockSpec((1, Ctot), c0),
            pl.BlockSpec((Tin, Tf), c0),
            pl.BlockSpec((1, Tf), c0),
            pl.BlockSpec((Tf, 1), c0),
            pl.BlockSpec((1, 1), c0),
            pl.BlockSpec((Ctot, F), c0),
            pl.BlockSpec((1, F), c0),
            pl.BlockSpec((1, F), c0),
            pl.BlockSpec((1, F), c0),
            pl.BlockSpec((F, 64), c0),
            pl.BlockSpec((1, 64), c0),
        ],
        out_specs=pl.BlockSpec((tm, 64), lambda i: (i, 0)),
        compiler_params=pltpu.CompilerParams(dimension_semantics=("parallel",)),
    )(x_rows, hp['poi_mask'], hp['convm_w'], hp['convm_b'],
      hp['convf_w'], hp['convf_b'], hp['w_pack'], hp['b_pack'],
      hp['bn1_s'], hp['bn1_sh'], hp['conv1_w'], hp['conv1_b'])


def plus_forward(cpt_rows, rp, B, HW):
    """plus_conv of one ResPlus iteration; output already in (b, row, out_channel) order."""
    M, C = cpt_rows.shape                       # M = B*HW, C = 64
    K = HW * C
    Kp, N = rp['plus_w'].shape                  # Kp multiple of 512, N = HW*8
    x_flat = cpt_rows.reshape(B, K)             # free row-major reshape in HBM
    if Kp != K:
        x_flat = jnp.pad(x_flat, ((0, 0), (0, Kp - K)))
    tk = 512
    for t in (2048, 1024):                      # largest K tile dividing Kp (HBM-bound kernel)
        if Kp % t == 0:
            tk = t
            break
    tn = _pick_cols(N, 2048, 128)               # keep >= 2 parallel N steps when possible
    grid = (N // tn, Kp // tk)
    out = pl.pallas_call(
        _plus_kernel,
        out_shape=jax.ShapeDtypeStruct((B, N), jnp.float32),
        grid=grid,
        in_specs=[
            pl.BlockSpec((B, tk), lambda n, k: (0, k)),
            pl.BlockSpec((1, tk), lambda n, k: (0, k)),
            pl.BlockSpec((1, tk), lambda n, k: (0, k)),
            pl.BlockSpec((tk, tn), lambda n, k: (k, n)),
            pl.BlockSpec((1, tn), lambda n, k: (0, n)),
        ],
        out_specs=pl.BlockSpec((B, tn), lambda n, k: (0, n)),
        compiler_params=pltpu.CompilerParams(
            dimension_semantics=("parallel", "arbitrary"),
            vmem_limit_bytes=48 * 1024 * 1024),
    )(x_flat, rp['plus_s'], rp['plus_sh'], rp['plus_w'], rp['plus_b'])
    return out.reshape(M, 8)                    # rows ordered (b, h, w)


def resplus_spatial(cpt_rows, z2_rows, rp, H, W, B):
    M, C = cpt_rows.shape
    HW = H * W
    G = _pick_group(B, HW)
    R = G * HW
    masks = jnp.tile(rp['masks_hw'], (G, 1))    # (R, 9) tap-validity masks (per image, tiled)
    Cm = rp['w1'].shape[1]                      # 56
    kern = functools.partial(_resplus_kernel, W=W)
    c0 = lambda g: (0, 0)
    rowmap = lambda g: (g, 0)
    return pl.pallas_call(
        kern,
        out_shape=jax.ShapeDtypeStruct((M, C), jnp.float32),
        grid=(M // R,),
        in_specs=[
            pl.BlockSpec((R, C), rowmap),       # x rows (G images per grid step)
            pl.BlockSpec((R, 8), rowmap),       # z2 rows
            pl.BlockSpec((R, 9), c0),           # tap validity masks
            pl.BlockSpec((9 * C, Cm), c0),      # conv1 taps flattened (bf16)
            pl.BlockSpec((1, Cm), c0),          # conv1 bias
            pl.BlockSpec((9 * C, C), c0),       # merged conv2 taps flattened (bf16)
            pl.BlockSpec((1, C), c0),           # conv2 bias
            pl.BlockSpec((1, C), c0),           # bn1 scale
            pl.BlockSpec((1, C), c0),           # bn1 shift
            pl.BlockSpec((1, C), c0),           # bn2 scale
            pl.BlockSpec((1, C), c0),           # bn2 shift
        ],
        out_specs=pl.BlockSpec((R, C), rowmap),
        compiler_params=pltpu.CompilerParams(dimension_semantics=("parallel",)),
    )(cpt_rows, z2_rows, masks, rp['w1'], rp['b1'], rp['w2'], rp['b2'],
      rp['bn1_s'], rp['bn1_sh'], rp['bn2_s'], rp['bn2_sh'])


def tail_forward(cpt_rows, tp):
    M, C = cpt_rows.shape
    tm = _pick_rows(M, 2048)
    c0 = lambda i: (0, 0)
    return pl.pallas_call(
        _tail_kernel,
        out_shape=jax.ShapeDtypeStruct((M, 2), jnp.float32),
        grid=(M // tm,),
        in_specs=[
            pl.BlockSpec((tm, C), lambda i: (i, 0)),
            pl.BlockSpec((1, C), c0),
            pl.BlockSpec((1, C), c0),
            pl.BlockSpec((C, 2), c0),
            pl.BlockSpec((1, 2), c0),
        ],
        out_specs=pl.BlockSpec((tm, 2), lambda i: (i, 0)),
        compiler_params=pltpu.CompilerParams(dimension_semantics=("parallel",)),
    )(cpt_rows, tp['bn2_s'], tp['bn2_sh'], tp['conv2_w'], tp['conv2_b'])


# ----------------------------------------------------------------------------
# Parameters (torch-native layouts) + kernel-side packing
# ----------------------------------------------------------------------------

def init_params(key, cfg):
    ch, c, p, t = cfg['channel'], cfg['c'], cfg['p'], cfg['t']
    H, W = cfg['H'], cfg['W']
    PoI_N, PT_F = cfg['PoI_N'], cfg['PT_F']
    T_feat, T_int = cfg['T_feat'], cfg['T_interval']
    keys = iter(jax.random.split(key, 64))

    def nrm(shape, scale=0.1):
        return (scale * jax.random.normal(next(keys), shape)).astype(jnp.float32)

    def bn(C):
        return dict(gamma=1.0 + nrm((C,)), beta=nrm((C,)),
                    mean=nrm((C,)), var=1.0 + jnp.abs(nrm((C,))))

    P = {}
    P['convc_w'] = nrm((64, ch * c, 1, 1)); P['convc_b'] = nrm((64,))
    P['convp_w'] = nrm((64, ch * p, 1, 1)); P['convp_b'] = nrm((64,))
    P['convt_w'] = nrm((64, ch * t, 1, 1)); P['convt_b'] = nrm((64,))
    P['convm_w'] = nrm((T_feat, T_int + 7, 1, 1)); P['convm_b'] = nrm((T_feat,))
    P['convf_w'] = nrm((1, T_feat, 1, 1)); P['convf_b'] = nrm((1,))
    P['poiconv_w'] = nrm((PT_F, PoI_N, 1, 1)); P['poiconv_b'] = nrm((PT_F,))
    P['bn1'] = bn(64 * 3 + PT_F)
    P['conv1_w'] = nrm((64, 64 * 3 + PT_F, 1, 1)); P['conv1_b'] = nrm((64,))
    P['res'] = dict(
        bn1=bn(64),
        conv1_w=nrm((56, 64, 3, 3)), conv1_b=nrm((56,)),
        bn2=bn(64),
        conv2_w=nrm((64, 64, 3, 3)), conv2_b=nrm((64,)),
        plus_w=nrm((8 * H * W, 64, H, W)), plus_b=nrm((8 * H * W,)),
    )
    P['bn2'] = bn(64)
    P['conv2_w'] = nrm((2, 64, 1, 1)); P['conv2_b'] = nrm((2,))
    return P


def _bn_scale_shift(bnp, eps=1e-5):
    s = bnp['gamma'] / jnp.sqrt(bnp['var'] + eps)
    return s, bnp['beta'] - bnp['mean'] * s


def _c1x1(w):                         # (O, I, 1, 1) -> (I, O)
    return w[:, :, 0, 0].T


def _c3x3_taps(w):                    # (O, I, 3, 3) -> (9, I, O), tap index kh*3+kw
    return jnp.transpose(w, (2, 3, 1, 0)).reshape(9, w.shape[1], w.shape[0])


def prepare_kernel_params(P, cfg):
    ch, c, p, t = cfg['channel'], cfg['c'], cfg['p'], cfg['t']
    H, W = cfg['H'], cfg['W']
    HW = H * W
    PoI_N, PT_F = cfg['PoI_N'], cfg['PT_F']
    T_int = cfg['T_interval']
    cut1 = ch * c; cut2 = cut1 + ch * p; cut3 = cut2 + ch * t
    Ctot = cut3 + PoI_N + T_int + 7
    F = 64 * 3 + PT_F

    kp = {}

    # ---- head: block-diagonal packed weight over [c | p | t | poi] channels ----
    wpack = jnp.zeros((Ctot, F), jnp.float32)
    wpack = wpack.at[0:cut1, 0:64].set(_c1x1(P['convc_w']))
    wpack = wpack.at[cut1:cut2, 64:128].set(_c1x1(P['convp_w']))
    wpack = wpack.at[cut2:cut3, 128:192].set(_c1x1(P['convt_w']))
    wpack = wpack.at[cut3:cut3 + PoI_N, 192:F].set(_c1x1(P['poiconv_w']))
    bpack = jnp.concatenate([P['convc_b'], P['convp_b'], P['convt_b'], P['poiconv_b']])
    s1, sh1 = _bn_scale_shift(P['bn1'])
    kp['head'] = dict(
        poi_mask=jnp.zeros((1, Ctot), jnp.float32).at[0, cut3:cut3 + PoI_N].set(1.0),
        convm_w=_c1x1(P['convm_w']), convm_b=P['convm_b'].reshape(1, -1),
        convf_w=_c1x1(P['convf_w']), convf_b=P['convf_b'].reshape(1, 1),
        w_pack=wpack, b_pack=bpack.reshape(1, F),
        bn1_s=s1.reshape(1, F), bn1_sh=sh1.reshape(1, F),
        conv1_w=_c1x1(P['conv1_w']), conv1_b=P['conv1_b'].reshape(1, -1),
    )

    # ---- ResPlus ----
    rp = P['res']
    rs1, rsh1 = _bn_scale_shift(rp['bn1'])
    rs2, rsh2 = _bn_scale_shift(rp['bn2'])
    Cm = rp['conv1_w'].shape[0]                  # 56

    # 3x3 taps flattened for a single im2col matmul (tap-major, K = 9*64 = 576).
    t1 = _c3x3_taps(rp['conv1_w'])                                    # (9, 64, 56)
    w1 = t1.reshape(9 * t1.shape[1], Cm).astype(jnp.bfloat16)         # (576, 56)
    t2 = _c3x3_taps(rp['conv2_w'])                                    # (9, 64, 64), in-chs = [z1|z2]
    w2 = t2.reshape(9 * t2.shape[1], 64).astype(jnp.bfloat16)         # (576, 64) merged

    # Static tap validity masks, (HW, 9); tiled per image by the wrapper.
    hh = jnp.arange(HW) // W
    ww = jnp.arange(HW) % W
    cols = []
    for kh in range(3):
        for kw in range(3):
            dh, dw = kh - 1, kw - 1
            valid = ((hh + dh >= 0) & (hh + dh < H) & (ww + dw >= 0) & (ww + dw < W))
            cols.append(valid.astype(jnp.float32))
    masks_hw = jnp.stack(cols, axis=1)                                # (HW, 9)

    # plus_conv as a (HW*64) x (HW*8) matmul.  Rows follow the (h, w, c) activation
    # flattening; columns are permuted to (row, out_channel) so the kernel output needs
    # no transpose before being concatenated with z1.
    pw = rp['plus_w'].reshape(8, HW, 64, H, W)
    pw = jnp.transpose(pw, (3, 4, 2, 1, 0)).reshape(HW * 64, HW * 8)
    pb = rp['plus_b'].reshape(8, HW).T.reshape(1, HW * 8)
    s_tiled = jnp.tile(rs1, HW).reshape(1, HW * 64)
    sh_tiled = jnp.tile(rsh1, HW).reshape(1, HW * 64)
    K = HW * 64
    Kp = ((K + 511) // 512) * 512                # K always padded to a 512 multiple
    if Kp != K:
        pw = jnp.pad(pw, ((0, Kp - K), (0, 0)))
        s_tiled = jnp.pad(s_tiled, ((0, 0), (0, Kp - K)))
        sh_tiled = jnp.pad(sh_tiled, ((0, 0), (0, Kp - K)))

    kp['res'] = dict(
        bn1_s=rs1.reshape(1, 64), bn1_sh=rsh1.reshape(1, 64),
        bn2_s=rs2.reshape(1, 64), bn2_sh=rsh2.reshape(1, 64),
        w1=w1, b1=rp['conv1_b'].reshape(1, Cm),
        w2=w2, b2=rp['conv2_b'].reshape(1, 64),
        masks_hw=masks_hw,
        plus_w=pw.astype(jnp.bfloat16), plus_b=pb,
        plus_s=s_tiled, plus_sh=sh_tiled,
    )

    # ---- tail ----
    s2, sh2 = _bn_scale_shift(P['bn2'])
    kp['tail'] = dict(
        bn2_s=s2.reshape(1, 64), bn2_sh=sh2.reshape(1, 64),
        conv2_w=_c1x1(P['conv2_w']), conv2_b=P['conv2_b'].reshape(1, 2),
    )
    return kp


# ----------------------------------------------------------------------------
# Full forward (Pallas) and a pure-JAX reference for the correctness check
# ----------------------------------------------------------------------------

def deepstn_pallas_forward(x_nchw, kp, *, cfg):
    B, Ctot, H, W = x_nchw.shape
    HW = H * W
    M = B * HW

    x_rows = jnp.transpose(x_nchw, (0, 2, 3, 1)).reshape(M, Ctot)     # NCHW -> rows (b,h,w)

    cpt = head_forward(x_rows, kp['head'])                            # (M, 64)

    rp = kp['res']
    for _ in range(cfg['RP_N']):
        z2 = plus_forward(cpt, rp, B, HW)                             # (M, 8)
        cpt = resplus_spatial(cpt, z2, rp, H, W, B)                   # (M, 64)

    out_rows = tail_forward(cpt, kp['tail'])                          # (M, 2)
    return jnp.transpose(out_rows.reshape(B, H, W, 2), (0, 3, 1, 2))  # -> NCHW


def deepstn_reference(x, P, *, cfg):
    """Pure-JAX (lax.conv) mirror of the PyTorch forward, inference semantics,
    with the same bf16 casts the kernels use for the heavy convs."""
    B, Ctot, H, W = x.shape
    ch, c, p, t = cfg['channel'], cfg['c'], cfg['p'], cfg['t']
    PoI_N, T_int = cfg['PoI_N'], cfg['T_interval']
    cut1 = ch * c; cut2 = cut1 + ch * p; cut3 = cut2 + ch * t
    dn = ('NCHW', 'OIHW', 'NCHW')

    def conv(z, w, b, padding='VALID'):
        y = lax.conv_general_dilated(z, w, (1, 1), padding, dimension_numbers=dn,
                                     precision=lax.Precision.HIGHEST)
        return y + b.reshape(1, -1, 1, 1)

    def conv_bf16(z, w, b, padding):
        y = lax.conv_general_dilated(z.astype(jnp.bfloat16), w.astype(jnp.bfloat16),
                                     (1, 1), padding, dimension_numbers=dn,
                                     preferred_element_type=jnp.float32)
        return y + b.reshape(1, -1, 1, 1)

    def bn(z, bnp):
        s, sh = _bn_scale_shift(bnp)
        return z * s.reshape(1, -1, 1, 1) + sh.reshape(1, -1, 1, 1)

    c_in = x[:, :cut1]; p_in = x[:, cut1:cut2]; t_in = x[:, cut2:cut3]
    poi_in = x[:, Ctot - (PoI_N + T_int + 7): Ctot - (T_int + 7)]
    time_in = x[:, Ctot - (T_int + 7):]

    cf = conv(c_in, P['convc_w'], P['convc_b'])
    pf = conv(p_in, P['convp_w'], P['convp_b'])
    tf = conv(t_in, P['convt_w'], P['convt_b'])

    tx = jnp.maximum(conv(time_in, P['convm_w'], P['convm_b']), 0.0)
    tx = jnp.maximum(conv(tx, P['convf_w'], P['convf_b']), 0.0)       # (B, 1, H, W)
    poi_time = conv(poi_in * tx, P['poiconv_w'], P['poiconv_b'])

    cpt = jnp.concatenate([cf, pf, tf, poi_time], axis=1)
    cpt = bn(jnp.maximum(cpt, 0.0), P['bn1'])
    cpt = conv(cpt, P['conv1_w'], P['conv1_b'])

    rp = P['res']
    for _ in range(cfg['RP_N']):
        x0 = cpt
        z1 = jnp.maximum(bn(x0, rp['bn1']), 0.0)
        z1 = conv_bf16(z1, rp['conv1_w'], rp['conv1_b'], ((1, 1), (1, 1)))
        z2 = bn(jnp.maximum(x0, 0.0), rp['bn1'])
        z2 = conv_bf16(z2, rp['plus_w'], rp['plus_b'], 'VALID')       # (B, 8HW, 1, 1)
        z2 = z2.reshape(B, 8, H, W)
        z3 = jnp.concatenate([z1, z2], axis=1)
        z3 = jnp.maximum(bn(z3, rp['bn2']), 0.0)
        cpt = conv_bf16(z3, rp['conv2_w'], rp['conv2_b'], ((1, 1), (1, 1))) + x0

    out = bn(jnp.maximum(cpt, 0.0), P['bn2'])
    out = conv(out, P['conv2_w'], P['conv2_b'])
    return jnp.tanh(out)


# ----------------------------------------------------------------------------

if __name__ == "__main__":
    cfg = dict(B=2, channel=2, c=2, p=1, t=1, H=8, W=8,
               RP_N=2, PoI_N=4, PT_F=4, T_feat=4, T_interval=5)
    key = jax.random.PRNGKey(0)
    kparam, kx = jax.random.split(key)
    P = init_params(kparam, cfg)
    kp = prepare_kernel_params(P, cfg)

    Ctot = (cfg['channel'] * (cfg['c'] + cfg['p'] + cfg['t'])
            + cfg['PoI_N'] + cfg['T_interval'] + 7)
    x = jax.random.normal(kx, (cfg['B'], Ctot, cfg['H'], cfg['W']), jnp.float32)

    fwd = jax.jit(functools.partial(deepstn_pallas_forward, cfg=cfg))
    out = fwd(x, kp)
    jax.block_until_ready(out)

    ref = jax.jit(functools.partial(deepstn_reference, cfg=cfg))(x, P)
    err = float(jnp.max(jnp.abs(out - ref)))
    assert err < 3e-2, f"Pallas forward deviates from reference: max abs err = {err}"
    print("KERNEL_OK")
</pallas_src>

<mosaic_0001>
module attributes {stable_mosaic.version = 11 : i64} {
  func.func @_head_kernel(%arg0: i32, %arg1: memref<64x24xf32, #tpu.memory_space<vmem>>, %arg2: memref<1x24xf32, #tpu.memory_space<vmem>>, %arg3: memref<12x4xf32, #tpu.memory_space<vmem>>, %arg4: memref<1x4xf32, #tpu.memory_space<vmem>>, %arg5: memref<4x1xf32, #tpu.memory_space<vmem>>, %arg6: memref<1x1xf32, #tpu.memory_space<vmem>>, %arg7: memref<24x196xf32, #tpu.memory_space<vmem>>, %arg8: memref<1x196xf32, #tpu.memory_space<vmem>>, %arg9: memref<1x196xf32, #tpu.memory_space<vmem>>, %arg10: memref<1x196xf32, #tpu.memory_space<vmem>>, %arg11: memref<196x64xf32, #tpu.memory_space<vmem>>, %arg12: memref<1x64xf32, #tpu.memory_space<vmem>>, %arg13: memref<64x64xf32, #tpu.memory_space<vmem>>) attributes {dimension_semantics = [#tpu.dimension_semantics<parallel>], iteration_bounds = array<i64: 2>, scalar_prefetch = 0 : i64, scratch_operands = 0 : i64, tpu.core_type = #tpu.core_type<tc>, window_params = [{transform_indices = @transform_0, window_bounds = array<i64: 64, 24>}, {pipeline_mode = #tpu.pipeline_mode<synchronous>, transform_indices = @transform_1, window_bounds = array<i64: 1, 24>}, {pipeline_mode = #tpu.pipeline_mode<synchronous>, transform_indices = @transform_2, window_bounds = array<i64: 12, 4>}, {pipeline_mode = #tpu.pipeline_mode<synchronous>, transform_indices = @transform_3, window_bounds = array<i64: 1, 4>}, {pipeline_mode = #tpu.pipeline_mode<synchronous>, transform_indices = @transform_4, window_bounds = array<i64: 4, 1>}, {pipeline_mode = #tpu.pipeline_mode<synchronous>, transform_indices = @transform_5, window_bounds = array<i64: 1, 1>}, {pipeline_mode = #tpu.pipeline_mode<synchronous>, transform_indices = @transform_6, window_bounds = array<i64: 24, 196>}, {pipeline_mode = #tpu.pipeline_mode<synchronous>, transform_indices = @transform_7, window_bounds = array<i64: 1, 196>}, {pipeline_mode = #tpu.pipeline_mode<synchronous>, transform_indices = @transform_8, window_bounds = array<i64: 1, 196>}, {pipeline_mode = #tpu.pipeline_mode<synchronous>, transform_indices = @transform_9, window_bounds = array<i64: 1, 196>}, {pipeline_mode = #tpu.pipeline_mode<synchronous>, transform_indices = @transform_10, window_bounds = array<i64: 196, 64>}, {pipeline_mode = #tpu.pipeline_mode<synchronous>, transform_indices = @transform_11, window_bounds = array<i64: 1, 64>}, {transform_indices = @transform_12, window_bounds = array<i64: 64, 64>}]} {
    %c0 = arith.constant 0 : index
    %c0_0 = arith.constant 0 : index
    %0 = vector.load %arg1[%c0, %c0_0] : memref<64x24xf32, #tpu.memory_space<vmem>>, vector<64x24xf32>
    %1 = vector.extract_strided_slice %0 {offsets = [0, 12], sizes = [64, 12], strides = [1, 1]} : vector<64x24xf32> to vector<64x12xf32>
    %c0_1 = arith.constant 0 : index
    %c0_2 = arith.constant 0 : index
    %2 = vector.load %arg3[%c0_1, %c0_2] : memref<12x4xf32, #tpu.memory_space<vmem>>, vector<12x4xf32>
    %cst = arith.constant dense<0.000000e+00> : vector<64x4xf32>
    %3 = tpu.matmul %1, %2, %cst {dimension_numbers = #tpu.dot_dimension_numbers<[1], [0], [0], [1], [0, 0, 1, 1], [], []>} : vector<64x12xf32>, vector<12x4xf32>, vector<64x4xf32> -> vector<64x4xf32>
    %c0_3 = arith.constant 0 : index
    %c0_4 = arith.constant 0 : index
    %4 = vector.load %arg4[%c0_3, %c0_4] : memref<1x4xf32, #tpu.memory_space<vmem>>, vector<1x4xf32>
    %5 = vector.broadcast %4 : vector<1x4xf32> to vector<64x4xf32>
    %6 = arith.addf %3, %5 : vector<64x4xf32>
    %cst_5 = arith.constant 0.000000e+00 : f32
    %7 = vector.broadcast %cst_5 : f32 to vector<64x4xf32>
    %8 = arith.maximumf %6, %7 : vector<64x4xf32>
    %c0_6 = arith.constant 0 : index
    %c0_7 = arith.constant 0 : index
    %9 = vector.load %arg5[%c0_6, %c0_7] : memref<4x1xf32, #tpu.memory_space<vmem>>, vector<4x1xf32>
    %cst_8 = arith.constant dense<0.000000e+00> : vector<64x1xf32>
    %10 = tpu.matmul %8, %9, %cst_8 {dimension_numbers = #tpu.dot_dimension_numbers<[1], [0], [0], [1], [0, 0, 1, 1], [], []>} : vector<64x4xf32>, vector<4x1xf32>, vector<64x1xf32> -> vector<64x1xf32>
    %c0_9 = arith.constant 0 : index
    %c0_10 = arith.constant 0 : index
    %11 = vector.load %arg6[%c0_9, %c0_10] : memref<1x1xf32, #tpu.memory_space<vmem>>, vector<1x1xf32>
    %12 = vector.broadcast %11 : vector<1x1xf32> to vector<64x1xf32>
    %13 = arith.addf %10, %12 : vector<64x1xf32>
    %cst_11 = arith.constant 0.000000e+00 : f32
    %14 = vector.broadcast %cst_11 : f32 to vector<64x1xf32>
    %15 = arith.maximumf %13, %14 : vector<64x1xf32>
    %c0_12 = arith.constant 0 : index
    %c0_13 = arith.constant 0 : index
    %16 = vector.load %arg2[%c0_12, %c0_13] : memref<1x24xf32, #tpu.memory_space<vmem>>, vector<1x24xf32>
    %cst_14 = arith.constant 1.000000e+00 : f32
    %17 = vector.broadcast %cst_14 : f32 to vector<64x1xf32>
    %18 = arith.subf %15, %17 : vector<64x1xf32>
    %19 = vector.broadcast %16 : vector<1x24xf32> to vector<64x24xf32>
    %20 = vector.broadcast %18 : vector<64x1xf32> to vector<64x24xf32>
    %21 = arith.mulf %19, %20 : vector<64x24xf32>
    %cst_15 = arith.constant 1.000000e+00 : f32
    %22 = vector.broadcast %cst_15 : f32 to vector<64x24xf32>
    %23 = arith.addf %22, %21 : vector<64x24xf32>
    %24 = arith.mulf %0, %23 : vector<64x24xf32>
    %c0_16 = arith.constant 0 : index
    %c0_17 = arith.constant 0 : index
    %25 = vector.load %arg7[%c0_16, %c0_17] : memref<24x196xf32, #tpu.memory_space<vmem>>, vector<24x196xf32>
    %cst_18 = arith.constant dense<0.000000e+00> : vector<64x196xf32>
    %26 = tpu.matmul %24, %25, %cst_18 {dimension_numbers = #tpu.dot_dimension_numbers<[1], [0], [0], [1], [0, 0, 1, 1], [], []>} : vector<64x24xf32>, vector<24x196xf32>, vector<64x196xf32> -> vector<64x196xf32>
    %c0_19 = arith.constant 0 : index
    %c0_20 = arith.constant 0 : index
    %27 = vector.load %arg8[%c0_19, %c0_20] : memref<1x196xf32, #tpu.memory_space<vmem>>, vector<1x196xf32>
    %28 = vector.broadcast %27 : vector<1x196xf32> to vector<64x196xf32>
    %29 = arith.addf %26, %28 : vector<64x196xf32>
    %cst_21 = arith.constant 0.000000e+00 : f32
    %30 = vector.broadcast %cst_21 : f32 to vector<64x196xf32>
    %31 = arith.maximumf %29, %30 : vector<64x196xf32>
    %c0_22 = arith.constant 0 : index
    %c0_23 = arith.constant 0 : index
    %32 = vector.load %arg9[%c0_22, %c0_23] : memref<1x196xf32, #tpu.memory_space<vmem>>, vector<1x196xf32>
    %33 = vector.broadcast %32 : vector<1x196xf32> to vector<64x196xf32>
    %34 = arith.mulf %31, %33 : vector<64x196xf32>
    %c0_24 = arith.constant 0 : index
    %c0_25 = arith.constant 0 : index
    %35 = vector.load %arg10[%c0_24, %c0_25] : memref<1x196xf32, #tpu.memory_space<vmem>>, vector<1x196xf32>
    %36 = vector.broadcast %35 : vector<1x196xf32> to vector<64x196xf32>
    %37 = arith.addf %34, %36 : vector<64x196xf32>
    %c0_26 = arith.constant 0 : index
    %c0_27 = arith.constant 0 : index
    %38 = vector.load %arg11[%c0_26, %c0_27] : memref<196x64xf32, #tpu.memory_space<vmem>>, vector<196x64xf32>
    %cst_28 = arith.constant dense<0.000000e+00> : vector<64x64xf32>
    %39 = tpu.matmul %37, %38, %cst_28 {dimension_numbers = #tpu.dot_dimension_numbers<[1], [0], [0], [1], [0, 0, 1, 1], [], []>} : vector<64x196xf32>, vector<196x64xf32>, vector<64x64xf32> -> vector<64x64xf32>
    %c0_29 = arith.constant 0 : index
    %c0_30 = arith.constant 0 : index
    %40 = vector.load %arg12[%c0_29, %c0_30] : memref<1x64xf32, #tpu.memory_space<vmem>>, vector<1x64xf32>
    %41 = vector.broadcast %40 : vector<1x64xf32> to vector<64x64xf32>
    %42 = arith.addf %39, %41 : vector<64x64xf32>
    %c0_31 = arith.constant 0 : index
    %c0_32 = arith.constant 0 : index
    %43 = vector.load %arg13[%c0_31, %c0_32] : memref<64x64xf32, #tpu.memory_space<vmem>>, vector<64x64xf32>
    tpu.vector_store %arg13[%c0_31, %c0_32], %42 {strides = array<i32>} : memref<64x64xf32, #tpu.memory_space<vmem>>, vector<64x64xf32>,
    return
  }
  func.func @transform_0(%arg0: i32) -> (i32, i32) {
    %c0_i32 = arith.constant 0 : i32
    %c0_i32_0 = arith.constant 0 : i32
    return %arg0, %c0_i32 : i32, i32
  }
  func.func @transform_1(%arg0: i32) -> (i32, i32) {
    %c0_i32 = arith.constant 0 : i32
    %c0_i32_0 = arith.constant 0 : i32
    %c0_i32_1 = arith.constant 0 : i32
    return %c0_i32, %c0_i32_0 : i32, i32
  }
  func.func @transform_2(%arg0: i32) -> (i32, i32) {
    %c0_i32 = arith.constant 0 : i32
    %c0_i32_0 = arith.constant 0 : i32
    %c0_i32_1 = arith.constant 0 : i32
    return %c0_i32, %c0_i32_0 : i32, i32
  }
  func.func @transform_3(%arg0: i32) -> (i32, i32) {
    %c0_i32 = arith.constant 0 : i32
    %c0_i32_0 = arith.constant 0 : i32
    %c0_i32_1 = arith.constant 0 : i32
    return %c0_i32, %c0_i32_0 : i32, i32
  }
  func.func @transform_4(%arg0: i32) -> (i32, i32) {
    %c0_i32 = arith.constant 0 : i32
    %c0_i32_0 = arith.constant 0 : i32
    %c0_i32_1 = arith.constant 0 : i32
    return %c0_i32, %c0_i32_0 : i32, i32
  }
  func.func @transform_5(%arg0: i32) -> (i32, i32) {
    %c0_i32 = arith.constant 0 : i32
    %c0_i32_0 = arith.constant 0 : i32
    %c0_i32_1 = arith.constant 0 : i32
    return %c0_i32, %c0_i32_0 : i32, i32
  }
  func.func @transform_6(%arg0: i32) -> (i32, i32) {
    %c0_i32 = arith.constant 0 : i32
    %c0_i32_0 = arith.constant 0 : i32
    %c0_i32_1 = arith.constant 0 : i32
    return %c0_i32, %c0_i32_0 : i32, i32
  }
  func.func @transform_7(%arg0: i32) -> (i32, i32) {
    %c0_i32 = arith.constant 0 : i32
    %c0_i32_0 = arith.constant 0 : i32
    %c0_i32_1 = arith.constant 0 : i32
    return %c0_i32, %c0_i32_0 : i32, i32
  }
  func.func @transform_8(%arg0: i32) -> (i32, i32) {
    %c0_i32 = arith.constant 0 : i32
    %c0_i32_0 = arith.constant 0 : i32
    %c0_i32_1 = arith.constant 0 : i32
    return %c0_i32, %c0_i32_0 : i32, i32
  }
  func.func @transform_9(%arg0: i32) -> (i32, i32) {
    %c0_i32 = arith.constant 0 : i32
    %c0_i32_0 = arith.constant 0 : i32
    %c0_i32_1 = arith.constant 0 : i32
    return %c0_i32, %c0_i32_0 : i32, i32
  }
  func.func @transform_10(%arg0: i32) -> (i32, i32) {
    %c0_i32 = arith.constant 0 : i32
    %c0_i32_0 = arith.constant 0 : i32
    %c0_i32_1 = arith.constant 0 : i32
    return %c0_i32, %c0_i32_0 : i32, i32
  }
  func.func @transform_11(%arg0: i32) -> (i32, i32) {
    %c0_i32 = arith.constant 0 : i32
    %c0_i32_0 = arith.constant 0 : i32
    %c0_i32_1 = arith.constant 0 : i32
    return %c0_i32, %c0_i32_0 : i32, i32
  }
  func.func @transform_12(%arg0: i32) -> (i32, i32) {
    %c0_i32 = arith.constant 0 : i32
    %c0_i32_0 = arith.constant 0 : i32
    return %arg0, %c0_i32 : i32, i32
  }
}

module attributes {stable_mosaic.version = 11 : i64} {
  func.func @_plus_kernel(%arg0: i32, %arg1: i32, %arg2: memref<2x2048xf32, #tpu.memory_space<vmem>>, %arg3: memref<1x2048xf32, #tpu.memory_space<vmem>>, %arg4: memref<1x2048xf32, #tpu.memory_space<vmem>>, %arg5: memref<2048x256xbf16, #tpu.memory_space<vmem>>, %arg6: memref<1x256xf32, #tpu.memory_space<vmem>>, %arg7: memref<2x256xf32, #tpu.memory_space<vmem>>) attributes {dimension_semantics = [#tpu.dimension_semantics<parallel>, #tpu.dimension_semantics<arbitrary>], iteration_bounds = array<i64: 2, 2>, scalar_prefetch = 0 : i64, scratch_operands = 0 : i64, tpu.core_type = #tpu.core_type<tc>, window_params = [{transform_indices = @transform_0, window_bounds = array<i64: 2, 2048>}, {transform_indices = @transform_1, window_bounds = array<i64: 1, 2048>}, {transform_indices = @transform_2, window_bounds = array<i64: 1, 2048>}, {transform_indices = @transform_3, window_bounds = array<i64: 2048, 256>}, {transform_indices = @transform_4, window_bounds = array<i64: 1, 256>}, {transform_indices = @transform_5, window_bounds = array<i64: 2, 256>}]} {
    %c0_i32 = arith.constant 0 : i32
    %0 = arith.cmpi eq, %arg1, %c0_i32 : i32
    %1 = arith.extui %0 : i1 to i32
    %c0_i32_0 = arith.constant 0 : i32
    %2 = arith.cmpi ne, %1, %c0_i32_0 : i32
    scf.if %2 {
      %c0_13 = arith.constant 0 : index
      %c0_14 = arith.constant 0 : index
      %18 = vector.load %arg6[%c0_13, %c0_14] : memref<1x256xf32, #tpu.memory_space<vmem>>, vector<1x256xf32>
      %19 = vector.shape_cast %18 : vector<1x256xf32> to vector<1x256xf32>
      %20 = vector.broadcast %19 : vector<1x256xf32> to vector<2x256xf32>
      %c0_15 = arith.constant 0 : index
      %c0_16 = arith.constant 0 : index
      %21 = vector.load %arg7[%c0_15, %c0_16] : memref<2x256xf32, #tpu.memory_space<vmem>>, vector<2x256xf32>
      tpu.vector_store %arg7[%c0_15, %c0_16], %20 {strides = array<i32>} : memref<2x256xf32, #tpu.memory_space<vmem>>, vector<2x256xf32>,
    } else {
    }
    %c0 = arith.constant 0 : index
    %c0_1 = arith.constant 0 : index
    %3 = vector.load %arg2[%c0, %c0_1] : memref<2x2048xf32, #tpu.memory_space<vmem>>, vector<2x2048xf32>
    %cst = arith.constant 0.000000e+00 : f32
    %4 = vector.broadcast %cst : f32 to vector<2x2048xf32>
    %5 = arith.maximumf %3, %4 : vector<2x2048xf32>
    %c0_2 = arith.constant 0 : index
    %c0_3 = arith.constant 0 : index
    %6 = vector.load %arg3[%c0_2, %c0_3] : memref<1x2048xf32, #tpu.memory_space<vmem>>, vector<1x2048xf32>
    %7 = vector.broadcast %6 : vector<1x2048xf32> to vector<2x2048xf32>
    %8 = arith.mulf %5, %7 : vector<2x2048xf32>
    %c0_4 = arith.constant 0 : index
    %c0_5 = arith.constant 0 : index
    %9 = vector.load %arg4[%c0_4, %c0_5] : memref<1x2048xf32, #tpu.memory_space<vmem>>, vector<1x2048xf32>
    %10 = vector.broadcast %9 : vector<1x2048xf32> to vector<2x2048xf32>
    %11 = arith.addf %8, %10 : vector<2x2048xf32>
    %c0_6 = arith.constant 0 : index
    %c0_7 = arith.constant 0 : index
    %12 = vector.load %arg7[%c0_6, %c0_7] : memref<2x256xf32, #tpu.memory_space<vmem>>, vector<2x256xf32>
    %13 = arith.truncf %11 : vector<2x2048xf32> to vector<2x2048xbf16>
    %c0_8 = arith.constant 0 : index
    %c0_9 = arith.constant 0 : index
    %14 = vector.load %arg5[%c0_8, %c0_9] : memref<2048x256xbf16, #tpu.memory_space<vmem>>, vector<2048x256xbf16>
    %cst_10 = arith.constant dense<0.000000e+00> : vector<2x256xf32>
    %15 = tpu.matmul %13, %14, %cst_10 {dimension_numbers = #tpu.dot_dimension_numbers<[1], [0], [0], [1], [0, 0, 1, 1], [], []>} : vector<2x2048xbf16>, vector<2048x256xbf16>, vector<2x256xf32> -> vector<2x256xf32>
    %16 = arith.addf %12, %15 : vector<2x256xf32>
    %c0_11 = arith.constant 0 : index
    %c0_12 = arith.constant 0 : index
    %17 = vector.load %arg7[%c0_11, %c0_12] : memref<2x256xf32, #tpu.memory_space<vmem>>, vector<2x256xf32>
    tpu.vector_store %arg7[%c0_11, %c0_12], %16 {strides = array<i32>} : memref<2x256xf32, #tpu.memory_space<vmem>>, vector<2x256xf32>,
    return
  }
  func.func @transform_0(%arg0: i32, %arg1: i32) -> (i32, i32) {
    %c0_i32 = arith.constant 0 : i32
    %c0_i32_0 = arith.constant 0 : i32
    return %c0_i32, %arg1 : i32, i32
  }
  func.func @transform_1(%arg0: i32, %arg1: i32) -> (i32, i32) {
    %c0_i32 = arith.constant 0 : i32
    %c0_i32_0 = arith.constant 0 : i32
    return %c0_i32, %arg1 : i32, i32
  }
  func.func @transform_2(%arg0: i32, %arg1: i32) -> (i32, i32) {
    %c0_i32 = arith.constant 0 : i32
    %c0_i32_0 = arith.constant 0 : i32
    return %c0_i32, %arg1 : i32, i32
  }
  func.func @transform_3(%arg0: i32, %arg1: i32) -> (i32, i32) {
    %c0_i32 = arith.constant 0 : i32
    return %arg1, %arg0 : i32, i32
  }
  func.func @transform_4(%arg0: i32, %arg1: i32) -> (i32, i32) {
    %c0_i32 = arith.constant 0 : i32
    %c0_i32_0 = arith.constant 0 : i32
    return %c0_i32, %arg0 : i32, i32
  }
  func.func @transform_5(%arg0: i32, %arg1: i32) -> (i32, i32) {
    %c0_i32 = arith.constant 0 : i32
    %c0_i32_0 = arith.constant 0 : i32
    return %c0_i32, %arg0 : i32, i32
  }
}

module attributes {stable_mosaic.version = 11 : i64} {
  func.func @_plus_kernel(%arg0: i32, %arg1: i32, %arg2: memref<2x2048xf32, #tpu.memory_space<vmem>>, %arg3: memref<1x2048xf32, #tpu.memory_space<vmem>>, %arg4: memref<1x2048xf32, #tpu.memory_space<vmem>>, %arg5: memref<2048x256xbf16, #tpu.memory_space<vmem>>, %arg6: memref<1x256xf32, #tpu.memory_space<vmem>>, %arg7: memref<2x256xf32, #tpu.memory_space<vmem>>) attributes {dimension_semantics = [#tpu.dimension_semantics<parallel>, #tpu.dimension_semantics<arbitrary>], iteration_bounds = array<i64: 2, 2>, scalar_prefetch = 0 : i64, scratch_operands = 0 : i64, tpu.core_type = #tpu.core_type<tc>, window_params = [{transform_indices = @transform_0, window_bounds = array<i64: 2, 2048>}, {transform_indices = @transform_1, window_bounds = array<i64: 1, 2048>}, {transform_indices = @transform_2, window_bounds = array<i64: 1, 2048>}, {transform_indices = @transform_3, window_bounds = array<i64: 2048, 256>}, {transform_indices = @transform_4, window_bounds = array<i64: 1, 256>}, {transform_indices = @transform_5, window_bounds = array<i64: 2, 256>}]} {
    %c0_i32 = arith.constant 0 : i32
    %0 = arith.cmpi eq, %arg1, %c0_i32 : i32
    %1 = arith.extui %0 : i1 to i32
    %c0_i32_0 = arith.constant 0 : i32
    %2 = arith.cmpi ne, %1, %c0_i32_0 : i32
    scf.if %2 {
      %c0_13 = arith.constant 0 : index
      %c0_14 = arith.constant 0 : index
      %18 = vector.load %arg6[%c0_13, %c0_14] : memref<1x256xf32, #tpu.memory_space<vmem>>, vector<1x256xf32>
      %19 = vector.shape_cast %18 : vector<1x256xf32> to vector<1x256xf32>
      %20 = vector.broadcast %19 : vector<1x256xf32> to vector<2x256xf32>
      %c0_15 = arith.constant 0 : index
      %c0_16 = arith.constant 0 : index
      %21 = vector.load %arg7[%c0_15, %c0_16] : memref<2x256xf32, #tpu.memory_space<vmem>>, vector<2x256xf32>
      tpu.vector_store %arg7[%c0_15, %c0_16], %20 {strides = array<i32>} : memref<2x256xf32, #tpu.memory_space<vmem>>, vector<2x256xf32>,
    } else {
    }
    %c0 = arith.constant 0 : index
    %c0_1 = arith.constant 0 : index
    %3 = vector.load %arg2[%c0, %c0_1] : memref<2x2048xf32, #tpu.memory_space<vmem>>, vector<2x2048xf32>
    %cst = arith.constant 0.000000e+00 : f32
    %4 = vector.broadcast %cst : f32 to vector<2x2048xf32>
    %5 = arith.maximumf %3, %4 : vector<2x2048xf32>
    %c0_2 = arith.constant 0 : index
    %c0_3 = arith.constant 0 : index
    %6 = vector.load %arg3[%c0_2, %c0_3] : memref<1x2048xf32, #tpu.memory_space<vmem>>, vector<1x2048xf32>
    %7 = vector.broadcast %6 : vector<1x2048xf32> to vector<2x2048xf32>
    %8 = arith.mulf %5, %7 : vector<2x2048xf32>
    %c0_4 = arith.constant 0 : index
    %c0_5 = arith.constant 0 : index
    %9 = vector.load %arg4[%c0_4, %c0_5] : memref<1x2048xf32, #tpu.memory_space<vmem>>, vector<1x2048xf32>
    %10 = vector.broadcast %9 : vector<1x2048xf32> to vector<2x2048xf32>
    %11 = arith.addf %8, %10 : vector<2x2048xf32>
    %c0_6 = arith.constant 0 : index
    %c0_7 = arith.constant 0 : index
    %12 = vector.load %arg7[%c0_6, %c0_7] : memref<2x256xf32, #tpu.memory_space<vmem>>, vector<2x256xf32>
    %13 = arith.truncf %11 : vector<2x2048xf32> to vector<2x2048xbf16>
    %c0_8 = arith.constant 0 : index
    %c0_9 = arith.constant 0 : index
    %14 = vector.load %arg5[%c0_8, %c0_9] : memref<2048x256xbf16, #tpu.memory_space<vmem>>, vector<2048x256xbf16>
    %cst_10 = arith.constant dense<0.000000e+00> : vector<2x256xf32>
    %15 = tpu.matmul %13, %14, %cst_10 {dimension_numbers = #tpu.dot_dimension_numbers<[1], [0], [0], [1], [0, 0, 1, 1], [], []>} : vector<2x2048xbf16>, vector<2048x256xbf16>, vector<2x256xf32> -> vector<2x256xf32>
    %16 = arith.addf %12, %15 : vector<2x256xf32>
    %c0_11 = arith.constant 0 : index
    %c0_12 = arith.constant 0 : index
    %17 = vector.load %arg7[%c0_11, %c0_12] : memref<2x256xf32, #tpu.memory_space<vmem>>, vector<2x256xf32>
    tpu.vector_store %arg7[%c0_11, %c0_12], %16 {strides = array<i32>} : memref<2x256xf32, #tpu.memory_space<vmem>>, vector<2x256xf32>,
    return
  }
  func.func @transform_0(%arg0: i32, %arg1: i32) -> (i32, i32) {
    %c0_i32 = arith.constant 0 : i32
    %c0_i32_0 = arith.constant 0 : i32
    return %c0_i32, %arg1 : i32, i32
  }
  func.func @transform_1(%arg0: i32, %arg1: i32) -> (i32, i32) {
    %c0_i32 = arith.constant 0 : i32
    %c0_i32_0 = arith.constant 0 : i32
    return %c0_i32, %arg1 : i32, i32
  }
  func.func @transform_2(%arg0: i32, %arg1: i32) -> (i32, i32) {
    %c0_i32 = arith.constant 0 : i32
    %c0_i32_0 = arith.constant 0 : i32
    return %c0_i32, %arg1 : i32, i32
  }
  func.func @transform_3(%arg0: i32, %arg1: i32) -> (i32, i32) {
    %c0_i32 = arith.constant 0 : i32
    return %arg1, %arg0 : i32, i32
  }
  func.func @transform_4(%arg0: i32, %arg1: i32) -> (i32, i32) {
    %c0_i32 = arith.constant 0 : i32
    %c0_i32_0 = arith.constant 0 : i32
    return %c0_i32, %arg0 : i32, i32
  }
  func.func @transform_5(%arg0: i32, %arg1: i32) -> (i32, i32) {
    %c0_i32 = arith.constant 0 : i32
    %c0_i32_0 = arith.constant 0 : i32
    return %c0_i32, %arg0 : i32, i32
  }
}

module attributes {stable_mosaic.version = 11 : i64} {
  func.func @_resplus_kernel(%arg0: i32, %arg1: memref<64x64xf32, #tpu.memory_space<vmem>>, %arg2: memref<64x8xf32, #tpu.memory_space<vmem>>, %arg3: memref<64x9xf32, #tpu.memory_space<vmem>>, %arg4: memref<576x56xbf16, #tpu.memory_space<vmem>>, %arg5: memref<1x56xf32, #tpu.memory_space<vmem>>, %arg6: memref<576x64xbf16, #tpu.memory_space<vmem>>, %arg7: memref<1x64xf32, #tpu.memory_space<vmem>>, %arg8: memref<1x64xf32, #tpu.memory_space<vmem>>, %arg9: memref<1x64xf32, #tpu.memory_space<vmem>>, %arg10: memref<1x64xf32, #tpu.memory_space<vmem>>, %arg11: memref<1x64xf32, #tpu.memory_space<vmem>>, %arg12: memref<64x64xf32, #tpu.memory_space<vmem>>) attributes {dimension_semantics = [#tpu.dimension_semantics<parallel>], iteration_bounds = array<i64: 2>, scalar_prefetch = 0 : i64, scratch_operands = 0 : i64, tpu.core_type = #tpu.core_type<tc>, window_params = [{transform_indices = @transform_0, window_bounds = array<i64: 64, 64>}, {transform_indices = @transform_1, window_bounds = array<i64: 64, 8>}, {pipeline_mode = #tpu.pipeline_mode<synchronous>, transform_indices = @transform_2, window_bounds = array<i64: 64, 9>}, {pipeline_mode = #tpu.pipeline_mode<synchronous>, transform_indices = @transform_3, window_bounds = array<i64: 576, 56>}, {pipeline_mode = #tpu.pipeline_mode<synchronous>, transform_indices = @transform_4, window_bounds = array<i64: 1, 56>}, {pipeline_mode = #tpu.pipeline_mode<synchronous>, transform_indices = @transform_5, window_bounds = array<i64: 576, 64>}, {pipeline_mode = #tpu.pipeline_mode<synchronous>, transform_indices = @transform_6, window_bounds = array<i64: 1, 64>}, {pipeline_mode = #tpu.pipeline_mode<synchronous>, transform_indices = @transform_7, window_bounds = array<i64: 1, 64>}, {pipeline_mode = #tpu.pipeline_mode<synchronous>, transform_indices = @transform_8, window_bounds = array<i64: 1, 64>}, {pipeline_mode = #tpu.pipeline_mode<synchronous>, transform_indices = @transform_9, window_bounds = array<i64: 1, 64>}, {pipeline_mode = #tpu.pipeline_mode<synchronous>, transform_indices = @transform_10, window_bounds = array<i64: 1, 64>}, {transform_indices = @transform_11, window_bounds = array<i64: 64, 64>}]} {
    %c0 = arith.constant 0 : index
    %c0_0 = arith.constant 0 : index
    %0 = vector.load %arg1[%c0, %c0_0] : memref<64x64xf32, #tpu.memory_space<vmem>>, vector<64x64xf32>
    %c0_1 = arith.constant 0 : index
    %c0_2 = arith.constant 0 : index
    %1 = vector.load %arg3[%c0_1, %c0_2] : memref<64x9xf32, #tpu.memory_space<vmem>>, vector<64x9xf32>
    %c0_3 = arith.constant 0 : index
    %c0_4 = arith.constant 0 : index
    %2 = vector.load %arg8[%c0_3, %c0_4] : memref<1x64xf32, #tpu.memory_space<vmem>>, vector<1x64xf32>
    %3 = vector.broadcast %2 : vector<1x64xf32> to vector<64x64xf32>
    %4 = arith.mulf %0, %3 : vector<64x64xf32>
    %c0_5 = arith.constant 0 : index
    %c0_6 = arith.constant 0 : index
    %5 = vector.load %arg9[%c0_5, %c0_6] : memref<1x64xf32, #tpu.memory_space<vmem>>, vector<1x64xf32>
    %6 = vector.broadcast %5 : vector<1x64xf32> to vector<64x64xf32>
    %7 = arith.addf %4, %6 : vector<64x64xf32>
    %cst = arith.constant 0.000000e+00 : f32
    %8 = vector.broadcast %cst : f32 to vector<64x64xf32>
    %9 = arith.maximumf %7, %8 : vector<64x64xf32>
    %c9_i32 = arith.constant 9 : i32
    %10 = tpu.dynamic_rotate %9 by %c9_i32 dim 0 : vector<64x64xf32>, i32 -> vector<64x64xf32>
    %11 = vector.extract_strided_slice %1 {offsets = [0, 0], sizes = [64, 1], strides = [1, 1]} : vector<64x9xf32> to vector<64x1xf32>
    %12 = vector.broadcast %11 : vector<64x1xf32> to vector<64x64xf32>
    %13 = arith.mulf %10, %12 : vector<64x64xf32>
    %14 = arith.truncf %13 : vector<64x64xf32> to vector<64x64xbf16>
    %c8_i32 = arith.constant 8 : i32
    %15 = tpu.dynamic_rotate %9 by %c8_i32 dim 0 : vector<64x64xf32>, i32 -> vector<64x64xf32>
    %16 = vector.extract_strided_slice %1 {offsets = [0, 1], sizes = [64, 1], strides = [1, 1]} : vector<64x9xf32> to vector<64x1xf32>
    %17 = vector.broadcast %16 : vector<64x1xf32> to vector<64x64xf32>
    %18 = arith.mulf %15, %17 : vector<64x64xf32>
    %19 = arith.truncf %18 : vector<64x64xf32> to vector<64x64xbf16>
    %c7_i32 = arith.constant 7 : i32
    %20 = tpu.dynamic_rotate %9 by %c7_i32 dim 0 : vector<64x64xf32>, i32 -> vector<64x64xf32>
    %21 = vector.extract_strided_slice %1 {offsets = [0, 2], sizes = [64, 1], strides = [1, 1]} : vector<64x9xf32> to vector<64x1xf32>
    %22 = vector.broadcast %21 : vector<64x1xf32> to vector<64x64xf32>
    %23 = arith.mulf %20, %22 : vector<64x64xf32>
    %24 = arith.truncf %23 : vector<64x64xf32> to vector<64x64xbf16>
    %c1_i32 = arith.constant 1 : i32
    %25 = tpu.dynamic_rotate %9 by %c1_i32 dim 0 : vector<64x64xf32>, i32 -> vector<64x64xf32>
    %26 = vector.extract_strided_slice %1 {offsets = [0, 3], sizes = [64, 1], strides = [1, 1]} : vector<64x9xf32> to vector<64x1xf32>
    %27 = vector.broadcast %26 : vector<64x1xf32> to vector<64x64xf32>
    %28 = arith.mulf %25, %27 : vector<64x64xf32>
    %29 = arith.truncf %28 : vector<64x64xf32> to vector<64x64xbf16>
    %30 = vector.extract_strided_slice %1 {offsets = [0, 4], sizes = [64, 1], strides = [1, 1]} : vector<64x9xf32> to vector<64x1xf32>
    %31 = vector.broadcast %30 : vector<64x1xf32> to vector<64x64xf32>
    %32 = arith.mulf %9, %31 : vector<64x64xf32>
    %33 = arith.truncf %32 : vector<64x64xf32> to vector<64x64xbf16>
    %c63_i32 = arith.constant 63 : i32
    %34 = tpu.dynamic_rotate %9 by %c63_i32 dim 0 : vector<64x64xf32>, i32 -> vector<64x64xf32>
    %35 = vector.extract_strided_slice %1 {offsets = [0, 5], sizes = [64, 1], strides = [1, 1]} : vector<64x9xf32> to vector<64x1xf32>
    %36 = vector.broadcast %35 : vector<64x1xf32> to vector<64x64xf32>
    %37 = arith.mulf %34, %36 : vector<64x64xf32>
    %38 = arith.truncf %37 : vector<64x64xf32> to vector<64x64xbf16>
    %c57_i32 = arith.constant 57 : i32
    %39 = tpu.dynamic_rotate %9 by %c57_i32 dim 0 : vector<64x64xf32>, i32 -> vector<64x64xf32>
    %40 = vector.extract_strided_slice %1 {offsets = [0, 6], sizes = [64, 1], strides = [1, 1]} : vector<64x9xf32> to vector<64x1xf32>
    %41 = vector.broadcast %40 : vector<64x1xf32> to vector<64x64xf32>
    %42 = arith.mulf %39, %41 : vector<64x64xf32>
    %43 = arith.truncf %42 : vector<64x64xf32> to vector<64x64xbf16>
    %c56_i32 = arith.constant 56 : i32
    %44 = tpu.dynamic_rotate %9 by %c56_i32 dim 0 : vector<64x64xf32>, i32 -> vector<64x64xf32>
    %45 = vector.extract_strided_slice %1 {offsets = [0, 7], sizes = [64, 1], strides = [1, 1]} : vector<64x9xf32> to vector<64x1xf32>
    %46 = vector.broadcast %45 : vector<64x1xf32> to vector<64x64xf32>
    %47 = arith.mulf %44, %46 : vector<64x64xf32>
    %48 = arith.truncf %47 : vector<64x64xf32> to vector<64x64xbf16>
    %c55_i32 = arith.constant 55 : i32
    %49 = tpu.dynamic_rotate %9 by %c55_i32 dim 0 : vector<64x64xf32>, i32 -> vector<64x64xf32>
    %50 = vector.extract_strided_slice %1 {offsets = [0, 8], sizes = [64, 1], strides = [1, 1]} : vector<64x9xf32> to vector<64x1xf32>
    %51 = vector.broadcast %50 : vector<64x1xf32> to vector<64x64xf32>
    %52 = arith.mulf %49, %51 : vector<64x64xf32>
    %53 = arith.truncf %52 : vector<64x64xf32> to vector<64x64xbf16>
    %54 = tpu.concatenate %14, %19, %24, %29, %33, %38, %43, %48, %53 in 1 : vector<64x64xbf16>, vector<64x64xbf16>, vector<64x64xbf16>, vector<64x64xbf16>, vector<64x64xbf16>, vector<64x64xbf16>, vector<64x64xbf16>, vector<64x64xbf16>, vector<64x64xbf16> -> vector<64x576xbf16>
    %c0_7 = arith.constant 0 : index
    %c0_8 = arith.constant 0 : index
    %55 = vector.load %arg4[%c0_7, %c0_8] : memref<576x56xbf16, #tpu.memory_space<vmem>>, vector<576x56xbf16>
    %cst_9 = arith.constant dense<0.000000e+00> : vector<64x56xf32>
    %56 = tpu.matmul %54, %55, %cst_9 {dimension_numbers = #tpu.dot_dimension_numbers<[1], [0], [0], [1], [0, 0, 1, 1], [], []>} : vector<64x576xbf16>, vector<576x56xbf16>, vector<64x56xf32> -> vector<64x56xf32>
    %c0_10 = arith.constant 0 : index
    %c0_11 = arith.constant 0 : index
    %57 = vector.load %arg5[%c0_10, %c0_11] : memref<1x56xf32, #tpu.memory_space<vmem>>, vector<1x56xf32>
    %58 = vector.broadcast %57 : vector<1x56xf32> to vector<64x56xf32>
    %59 = arith.addf %56, %58 : vector<64x56xf32>
    %c0_12 = arith.constant 0 : index
    %c0_13 = arith.constant 0 : index
    %60 = vector.load %arg2[%c0_12, %c0_13] : memref<64x8xf32, #tpu.memory_space<vmem>>, vector<64x8xf32>
    %61 = tpu.concatenate %59, %60 in 1 : vector<64x56xf32>, vector<64x8xf32> -> vector<64x64xf32>
    %c0_14 = arith.constant 0 : index
    %c0_15 = arith.constant 0 : index
    %62 = vector.load %arg10[%c0_14, %c0_15] : memref<1x64xf32, #tpu.memory_space<vmem>>, vector<1x64xf32>
    %63 = vector.broadcast %62 : vector<1x64xf32> to vector<64x64xf32>
    %64 = arith.mulf %61, %63 : vector<64x64xf32>
    %c0_16 = arith.constant 0 : index
    %c0_17 = arith.constant 0 : index
    %65 = vector.load %arg11[%c0_16, %c0_17] : memref<1x64xf32, #tpu.memory_space<vmem>>, vector<1x64xf32>
    %66 = vector.broadcast %65 : vector<1x64xf32> to vector<64x64xf32>
    %67 = arith.addf %64, %66 : vector<64x64xf32>
    %cst_18 = arith.constant 0.000000e+00 : f32
    %68 = vector.broadcast %cst_18 : f32 to vector<64x64xf32>
    %69 = arith.maximumf %67, %68 : vector<64x64xf32>
    %c9_i32_19 = arith.constant 9 : i32
    %70 = tpu.dynamic_rotate %69 by %c9_i32_19 dim 0 : vector<64x64xf32>, i32 -> vector<64x64xf32>
    %71 = vector.extract_strided_slice %1 {offsets = [0, 0], sizes = [64, 1], strides = [1, 1]} : vector<64x9xf32> to vector<64x1xf32>
    %72 = vector.broadcast %71 : vector<64x1xf32> to vector<64x64xf32>
    %73 = arith.mulf %70, %72 : vector<64x64xf32>
    %74 = arith.truncf %73 : vector<64x64xf32> to vector<64x64xbf16>
    %c8_i32_20 = arith.constant 8 : i32
    %75 = tpu.dynamic_rotate %69 by %c8_i32_20 dim 0 : vector<64x64xf32>, i32 -> vector<64x64xf32>
    %76 = vector.extract_strided_slice %1 {offsets = [0, 1], sizes = [64, 1], strides = [1, 1]} : vector<64x9xf32> to vector<64x1xf32>
    %77 = vector.broadcast %76 : vector<64x1xf32> to vector<64x64xf32>
    %78 = arith.mulf %75, %77 : vector<64x64xf32>
    %79 = arith.truncf %78 : vector<64x64xf32> to vector<64x64xbf16>
    %c7_i32_21 = arith.constant 7 : i32
    %80 = tpu.dynamic_rotate %69 by %c7_i32_21 dim 0 : vector<64x64xf32>, i32 -> vector<64x64xf32>
    %81 = vector.extract_strided_slice %1 {offsets = [0, 2], sizes = [64, 1], strides = [1, 1]} : vector<64x9xf32> to vector<64x1xf32>
    %82 = vector.broadcast %81 : vector<64x1xf32> to vector<64x64xf32>
    %83 = arith.mulf %80, %82 : vector<64x64xf32>
    %84 = arith.truncf %83 : vector<64x64xf32> to vector<64x64xbf16>
    %c1_i32_22 = arith.constant 1 : i32
    %85 = tpu.dynamic_rotate %69 by %c1_i32_22 dim 0 : vector<64x64xf32>, i32 -> vector<64x64xf32>
    %86 = vector.extract_strided_slice %1 {offsets = [0, 3], sizes = [64, 1], strides = [1, 1]} : vector<64x9xf32> to vector<64x1xf32>
    %87 = vector.broadcast %86 : vector<64x1xf32> to vector<64x64xf32>
    %88 = arith.mulf %85, %87 : vector<64x64xf32>
    %89 = arith.truncf %88 : vector<64x64xf32> to vector<64x64xbf16>
    %90 = vector.extract_strided_slice %1 {offsets = [0, 4], sizes = [64, 1], strides = [1, 1]} : vector<64x9xf32> to vector<64x1xf32>
    %91 = vector.broadcast %90 : vector<64x1xf32> to vector<64x64xf32>
    %92 = arith.mulf %69, %91 : vector<64x64xf32>
    %93 = arith.truncf %92 : vector<64x64xf32> to vector<64x64xbf16>
    %c63_i32_23 = arith.constant 63 : i32
    %94 = tpu.dynamic_rotate %69 by %c63_i32_23 dim 0 : vector<64x64xf32>, i32 -> vector<64x64xf32>
    %95 = vector.extract_strided_slice %1 {offsets = [0, 5], sizes = [64, 1], strides = [1, 1]} : vector<64x9xf32> to vector<64x1xf32>
    %96 = vector.broadcast %95 : vector<64x1xf32> to vector<64x64xf32>
    %97 = arith.mulf %94, %96 : vector<64x64xf32>
    %98 = arith.truncf %97 : vector<64x64xf32> to vector<64x64xbf16>
    %c57_i32_24 = arith.constant 57 : i32
    %99 = tpu.dynamic_rotate %69 by %c57_i32_24 dim 0 : vector<64x64xf32>, i32 -> vector<64x64xf32>
    %100 = vector.extract_strided_slice %1 {offsets = [0, 6], sizes = [64, 1], strides = [1, 1]} : vector<64x9xf32> to vector<64x1xf32>
    %101 = vector.broadcast %100 : vector<64x1xf32> to vector<64x64xf32>
    %102 = arith.mulf %99, %101 : vector<64x64xf32>
    %103 = arith.truncf %102 : vector<64x64xf32> to vector<64x64xbf16>
    %c56_i32_25 = arith.constant 56 : i32
    %104 = tpu.dynamic_rotate %69 by %c56_i32_25 dim 0 : vector<64x64xf32>, i32 -> vector<64x64xf32>
    %105 = vector.extract_strided_slice %1 {offsets = [0, 7], sizes = [64, 1], strides = [1, 1]} : vector<64x9xf32> to vector<64x1xf32>
    %106 = vector.broadcast %105 : vector<64x1xf32> to vector<64x64xf32>
    %107 = arith.mulf %104, %106 : vector<64x64xf32>
    %108 = arith.truncf %107 : vector<64x64xf32> to vector<64x64xbf16>
    %c55_i32_26 = arith.constant 55 : i32
    %109 = tpu.dynamic_rotate %69 by %c55_i32_26 dim 0 : vector<64x64xf32>, i32 -> vector<64x64xf32>
    %110 = vector.extract_strided_slice %1 {offsets = [0, 8], sizes = [64, 1], strides = [1, 1]} : vector<64x9xf32> to vector<64x1xf32>
    %111 = vector.broadcast %110 : vector<64x1xf32> to vector<64x64xf32>
    %112 = arith.mulf %109, %111 : vector<64x64xf32>
    %113 = arith.truncf %112 : vector<64x64xf32> to vector<64x64xbf16>
    %114 = tpu.concatenate %74, %79, %84, %89, %93, %98, %103, %108, %113 in 1 : vector<64x64xbf16>, vector<64x64xbf16>, vector<64x64xbf16>, vector<64x64xbf16>, vector<64x64xbf16>, vector<64x64xbf16>, vector<64x64xbf16>, vector<64x64xbf16>, vector<64x64xbf16> -> vector<64x576xbf16>
    %c0_27 = arith.constant 0 : index
    %c0_28 = arith.constant 0 : index
    %115 = vector.load %arg6[%c0_27, %c0_28] : memref<576x64xbf16, #tpu.memory_space<vmem>>, vector<576x64xbf16>
    %cst_29 = arith.constant dense<0.000000e+00> : vector<64x64xf32>
    %116 = tpu.matmul %114, %115, %cst_29 {dimension_numbers = #tpu.dot_dimension_numbers<[1], [0], [0], [1], [0, 0, 1, 1], [], []>} : vector<64x576xbf16>, vector<576x64xbf16>, vector<64x64xf32> -> vector<64x64xf32>
    %c0_30 = arith.constant 0 : index
    %c0_31 = arith.constant 0 : index
    %117 = vector.load %arg7[%c0_30, %c0_31] : memref<1x64xf32, #tpu.memory_space<vmem>>, vector<1x64xf32>
    %118 = vector.broadcast %117 : vector<1x64xf32> to vector<64x64xf32>
    %119 = arith.addf %116, %118 : vector<64x64xf32>
    %120 = arith.addf %119, %0 : vector<64x64xf32>
    %c0_32 = arith.constant 0 : index
    %c0_33 = arith.constant 0 : index
    %121 = vector.load %arg12[%c0_32, %c0_33] : memref<64x64xf32, #tpu.memory_space<vmem>>, vector<64x64xf32>
    tpu.vector_store %arg12[%c0_32, %c0_33], %120 {strides = array<i32>} : memref<64x64xf32, #tpu.memory_space<vmem>>, vector<64x64xf32>,
    return
  }
  func.func @transform_0(%arg0: i32) -> (i32, i32) {
    %c0_i32 = arith.constant 0 : i32
    %c0_i32_0 = arith.constant 0 : i32
    return %arg0, %c0_i32 : i32, i32
  }
  func.func @transform_1(%arg0: i32) -> (i32, i32) {
    %c0_i32 = arith.constant 0 : i32
    %c0_i32_0 = arith.constant 0 : i32
    return %arg0, %c0_i32 : i32, i32
  }
  func.func @transform_2(%arg0: i32) -> (i32, i32) {
    %c0_i32 = arith.constant 0 : i32
    %c0_i32_0 = arith.constant 0 : i32
    %c0_i32_1 = arith.constant 0 : i32
    return %c0_i32, %c0_i32_0 : i32, i32
  }
  func.func @transform_3(%arg0: i32) -> (i32, i32) {
    %c0_i32 = arith.constant 0 : i32
    %c0_i32_0 = arith.constant 0 : i32
    %c0_i32_1 = arith.constant 0 : i32
    return %c0_i32, %c0_i32_0 : i32, i32
  }
  func.func @transform_4(%arg0: i32) -> (i32, i32) {
    %c0_i32 = arith.constant 0 : i32
    %c0_i32_0 = arith.constant 0 : i32
    %c0_i32_1 = arith.constant 0 : i32
    return %c0_i32, %c0_i32_0 : i32, i32
  }
  func.func @transform_5(%arg0: i32) -> (i32, i32) {
    %c0_i32 = arith.constant 0 : i32
    %c0_i32_0 = arith.constant 0 : i32
    %c0_i32_1 = arith.constant 0 : i32
    return %c0_i32, %c0_i32_0 : i32, i32
  }
  func.func @transform_6(%arg0: i32) -> (i32, i32) {
    %c0_i32 = arith.constant 0 : i32
    %c0_i32_0 = arith.constant 0 : i32
    %c0_i32_1 = arith.constant 0 : i32
    return %c0_i32, %c0_i32_0 : i32, i32
  }
  func.func @transform_7(%arg0: i32) -> (i32, i32) {
    %c0_i32 = arith.constant 0 : i32
    %c0_i32_0 = arith.constant 0 : i32
    %c0_i32_1 = arith.constant 0 : i32
    return %c0_i32, %c0_i32_0 : i32, i32
  }
  func.func @transform_8(%arg0: i32) -> (i32, i32) {
    %c0_i32 = arith.constant 0 : i32
    %c0_i32_0 = arith.constant 0 : i32
    %c0_i32_1 = arith.constant 0 : i32
    return %c0_i32, %c0_i32_0 : i32, i32
  }
  func.func @transform_9(%arg0: i32) -> (i32, i32) {
    %c0_i32 = arith.constant 0 : i32
    %c0_i32_0 = arith.constant 0 : i32
    %c0_i32_1 = arith.constant 0 : i32
    return %c0_i32, %c0_i32_0 : i32, i32
  }
  func.func @transform_10(%arg0: i32) -> (i32, i32) {
    %c0_i32 = arith.constant 0 : i32
    %c0_i32_0 = arith.constant 0 : i32
    %c0_i32_1 = arith.constant 0 : i32
    return %c0_i32, %c0_i32_0 : i32, i32
  }
  func.func @transform_11(%arg0: i32) -> (i32, i32) {
    %c0_i32 = arith.constant 0 : i32
    %c0_i32_0 = arith.constant 0 : i32
    return %arg0, %c0_i32 : i32, i32
  }
}

module attributes {stable_mosaic.version = 11 : i64} {
  func.func @_tail_kernel(%arg0: i32, %arg1: memref<64x64xf32, #tpu.memory_space<vmem>>, %arg2: memref<1x64xf32, #tpu.memory_space<vmem>>, %arg3: memref<1x64xf32, #tpu.memory_space<vmem>>, %arg4: memref<64x2xf32, #tpu.memory_space<vmem>>, %arg5: memref<1x2xf32, #tpu.memory_space<vmem>>, %arg6: memref<64x2xf32, #tpu.memory_space<vmem>>) attributes {dimension_semantics = [#tpu.dimension_semantics<parallel>], iteration_bounds = array<i64: 2>, scalar_prefetch = 0 : i64, scratch_operands = 0 : i64, tpu.core_type = #tpu.core_type<tc>, window_params = [{transform_indices = @transform_0, window_bounds = array<i64: 64, 64>}, {pipeline_mode = #tpu.pipeline_mode<synchronous>, transform_indices = @transform_1, window_bounds = array<i64: 1, 64>}, {pipeline_mode = #tpu.pipeline_mode<synchronous>, transform_indices = @transform_2, window_bounds = array<i64: 1, 64>}, {pipeline_mode = #tpu.pipeline_mode<synchronous>, transform_indices = @transform_3, window_bounds = array<i64: 64, 2>}, {pipeline_mode = #tpu.pipeline_mode<synchronous>, transform_indices = @transform_4, window_bounds = array<i64: 1, 2>}, {transform_indices = @transform_5, window_bounds = array<i64: 64, 2>}]} {
    %c0 = arith.constant 0 : index
    %c0_0 = arith.constant 0 : index
    %0 = vector.load %arg1[%c0, %c0_0] : memref<64x64xf32, #tpu.memory_space<vmem>>, vector<64x64xf32>
    %cst = arith.constant 0.000000e+00 : f32
    %1 = vector.broadcast %cst : f32 to vector<64x64xf32>
    %2 = arith.maximumf %0, %1 : vector<64x64xf32>
    %c0_1 = arith.constant 0 : index
    %c0_2 = arith.constant 0 : index
    %3 = vector.load %arg2[%c0_1, %c0_2] : memref<1x64xf32, #tpu.memory_space<vmem>>, vector<1x64xf32>
    %4 = vector.broadcast %3 : vector<1x64xf32> to vector<64x64xf32>
    %5 = arith.mulf %2, %4 : vector<64x64xf32>
    %c0_3 = arith.constant 0 : index
    %c0_4 = arith.constant 0 : index
    %6 = vector.load %arg3[%c0_3, %c0_4] : memref<1x64xf32, #tpu.memory_space<vmem>>, vector<1x64xf32>
    %7 = vector.broadcast %6 : vector<1x64xf32> to vector<64x64xf32>
    %8 = arith.addf %5, %7 : vector<64x64xf32>
    %c0_5 = arith.constant 0 : index
    %c0_6 = arith.constant 0 : index
    %9 = vector.load %arg4[%c0_5, %c0_6] : memref<64x2xf32, #tpu.memory_space<vmem>>, vector<64x2xf32>
    %cst_7 = arith.constant dense<0.000000e+00> : vector<64x2xf32>
    %10 = tpu.matmul %8, %9, %cst_7 {dimension_numbers = #tpu.dot_dimension_numbers<[1], [0], [0], [1], [0, 0, 1, 1], [], []>} : vector<64x64xf32>, vector<64x2xf32>, vector<64x2xf32> -> vector<64x2xf32>
    %c0_8 = arith.constant 0 : index
    %c0_9 = arith.constant 0 : index
    %11 = vector.load %arg5[%c0_8, %c0_9] : memref<1x2xf32, #tpu.memory_space<vmem>>, vector<1x2xf32>
    %12 = vector.broadcast %11 : vector<1x2xf32> to vector<64x2xf32>
    %13 = arith.addf %10, %12 : vector<64x2xf32>
    %14 = math.tanh %13 : vector<64x2xf32>
    %c0_10 = arith.constant 0 : index
    %c0_11 = arith.constant 0 : index
    %15 = vector.load %arg6[%c0_10, %c0_11] : memref<64x2xf32, #tpu.memory_space<vmem>>, vector<64x2xf32>
    tpu.vector_store %arg6[%c0_10, %c0_11], %14 {strides = array<i32>} : memref<64x2xf32, #tpu.memory_space<vmem>>, vector<64x2xf32>,
    return
  }
  func.func @transform_0(%arg0: i32) -> (i32, i32) {
    %c0_i32 = arith.constant 0 : i32
    %c0_i32_0 = arith.constant 0 : i32
    return %arg0, %c0_i32 : i32, i32
  }
  func.func @transform_1(%arg0: i32) -> (i32, i32) {
    %c0_i32 = arith.constant 0 : i32
    %c0_i32_0 = arith.constant 0 : i32
    %c0_i32_1 = arith.constant 0 : i32
    return %c0_i32, %c0_i32_0 : i32, i32
  }
  func.func @transform_2(%arg0: i32) -> (i32, i32) {
    %c0_i32 = arith.constant 0 : i32
    %c0_i32_0 = arith.constant 0 : i32
    %c0_i32_1 = arith.constant 0 : i32
    return %c0_i32, %c0_i32_0 : i32, i32
  }
  func.func @transform_3(%arg0: i32) -> (i32, i32) {
    %c0_i32 = arith.constant 0 : i32
    %c0_i32_0 = arith.constant 0 : i32
    %c0_i32_1 = arith.constant 0 : i32
    return %c0_i32, %c0_i32_0 : i32, i32
  }
  func.func @transform_4(%arg0: i32) -> (i32, i32) {
    %c0_i32 = arith.constant 0 : i32
    %c0_i32_0 = arith.constant 0 : i32
    %c0_i32_1 = arith.constant 0 : i32
    return %c0_i32, %c0_i32_0 : i32, i32
  }
  func.func @transform_5(%arg0: i32) -> (i32, i32) {
    %c0_i32 = arith.constant 0 : i32
    %c0_i32_0 = arith.constant 0 : i32
    return %arg0, %c0_i32 : i32, i32
  }
}

</mosaic_0001>

<llo_original>
// kernel: deepstn_pallas_forward.6
$region0: #{deepstn_pallas_forward.6}
  #allocation0 [shape = 'u32[]', space=smem, size = 0x4, offset = 0x4, fixed_abs, tag = 'smem constant byte address 0x4 - core index']
  #allocation1 [shape = 'u32[144,128]{1,0:T(1,128)}', space=vmem, size = 0x12000, scoped, tag = 'internal scratch']
  #allocation2 [shape = 'f32[1,1]{1,0:T(1,128)S(1)}', space=vmem, size = 0x200, scoped, tag = 'scoped memory for deepstn_pallas_forward.6']
  %s0 = inlined_call_operand.hbm [shape: f32[128,24], index: 0, kind: input, shape index: {}]
  %s1 = inlined_call_operand.hbm [shape: f32[1,24], index: 1, kind: input, shape index: {}]
  %s2 = inlined_call_operand.vmem [shape: f32[12,4], index: 2, kind: input, shape index: {}]
  %s3 = inlined_call_operand.hbm [shape: f32[1,4], index: 3, kind: input, shape index: {}]
  %s4 = inlined_call_operand.vmem [shape: f32[4,1], index: 4, kind: input, shape index: {}]
  %s5 = inlined_call_operand.<no memory space> [shape: f32[1,1], index: 5, kind: input, shape index: {}]
  %s6 = inlined_call_operand.hbm [shape: f32[24,196], index: 6, kind: input, shape index: {}]
  %s7 = inlined_call_operand.hbm [shape: f32[1,196], index: 7, kind: input, shape index: {}]
  %s8 = inlined_call_operand.hbm [shape: f32[1,196], index: 8, kind: input, shape index: {}]
  %s9 = inlined_call_operand.hbm [shape: f32[1,196], index: 9, kind: input, shape index: {}]
  %s10 = inlined_call_operand.vmem [shape: f32[196,64], index: 10, kind: input, shape index: {}]
  %s11 = inlined_call_operand.hbm [shape: f32[1,64], index: 11, kind: input, shape index: {}]
  %s12 = inlined_call_operand.vmem [shape: f32[128,64], index: 12, kind: output, shape index: {}]
  %s13 = sld [smem:[#allocation0]]
  $region113: #{deepstn_pallas_forward.6} parent=0
    _
  %s15 = ssub.s32 1, %s13
  %s16 = scalar_select 0, %s15, %s13
  %v17 = vstv %s5
  %18 = vst [vmem:[#allocation2] sm:$0x1] %v17
  $region1: #{deepstn_pallas_forward.6} parent=0
    #allocation3 [shape = 'u8[65536]{0}', space=vmem, size = 0x10000, scoped, tag = 'input window, operand 0']
    #allocation4 [shape = 's32[2]{0}', space=sflag, size = 0x8, scoped, tag = 'scoped memory for deepstn_pallas_forward.6']
    #allocation5 [shape = 'u8[512]{0}', space=vmem, size = 0x400, scoped, tag = 'input window, operand 1, single buffered']
    #allocation6 [shape = 's32[1]{0}', space=sflag, size = 0x4, scoped, tag = 'scoped memory for deepstn_pallas_forward.6']
    #allocation7 [shape = 'u8[512]{0}', space=vmem, size = 0x400, scoped, tag = 'input window, operand 3, single buffered']
    #allocation8 [shape = 'u8[24576]{0}', space=vmem, size = 0x6000, scoped, tag = 'input window, operand 6, single buffered']
    #allocation9 [shape = 's32[1]{0}', space=sflag, size = 0x4, scoped, tag = 'scoped memory for deepstn_pallas_forward.6']
    #allocation10 [shape = 'u8[1024]{0}', space=vmem, size = 0x400, scoped, tag = 'input window, operand 7, single buffered']
    #allocation11 [shape = 'u8[1024]{0}', space=vmem, size = 0x400, scoped, tag = 'input window, operand 8, single buffered']
    #allocation12 [shape = 's32[1]{0}', space=sflag, size = 0x4, scoped, tag = 'scoped memory for deepstn_pallas_forward.6']
    #allocation13 [shape = 'u8[1024]{0}', space=vmem, size = 0x400, scoped, tag = 'input window, operand 9, single buffered']
    #allocation14 [shape = 'u8[512]{0}', space=vmem, size = 0x400, scoped, tag = 'input window, operand 11, single buffered']
    #allocation15 [shape = 's32[1]{0}', space=sflag, size = 0x4, scoped, tag = 'scoped memory for deepstn_pallas_forward.6']
    %19 = vsyncpa [#allocation4], 0
    %s20 = scalar_lea.sflag [#allocation4], 1
    %21 = vsyncpa %s20, 0
    %22 = vsyncpa [#allocation6], 0
    %23 = vsyncpa [#allocation9], 0
    %24 = vsyncpa [#allocation12], 0
    %25 = vsyncpa [#allocation15], 0
    loop: start=0, step=1, limit=4
    $region2: #{deepstn_pallas_forward.6} parent=1 // loop_pre_header
      _
    $region3: #{deepstn_pallas_forward.6} parent=1 // loop_header
      %s27 = sphi 0, %s31
      %p28 = scmp.ge.s32.totalorder %s27, 4
      %s37 = sphi 0, %s39
      %s40 = sphi 0, %s37
      %s41 = sphi 0, %s40
      %s57 = sphi 0, %s41
      %s61 = sphi 0, %s61
      %s63 = sphi 0, %s61
      %s64 = sphi 0, %s63
      %s78 = sphi 0, %s64
      %s82 = sphi 0, %s82
      %s84 = sphi 0, %s82
      %s85 = sphi 0, %s84
      %s99 = sphi 0, %s85
      %s103 = sphi 0, %s103
      %s105 = sphi 0, %s103
      %s106 = sphi 0, %s105
      %s120 = sphi 0, %s106
      %s124 = sphi 0, %s124
      %s126 = sphi 0, %s124
      %s127 = sphi 0, %s126
      %s141 = sphi 0, %s127
      %s145 = sphi 0, %s145
      %s147 = sphi 0, %s145
      %s148 = sphi 0, %s147
      %s162 = sphi 0, %s148
      %s166 = sphi 0, %s166
      %s168 = sphi 0, %s166
      %s169 = sphi 0, %s168
      %s183 = sphi 0, %s169
      %s187 = sphi 0, %s187
      %s189 = sphi 0, %s187
      %s190 = sphi 0, %s189
      %s204 = sphi 0, %s190
      %s208 = sphi 0, %s208
      %s210 = sphi 0, %s208
      %s211 = sphi 0, %s210
      %s225 = sphi 0, %s211
      %s229 = sphi 0, %s229
      %s231 = sphi 0, %s229
      %s232 = sphi 0, %s231
      %s246 = sphi 0, %s232
      %s250 = sphi 0, %s250
      %s252 = sphi 0, %s250
      %s253 = sphi 0, %s252
      %s267 = sphi 0, %s253
      %s271 = sphi 0, %s271
      %s273 = sphi 0, %s271
      %s274 = sphi 0, %s273
      %s288 = sphi 0, %s274
      %s294 = sphi 0, %s296
      %s297 = sphi 0, %s294
      %s298 = sphi 0, %s297
      %s314 = sphi 0, %s298
    $region4: #{deepstn_pallas_forward.6} parent=1 // loop_header_branch
      %30 = sbr.rel (%p28) target = $region8
    $region5: #{deepstn_pallas_forward.6} parent=1 // loop_body
      %s32 = ssub.s32 %s27, 1
      %s33 = ssub.s32 %s27, 2
      %s34 = sadd.s32 %s27, 1
      %s35 = ssub.s32 %s27, %s34
      %p36 = scmp.eq.s32.totalorder %s35, 0
      %s38 = sadd.s32 %s37, 1
      %s39 = scalar_select %p36, %s37, %s38
      %p42 = pneg %p36
      %p43 = scmp.eq.s32.totalorder %s27, 1
      %p44 = por %p42, %p43
      %p45 = scmp.ne.s32.totalorder %s37, %s40
      %p46 = scmp.eq.s32.totalorder %s27, 0
      %p47 = por %p45, %p46
      %p48 = scmp.ne.s32.totalorder %s37, %s40
      %p49 = scmp.eq.s32.totalorder %s32, 1
      %p50 = por %p48, %p49
      %p51 = scmp.ne.s32.totalorder %s40, %s41
      %p52 = scmp.eq.s32.totalorder %s32, 0
      %p53 = por %p51, %p52
      %p54 = scmp.ne.s32.totalorder %s40, %s41
      %p55 = scmp.eq.s32.totalorder %s33, 1
      %p56 = por %p54, %p55
      %p58 = scmp.ne.s32.totalorder %s41, %s57
      %p59 = scmp.eq.s32.totalorder %s33, 0
      %p60 = por %p58, %p59
      %s62 = sadd.s32 %s61, 1
      %p65 = scmp.eq.s32.totalorder %s27, 1
      %p66 = scmp.ne.s32.totalorder %s61, %s63
      %p67 = scmp.eq.s32.totalorder %s27, 0
      %p68 = por %p66, %p67
      %p69 = scmp.ne.s32.totalorder %s61, %s63
      %p70 = scmp.eq.s32.totalorder %s32, 1
      %p71 = por %p69, %p70
      %p72 = scmp.ne.s32.totalorder %s63, %s64
      %p73 = scmp.eq.s32.totalorder %s32, 0
      %p74 = por %p72, %p73
      %p75 = scmp.ne.s32.totalorder %s63, %s64
      %p76 = scmp.eq.s32.totalorder %s33, 1
      %p77 = por %p75, %p76
      %p79 = scmp.ne.s32.totalorder %s64, %s78
      %p80 = scmp.eq.s32.totalorder %s33, 0
      %p81 = por %p79, %p80
      %s83 = sadd.s32 %s82, 1
      %p86 = scmp.eq.s32.totalorder %s27, 1
      %p87 = scmp.ne.s32.totalorder %s82, %s84
      %p88 = scmp.eq.s32.totalorder %s27, 0
      %p89 = por %p87, %p88
      %p90 = scmp.ne.s32.totalorder %s82, %s84
      %p91 = scmp.eq.s32.totalorder %s32, 1
      %p92 = por %p90, %p91
      %p93 = scmp.ne.s32.totalorder %s84, %s85
      %p94 = scmp.eq.s32.totalorder %s32, 0
      %p95 = por %p93, %p94
      %p96 = scmp.ne.s32.totalorder %s84, %s85
      %p97 = scmp.eq.s32.totalorder %s33, 1
      %p98 = por %p96, %p97
      %p100 = scmp.ne.s32.totalorder %s85, %s99
      %p101 = scmp.eq.s32.totalorder %s33, 0
      %p102 = por %p100, %p101
      %s104 = sadd.s32 %s103, 1
      %p107 = scmp.eq.s32.totalorder %s27, 1
      %p108 = scmp.ne.s32.totalorder %s103, %s105
      %p109 = scmp.eq.s32.totalorder %s27, 0
      %p110 = por %p108, %p109
      %p111 = scmp.ne.s32.totalorder %s103, %s105
      %p112 = scmp.eq.s32.totalorder %s32, 1
      %p113 = por %p111, %p112
      %p114 = scmp.ne.s32.totalorder %s105, %s106
      %p115 = scmp.eq.s32.totalorder %s32, 0
      %p116 = por %p114, %p115
      %p117 = scmp.ne.s32.totalorder %s105, %s106
      %p118 = scmp.eq.s32.totalorder %s33, 1
      %p119 = por %p117, %p118
      %p121 = scmp.ne.s32.totalorder %s106, %s120
      %p122 = scmp.eq.s32.totalorder %s33, 0
      %p123 = por %p121, %p122
      %s125 = sadd.s32 %s124, 1
      %p128 = scmp.eq.s32.totalorder %s27, 1
      %p129 = scmp.ne.s32.totalorder %s124, %s126
      %p130 = scmp.eq.s32.totalorder %s27, 0
      %p131 = por %p129, %p130
      %p132 = scmp.ne.s32.totalorder %s124, %s126
      %p133 = scmp.eq.s32.totalorder %s32, 1
      %p134 = por %p132, %p133
      %p135 = scmp.ne.s32.totalorder %s126, %s127
      %p136 = scmp.eq.s32.totalorder %s32, 0
      %p137 = por %p135, %p136
      %p138 = scmp.ne.s32.totalorder %s126, %s127
      %p139 = scmp.eq.s32.totalorder %s33, 1
      %p140 = por %p138, %p139
      %p142 = scmp.ne.s32.totalorder %s127, %s141
      %p143 = scmp.eq.s32.totalorder %s33, 0
      %p144 = por %p142, %p143
      %s146 = sadd.s32 %s145, 1
      %p149 = scmp.eq.s32.totalorder %s27, 1
      %p150 = scmp.ne.s32.totalorder %s145, %s147
      %p151 = scmp.eq.s32.totalorder %s27, 0
      %p152 = por %p150, %p151
      %p153 = scmp.ne.s32.totalorder %s145, %s147
      %p154 = scmp.eq.s32.totalorder %s32, 1
      %p155 = por %p153, %p154
      %p156 = scmp.ne.s32.totalorder %s147, %s148
      %p157 = scmp.eq.s32.totalorder %s32, 0
      %p158 = por %p156, %p157
      %p159 = scmp.ne.s32.totalorder %s147, %s148
      %p160 = scmp.eq.s32.totalorder %s33, 1
      %p161 = por %p159, %p160
      %p163 = scmp.ne.s32.totalorder %s148, %s162
      %p164 = scmp.eq.s32.totalorder %s33, 0
      %p165 = por %p163, %p164
      %s167 = sadd.s32 %s166, 1
      %p170 = scmp.eq.s32.totalorder %s27, 1
      %p171 = scmp.ne.s32.totalorder %s166, %s168
      %p172 = scmp.eq.s32.totalorder %s27, 0
      %p173 = por %p171, %p172
      %p174 = scmp.ne.s32.totalorder %s166, %s168
      %p175 = scmp.eq.s32.totalorder %s32, 1
      %p176 = por %p174, %p175
      %p177 = scmp.ne.s32.totalorder %s168, %s169
      %p178 = scmp.eq.s32.totalorder %s32, 0
      %p179 = por %p177, %p178
      %p180 = scmp.ne.s32.totalorder %s168, %s169
      %p181 = scmp.eq.s32.totalorder %s33, 1
      %p182 = por %p180, %p181
      %p184 = scmp.ne.s32.totalorder %s169, %s183
      %p185 = scmp.eq.s32.totalorder %s33, 0
      %p186 = por %p184, %p185
      %s188 = sadd.s32 %s187, 1
      %p191 = scmp.eq.s32.totalorder %s27, 1
      %p192 = scmp.ne.s32.totalorder %s187, %s189
      %p193 = scmp.eq.s32.totalorder %s27, 0
      %p194 = por %p192, %p193
      %p195 = scmp.ne.s32.totalorder %s187, %s189
      %p196 = scmp.eq.s32.totalorder %s32, 1
      %p197 = por %p195, %p196
      %p198 = scmp.ne.s32.totalorder %s189, %s190
      %p199 = scmp.eq.s32.totalorder %s32, 0
      %p200 = por %p198, %p199
      %p201 = scmp.ne.s32.totalorder %s189, %s190
      %p202 = scmp.eq.s32.totalorder %s33, 1
      %p203 = por %p201, %p202
      %p205 = scmp.ne.s32.totalorder %s190, %s204
      %p206 = scmp.eq.s32.totalorder %s33, 0
      %p207 = por %p205, %p206
      %s209 = sadd.s32 %s208, 1
      %p212 = scmp.eq.s32.totalorder %s27, 1
      %p213 = scmp.ne.s32.totalorder %s208, %s210
      %p214 = scmp.eq.s32.totalorder %s27, 0
      %p215 = por %p213, %p214
      %p216 = scmp.ne.s32.totalorder %s208, %s210
      %p217 = scmp.eq.s32.totalorder %s32, 1
      %p218 = por %p216, %p217
      %p219 = scmp.ne.s32.totalorder %s210, %s211
      %p220 = scmp.eq.s32.totalorder %s32, 0
      %p221 = por %p219, %p220
      %p222 = scmp.ne.s32.totalorder %s210, %s211
      %p223 = scmp.eq.s32.totalorder %s33, 1
      %p224 = por %p222, %p223
      %p226 = scmp.ne.s32.totalorder %s211, %s225
      %p227 = scmp.eq.s32.totalorder %s33, 0
      %p228 = por %p226, %p227
      %s230 = sadd.s32 %s229, 1
      %p233 = scmp.eq.s32.totalorder %s27, 1
      %p234 = scmp.ne.s32.totalorder %s229, %s231
      %p235 = scmp.eq.s32.totalorder %s27, 0
      %p236 = por %p234, %p235
      %p237 = scmp.ne.s32.totalorder %s229, %s231
      %p238 = scmp.eq.s32.totalorder %s32, 1
      %p239 = por %p237, %p238
      %p240 = scmp.ne.s32.totalorder %s231, %s232
      %p241 = scmp.eq.s32.totalorder %s32, 0
      %p242 = por %p240, %p241
      %p243 = scmp.ne.s32.totalorder %s231, %s232
      %p244 = scmp.eq.s32.totalorder %s33, 1
      %p245 = por %p243, %p244
      %p247 = scmp.ne.s32.totalorder %s232, %s246
      %p248 = scmp.eq.s32.totalorder %s33, 0
      %p249 = por %p247, %p248
      %s251 = sadd.s32 %s250, 1
      %p254 = scmp.eq.s32.totalorder %s27, 1
      %p255 = scmp.ne.s32.totalorder %s250, %s252
      %p256 = scmp.eq.s32.totalorder %s27, 0
      %p257 = por %p255, %p256
      %p258 = scmp.ne.s32.totalorder %s250, %s252
      %p259 = scmp.eq.s32.totalorder %s32, 1
      %p260 = por %p258, %p259
      %p261 = scmp.ne.s32.totalorder %s252, %s253
      %p262 = scmp.eq.s32.totalorder %s32, 0
      %p263 = por %p261, %p262
      %p264 = scmp.ne.s32.totalorder %s252, %s253
      %p265 = scmp.eq.s32.totalorder %s33, 1
      %p266 = por %p264, %p265
      %p268 = scmp.ne.s32.totalorder %s253, %s267
      %p269 = scmp.eq.s32.totalorder %s33, 0
      %p270 = por %p268, %p269
      %s272 = sadd.s32 %s271, 1
      %p275 = scmp.eq.s32.totalorder %s27, 1
      %p276 = scmp.ne.s32.totalorder %s271, %s273
      %p277 = scmp.eq.s32.totalorder %s27, 0
      %p278 = por %p276, %p277
      %p279 = scmp.ne.s32.totalorder %s271, %s273
      %p280 = scmp.eq.s32.totalorder %s32, 1
      %p281 = por %p279, %p280
      %p282 = scmp.ne.s32.totalorder %s273, %s274
      %p283 = scmp.eq.s32.totalorder %s32, 0
      %p284 = por %p282, %p283
      %p285 = scmp.ne.s32.totalorder %s273, %s274
      %p286 = scmp.eq.s32.totalorder %s33, 1
      %p287 = por %p285, %p286
      %p289 = scmp.ne.s32.totalorder %s274, %s288
      %p290 = scmp.eq.s32.totalorder %s33, 0
      %p291 = por %p289, %p290
      %s292 = ssub.s32 %s27, %s34
      %p293 = scmp.eq.s32.totalorder %s292, 0
      %s295 = sadd.s32 %s294, 1
      %s296 = scalar_select %p293, %s294, %s295
      %p299 = pneg %p293
      %p300 = scmp.eq.s32.totalorder %s27, 1
      %p301 = por %p299, %p300
      %p302 = scmp.ne.s32.totalorder %s294, %s297
      %p303 = scmp.eq.s32.totalorder %s27, 0
      %p304 = por %p302, %p303
      %p305 = scmp.ne.s32.totalorder %s294, %s297
      %p306 = scmp.eq.s32.totalorder %s32, 1
      %p307 = por %p305, %p306
      %p308 = scmp.ne.s32.totalorder %s297, %s298
      %p309 = scmp.eq.s32.totalorder %s32, 0
      %p310 = por %p308, %p309
      %p311 = scmp.ne.s32.totalorder %s297, %s298
      %p312 = scmp.eq.s32.totalorder %s33, 1
      %p313 = por %p311, %p312
      %p315 = scmp.ne.s32.totalorder %s298, %s314
      %p316 = scmp.eq.s32.totalorder %s33, 0
      %p317 = por %p315, %p316
      %p318 = scmp.le.s32.totalorder 1, %s27
      %p319 = scmp.lt.s32.totalorder %s27, 3
      %p320 = pnand %p318, %p319
      %p321 = pneg %p320
      // Predicated region
      $region9: #{deepstn_pallas_forward.6} parent=5 // pred_check
        _
      $region10: #{deepstn_pallas_forward.6} parent=5 // pred_check_branch
        %323 = sbr.rel (%p320) target = $region12
      $region11: #{deepstn_pallas_forward.6} parent=5 // pred_region
        %s324 = ssub.s32 %s27, 1
        // Predicated region
        $region13: #{deepstn_pallas_forward.6} parent=11 // pred_check
          %p325 = pneg %p74
        $region14: #{deepstn_pallas_forward.6} parent=11 // pred_check_branch
          %327 = sbr.rel (%p325) target = $region16
        $region15: #{deepstn_pallas_forward.6} parent=11 // pred_region
          %s329 = ssub.s32 16, 16
          %330 = vsyncadd [#allocation6], %s329
          %s332 = sshll.u32 [#allocation5], 4
          %s333 = int_to_ptr.vmem [resolvable:$true] %s332
          %335 = dma.hbm_to_vmem [thread:$0]  %s1, 16, %s333, [#allocation6]
        $region16: #{deepstn_pallas_forward.6} parent=11 // pred_fallthru
          _
        // Predicated region
        $region17: #{deepstn_pallas_forward.6} parent=11 // pred_check
          %p336 = pneg %p95
        $region18: #{deepstn_pallas_forward.6} parent=11 // pred_check_branch
          %338 = sbr.rel (%p336) target = $region20
        $region19: #{deepstn_pallas_forward.6} parent=11 // pred_region
          _
        $region20: #{deepstn_pallas_forward.6} parent=11 // pred_fallthru
          _
        // Predicated region
        $region21: #{deepstn_pallas_forward.6} parent=11 // pred_check
          %p339 = pneg %p116
        $region22: #{deepstn_pallas_forward.6} parent=11 // pred_check_branch
          %341 = sbr.rel (%p339) target = $region24
        $region23: #{deepstn_pallas_forward.6} parent=11 // pred_region
          %s343 = ssub.s32 16, 16
          %344 = vsyncadd [#allocation6], %s343
          %s346 = sshll.u32 [#allocation7], 4
          %s347 = int_to_ptr.vmem [resolvable:$true] %s346
          %349 = dma.hbm_to_vmem [thread:$0]  %s3, 16, %s347, [#allocation6]
        $region24: #{deepstn_pallas_forward.6} parent=11 // pred_fallthru
          _
        // Predicated region
        $region25: #{deepstn_pallas_forward.6} parent=11 // pred_check
          %p350 = pneg %p137
        $region26: #{deepstn_pallas_forward.6} parent=11 // pred_check_branch
          %352 = sbr.rel (%p350) target = $region28
        $region27: #{deepstn_pallas_forward.6} parent=11 // pred_region
          _
        $region28: #{deepstn_pallas_forward.6} parent=11 // pred_fallthru
          _
        // Predicated region
        $region29: #{deepstn_pallas_forward.6} parent=11 // pred_check
          %p353 = pneg %p158
        $region30: #{deepstn_pallas_forward.6} parent=11 // pred_check_branch
          %355 = sbr.rel (%p353) target = $region32
        $region31: #{deepstn_pallas_forward.6} parent=11 // pred_region
          _
        $region32: #{deepstn_pallas_forward.6} parent=11 // pred_fallthru
          _
        // Predicated region
        $region33: #{deepstn_pallas_forward.6} parent=11 // pred_check
          %p356 = pneg %p179
        $region34: #{deepstn_pallas_forward.6} parent=11 // pred_check_branch
          %358 = sbr.rel (%p356) target = $region36
        $region35: #{deepstn_pallas_forward.6} parent=11 // pred_region
          %s360 = ssub.s32 768, 768
          %361 = vsyncadd [#allocation9], %s360
          %s362 = sshll.u32 [#allocation8], 4
          %s363 = int_to_ptr.vmem [resolvable:$true] %s362
          %368 = dma.hbm_to_vmem [thread:$0]  %s6, 768, %s363, [#allocation9], 256, 256, 16
        $region36: #{deepstn_pallas_forward.6} parent=11 // pred_fallthru
          _
        // Predicated region
        $region37: #{deepstn_pallas_forward.6} parent=11 // pred_check
          %p369 = pneg %p200
        $region38: #{deepstn_pallas_forward.6} parent=11 // pred_check_branch
          %371 = sbr.rel (%p369) target = $region40
        $region39: #{deepstn_pallas_forward.6} parent=11 // pred_region
          %s373 = ssub.s32 32, 32
          %374 = vsyncadd [#allocation9], %s373
          %s376 = sshll.u32 [#allocation10], 4
          %s377 = int_to_ptr.vmem [resolvable:$true] %s376
          %379 = dma.hbm_to_vmem [thread:$0]  %s7, 32, %s377, [#allocation9]
        $region40: #{deepstn_pallas_forward.6} parent=11 // pred_fallthru
          _
        // Predicated region
        $region41: #{deepstn_pallas_forward.6} parent=11 // pred_check
          %p380 = pneg %p221
        $region42: #{deepstn_pallas_forward.6} parent=11 // pred_check_branch
          %382 = sbr.rel (%p380) target = $region44
        $region43: #{deepstn_pallas_forward.6} parent=11 // pred_region
          %s384 = ssub.s32 32, 32
          %385 = vsyncadd [#allocation12], %s384
          %s387 = sshll.u32 [#allocation11], 4
          %s388 = int_to_ptr.vmem [resolvable:$true] %s387
          %390 = dma.hbm_to_vmem [thread:$0]  %s8, 32, %s388, [#allocation12]
        $region44: #{deepstn_pallas_forward.6} parent=11 // pred_fallthru
          _
        // Predicated region
        $region45: #{deepstn_pallas_forward.6} parent=11 // pred_check
          %p391 = pneg %p242
        $region46: #{deepstn_pallas_forward.6} parent=11 // pred_check_branch
          %393 = sbr.rel (%p391) target = $region48
        $region47: #{deepstn_pallas_forward.6} parent=11 // pred_region
          %s395 = ssub.s32 32, 32
          %396 = vsyncadd [#allocation12], %s395
          %s398 = sshll.u32 [#allocation13], 4
          %s399 = int_to_ptr.vmem [resolvable:$true] %s398
          %401 = dma.hbm_to_vmem [thread:$0]  %s9, 32, %s399, [#allocation12]
        $region48: #{deepstn_pallas_forward.6} parent=11 // pred_fallthru
          _
        // Predicated region
        $region49: #{deepstn_pallas_forward.6} parent=11 // pred_check
          %p402 = pneg %p263
        $region50: #{deepstn_pallas_forward.6} parent=11 // pred_check_branch
          %404 = sbr.rel (%p402) target = $region52
        $region51: #{deepstn_pallas_forward.6} parent=11 // pred_region
          _
        $region52: #{deepstn_pallas_forward.6} parent=11 // pred_fallthru
          _
        // Predicated region
        $region53: #{deepstn_pallas_forward.6} parent=11 // pred_check
          %p405 = pneg %p284
        $region54: #{deepstn_pallas_forward.6} parent=11 // pred_check_branch
          %407 = sbr.rel (%p405) target = $region56
        $region55: #{deepstn_pallas_forward.6} parent=11 // pred_region
          %s409 = ssub.s32 16, 16
          %410 = vsyncadd [#allocation15], %s409
          %s412 = sshll.u32 [#allocation14], 4
          %s413 = int_to_ptr.vmem [resolvable:$true] %s412
          %415 = dma.hbm_to_vmem [thread:$0]  %s11, 16, %s413, [#allocation15]
        $region56: #{deepstn_pallas_forward.6} parent=11 // pred_fallthru
          _
      $region12: #{deepstn_pallas_forward.6} parent=5 // pred_fallthru
        _
      %p416 = scmp.lt.s32.totalorder %s27, 2
      // Predicated region
      $region57: #{deepstn_pallas_forward.6} parent=5 // pred_check
        %p417 = pneg %p416
      $region58: #{deepstn_pallas_forward.6} parent=5 // pred_check_branch
        %419 = sbr.rel (%p417) target = $region60
      $region59: #{deepstn_pallas_forward.6} parent=5 // pred_region
        // Predicated region
        $region61: #{deepstn_pallas_forward.6} parent=59 // pred_check
          %p420 = pneg %p47
        $region62: #{deepstn_pallas_forward.6} parent=59 // pred_check_branch
          %422 = sbr.rel (%p420) target = $region64
        $region63: #{deepstn_pallas_forward.6} parent=59 // pred_region
          %s423 = sand.u32 %s37, 1
          %s424 = scalar_lea.sflag [#allocation4], %s423
          %s425 = sand.u32 %s37, 1
          %s426 = smul.addr %s425, 64
          %s427 = scalar_lea.vmem [#allocation3], %s426
          %s428 = smul.u32 8, %s27
          %s430 = ssub.s32 1024, 1024
          %431 = vsyncadd %s424, %s430
          %s432 = smul.addr %s428, 128
          %s433 = scalar_lea.hbm %s0, %s432
          %s434 = sshll.u32 %s427, 4
          %s435 = int_to_ptr.vmem [resolvable:$true] %s434
          %440 = dma.hbm_to_vmem [thread:$0]  %s433, 1024, %s435, %s424, 128, 128, 8
        $region64: #{deepstn_pallas_forward.6} parent=59 // pred_fallthru
          _
      $region60: #{deepstn_pallas_forward.6} parent=5 // pred_fallthru
        _
      %p441 = scmp.le.s32.totalorder 1, %s27
      %p442 = scmp.lt.s32.totalorder %s27, 3
      %p443 = pnand %p441, %p442
      %p444 = pneg %p443
      // Predicated region
      $region65: #{deepstn_pallas_forward.6} parent=5 // pred_check
        _
      $region66: #{deepstn_pallas_forward.6} parent=5 // pred_check_branch
        %446 = sbr.rel (%p443) target = $region68
      $region67: #{deepstn_pallas_forward.6} parent=5 // pred_region
        %s447 = ssub.s32 %s27, 1
        %s448 = sand.u32 %s40, 1
        %s449 = scalar_lea.sflag [#allocation4], %s448
        %s450 = sand.u32 %s40, 1
        %s451 = smul.addr %s450, 64
        %s452 = scalar_lea.vmem [#allocation3], %s451
        // Predicated region
        $region69: #{deepstn_pallas_forward.6} parent=67 // pred_check
          %p453 = pneg %p53
        $region70: #{deepstn_pallas_forward.6} parent=67 // pred_check_branch
          %455 = sbr.rel (%p453) target = $region72
        $region71: #{deepstn_pallas_forward.6} parent=67 // pred_region
          %456 = dma.done %s449, 1024
        $region72: #{deepstn_pallas_forward.6} parent=67 // pred_fallthru
          _
        // Predicated region
        $region73: #{deepstn_pallas_forward.6} parent=67 // pred_check
          %p457 = pneg %p74
        $region74: #{deepstn_pallas_forward.6} parent=67 // pred_check_branch
          %459 = sbr.rel (%p457) target = $region76
        $region75: #{deepstn_pallas_forward.6} parent=67 // pred_region
          %460 = dma.done [#allocation6], 16
        $region76: #{deepstn_pallas_forward.6} parent=67 // pred_fallthru
          _
        // Predicated region
        $region77: #{deepstn_pallas_forward.6} parent=67 // pred_check
          %p461 = pneg %p116
        $region78: #{deepstn_pallas_forward.6} parent=67 // pred_check_branch
          %463 = sbr.rel (%p461) target = $region80
        $region79: #{deepstn_pallas_forward.6} parent=67 // pred_region
          %464 = dma.done [#allocation6], 16
        $region80: #{deepstn_pallas_forward.6} parent=67 // pred_fallthru
          _
        // Predicated region
        $region81: #{deepstn_pallas_forward.6} parent=67 // pred_check
          %p465 = pneg %p179
        $region82: #{deepstn_pallas_forward.6} parent=67 // pred_check_branch
          %467 = sbr.rel (%p465) target = $region84
        $region83: #{deepstn_pallas_forward.6} parent=67 // pred_region
          %468 = dma.done [#allocation9], 768
        $region84: #{deepstn_pallas_forward.6} parent=67 // pred_fallthru
          _
        // Predicated region
        $region85: #{deepstn_pallas_forward.6} parent=67 // pred_check
          %p469 = pneg %p200
        $region86: #{deepstn_pallas_forward.6} parent=67 // pred_check_branch
          %471 = sbr.rel (%p469) target = $region88
        $region87: #{deepstn_pallas_forward.6} parent=67 // pred_region
          %472 = dma.done [#allocation9], 32
        $region88: #{deepstn_pallas_forward.6} parent=67 // pred_fallthru
          _
        // Predicated region
        $region89: #{deepstn_pallas_forward.6} parent=67 // pred_check
          %p473 = pneg %p221
        $region90: #{deepstn_pallas_forward.6} parent=67 // pred_check_branch
          %475 = sbr.rel (%p473) target = $region92
        $region91: #{deepstn_pallas_forward.6} parent=67 // pred_region
          %476 = dma.done [#allocation12], 32
        $region92: #{deepstn_pallas_forward.6} parent=67 // pred_fallthru
          _
        // Predicated region
        $region93: #{deepstn_pallas_forward.6} parent=67 // pred_check
          %p477 = pneg %p242
        $region94: #{deepstn_pallas_forward.6} parent=67 // pred_check_branch
          %479 = sbr.rel (%p477) target = $region96
        $region95: #{deepstn_pallas_forward.6} parent=67 // pred_region
          %480 = dma.done [#allocation12], 32
        $region96: #{deepstn_pallas_forward.6} parent=67 // pred_fallthru
          _
        // Predicated region
        $region97: #{deepstn_pallas_forward.6} parent=67 // pred_check
          %p481 = pneg %p284
        $region98: #{deepstn_pallas_forward.6} parent=67 // pred_check_branch
          %483 = sbr.rel (%p481) target = $region100
        $region99: #{deepstn_pallas_forward.6} parent=67 // pred_region
          %484 = dma.done [#allocation15], 16
        $region100: #{deepstn_pallas_forward.6} parent=67 // pred_fallthru
          _
        %s485 = sand.u32 %s40, 1
        %s486 = scalar_lea.sflag [#allocation4], %s485
        %s487 = sand.u32 %s40, 1
        %s488 = smul.addr %s487, 64
        %s489 = scalar_lea.vmem [#allocation3], %s488
        %p490 = pneg %p53
        %p491 = pneg %p50
        %p492 = pneg %p74
        %p493 = pneg %p71
        %p494 = pneg %p95
        %p495 = pneg %p92
        %p496 = pneg %p116
        %p497 = pneg %p113
        %p498 = pneg %p137
        %p499 = pneg %p134
        %p500 = pneg %p158
        %p501 = pneg %p155
        %p502 = pneg %p179
        %p503 = pneg %p176
        %p504 = pneg %p200
        %p505 = pneg %p197
        %p506 = pneg %p221
        %p507 = pneg %p218
        %p508 = pneg %p242
        %p509 = pneg %p239
        %p510 = pneg %p263
        %p511 = pneg %p260
        %p512 = pneg %p284
        %p513 = pneg %p281
        %p514 = pneg %p310
        %p515 = pneg %p307
        %s516 = smul.u32 8, %s32
        %p517 = scmp.lt.s32.totalorder %s516, 15
        %s518 = scalar_select %p517, %s516, 15
        %s519 = smul.addr %s518, 8
        %s520 = scalar_lea.vmem %s12, %s519
        %s521 = smul.u32 8, %s32
        %s522 = smul.u32 8, %s32
        %p523 = scmp.lt.s32.totalorder %s522, 15
        %s524 = scalar_select %p523, %s522, 15
        %s525 = smul.addr %s524, 8
        %s526 = scalar_lea.vmem %s12, %s525
        %s527 = smul.u32 8, %s32
        %v528 = vld [vmem:[%s452] sm:$0xff]
        %v529 = vld [vmem:[%s452 + $0x8] sm:$0xff]
        %v530 = vld [vmem:[%s452 + $0x10] sm:$0xff]
        %v531 = vld [vmem:[%s452 + $0x18] sm:$0xff]
        %v532 = vld [vmem:[%s452 + $0x20] sm:$0xff]
        %v533 = vld [vmem:[%s452 + $0x28] sm:$0xff]
        %v534 = vld [vmem:[%s452 + $0x30] sm:$0xff]
        %v535 = vld [vmem:[%s452 + $0x38] sm:$0xff]
        %v536 = vld [vmem:[%s2] sm:$0xff]
        %v537 = vld [vmem:[%s2 + $0x8] sm:$0xf]
        %v538 = vld [vmem:[#allocation7] sm:$0x1]
        %v540 = vlaneseq
        %v541 = vshrl.u32 %v540, 7
        %v542 = vsub.s32 0, %v541
        %v543 = vrot.slane %v538, %v542
        %553 = vrot.lane.b32.xlu0 %v528, 116
        %v554 = vpop.permute.xlu0 %553
        %555 = vrot.lane.b32.xlu0 %v529, 116
        %v556 = vpop.permute.xlu0 %555
        %557 = vrot.lane.b32.xlu0 %v530, 116
        %v558 = vpop.permute.xlu0 %557
        %559 = vrot.lane.b32.xlu0 %v531, 116
        %v560 = vpop.permute.xlu0 %559
        %561 = vrot.lane.b32.xlu0 %v532, 116
        %v562 = vpop.permute.xlu0 %561
        %563 = vrot.lane.b32.xlu0 %v533, 116
        %v564 = vpop.permute.xlu0 %563
        %565 = vrot.lane.b32.xlu0 %v534, 116
        %v566 = vpop.permute.xlu0 %565
        %567 = vrot.lane.b32.xlu0 %v535, 116
        %v568 = vpop.permute.xlu0 %567
        %vm569 = vcmask 97280
        %v570 = vsel %vm569, %v554, 0
        %v572 = vsel %vm569, %v556, 0
        %v574 = vsel %vm569, %v558, 0
        %v576 = vsel %vm569, %v560, 0
        %v578 = vsel %vm569, %v562, 0
        %v580 = vsel %vm569, %v564, 0
        %v582 = vsel %vm569, %v566, 0
        %v584 = vsel %vm569, %v568, 0
        %vm586 = vcmask 1043456
        %v588 = vsel %vm586, %v537, 0
        %590 = vmatprep.subr.mxu0 0.0
        %591 = vmatpush1.msra.mxu0 %v536
        %592 = vmatprep.subr.mxu0 0.0
        %593 = vmatpush1.msra.mxu0 %v588
        %594 = vmatprep.subr.mxu0 0.0
        %595 = vmatpush1.msra.mxu0 0.0
        %596 = vmatprep.subr.mxu0 0.0
        %597 = vmatpush1.msra.mxu0 0.0
        %598 = vmatprep.subr.mxu0 0.0
        %599 = vmatpush1.msra.mxu0 0.0
        %600 = vmatprep.subr.mxu0 0.0
        %601 = vmatpush1.msra.mxu0 0.0
        %602 = vmatprep.subr.mxu0 0.0
        %603 = vmatpush1.msra.mxu0 0.0
        %604 = vmatprep.subr.mxu0 0.0
        %605 = vmatpush1.msra.mxu0 0.0
        %606 = vmatprep.subr.mxu0 0.0
        %607 = vmatpush1.msra.mxu0 0.0
        %608 = vmatprep.subr.mxu0 0.0
        %609 = vmatpush1.msra.mxu0 0.0
        %610 = vmatprep.subr.mxu0 0.0
        %611 = vmatpush1.msra.mxu0 0.0
        %612 = vmatprep.subr.mxu0 0.0
        %613 = vmatpush1.msra.mxu0 0.0
        %614 = vmatprep.subr.mxu0 0.0
        %615 = vmatpush1.msra.mxu0 0.0
        %616 = vmatprep.subr.mxu0 0.0
        %617 = vmatpush1.msra.mxu0 0.0
        %618 = vmatprep.subr.mxu0 0.0
        %619 = vmatpush1.msra.mxu0 0.0
        %620 = vmatprep.subr.mxu0 0.0
        %621 = vmatpush1.msra.mxu0 0.0
        %622 = vmatprep.subr.mxu0 0.0
        %623 = vmatpush1.msra.mxu0 0.0
        %624 = vmatprep.subr.mxu0 0.0
        %625 = vmatpush1.msra.mxu0 0.0
        %626 = vmatprep.subr.mxu0 0.0
        %627 = vmatpush1.msra.mxu0 0.0
        %628 = vmatprep.subr.mxu0 0.0
        %629 = vmatpush1.msra.mxu0 0.0
        %630 = vmatprep.subr.mxu0 0.0
        %631 = vmatpush1.msra.mxu0 0.0
        %632 = vmatprep.subr.mxu0 0.0
        %633 = vmatpush1.msra.mxu0 0.0
        %634 = vmatprep.subr.mxu0 0.0
        %635 = vmatpush1.msra.mxu0 0.0
        %636 = vmatprep.subr.mxu0 0.0
        %637 = vmatpush1.msra.mxu0 0.0
        %638 = vmatprep.subr.mxu0 0.0
        %639 = vmatpush1.msra.mxu0 0.0
        %640 = vmatprep.subr.mxu0 0.0
        %641 = vmatpush1.msra.mxu0 0.0
        %642 = vmatprep.subr.mxu0 0.0
        %643 = vmatpush1.msra.mxu0 0.0
        %644 = vmatprep.subr.mxu0 0.0
        %645 = vmatpush1.msra.mxu0 0.0
        %646 = vmatprep.subr.mxu0 0.0
        %647 = vmatpush1.msra.mxu0 0.0
        %648 = vmatprep.subr.mxu0 0.0
        %649 = vmatpush1.msra.mxu0 0.0
        %650 = vmatprep.subr.mxu0 0.0
        %651 = vmatpush1.msra.mxu0 0.0
        %652 = vmatprep.subr.mxu0 0.0
        %653 = vmatpush1.msra.mxu0 0.0
        %654 = vmatprep.mubr.f32.mxu0 0.0
        %655 = vmatmul.mubr.f32.gmra.mrb[0].mxu0 %v570
        %v656 = vpop.f32.mrb[0].mxu0
        %v657 = vadd.f32 %v543, %v656
        %v658 = vpop.f32.mrb[0].mxu0
        %659 = vmatprep.mubr.f32.mxu0 0.0
        %660 = vmatmul.mubr.f32.gmra.mrb[0].mxu0 %v572
        %v661 = vpop.f32.mrb[0].mxu0
        %v662 = vadd.f32 %v543, %v661
        %v663 = vpop.f32.mrb[0].mxu0
        %664 = vmatprep.mubr.f32.mxu0 0.0
        %665 = vmatmul.mubr.f32.gmra.mrb[0].mxu0 %v574
        %v666 = vpop.f32.mrb[0].mxu0
        %v667 = vadd.f32 %v543, %v666
        %v668 = vpop.f32.mrb[0].mxu0
        %669 = vmatprep.mubr.f32.mxu0 0.0
        %670 = vmatmul.mubr.f32.gmra.mrb[0].mxu0 %v576
        %v671 = vpop.f32.mrb[0].mxu0
        %v672 = vadd.f32 %v543, %v671
        %v673 = vpop.f32.mrb[0].mxu0
        %674 = vmatprep.mubr.f32.mxu0 0.0
        %675 = vmatmul.mubr.f32.gmra.mrb[0].mxu0 %v578
        %v676 = vpop.f32.mrb[0].mxu0
        %v677 = vadd.f32 %v543, %v676
        %v678 = vpop.f32.mrb[0].mxu0
        %679 = vmatprep.mubr.f32.mxu0 0.0
        %680 = vmatmul.mubr.f32.gmra.mrb[0].mxu0 %v580
        %v681 = vpop.f32.mrb[0].mxu0
        %v682 = vadd.f32 %v543, %v681
        %v683 = vpop.f32.mrb[0].mxu0
        %684 = vmatprep.mubr.f32.mxu0 0.0
        %685 = vmatmul.mubr.f32.gmra.mrb[0].mxu0 %v582
        %v686 = vpop.f32.mrb[0].mxu0
        %v687 = vadd.f32 %v543, %v686
        %v688 = vpop.f32.mrb[0].mxu0
        %689 = vmatprep.mubr.f32.mxu0 0.0
        %690 = vmatmul.mubr.f32.gmra.mrb[0].mxu0 %v584
        %v691 = vpop.f32.mrb[0].mxu0
        %v692 = vadd.f32 %v543, %v691
        %v693 = vpop.f32.mrb[0].mxu0
        %694 = vdwg.mxu0
        %v695 = vmax.f32 %v657, 0.0
        %v696 = vmax.f32 %v662, 0.0
        %v697 = vmax.f32 %v667, 0.0
        %v698 = vmax.f32 %v672, 0.0
        %v699 = vmax.f32 %v677, 0.0
        %v700 = vmax.f32 %v682, 0.0
        %v701 = vmax.f32 %v687, 0.0
        %v702 = vmax.f32 %v692, 0.0
        %v703 = vld [vmem:[%s4] sm:$0xf]
        %v704 = vld [vmem:[#allocation2] sm:$0x1]
        %v706 = vlaneseq
        %v707 = vshrl.u32 %v706, 7
        %v708 = vsub.s32 0, %v707
        %v709 = vrot.slane %v704, %v708
        %vm711 = vcmask 31744
        %v713 = vsel %vm711, %v695, 0
        %v716 = vsel %vm711, %v696, 0
        %v719 = vsel %vm711, %v697, 0
        %v722 = vsel %vm711, %v698, 0
        %v725 = vsel %vm711, %v699, 0
        %v728 = vsel %vm711, %v700, 0
        %v731 = vsel %vm711, %v701, 0
        %v734 = vsel %vm711, %v702, 0
        %v737 = vsel %vm586, %v703, 0
        %739 = vmatprep.subr.mxu0 0.0
        %740 = vmatpush1.msra.mxu0 %v737
        %741 = vmatprep.subr.mxu0 0.0
        %742 = vmatpush1.msra.mxu0 0.0
        %743 = vmatprep.subr.mxu0 0.0
        %744 = vmatpush1.msra.mxu0 0.0
        %745 = vmatprep.subr.mxu0 0.0
        %746 = vmatpush1.msra.mxu0 0.0
        %747 = vmatprep.subr.mxu0 0.0
        %748 = vmatpush1.msra.mxu0 0.0
        %749 = vmatprep.subr.mxu0 0.0
        %750 = vmatpush1.msra.mxu0 0.0
        %751 = vmatprep.subr.mxu0 0.0
        %752 = vmatpush1.msra.mxu0 0.0
        %753 = vmatprep.subr.mxu0 0.0
        %754 = vmatpush1.msra.mxu0 0.0
        %755 = vmatprep.subr.mxu0 0.0
        %756 = vmatpush1.msra.mxu0 0.0
        %757 = vmatprep.subr.mxu0 0.0
        %758 = vmatpush1.msra.mxu0 0.0
        %759 = vmatprep.subr.mxu0 0.0
        %760 = vmatpush1.msra.mxu0 0.0
        %761 = vmatprep.subr.mxu0 0.0
        %762 = vmatpush1.msra.mxu0 0.0
        %763 = vmatprep.subr.mxu0 0.0
        %764 = vmatpush1.msra.mxu0 0.0
        %765 = vmatprep.subr.mxu0 0.0
        %766 = vmatpush1.msra.mxu0 0.0
        %767 = vmatprep.subr.mxu0 0.0
        %768 = vmatpush1.msra.mxu0 0.0
        %769 = vmatprep.subr.mxu0 0.0
        %770 = vmatpush1.msra.mxu0 0.0
        %771 = vmatprep.subr.mxu0 0.0
        %772 = vmatpush1.msra.mxu0 0.0
        %773 = vmatprep.subr.mxu0 0.0
        %774 = vmatpush1.msra.mxu0 0.0
        %775 = vmatprep.subr.mxu0 0.0
        %776 = vmatpush1.msra.mxu0 0.0
        %777 = vmatprep.subr.mxu0 0.0
        %778 = vmatpush1.msra.mxu0 0.0
        %779 = vmatprep.subr.mxu0 0.0
        %780 = vmatpush1.msra.mxu0 0.0
        %781 = vmatprep.subr.mxu0 0.0
        %782 = vmatpush1.msra.mxu0 0.0
        %783 = vmatprep.subr.mxu0 0.0
        %784 = vmatpush1.msra.mxu0 0.0
        %785 = vmatprep.subr.mxu0 0.0
        %786 = vmatpush1.msra.mxu0 0.0
        %787 = vmatprep.subr.mxu0 0.0
        %788 = vmatpush1.msra.mxu0 0.0
        %789 = vmatprep.subr.mxu0 0.0
        %790 = vmatpush1.msra.mxu0 0.0
        %791 = vmatprep.subr.mxu0 0.0
        %792 = vmatpush1.msra.mxu0 0.0
        %793 = vmatprep.subr.mxu0 0.0
        %794 = vmatpush1.msra.mxu0 0.0
        %795 = vmatprep.subr.mxu0 0.0
        %796 = vmatpush1.msra.mxu0 0.0
        %797 = vmatprep.subr.mxu0 0.0
        %798 = vmatpush1.msra.mxu0 0.0
        %799 = vmatprep.subr.mxu0 0.0
        %800 = vmatpush1.msra.mxu0 0.0
        %801 = vmatprep.subr.mxu0 0.0
        %802 = vmatpush1.msra.mxu0 0.0
        %803 = vmatprep.mubr.f32.mxu0 0.0
        %804 = vmatmul.mubr.f32.gmra.mrb[0].mxu0 %v713
        %v805 = vpop.f32.mrb[0].mxu0
        %v806 = vadd.f32 %v709, %v805
        %v807 = vpop.f32.mrb[0].mxu0
        %808 = vmatprep.mubr.f32.mxu0 0.0
        %809 = vmatmul.mubr.f32.gmra.mrb[0].mxu0 %v716
        %v810 = vpop.f32.mrb[0].mxu0
        %v811 = vadd.f32 %v709, %v810
        %v812 = vpop.f32.mrb[0].mxu0
        %813 = vmatprep.mubr.f32.mxu0 0.0
        %814 = vmatmul.mubr.f32.gmra.mrb[0].mxu0 %v719
        %v815 = vpop.f32.mrb[0].mxu0
        %v816 = vadd.f32 %v709, %v815
        %v817 = vpop.f32.mrb[0].mxu0
        %818 = vmatprep.mubr.f32.mxu0 0.0
        %819 = vmatmul.mubr.f32.gmra.mrb[0].mxu0 %v722
        %v820 = vpop.f32.mrb[0].mxu0
        %v821 = vadd.f32 %v709, %v820
        %v822 = vpop.f32.mrb[0].mxu0
        %823 = vmatprep.mubr.f32.mxu0 0.0
        %824 = vmatmul.mubr.f32.gmra.mrb[0].mxu0 %v725
        %v825 = vpop.f32.mrb[0].mxu0
        %v826 = vadd.f32 %v709, %v825
        %v827 = vpop.f32.mrb[0].mxu0
        %828 = vmatprep.mubr.f32.mxu0 0.0
        %829 = vmatmul.mubr.f32.gmra.mrb[0].mxu0 %v728
        %v830 = vpop.f32.mrb[0].mxu0
        %v831 = vadd.f32 %v709, %v830
        %v832 = vpop.f32.mrb[0].mxu0
        %833 = vmatprep.mubr.f32.mxu0 0.0
        %834 = vmatmul.mubr.f32.gmra.mrb[0].mxu0 %v731
        %v835 = vpop.f32.mrb[0].mxu0
        %v836 = vadd.f32 %v709, %v835
        %v837 = vpop.f32.mrb[0].mxu0
        %838 = vmatprep.mubr.f32.mxu0 0.0
        %839 = vmatmul.mubr.f32.gmra.mrb[0].mxu0 %v734
        %v840 = vpop.f32.mrb[0].mxu0
        %v841 = vadd.f32 %v709, %v840
        %v842 = vpop.f32.mrb[0].mxu0
        %843 = vdwg.mxu0
        %v844 = vmax.f32 %v806, 0.0
        %v845 = vmax.f32 %v811, 0.0
        %v846 = vmax.f32 %v816, 0.0
        %v847 = vmax.f32 %v821, 0.0
        %v848 = vmax.f32 %v826, 0.0
        %v849 = vmax.f32 %v831, 0.0
        %v850 = vmax.f32 %v836, 0.0
        %v851 = vmax.f32 %v841, 0.0
        %v852 = vld [vmem:[#allocation5] sm:$0x1]
        %v853 = vsub.f32 %v844, 1.0
        %v854 = vsub.f32 %v845, 1.0
        %v855 = vsub.f32 %v846, 1.0
        %v856 = vsub.f32 %v847, 1.0
        %v857 = vsub.f32 %v848, 1.0
        %v858 = vsub.f32 %v849, 1.0
        %v859 = vsub.f32 %v850, 1.0
        %v860 = vsub.f32 %v851, 1.0
        %v862 = vlaneseq
        %v863 = vshrl.u32 %v862, 7
        %v864 = vsub.s32 0, %v863
        %v865 = vrot.slane %v852, %v864
        %868 = vset.pattern.permute.xlu0 0
        %869 = vperm.xlu0 %868, %v853
        %v870 = vpop.permute.xlu0 %869
        %873 = vset.pattern.permute.xlu0 0
        %874 = vperm.xlu0 %873, %v854
        %v875 = vpop.permute.xlu0 %874
        %878 = vset.pattern.permute.xlu0 0
        %879 = vperm.xlu0 %878, %v855
        %v880 = vpop.permute.xlu0 %879
        %883 = vset.pattern.permute.xlu0 0
        %884 = vperm.xlu0 %883, %v856
        %v885 = vpop.permute.xlu0 %884
        %888 = vset.pattern.permute.xlu0 0
        %889 = vperm.xlu0 %888, %v857
        %v890 = vpop.permute.xlu0 %889
        %893 = vset.pattern.permute.xlu0 0
        %894 = vperm.xlu0 %893, %v858
        %v895 = vpop.permute.xlu0 %894
        %898 = vset.pattern.permute.xlu0 0
        %899 = vperm.xlu0 %898, %v859
        %v900 = vpop.permute.xlu0 %899
        %903 = vset.pattern.permute.xlu0 0
        %904 = vperm.xlu0 %903, %v860
        %v905 = vpop.permute.xlu0 %904
        %v907 = vmul.f32 %v865, %v870
        %v908 = vmul.f32 %v865, %v875
        %v909 = vmul.f32 %v865, %v880
        %v910 = vmul.f32 %v865, %v885
        %v911 = vmul.f32 %v865, %v890
        %v912 = vmul.f32 %v865, %v895
        %v913 = vmul.f32 %v865, %v900
        %v914 = vmul.f32 %v865, %v905
        %v915 = vadd.f32 %v907, 1.0
        %v916 = vadd.f32 %v908, 1.0
        %v917 = vadd.f32 %v909, 1.0
        %v918 = vadd.f32 %v910, 1.0
        %v919 = vadd.f32 %v911, 1.0
        %v920 = vadd.f32 %v912, 1.0
        %v921 = vadd.f32 %v913, 1.0
        %v922 = vadd.f32 %v914, 1.0
        %v923 = vmul.f32 %v528, %v915
        %v924 = vmul.f32 %v529, %v916
        %v925 = vmul.f32 %v530, %v917
        %v926 = vmul.f32 %v531, %v918
        %v927 = vmul.f32 %v532, %v919
        %v928 = vmul.f32 %v533, %v920
        %v929 = vmul.f32 %v534, %v921
        %v930 = vmul.f32 %v535, %v922
        %v931 = vld [vmem:[#allocation8] sm:$0xff]
        %v932 = vld [vmem:[#allocation8 + $0x8] sm:$0xff]
        %v933 = vld [vmem:[#allocation8 + $0x10] sm:$0xff]
        %v934 = vld [vmem:[#allocation8 + $0x18] sm:$0xff]
        %v935 = vld [vmem:[#allocation8 + $0x20] sm:$0xff]
        %v936 = vld [vmem:[#allocation8 + $0x28] sm:$0xff]
        %v937 = vld [vmem:[#allocation10] sm:$0x3]
        %v939 = vlaneseq
        %v940 = vshrl.u32 %v939, 7
        %v941 = vsub.s32 0, %v940
        %v942 = vrot.slane %v937, %v941
        %v943 = vlaneseq
        %v944 = vshrl.u32 %v943, 7
        %v945 = vsub.s32 1, %v944
        %v946 = vrot.slane %v937, %v945
        %vm949 = vcmask 195584
        %v951 = vsel %vm949, %v923, 0
        %v954 = vsel %vm949, %v924, 0
        %v957 = vsel %vm949, %v925, 0
        %v960 = vsel %vm949, %v926, 0
        %v963 = vsel %vm949, %v927, 0
        %v966 = vsel %vm949, %v928, 0
        %v969 = vsel %vm949, %v929, 0
        %v972 = vsel %vm949, %v930, 0
        %974 = vmatprep.subr.mxu0 %v932
        %975 = vmatpush1.msra.mxu0 %v931
        %976 = vmatprep.subr.mxu0 %v934
        %977 = vmatpush1.msra.mxu0 %v933
        %978 = vmatprep.subr.mxu0 %v936
        %979 = vmatpush1.msra.mxu0 %v935
        %980 = vmatprep.subr.mxu0 0.0
        %981 = vmatpush1.msra.mxu0 0.0
        %982 = vmatprep.subr.mxu0 0.0
        %983 = vmatpush1.msra.mxu0 0.0
        %984 = vmatprep.subr.mxu0 0.0
        %985 = vmatpush1.msra.mxu0 0.0
        %986 = vmatprep.subr.mxu0 0.0
        %987 = vmatpush1.msra.mxu0 0.0
        %988 = vmatprep.subr.mxu0 0.0
        %989 = vmatpush1.msra.mxu0 0.0
        %990 = vmatprep.subr.mxu0 0.0
        %991 = vmatpush1.msra.mxu0 0.0
        %992 = vmatprep.subr.mxu0 0.0
        %993 = vmatpush1.msra.mxu0 0.0
        %994 = vmatprep.subr.mxu0 0.0
        %995 = vmatpush1.msra.mxu0 0.0
        %996 = vmatprep.subr.mxu0 0.0
        %997 = vmatpush1.msra.mxu0 0.0
        %998 = vmatprep.subr.mxu0 0.0
        %999 = vmatpush1.msra.mxu0 0.0
        %1000 = vmatprep.subr.mxu0 0.0
        %1001 = vmatpush1.msra.mxu0 0.0
        %1002 = vmatprep.subr.mxu0 0.0
        %1003 = vmatpush1.msra.mxu0 0.0
        %1004 = vmatprep.subr.mxu0 0.0
        %1005 = vmatpush1.msra.mxu0 0.0
        %1006 = vmatprep.subr.mxu0 0.0
        %1007 = vmatpush1.msra.mxu0 0.0
        %1008 = vmatprep.subr.mxu0 0.0
        %1009 = vmatpush1.msra.mxu0 0.0
        %1010 = vmatprep.subr.mxu0 0.0
        %1011 = vmatpush1.msra.mxu0 0.0
        %1012 = vmatprep.subr.mxu0 0.0
        %1013 = vmatpush1.msra.mxu0 0.0
        %1014 = vmatprep.subr.mxu0 0.0
        %1015 = vmatpush1.msra.mxu0 0.0
        %1016 = vmatprep.subr.mxu0 0.0
        %1017 = vmatpush1.msra.mxu0 0.0
        %1018 = vmatprep.subr.mxu0 0.0
        %1019 = vmatpush1.msra.mxu0 0.0
        %1020 = vmatprep.subr.mxu0 0.0
        %1021 = vmatpush1.msra.mxu0 0.0
        %1022 = vmatprep.subr.mxu0 0.0
        %1023 = vmatpush1.msra.mxu0 0.0
        %1024 = vmatprep.subr.mxu0 0.0
        %1025 = vmatpush1.msra.mxu0 0.0
        %1026 = vmatprep.subr.mxu0 0.0
        %1027 = vmatpush1.msra.mxu0 0.0
        %1028 = vmatprep.subr.mxu0 0.0
        %1029 = vmatpush1.msra.mxu0 0.0
        %1030 = vmatprep.subr.mxu0 0.0
        %1031 = vmatpush1.msra.mxu0 0.0
        %1032 = vmatprep.subr.mxu0 0.0
        %1033 = vmatpush1.msra.mxu0 0.0
        %1034 = vmatprep.subr.mxu0 0.0
        %1035 = vmatpush1.msra.mxu0 0.0
        %1036 = vmatprep.subr.mxu0 0.0
        %1037 = vmatpush1.msra.mxu0 0.0
        %1038 = vmatprep.mubr.f32.mxu0 0.0
        %1039 = vmatmul.mubr.f32.gmra.mrb[0].mxu0 %v951
        %v1040 = vpop.f32.mrb[0].mxu0
        %v1041 = vadd.f32 %v942, %v1040
        %v1042 = vpop.f32.mrb[0].mxu0
        %v1043 = vadd.f32 %v946, %v1042
        %1044 = vmatprep.mubr.f32.mxu0 0.0
        %1045 = vmatmul.mubr.f32.gmra.mrb[0].mxu0 %v954
        %v1046 = vpop.f32.mrb[0].mxu0
        %v1047 = vadd.f32 %v942, %v1046
        %v1048 = vpop.f32.mrb[0].mxu0
        %v1049 = vadd.f32 %v946, %v1048
        %1050 = vmatprep.mubr.f32.mxu0 0.0
        %1051 = vmatmul.mubr.f32.gmra.mrb[0].mxu0 %v957
        %v1052 = vpop.f32.mrb[0].mxu0
        %v1053 = vadd.f32 %v942, %v1052
        %v1054 = vpop.f32.mrb[0].mxu0
        %v1055 = vadd.f32 %v946, %v1054
        %1056 = vmatprep.mubr.f32.mxu0 0.0
        %1057 = vmatmul.mubr.f32.gmra.mrb[0].mxu0 %v960
        %v1058 = vpop.f32.mrb[0].mxu0
        %v1059 = vadd.f32 %v942, %v1058
        %v1060 = vpop.f32.mrb[0].mxu0
        %v1061 = vadd.f32 %v946, %v1060
        %1062 = vmatprep.mubr.f32.mxu0 0.0
        %1063 = vmatmul.mubr.f32.gmra.mrb[0].mxu0 %v963
        %v1064 = vpop.f32.mrb[0].mxu0
        %v1065 = vadd.f32 %v942, %v1064
        %v1066 = vpop.f32.mrb[0].mxu0
        %v1067 = vadd.f32 %v946, %v1066
        %1068 = vmatprep.mubr.f32.mxu0 0.0
        %1069 = vmatmul.mubr.f32.gmra.mrb[0].mxu0 %v966
        %v1070 = vpop.f32.mrb[0].mxu0
        %v1071 = vadd.f32 %v942, %v1070
        %v1072 = vpop.f32.mrb[0].mxu0
        %v1073 = vadd.f32 %v946, %v1072
        %1074 = vmatprep.mubr.f32.mxu0 0.0
        %1075 = vmatmul.mubr.f32.gmra.mrb[0].mxu0 %v969
        %v1076 = vpop.f32.mrb[0].mxu0
        %v1077 = vadd.f32 %v942, %v1076
        %v1078 = vpop.f32.mrb[0].mxu0
        %v1079 = vadd.f32 %v946, %v1078
        %1080 = vmatprep.mubr.f32.mxu0 0.0
        %1081 = vmatmul.mubr.f32.gmra.mrb[0].mxu0 %v972
        %v1082 = vpop.f32.mrb[0].mxu0
        %v1083 = vadd.f32 %v942, %v1082
        %v1084 = vpop.f32.mrb[0].mxu0
        %v1085 = vadd.f32 %v946, %v1084
        %1086 = vdwg.mxu0
        %v1087 = vmax.f32 %v1041, 0.0
        %v1088 = vmax.f32 %v1043, 0.0
        %v1089 = vmax.f32 %v1047, 0.0
        %v1090 = vmax.f32 %v1049, 0.0
        %v1091 = vmax.f32 %v1053, 0.0
        %v1092 = vmax.f32 %v1055, 0.0
        %v1093 = vmax.f32 %v1059, 0.0
        %v1094 = vmax.f32 %v1061, 0.0
        %v1095 = vmax.f32 %v1065, 0.0
        %v1096 = vmax.f32 %v1067, 0.0
        %v1097 = vmax.f32 %v1071, 0.0
        %v1098 = vmax.f32 %v1073, 0.0
        %v1099 = vmax.f32 %v1077, 0.0
        %v1100 = vmax.f32 %v1079, 0.0
        %v1101 = vmax.f32 %v1083, 0.0
        %v1102 = vmax.f32 %v1085, 0.0
        %v1103 = vld [vmem:[#allocation11] sm:$0x3]
        %v1105 = vlaneseq
        %v1106 = vshrl.u32 %v1105, 7
        %v1107 = vsub.s32 0, %v1106
        %v1108 = vrot.slane %v1103, %v1107
        %v1109 = vlaneseq
        %v1110 = vshrl.u32 %v1109, 7
        %v1111 = vsub.s32 1, %v1110
        %v1112 = vrot.slane %v1103, %v1111
        %v1115 = vmul.f32 %v1087, %v1108
        %v1116 = vmul.f32 %v1088, %v1112
        %v1117 = vmul.f32 %v1089, %v1108
        %v1118 = vmul.f32 %v1090, %v1112
        %v1119 = vmul.f32 %v1091, %v1108
        %v1120 = vmul.f32 %v1092, %v1112
        %v1121 = vmul.f32 %v1093, %v1108
        %v1122 = vmul.f32 %v1094, %v1112
        %v1123 = vmul.f32 %v1095, %v1108
        %v1124 = vmul.f32 %v1096, %v1112
        %v1125 = vmul.f32 %v1097, %v1108
        %v1126 = vmul.f32 %v1098, %v1112
        %v1127 = vmul.f32 %v1099, %v1108
        %v1128 = vmul.f32 %v1100, %v1112
        %v1129 = vmul.f32 %v1101, %v1108
        %v1130 = vmul.f32 %v1102, %v1112
        %v1131 = vld [vmem:[#allocation13] sm:$0x3]
        %v1133 = vlaneseq
        %v1134 = vshrl.u32 %v1133, 7
        %v1135 = vsub.s32 0, %v1134
        %v1136 = vrot.slane %v1131, %v1135
        %v1137 = vlaneseq
        %v1138 = vshrl.u32 %v1137, 7
        %v1139 = vsub.s32 1, %v1138
        %v1140 = vrot.slane %v1131, %v1139
        %v1143 = vadd.f32 %v1115, %v1136
        %v1144 = vadd.f32 %v1116, %v1140
        %v1145 = vadd.f32 %v1117, %v1136
        %v1146 = vadd.f32 %v1118, %v1140
        %v1147 = vadd.f32 %v1119, %v1136
        %v1148 = vadd.f32 %v1120, %v1140
        %v1149 = vadd.f32 %v1121, %v1136
        %v1150 = vadd.f32 %v1122, %v1140
        %v1151 = vadd.f32 %v1123, %v1136
        %v1152 = vadd.f32 %v1124, %v1140
        %v1153 = vadd.f32 %v1125, %v1136
        %v1154 = vadd.f32 %v1126, %v1140
        %v1155 = vadd.f32 %v1127, %v1136
        %v1156 = vadd.f32 %v1128, %v1140
        %v1157 = vadd.f32 %v1129, %v1136
        %v1158 = vadd.f32 %v1130, %v1140
        %v1159 = vld [vmem:[%s10] sm:$0xff]
        %v1160 = vld [vmem:[%s10 + $0x8] sm:$0xff]
        %v1161 = vld [vmem:[%s10 + $0x10] sm:$0xff]
        %v1162 = vld [vmem:[%s10 + $0x18] sm:$0xff]
        %v1163 = vld [vmem:[%s10 + $0x20] sm:$0xff]
        %v1164 = vld [vmem:[%s10 + $0x28] sm:$0xff]
        %v1165 = vld [vmem:[%s10 + $0x30] sm:$0xff]
        %v1166 = vld [vmem:[%s10 + $0x38] sm:$0xff]
        %v1167 = vld [vmem:[%s10 + $0x40] sm:$0xff]
        %v1168 = vld [vmem:[%s10 + $0x48] sm:$0xff]
        %v1169 = vld [vmem:[%s10 + $0x50] sm:$0xff]
        %v1170 = vld [vmem:[%s10 + $0x58] sm:$0xff]
        %v1171 = vld [vmem:[%s10 + $0x60] sm:$0xff]
        %v1172 = vld [vmem:[%s10 + $0x68] sm:$0xff]
        %v1173 = vld [vmem:[%s10 + $0x70] sm:$0xff]
        %v1174 = vld [vmem:[%s10 + $0x78] sm:$0xff]
        %v1175 = vld [vmem:[%s10 + $0x80] sm:$0xff]
        %v1176 = vld [vmem:[%s10 + $0x88] sm:$0xff]
        %v1177 = vld [vmem:[%s10 + $0x90] sm:$0xff]
        %v1178 = vld [vmem:[%s10 + $0x98] sm:$0xff]
        %v1179 = vld [vmem:[%s10 + $0xa0] sm:$0xff]
        %v1180 = vld [vmem:[%s10 + $0xa8] sm:$0xff]
        %v1181 = vld [vmem:[%s10 + $0xb0] sm:$0xff]
        %v1182 = vld [vmem:[%s10 + $0xb8] sm:$0xff]
        %v1183 = vld [vmem:[%s10 + $0xc0] sm:$0xf]
        %v1184 = vld [vmem:[#allocation14] sm:$0x1]
        %v1186 = vlaneseq
        %v1187 = vshrl.u32 %v1186, 7
        %v1188 = vsub.s32 0, %v1187
        %v1189 = vrot.slane %v1184, %v1188
        %vm1191 = vcmask 556032
        %v1193 = vsel %vm1191, %v1144, 0
        %v1196 = vsel %vm1191, %v1146, 0
        %v1199 = vsel %vm1191, %v1148, 0
        %v1202 = vsel %vm1191, %v1150, 0
        %v1205 = vsel %vm1191, %v1152, 0
        %v1208 = vsel %vm1191, %v1154, 0
        %v1211 = vsel %vm1191, %v1156, 0
        %v1214 = vsel %vm1191, %v1158, 0
        %v1217 = vsel %vm586, %v1183, 0
        %1219 = vmatprep.subr.mxu0 0.0
        %1220 = vmatpush1.msra.mxu0 %v1159
        %1221 = vmatprep.subr.mxu0 0.0
        %1222 = vmatpush1.msra.mxu0 %v1160
        %1223 = vmatprep.subr.mxu0 0.0
        %1224 = vmatpush1.msra.mxu0 %v1161
        %1225 = vmatprep.subr.mxu0 0.0
        %1226 = vmatpush1.msra.mxu0 %v1162
        %1227 = vmatprep.subr.mxu0 0.0
        %1228 = vmatpush1.msra.mxu0 %v1163
        %1229 = vmatprep.subr.mxu0 0.0
        %1230 = vmatpush1.msra.mxu0 %v1164
        %1231 = vmatprep.subr.mxu0 0.0
        %1232 = vmatpush1.msra.mxu0 %v1165
        %1233 = vmatprep.subr.mxu0 0.0
        %1234 = vmatpush1.msra.mxu0 %v1166
        %1235 = vmatprep.subr.mxu0 0.0
        %1236 = vmatpush1.msra.mxu0 %v1167
        %1237 = vmatprep.subr.mxu0 0.0
        %1238 = vmatpush1.msra.mxu0 %v1168
        %1239 = vmatprep.subr.mxu0 0.0
        %1240 = vmatpush1.msra.mxu0 %v1169
        %1241 = vmatprep.subr.mxu0 0.0
        %1242 = vmatpush1.msra.mxu0 %v1170
        %1243 = vmatprep.subr.mxu0 0.0
        %1244 = vmatpush1.msra.mxu0 %v1171
        %1245 = vmatprep.subr.mxu0 0.0
        %1246 = vmatpush1.msra.mxu0 %v1172
        %1247 = vmatprep.subr.mxu0 0.0
        %1248 = vmatpush1.msra.mxu0 %v1173
        %1249 = vmatprep.subr.mxu0 0.0
        %1250 = vmatpush1.msra.mxu0 %v1174
        %1251 = vmatprep.subr.mxu0 0.0
        %1252 = vmatpush1.msra.mxu0 %v1175
        %1253 = vmatprep.subr.mxu0 0.0
        %1254 = vmatpush1.msra.mxu0 %v1176
        %1255 = vmatprep.subr.mxu0 0.0
        %1256 = vmatpush1.msra.mxu0 %v1177
        %1257 = vmatprep.subr.mxu0 0.0
        %1258 = vmatpush1.msra.mxu0 %v1178
        %1259 = vmatprep.subr.mxu0 0.0
        %1260 = vmatpush1.msra.mxu0 %v1179
        %1261 = vmatprep.subr.mxu0 0.0
        %1262 = vmatpush1.msra.mxu0 %v1180
        %1263 = vmatprep.subr.mxu0 0.0
        %1264 = vmatpush1.msra.mxu0 %v1181
        %1265 = vmatprep.subr.mxu0 0.0
        %1266 = vmatpush1.msra.mxu0 %v1182
        %1267 = vmatprep.subr.mxu0 0.0
        %1268 = vmatpush1.msra.mxu0 %v1217
        %1269 = vmatprep.subr.mxu0 0.0
        %1270 = vmatpush1.msra.mxu0 0.0
        %1271 = vmatprep.subr.mxu0 0.0
        %1272 = vmatpush1.msra.mxu0 0.0
        %1273 = vmatprep.subr.mxu0 0.0
        %1274 = vmatpush1.msra.mxu0 0.0
        %1275 = vmatprep.subr.mxu0 0.0
        %1276 = vmatpush1.msra.mxu0 0.0
        %1277 = vmatprep.subr.mxu0 0.0
        %1278 = vmatpush1.msra.mxu0 0.0
        %1279 = vmatprep.subr.mxu0 0.0
        %1280 = vmatpush1.msra.mxu0 0.0
        %1281 = vmatprep.subr.mxu0 0.0
        %1282 = vmatpush1.msra.mxu0 0.0
        %1283 = vmatprep.mubr.f32.mxu0 %v1193
        %1284 = vmatmul.mubr.f32.gmra.mrb[0].mxu0 %v1143
        %v1285 = vpop.f32.mrb[0].mxu0
        %v1286 = vadd.f32 %v1189, %v1285
        %v1287 = vpop.f32.mrb[0].mxu0
        %1288 = vmatprep.mubr.f32.mxu0 %v1196
        %1289 = vmatmul.mubr.f32.gmra.mrb[0].mxu0 %v1145
        %v1290 = vpop.f32.mrb[0].mxu0
        %v1291 = vadd.f32 %v1189, %v1290
        %v1292 = vpop.f32.mrb[0].mxu0
        %1293 = vmatprep.mubr.f32.mxu0 %v1199
        %1294 = vmatmul.mubr.f32.gmra.mrb[0].mxu0 %v1147
        %v1295 = vpop.f32.mrb[0].mxu0
        %v1296 = vadd.f32 %v1189, %v1295
        %v1297 = vpop.f32.mrb[0].mxu0
        %1298 = vmatprep.mubr.f32.mxu0 %v1202
        %1299 = vmatmul.mubr.f32.gmra.mrb[0].mxu0 %v1149
        %v1300 = vpop.f32.mrb[0].mxu0
        %v1301 = vadd.f32 %v1189, %v1300
        %v1302 = vpop.f32.mrb[0].mxu0
        %1303 = vmatprep.mubr.f32.mxu0 %v1205
        %1304 = vmatmul.mubr.f32.gmra.mrb[0].mxu0 %v1151
        %v1305 = vpop.f32.mrb[0].mxu0
        %v1306 = vadd.f32 %v1189, %v1305
        %v1307 = vpop.f32.mrb[0].mxu0
        %1308 = vmatprep.mubr.f32.mxu0 %v1208
        %1309 = vmatmul.mubr.f32.gmra.mrb[0].mxu0 %v1153
        %v1310 = vpop.f32.mrb[0].mxu0
        %v1311 = vadd.f32 %v1189, %v1310
        %v1312 = vpop.f32.mrb[0].mxu0
        %1313 = vmatprep.mubr.f32.mxu0 %v1211
        %1314 = vmatmul.mubr.f32.gmra.mrb[0].mxu0 %v1155
        %v1315 = vpop.f32.mrb[0].mxu0
        %v1316 = vadd.f32 %v1189, %v1315
        %v1317 = vpop.f32.mrb[0].mxu0
        %1318 = vmatprep.mubr.f32.mxu0 %v1214
        %1319 = vmatmul.mubr.f32.gmra.mrb[0].mxu0 %v1157
        %v1320 = vpop.f32.mrb[0].mxu0
        %v1321 = vadd.f32 %v1189, %v1320
        %v1322 = vpop.f32.mrb[0].mxu0
        %1323 = vdwg.mxu0
        %vm1324 = vcmask 523264
        %1325 = vst.msk [vmem:[%s526] sm:$0xff] %vm1324, %v1286
        %1326 = vst.msk [vmem:[%s526 + $0x8] sm:$0xff] %vm1324, %v1291
        %1327 = vst.msk [vmem:[%s526 + $0x10] sm:$0xff] %vm1324, %v1296
        %1328 = vst.msk [vmem:[%s526 + $0x18] sm:$0xff] %vm1324, %v1301
        %1329 = vst.msk [vmem:[%s526 + $0x20] sm:$0xff] %vm1324, %v1306
        %1330 = vst.msk [vmem:[%s526 + $0x28] sm:$0xff] %vm1324, %v1311
        %1331 = vst.msk [vmem:[%s526 + $0x30] sm:$0xff] %vm1324, %v1316
        %1332 = vst.msk [vmem:[%s526 + $0x38] sm:$0xff] %vm1324, %v1321
        %s1333 = smul.u32 8, %s32
        %p1334 = scmp.lt.s32.totalorder %s1333, 15
        %s1335 = scalar_select %p1334, %s1333, 15
        %s1336 = smul.addr %s1335, 8
        %s1337 = scalar_lea.vmem %s12, %s1336
        // Predicated region
        $region101: #{deepstn_pallas_forward.6} parent=67 // pred_check
          %p1338 = pneg %p307
        $region102: #{deepstn_pallas_forward.6} parent=67 // pred_check_branch
          %1340 = sbr.rel (%p1338) target = $region104
        $region103: #{deepstn_pallas_forward.6} parent=67 // pred_region
          %s1341 = smul.u32 8, %s32
        $region104: #{deepstn_pallas_forward.6} parent=67 // pred_fallthru
          _
      $region68: #{deepstn_pallas_forward.6} parent=5 // pred_fallthru
        _
      %p1342 = scmp.le.s32.totalorder 2, %s27
      // Predicated region
      $region105: #{deepstn_pallas_forward.6} parent=5 // pred_check
        %p1343 = pneg %p1342
      $region106: #{deepstn_pallas_forward.6} parent=5 // pred_check_branch
        %1345 = sbr.rel (%p1343) target = $region108
      $region107: #{deepstn_pallas_forward.6} parent=5 // pred_region
        %s1346 = ssub.s32 %s27, 2
        // Predicated region
        $region109: #{deepstn_pallas_forward.6} parent=107 // pred_check
          %p1347 = pneg %p313
        $region110: #{deepstn_pallas_forward.6} parent=107 // pred_check_branch
          %1349 = sbr.rel (%p1347) target = $region112
        $region111: #{deepstn_pallas_forward.6} parent=107 // pred_region
          %s1350 = smul.u32 8, %s33
          %p1351 = scmp.lt.s32.totalorder %s1350, 15
          %s1352 = scalar_select %p1351, %s1350, 15
          %s1353 = smul.addr %s1352, 8
          %s1354 = scalar_lea.vmem %s12, %s1353
        $region112: #{deepstn_pallas_forward.6} parent=107 // pred_fallthru
          _
      $region108: #{deepstn_pallas_forward.6} parent=5 // pred_fallthru
        _
    $region6: #{deepstn_pallas_forward.6} parent=1 // loop_footer
      %s31 = sadd.s32 1, %s27
    $region7: #{deepstn_pallas_forward.6} parent=1 // loop_footer_branch
      %26 = sbr.rel target = $region3
    $region8: #{deepstn_pallas_forward.6} parent=1 // loop_exit
      _
    %1355 = vsyncpa [#allocation4], 1
    %s1356 = scalar_lea.sflag [#allocation4], 1
    %1357 = vsyncpa %s1356, 1
    %1358 = vsyncpa [#allocation6], 1
    %1359 = vsyncpa [#allocation9], 1
    %1360 = vsyncpa [#allocation12], 1
    %1361 = vsyncpa [#allocation15], 1

// kernel: deepstn_pallas_forward.7
$region0: #{deepstn_pallas_forward.7}
  #allocation0 [shape = 'u32[]', space=smem, size = 0x4, offset = 0x4, fixed_abs, tag = 'smem constant byte address 0x4 - core index']
  #allocation1 [shape = 'u32[144,128]{1,0:T(1,128)}', space=vmem, size = 0x12000, scoped, tag = 'internal scratch']
  %s0 = inlined_call_operand.vmem [shape: f32[2,4096], index: 0, kind: input, shape index: {}]
  %s1 = inlined_call_operand.hbm [shape: f32[1,4096], index: 1, kind: input, shape index: {}]
  %s2 = inlined_call_operand.hbm [shape: f32[1,4096], index: 2, kind: input, shape index: {}]
  %s3 = inlined_call_operand.hbm [shape: bf16[4096,512], index: 3, kind: input, shape index: {}]
  %s4 = inlined_call_operand.hbm [shape: f32[1,512], index: 4, kind: input, shape index: {}]
  %s5 = inlined_call_operand.vmem [shape: f32[2,512], index: 5, kind: output, shape index: {}]
  %s6 = sld [smem:[#allocation0]]
  $region73: #{deepstn_pallas_forward.7} parent=0
    _
  %s8 = ssub.s32 1, %s6
  %s9 = scalar_select 0, %s8, %s6
  $region1: #{deepstn_pallas_forward.7} parent=0
    #allocation2 [shape = 'u8[16384]{0}', space=vmem, size = 0x4000, scoped, tag = 'input window, operand 1']
    #allocation3 [shape = 's32[2]{0}', space=sflag, size = 0x8, scoped, tag = 'scoped memory for deepstn_pallas_forward.7']
    #allocation4 [shape = 'u8[16384]{0}', space=vmem, size = 0x4000, scoped, tag = 'input window, operand 2']
    #allocation5 [shape = 's32[2]{0}', space=sflag, size = 0x8, scoped, tag = 'scoped memory for deepstn_pallas_forward.7']
    #allocation6 [shape = 'u8[2097152]{0}', space=vmem, size = 0x200000, scoped, tag = 'input window, operand 3']
    #allocation7 [shape = 'u8[2048]{0}', space=vmem, size = 0x800, scoped, tag = 'input window, operand 4']
    #allocation8 [shape = 's32[2]{0}', space=sflag, size = 0x8, scoped, tag = 'scoped memory for deepstn_pallas_forward.7']
    %10 = vsyncpa [#allocation3], 0
    %s11 = scalar_lea.sflag [#allocation3], 1
    %12 = vsyncpa %s11, 0
    %13 = vsyncpa [#allocation5], 0
    %s14 = scalar_lea.sflag [#allocation5], 1
    %15 = vsyncpa %s14, 0
    %16 = vsyncpa [#allocation8], 0
    %s17 = scalar_lea.sflag [#allocation8], 1
    %18 = vsyncpa %s17, 0
    loop: start=0, step=1, limit=6
    $region2: #{deepstn_pallas_forward.7} parent=1 // loop_pre_header
      _
    $region3: #{deepstn_pallas_forward.7} parent=1 // loop_header
      %s20 = sphi 0, %s24
      %p21 = scmp.ge.s32.totalorder %s20, 6
      %s27 = sphi 0, %s39
      %s28 = sphi 0, %s35
      %s29 = sphi 0, %s27
      %s30 = sphi 0, %s28
      %s31 = sphi 0, %s29
      %s32 = sphi 0, %s30
      %s42 = sphi 0, %s44
      %s45 = sphi 0, %s42
      %s46 = sphi 0, %s45
      %s62 = sphi 0, %s46
      %s68 = sphi 0, %s70
      %s71 = sphi 0, %s68
      %s72 = sphi 0, %s71
      %s88 = sphi 0, %s72
      %s94 = sphi 0, %s96
      %s97 = sphi 0, %s94
      %s98 = sphi 0, %s97
      %s114 = sphi 0, %s98
      %s122 = sphi 0, %s124
      %s125 = sphi 0, %s122
      %s126 = sphi 0, %s125
      %s142 = sphi 0, %s126
      %s148 = sphi 0, %s150
      %s151 = sphi 0, %s148
      %s152 = sphi 0, %s151
      %s168 = sphi 0, %s152
      %s174 = sphi 0, %s176
      %s177 = sphi 0, %s174
      %s178 = sphi 0, %s177
      %s194 = sphi 0, %s178
    $region4: #{deepstn_pallas_forward.7} parent=1 // loop_header_branch
      %23 = sbr.rel (%p21) target = $region8
    $region5: #{deepstn_pallas_forward.7} parent=1 // loop_body
      %s25 = ssub.s32 %s20, 1
      %s26 = ssub.s32 %s20, 2
      %s33 = sadd.s32 1, %s28
      %p34 = scmp.ge.s32.totalorder %s33, 2
      %s35 = scalar_select %p34, 0, %s33
      %s36 = sadd.s32 1, %s27
      %s37 = scalar_select %p34, %s36, %s27
      %p38 = scmp.ge.s32.totalorder %s37, 2
      %s39 = scalar_select %p38, 0, %s37
      %s40 = ssub.s32 %s28, %s35
      %p41 = scmp.eq.s32.totalorder %s40, 0
      %s43 = sadd.s32 %s42, 1
      %s44 = scalar_select %p41, %s42, %s43
      %p47 = pneg %p41
      %p48 = scmp.eq.s32.totalorder %s20, 3
      %p49 = por %p47, %p48
      %p50 = scmp.ne.s32.totalorder %s42, %s45
      %p51 = scmp.eq.s32.totalorder %s20, 0
      %p52 = por %p50, %p51
      %p53 = scmp.ne.s32.totalorder %s42, %s45
      %p54 = scmp.eq.s32.totalorder %s25, 3
      %p55 = por %p53, %p54
      %p56 = scmp.ne.s32.totalorder %s45, %s46
      %p57 = scmp.eq.s32.totalorder %s25, 0
      %p58 = por %p56, %p57
      %p59 = scmp.ne.s32.totalorder %s45, %s46
      %p60 = scmp.eq.s32.totalorder %s26, 3
      %p61 = por %p59, %p60
      %p63 = scmp.ne.s32.totalorder %s46, %s62
      %p64 = scmp.eq.s32.totalorder %s26, 0
      %p65 = por %p63, %p64
      %s66 = ssub.s32 %s28, %s35
      %p67 = scmp.eq.s32.totalorder %s66, 0
      %s69 = sadd.s32 %s68, 1
      %s70 = scalar_select %p67, %s68, %s69
      %p73 = pneg %p67
      %p74 = scmp.eq.s32.totalorder %s20, 3
      %p75 = por %p73, %p74
      %p76 = scmp.ne.s32.totalorder %s68, %s71
      %p77 = scmp.eq.s32.totalorder %s20, 0
      %p78 = por %p76, %p77
      %p79 = scmp.ne.s32.totalorder %s68, %s71
      %p80 = scmp.eq.s32.totalorder %s25, 3
      %p81 = por %p79, %p80
      %p82 = scmp.ne.s32.totalorder %s71, %s72
      %p83 = scmp.eq.s32.totalorder %s25, 0
      %p84 = por %p82, %p83
      %p85 = scmp.ne.s32.totalorder %s71, %s72
      %p86 = scmp.eq.s32.totalorder %s26, 3
      %p87 = por %p85, %p86
      %p89 = scmp.ne.s32.totalorder %s72, %s88
      %p90 = scmp.eq.s32.totalorder %s26, 0
      %p91 = por %p89, %p90
      %s92 = ssub.s32 %s28, %s35
      %p93 = scmp.eq.s32.totalorder %s92, 0
      %s95 = sadd.s32 %s94, 1
      %s96 = scalar_select %p93, %s94, %s95
      %p99 = pneg %p93
      %p100 = scmp.eq.s32.totalorder %s20, 3
      %p101 = por %p99, %p100
      %p102 = scmp.ne.s32.totalorder %s94, %s97
      %p103 = scmp.eq.s32.totalorder %s20, 0
      %p104 = por %p102, %p103
      %p105 = scmp.ne.s32.totalorder %s94, %s97
      %p106 = scmp.eq.s32.totalorder %s25, 3
      %p107 = por %p105, %p106
      %p108 = scmp.ne.s32.totalorder %s97, %s98
      %p109 = scmp.eq.s32.totalorder %s25, 0
      %p110 = por %p108, %p109
      %p111 = scmp.ne.s32.totalorder %s97, %s98
      %p112 = scmp.eq.s32.totalorder %s26, 3
      %p113 = por %p111, %p112
      %p115 = scmp.ne.s32.totalorder %s98, %s114
      %p116 = scmp.eq.s32.totalorder %s26, 0
      %p117 = por %p115, %p116
      %s118 = ssub.s32 %s28, %s35
      %s119 = ssub.s32 %s27, %s39
      %s120 = sor.u32 %s118, %s119
      %p121 = scmp.eq.s32.totalorder %s120, 0
      %s123 = sadd.s32 %s122, 1
      %s124 = scalar_select %p121, %s122, %s123
      %p127 = pneg %p121
      %p128 = scmp.eq.s32.totalorder %s20, 3
      %p129 = por %p127, %p128
      %p130 = scmp.ne.s32.totalorder %s122, %s125
      %p131 = scmp.eq.s32.totalorder %s20, 0
      %p132 = por %p130, %p131
      %p133 = scmp.ne.s32.totalorder %s122, %s125
      %p134 = scmp.eq.s32.totalorder %s25, 3
      %p135 = por %p133, %p134
      %p136 = scmp.ne.s32.totalorder %s125, %s126
      %p137 = scmp.eq.s32.totalorder %s25, 0
      %p138 = por %p136, %p137
      %p139 = scmp.ne.s32.totalorder %s125, %s126
      %p140 = scmp.eq.s32.totalorder %s26, 3
      %p141 = por %p139, %p140
      %p143 = scmp.ne.s32.totalorder %s126, %s142
      %p144 = scmp.eq.s32.totalorder %s26, 0
      %p145 = por %p143, %p144
      %s146 = ssub.s32 %s27, %s39
      %p147 = scmp.eq.s32.totalorder %s146, 0
      %s149 = sadd.s32 %s148, 1
      %s150 = scalar_select %p147, %s148, %s149
      %p153 = pneg %p147
      %p154 = scmp.eq.s32.totalorder %s20, 3
      %p155 = por %p153, %p154
      %p156 = scmp.ne.s32.totalorder %s148, %s151
      %p157 = scmp.eq.s32.totalorder %s20, 0
      %p158 = por %p156, %p157
      %p159 = scmp.ne.s32.totalorder %s148, %s151
      %p160 = scmp.eq.s32.totalorder %s25, 3
      %p161 = por %p159, %p160
      %p162 = scmp.ne.s32.totalorder %s151, %s152
      %p163 = scmp.eq.s32.totalorder %s25, 0
      %p164 = por %p162, %p163
      %p165 = scmp.ne.s32.totalorder %s151, %s152
      %p166 = scmp.eq.s32.totalorder %s26, 3
      %p167 = por %p165, %p166
      %p169 = scmp.ne.s32.totalorder %s152, %s168
      %p170 = scmp.eq.s32.totalorder %s26, 0
      %p171 = por %p169, %p170
      %s172 = ssub.s32 %s27, %s39
      %p173 = scmp.eq.s32.totalorder %s172, 0
      %s175 = sadd.s32 %s174, 1
      %s176 = scalar_select %p173, %s174, %s175
      %p179 = pneg %p173
      %p180 = scmp.eq.s32.totalorder %s20, 3
      %p181 = por %p179, %p180
      %p182 = scmp.ne.s32.totalorder %s174, %s177
      %p183 = scmp.eq.s32.totalorder %s20, 0
      %p184 = por %p182, %p183
      %p185 = scmp.ne.s32.totalorder %s174, %s177
      %p186 = scmp.eq.s32.totalorder %s25, 3
      %p187 = por %p185, %p186
      %p188 = scmp.ne.s32.totalorder %s177, %s178
      %p189 = scmp.eq.s32.totalorder %s25, 0
      %p190 = por %p188, %p189
      %p191 = scmp.ne.s32.totalorder %s177, %s178
      %p192 = scmp.eq.s32.totalorder %s26, 3
      %p193 = por %p191, %p192
      %p195 = scmp.ne.s32.totalorder %s178, %s194
      %p196 = scmp.eq.s32.totalorder %s26, 0
      %p197 = por %p195, %p196
      %p198 = scmp.le.s32.totalorder 1, %s20
      %p199 = scmp.lt.s32.totalorder %s20, 5
      %p200 = pnand %p198, %p199
      %p201 = pneg %p200
      // Predicated region
      $region9: #{deepstn_pallas_forward.7} parent=5 // pred_check
        _
      $region10: #{deepstn_pallas_forward.7} parent=5 // pred_check_branch
        %203 = sbr.rel (%p200) target = $region12
      $region11: #{deepstn_pallas_forward.7} parent=5 // pred_region
        %s204 = ssub.s32 %s20, 1
      $region12: #{deepstn_pallas_forward.7} parent=5 // pred_fallthru
        _
      %p205 = scmp.lt.s32.totalorder %s20, 4
      // Predicated region
      $region13: #{deepstn_pallas_forward.7} parent=5 // pred_check
        %p206 = pneg %p205
      $region14: #{deepstn_pallas_forward.7} parent=5 // pred_check_branch
        %208 = sbr.rel (%p206) target = $region16
      $region15: #{deepstn_pallas_forward.7} parent=5 // pred_region
        // Predicated region
        $region17: #{deepstn_pallas_forward.7} parent=15 // pred_check
          %p209 = pneg %p52
        $region18: #{deepstn_pallas_forward.7} parent=15 // pred_check_branch
          %211 = sbr.rel (%p209) target = $region20
        $region19: #{deepstn_pallas_forward.7} parent=15 // pred_region
          %s212 = smul.u32 16, %s28
          %p213 = scmp.lt.s32.totalorder %s212, 31
          %s214 = scalar_select %p213, %s212, 31
          %s215 = smul.addr %s214, 2
          %s216 = scalar_lea.vmem %s0, %s215
          %s217 = smul.u32 16, %s28
        $region20: #{deepstn_pallas_forward.7} parent=15 // pred_fallthru
          _
        // Predicated region
        $region21: #{deepstn_pallas_forward.7} parent=15 // pred_check
          %p218 = pneg %p78
        $region22: #{deepstn_pallas_forward.7} parent=15 // pred_check_branch
          %220 = sbr.rel (%p218) target = $region24
        $region23: #{deepstn_pallas_forward.7} parent=15 // pred_region
          %s221 = sand.u32 %s68, 1
          %s222 = scalar_lea.sflag [#allocation3], %s221
          %s223 = sand.u32 %s68, 1
          %s224 = smul.addr %s223, 16
          %s225 = scalar_lea.vmem [#allocation2], %s224
          %s226 = smul.u32 16, %s28
          %s228 = ssub.s32 256, 256
          %229 = vsyncadd %s222, %s228
          %s230 = smul.addr %s226, 16
          %s231 = scalar_lea.hbm %s1, %s230
          %s233 = sshll.u32 %s225, 4
          %s234 = int_to_ptr.vmem [resolvable:$true] %s233
          %236 = dma.hbm_to_vmem [thread:$0]  %s231, 256, %s234, %s222
        $region24: #{deepstn_pallas_forward.7} parent=15 // pred_fallthru
          _
        // Predicated region
        $region25: #{deepstn_pallas_forward.7} parent=15 // pred_check
          %p237 = pneg %p104
        $region26: #{deepstn_pallas_forward.7} parent=15 // pred_check_branch
          %239 = sbr.rel (%p237) target = $region28
        $region27: #{deepstn_pallas_forward.7} parent=15 // pred_region
          %s240 = sand.u32 %s20, 1
          %s241 = scalar_lea.sflag [#allocation5], %s240
          %s242 = sand.u32 %s94, 1
          %s243 = smul.addr %s242, 16
          %s244 = scalar_lea.vmem [#allocation4], %s243
          %s245 = smul.u32 16, %s28
          %s247 = ssub.s32 256, 256
          %248 = vsyncadd %s241, %s247
          %s249 = smul.addr %s245, 16
          %s250 = scalar_lea.hbm %s2, %s249
          %s252 = sshll.u32 %s244, 4
          %s253 = int_to_ptr.vmem [resolvable:$true] %s252
          %255 = dma.hbm_to_vmem [thread:$0]  %s250, 256, %s253, %s241
        $region28: #{deepstn_pallas_forward.7} parent=15 // pred_fallthru
          _
        // Predicated region
        $region29: #{deepstn_pallas_forward.7} parent=15 // pred_check
          %p256 = pneg %p132
        $region30: #{deepstn_pallas_forward.7} parent=15 // pred_check_branch
          %258 = sbr.rel (%p256) target = $region32
        $region31: #{deepstn_pallas_forward.7} parent=15 // pred_region
          %s259 = sand.u32 %s20, 1
          %s260 = scalar_lea.sflag [#allocation5], %s259
          %s261 = sand.u32 %s122, 1
          %s262 = smul.addr %s261, 2048
          %s263 = scalar_lea.vmem [#allocation6], %s262
          %s264 = smul.u32 256, %s28
          %s265 = smul.u32 2, %s27
          %s267 = ssub.s32 32768, 32768
          %268 = vsyncadd %s260, %s267
          %s269 = smul.addr %s264, 4
          %s270 = sadd.s32 %s265, %s269
          %s271 = smul.addr %s270, 64
          %s272 = scalar_lea.hbm %s3, %s271
          %s273 = sshll.u32 %s263, 4
          %s274 = int_to_ptr.vmem [resolvable:$true] %s273
          %279 = dma.hbm_to_vmem [thread:$0]  %s272, 32768, %s274, %s260, 256, 128, 8
        $region32: #{deepstn_pallas_forward.7} parent=15 // pred_fallthru
          _
        // Predicated region
        $region33: #{deepstn_pallas_forward.7} parent=15 // pred_check
          %p280 = pneg %p158
        $region34: #{deepstn_pallas_forward.7} parent=15 // pred_check_branch
          %282 = sbr.rel (%p280) target = $region36
        $region35: #{deepstn_pallas_forward.7} parent=15 // pred_region
          %s283 = sand.u32 %s148, 1
          %s284 = scalar_lea.sflag [#allocation8], %s283
          %s285 = sand.u32 %s148, 1
          %s286 = smul.addr %s285, 2
          %s287 = scalar_lea.vmem [#allocation7], %s286
          %s288 = smul.u32 2, %s27
          %s290 = ssub.s32 32, 32
          %291 = vsyncadd %s284, %s290
          %s292 = smul.addr %s288, 16
          %s293 = scalar_lea.hbm %s4, %s292
          %s295 = sshll.u32 %s287, 4
          %s296 = int_to_ptr.vmem [resolvable:$true] %s295
          %298 = dma.hbm_to_vmem [thread:$0]  %s293, 32, %s296, %s284
        $region36: #{deepstn_pallas_forward.7} parent=15 // pred_fallthru
          _
      $region16: #{deepstn_pallas_forward.7} parent=5 // pred_fallthru
        _
      %p299 = scmp.le.s32.totalorder 1, %s20
      %p300 = scmp.lt.s32.totalorder %s20, 5
      %p301 = pnand %p299, %p300
      %p302 = pneg %p301
      // Predicated region
      $region37: #{deepstn_pallas_forward.7} parent=5 // pred_check
        _
      $region38: #{deepstn_pallas_forward.7} parent=5 // pred_check_branch
        %304 = sbr.rel (%p301) target = $region40
      $region39: #{deepstn_pallas_forward.7} parent=5 // pred_region
        %s305 = ssub.s32 %s20, 1
        %s306 = sand.u32 %s71, 1
        %s307 = scalar_lea.sflag [#allocation3], %s306
        %s308 = sand.u32 %s71, 1
        %s309 = smul.addr %s308, 16
        %s310 = scalar_lea.vmem [#allocation2], %s309
        // Predicated region
        $region41: #{deepstn_pallas_forward.7} parent=39 // pred_check
          %p311 = pneg %p84
        $region42: #{deepstn_pallas_forward.7} parent=39 // pred_check_branch
          %313 = sbr.rel (%p311) target = $region44
        $region43: #{deepstn_pallas_forward.7} parent=39 // pred_region
          %314 = dma.done %s307, 256
        $region44: #{deepstn_pallas_forward.7} parent=39 // pred_fallthru
          _
        %s315 = sand.u32 %s25, 1
        %s316 = scalar_lea.sflag [#allocation5], %s315
        %s317 = sand.u32 %s97, 1
        %s318 = smul.addr %s317, 16
        %s319 = scalar_lea.vmem [#allocation4], %s318
        // Predicated region
        $region45: #{deepstn_pallas_forward.7} parent=39 // pred_check
          %p320 = pneg %p110
        $region46: #{deepstn_pallas_forward.7} parent=39 // pred_check_branch
          %322 = sbr.rel (%p320) target = $region48
        $region47: #{deepstn_pallas_forward.7} parent=39 // pred_region
          %323 = dma.done %s316, 256
        $region48: #{deepstn_pallas_forward.7} parent=39 // pred_fallthru
          _
        %s324 = sand.u32 %s25, 1
        %s325 = scalar_lea.sflag [#allocation5], %s324
        %s326 = sand.u32 %s125, 1
        %s327 = smul.addr %s326, 2048
        %s328 = scalar_lea.vmem [#allocation6], %s327
        // Predicated region
        $region49: #{deepstn_pallas_forward.7} parent=39 // pred_check
          %p329 = pneg %p138
        $region50: #{deepstn_pallas_forward.7} parent=39 // pred_check_branch
          %331 = sbr.rel (%p329) target = $region52
        $region51: #{deepstn_pallas_forward.7} parent=39 // pred_region
          %332 = dma.done %s325, 32768
        $region52: #{deepstn_pallas_forward.7} parent=39 // pred_fallthru
          _
        %s333 = sand.u32 %s151, 1
        %s334 = scalar_lea.sflag [#allocation8], %s333
        %s335 = sand.u32 %s151, 1
        %s336 = smul.addr %s335, 2
        %s337 = scalar_lea.vmem [#allocation7], %s336
        // Predicated region
        $region53: #{deepstn_pallas_forward.7} parent=39 // pred_check
          %p338 = pneg %p164
        $region54: #{deepstn_pallas_forward.7} parent=39 // pred_check_branch
          %340 = sbr.rel (%p338) target = $region56
        $region55: #{deepstn_pallas_forward.7} parent=39 // pred_region
          %341 = dma.done %s334, 32
        $region56: #{deepstn_pallas_forward.7} parent=39 // pred_fallthru
          _
        %s342 = smul.u32 16, %s30
        %p343 = scmp.lt.s32.totalorder %s342, 31
        %s344 = scalar_select %p343, %s342, 31
        %s345 = smul.addr %s344, 2
        %s346 = scalar_lea.vmem %s0, %s345
        %p347 = pneg %p58
        %p348 = pneg %p55
        %s349 = sand.u32 %s71, 1
        %s350 = scalar_lea.sflag [#allocation3], %s349
        %s351 = sand.u32 %s71, 1
        %s352 = smul.addr %s351, 16
        %s353 = scalar_lea.vmem [#allocation2], %s352
        %p354 = pneg %p84
        %p355 = pneg %p81
        %s356 = sand.u32 %s25, 1
        %s357 = scalar_lea.sflag [#allocation5], %s356
        %s358 = sand.u32 %s97, 1
        %s359 = smul.addr %s358, 16
        %s360 = scalar_lea.vmem [#allocation4], %s359
        %p361 = pneg %p110
        %p362 = pneg %p107
        %s363 = sand.u32 %s25, 1
        %s364 = scalar_lea.sflag [#allocation5], %s363
        %s365 = sand.u32 %s125, 1
        %s366 = smul.addr %s365, 2048
        %s367 = scalar_lea.vmem [#allocation6], %s366
        %p368 = pneg %p138
        %p369 = pneg %p135
        %s370 = sand.u32 %s151, 1
        %s371 = scalar_lea.sflag [#allocation8], %s370
        %s372 = sand.u32 %s151, 1
        %s373 = smul.addr %s372, 2
        %s374 = scalar_lea.vmem [#allocation7], %s373
        %p375 = pneg %p164
        %p376 = pneg %p161
        %p377 = pneg %p190
        %p378 = pneg %p187
        %s379 = smul.u32 2, %s29
        %p380 = scmp.lt.s32.totalorder %s379, 3
        %s381 = scalar_select %p380, %s379, 3
        %s382 = smul.addr %s381, 2
        %s383 = scalar_lea.vmem %s5, %s382
        %s384 = smul.u32 16, %s30
        %p385 = scmp.lt.s32.totalorder %s384, 31
        %s386 = scalar_select %p385, %s384, 31
        %s387 = smul.addr %s386, 2
        %s388 = scalar_lea.vmem %s0, %s387
        %s389 = smul.u32 16, %s30
        %s390 = smul.u32 16, %s30
        %s391 = smul.u32 16, %s30
        %s392 = smul.u32 256, %s30
        %s393 = smul.u32 2, %s29
        %s394 = smul.u32 2, %s29
        %s395 = smul.u32 2, %s29
        %p396 = scmp.lt.s32.totalorder %s395, 3
        %s397 = scalar_select %p396, %s395, 3
        %s398 = smul.addr %s397, 2
        %s399 = scalar_lea.vmem %s5, %s398
        %s400 = smul.u32 2, %s29
        %p401 = scmp.eq.s32.totalorder %s30, 0
        // Predicated region
        $region57: #{deepstn_pallas_forward.7} parent=39 // pred_check
          %p402 = pneg %p401
        $region58: #{deepstn_pallas_forward.7} parent=39 // pred_check_branch
          %404 = sbr.rel (%p402) target = $region60
        $region59: #{deepstn_pallas_forward.7} parent=39 // pred_region
          %v405 = vld [vmem:[%s337] sm:$0x3]
          %v407 = vlaneseq
          %v408 = vshrl.u32 %v407, 7
          %v409 = vsub.s32 0, %v408
          %v410 = vrot.slane %v405, %v409
          %v411 = vlaneseq
          %v412 = vshrl.u32 %v411, 7
          %v413 = vsub.s32 1, %v412
          %v414 = vrot.slane %v405, %v413
          %v415 = vcombine.low %v410, %v414
          %v417 = vunpack.c.l.s4 1983009808
          %v418 = vunpack.c.0.s8 %v417
          %v419 = vlaneseq
          %v420 = vshrl.u32 %v419, 7
          %v421 = vsub.s32 %v418, %v420
          %v422 = vrot.slane %v415, %v421
          %424 = vst [vmem:[%s399] sm:$0xf] %v422
        $region60: #{deepstn_pallas_forward.7} parent=39 // pred_fallthru
          _
        %v425 = vld [vmem:[%s388] sm:$0xff]
        %v426 = vld [vmem:[%s388 + $0x8] sm:$0xff]
        %v427 = vld [vmem:[%s388 + $0x10] sm:$0xff]
        %v428 = vld [vmem:[%s388 + $0x18] sm:$0xff]
        %v429 = vmax.f32 %v425, 0.0
        %v430 = vmax.f32 %v426, 0.0
        %v431 = vmax.f32 %v427, 0.0
        %v432 = vmax.f32 %v428, 0.0
        %v433 = vld [vmem:[%s310] sm:$0xff]
        %v434 = vld [vmem:[%s310 + $0x8] sm:$0xff]
        %v437 = vlaneseq
        %v438 = vshrl.u32 %v437, 7
        %v439 = vsub.s32 0, %v438
        %v440 = vrot.slane %v433, %v439
        %v441 = vlaneseq
        %v442 = vshrl.u32 %v441, 7
        %v443 = vsub.s32 1, %v442
        %v444 = vrot.slane %v433, %v443
        %v445 = vlaneseq
        %v446 = vshrl.u32 %v445, 7
        %v447 = vsub.s32 2, %v446
        %v448 = vrot.slane %v433, %v447
        %v449 = vlaneseq
        %v450 = vshrl.u32 %v449, 7
        %v451 = vsub.s32 3, %v450
        %v452 = vrot.slane %v433, %v451
        %v453 = vlaneseq
        %v454 = vshrl.u32 %v453, 7
        %v455 = vsub.s32 4, %v454
        %v456 = vrot.slane %v433, %v455
        %v457 = vlaneseq
        %v458 = vshrl.u32 %v457, 7
        %v459 = vsub.s32 5, %v458
        %v460 = vrot.slane %v433, %v459
        %v461 = vlaneseq
        %v462 = vshrl.u32 %v461, 7
        %v463 = vsub.s32 6, %v462
        %v464 = vrot.slane %v433, %v463
        %v465 = vlaneseq
        %v466 = vshrl.u32 %v465, 7
        %v467 = vsub.s32 7, %v466
        %v468 = vrot.slane %v433, %v467
        %v469 = vlaneseq
        %v470 = vshrl.u32 %v469, 7
        %v471 = vsub.s32 0, %v470
        %v472 = vrot.slane %v434, %v471
        %v473 = vlaneseq
        %v474 = vshrl.u32 %v473, 7
        %v475 = vsub.s32 1, %v474
        %v476 = vrot.slane %v434, %v475
        %v477 = vlaneseq
        %v478 = vshrl.u32 %v477, 7
        %v479 = vsub.s32 2, %v478
        %v480 = vrot.slane %v434, %v479
        %v481 = vlaneseq
        %v482 = vshrl.u32 %v481, 7
        %v483 = vsub.s32 3, %v482
        %v484 = vrot.slane %v434, %v483
        %v485 = vlaneseq
        %v486 = vshrl.u32 %v485, 7
        %v487 = vsub.s32 4, %v486
        %v488 = vrot.slane %v434, %v487
        %v489 = vlaneseq
        %v490 = vshrl.u32 %v489, 7
        %v491 = vsub.s32 5, %v490
        %v492 = vrot.slane %v434, %v491
        %v493 = vlaneseq
        %v494 = vshrl.u32 %v493, 7
        %v495 = vsub.s32 6, %v494
        %v496 = vrot.slane %v434, %v495
        %v497 = vlaneseq
        %v498 = vshrl.u32 %v497, 7
        %v499 = vsub.s32 7, %v498
        %v500 = vrot.slane %v434, %v499
        %v501 = vcombine.low %v440, %v444
        %v502 = vcombine.low %v448, %v452
        %v504 = vunpack.c.l.s4 1983009808
        %v505 = vunpack.c.0.s8 %v504
        %v506 = vlaneseq
        %v507 = vshrl.u32 %v506, 7
        %v508 = vsub.s32 %v505, %v507
        %v509 = vrot.slane %v501, %v508
        %v511 = vunpack.c.l.s4 1983009808
        %v512 = vunpack.c.0.s8 %v511
        %v513 = vlaneseq
        %v514 = vshrl.u32 %v513, 7
        %v515 = vsub.s32 %v512, %v514
        %v516 = vrot.slane %v502, %v515
        %v517 = vcombine.low %v509, %v516
        %v518 = vcombine.low %v456, %v460
        %v519 = vcombine.low %v464, %v468
        %v521 = vunpack.c.l.s4 1983009808
        %v522 = vunpack.c.0.s8 %v521
        %v523 = vlaneseq
        %v524 = vshrl.u32 %v523, 7
        %v525 = vsub.s32 %v522, %v524
        %v526 = vrot.slane %v518, %v525
        %v528 = vunpack.c.l.s4 1983009808
        %v529 = vunpack.c.0.s8 %v528
        %v530 = vlaneseq
        %v531 = vshrl.u32 %v530, 7
        %v532 = vsub.s32 %v529, %v531
        %v533 = vrot.slane %v519, %v532
        %v534 = vcombine.low %v526, %v533
        %v535 = vcombine.low %v472, %v476
        %v536 = vcombine.low %v480, %v484
        %v538 = vunpack.c.l.s4 1983009808
        %v539 = vunpack.c.0.s8 %v538
        %v540 = vlaneseq
        %v541 = vshrl.u32 %v540, 7
        %v542 = vsub.s32 %v539, %v541
        %v543 = vrot.slane %v535, %v542
        %v545 = vunpack.c.l.s4 1983009808
        %v546 = vunpack.c.0.s8 %v545
        %v547 = vlaneseq
        %v548 = vshrl.u32 %v547, 7
        %v549 = vsub.s32 %v546, %v548
        %v550 = vrot.slane %v536, %v549
        %v551 = vcombine.low %v543, %v550
        %v552 = vcombine.low %v488, %v492
        %v553 = vcombine.low %v496, %v500
        %v555 = vunpack.c.l.s4 1983009808
        %v556 = vunpack.c.0.s8 %v555
        %v557 = vlaneseq
        %v558 = vshrl.u32 %v557, 7
        %v559 = vsub.s32 %v556, %v558
        %v560 = vrot.slane %v552, %v559
        %v562 = vunpack.c.l.s4 1983009808
        %v563 = vunpack.c.0.s8 %v562
        %v564 = vlaneseq
        %v565 = vshrl.u32 %v564, 7
        %v566 = vsub.s32 %v563, %v565
        %v567 = vrot.slane %v553, %v566
        %v568 = vcombine.low %v560, %v567
        %v573 = vmul.f32 %v429, %v517
        %v574 = vmul.f32 %v430, %v534
        %v575 = vmul.f32 %v431, %v551
        %v576 = vmul.f32 %v432, %v568
        %v577 = vld [vmem:[%s319] sm:$0xff]
        %v578 = vld [vmem:[%s319 + $0x8] sm:$0xff]
        %v581 = vlaneseq
        %v582 = vshrl.u32 %v581, 7
        %v583 = vsub.s32 0, %v582
        %v584 = vrot.slane %v577, %v583
        %v585 = vlaneseq
        %v586 = vshrl.u32 %v585, 7
        %v587 = vsub.s32 1, %v586
        %v588 = vrot.slane %v577, %v587
        %v589 = vlaneseq
        %v590 = vshrl.u32 %v589, 7
        %v591 = vsub.s32 2, %v590
        %v592 = vrot.slane %v577, %v591
        %v593 = vlaneseq
        %v594 = vshrl.u32 %v593, 7
        %v595 = vsub.s32 3, %v594
        %v596 = vrot.slane %v577, %v595
        %v597 = vlaneseq
        %v598 = vshrl.u32 %v597, 7
        %v599 = vsub.s32 4, %v598
        %v600 = vrot.slane %v577, %v599
        %v601 = vlaneseq
        %v602 = vshrl.u32 %v601, 7
        %v603 = vsub.s32 5, %v602
        %v604 = vrot.slane %v577, %v603
        %v605 = vlaneseq
        %v606 = vshrl.u32 %v605, 7
        %v607 = vsub.s32 6, %v606
        %v608 = vrot.slane %v577, %v607
        %v609 = vlaneseq
        %v610 = vshrl.u32 %v609, 7
        %v611 = vsub.s32 7, %v610
        %v612 = vrot.slane %v577, %v611
        %v613 = vlaneseq
        %v614 = vshrl.u32 %v613, 7
        %v615 = vsub.s32 0, %v614
        %v616 = vrot.slane %v578, %v615
        %v617 = vlaneseq
        %v618 = vshrl.u32 %v617, 7
        %v619 = vsub.s32 1, %v618
        %v620 = vrot.slane %v578, %v619
        %v621 = vlaneseq
        %v622 = vshrl.u32 %v621, 7
        %v623 = vsub.s32 2, %v622
        %v624 = vrot.slane %v578, %v623
        %v625 = vlaneseq
        %v626 = vshrl.u32 %v625, 7
        %v627 = vsub.s32 3, %v626
        %v628 = vrot.slane %v578, %v627
        %v629 = vlaneseq
        %v630 = vshrl.u32 %v629, 7
        %v631 = vsub.s32 4, %v630
        %v632 = vrot.slane %v578, %v631
        %v633 = vlaneseq
        %v634 = vshrl.u32 %v633, 7
        %v635 = vsub.s32 5, %v634
        %v636 = vrot.slane %v578, %v635
        %v637 = vlaneseq
        %v638 = vshrl.u32 %v637, 7
        %v639 = vsub.s32 6, %v638
        %v640 = vrot.slane %v578, %v639
        %v641 = vlaneseq
        %v642 = vshrl.u32 %v641, 7
        %v643 = vsub.s32 7, %v642
        %v644 = vrot.slane %v578, %v643
        %v645 = vcombine.low %v584, %v588
        %v646 = vcombine.low %v592, %v596
        %v648 = vunpack.c.l.s4 1983009808
        %v649 = vunpack.c.0.s8 %v648
        %v650 = vlaneseq
        %v651 = vshrl.u32 %v650, 7
        %v652 = vsub.s32 %v649, %v651
        %v653 = vrot.slane %v645, %v652
        %v655 = vunpack.c.l.s4 1983009808
        %v656 = vunpack.c.0.s8 %v655
        %v657 = vlaneseq
        %v658 = vshrl.u32 %v657, 7
        %v659 = vsub.s32 %v656, %v658
        %v660 = vrot.slane %v646, %v659
        %v661 = vcombine.low %v653, %v660
        %v662 = vcombine.low %v600, %v604
        %v663 = vcombine.low %v608, %v612
        %v665 = vunpack.c.l.s4 1983009808
        %v666 = vunpack.c.0.s8 %v665
        %v667 = vlaneseq
        %v668 = vshrl.u32 %v667, 7
        %v669 = vsub.s32 %v666, %v668
        %v670 = vrot.slane %v662, %v669
        %v672 = vunpack.c.l.s4 1983009808
        %v673 = vunpack.c.0.s8 %v672
        %v674 = vlaneseq
        %v675 = vshrl.u32 %v674, 7
        %v676 = vsub.s32 %v673, %v675
        %v677 = vrot.slane %v663, %v676
        %v678 = vcombine.low %v670, %v677
        %v679 = vcombine.low %v616, %v620
        %v680 = vcombine.low %v624, %v628
        %v682 = vunpack.c.l.s4 1983009808
        %v683 = vunpack.c.0.s8 %v682
        %v684 = vlaneseq
        %v685 = vshrl.u32 %v684, 7
        %v686 = vsub.s32 %v683, %v685
        %v687 = vrot.slane %v679, %v686
        %v689 = vunpack.c.l.s4 1983009808
        %v690 = vunpack.c.0.s8 %v689
        %v691 = vlaneseq
        %v692 = vshrl.u32 %v691, 7
        %v693 = vsub.s32 %v690, %v692
        %v694 = vrot.slane %v680, %v693
        %v695 = vcombine.low %v687, %v694
        %v696 = vcombine.low %v632, %v636
        %v697 = vcombine.low %v640, %v644
        %v699 = vunpack.c.l.s4 1983009808
        %v700 = vunpack.c.0.s8 %v699
        %v701 = vlaneseq
        %v702 = vshrl.u32 %v701, 7
        %v703 = vsub.s32 %v700, %v702
        %v704 = vrot.slane %v696, %v703
        %v706 = vunpack.c.l.s4 1983009808
        %v707 = vunpack.c.0.s8 %v706
        %v708 = vlaneseq
        %v709 = vshrl.u32 %v708, 7
        %v710 = vsub.s32 %v707, %v709
        %v711 = vrot.slane %v697, %v710
        %v712 = vcombine.low %v704, %v711
        %v717 = vadd.f32 %v573, %v661
        %v718 = vadd.f32 %v574, %v678
        %v719 = vadd.f32 %v575, %v695
        %v720 = vadd.f32 %v576, %v712
        %v721 = vld [vmem:[%s399] sm:$0xf]
        %v726 = vcombine.high %v717, %v717
        %v728 = vunpack.c.l.s4 1983009808
        %v729 = vunpack.c.0.s8 %v728
        %v730 = vlaneseq
        %v731 = vshrl.u32 %v730, 7
        %v732 = vsub.s32 %v729, %v731
        %v733 = vrot.slane %v717, %v732
        %v735 = vunpack.c.l.s4 1983009808
        %v736 = vunpack.c.0.s8 %v735
        %v737 = vlaneseq
        %v738 = vshrl.u32 %v737, 7
        %v739 = vsub.s32 %v736, %v738
        %v740 = vrot.slane %v726, %v739
        %v741 = vcombine.high %v733, %v733
        %v742 = vcombine.high %v740, %v740
        %v743 = vcombine.high %v718, %v718
        %v745 = vunpack.c.l.s4 1983009808
        %v746 = vunpack.c.0.s8 %v745
        %v747 = vlaneseq
        %v748 = vshrl.u32 %v747, 7
        %v749 = vsub.s32 %v746, %v748
        %v750 = vrot.slane %v718, %v749
        %v752 = vunpack.c.l.s4 1983009808
        %v753 = vunpack.c.0.s8 %v752
        %v754 = vlaneseq
        %v755 = vshrl.u32 %v754, 7
        %v756 = vsub.s32 %v753, %v755
        %v757 = vrot.slane %v743, %v756
        %v758 = vcombine.high %v750, %v750
        %v759 = vcombine.high %v757, %v757
        %v760 = vcombine.high %v719, %v719
        %v762 = vunpack.c.l.s4 1983009808
        %v763 = vunpack.c.0.s8 %v762
        %v764 = vlaneseq
        %v765 = vshrl.u32 %v764, 7
        %v766 = vsub.s32 %v763, %v765
        %v767 = vrot.slane %v719, %v766
        %v769 = vunpack.c.l.s4 1983009808
        %v770 = vunpack.c.0.s8 %v769
        %v771 = vlaneseq
        %v772 = vshrl.u32 %v771, 7
        %v773 = vsub.s32 %v770, %v772
        %v774 = vrot.slane %v760, %v773
        %v775 = vcombine.high %v767, %v767
        %v776 = vcombine.high %v774, %v774
        %v777 = vcombine.high %v720, %v720
        %v779 = vunpack.c.l.s4 1983009808
        %v780 = vunpack.c.0.s8 %v779
        %v781 = vlaneseq
        %v782 = vshrl.u32 %v781, 7
        %v783 = vsub.s32 %v780, %v782
        %v784 = vrot.slane %v720, %v783
        %v786 = vunpack.c.l.s4 1983009808
        %v787 = vunpack.c.0.s8 %v786
        %v788 = vlaneseq
        %v789 = vshrl.u32 %v788, 7
        %v790 = vsub.s32 %v787, %v789
        %v791 = vrot.slane %v777, %v790
        %v792 = vcombine.high %v784, %v784
        %v793 = vcombine.high %v791, %v791
        %v810 = vpack.c.bf16 %v733, %v733
        %v811 = vpack.c.bf16 %v741, %v741
        %v812 = vpack.c.bf16 %v740, %v740
        %v813 = vpack.c.bf16 %v742, %v742
        %v814 = vpack.c.bf16 %v750, %v750
        %v815 = vpack.c.bf16 %v758, %v758
        %v816 = vpack.c.bf16 %v757, %v757
        %v817 = vpack.c.bf16 %v759, %v759
        %v818 = vpack.c.bf16 %v767, %v767
        %v819 = vpack.c.bf16 %v775, %v775
        %v820 = vpack.c.bf16 %v774, %v774
        %v821 = vpack.c.bf16 %v776, %v776
        %v822 = vpack.c.bf16 %v784, %v784
        %v823 = vpack.c.bf16 %v792, %v792
        %v824 = vpack.c.bf16 %v791, %v791
        %v825 = vpack.c.bf16 %v793, %v793
        %v826 = vld [vmem:[%s328] sm:$0xff]
        %v827 = vld [vmem:[%s328 + $0x8] sm:$0xff]
        %v828 = vld [vmem:[%s328 + $0x10] sm:$0xff]
        %v829 = vld [vmem:[%s328 + $0x18] sm:$0xff]
        %v830 = vld [vmem:[%s328 + $0x20] sm:$0xff]
        %v831 = vld [vmem:[%s328 + $0x28] sm:$0xff]
        %v832 = vld [vmem:[%s328 + $0x30] sm:$0xff]
        %v833 = vld [vmem:[%s328 + $0x38] sm:$0xff]
        %v834 = vld [vmem:[%s328 + $0x40] sm:$0xff]
        %v835 = vld [vmem:[%s328 + $0x48] sm:$0xff]
        %v836 = vld [vmem:[%s328 + $0x50] sm:$0xff]
        %v837 = vld [vmem:[%s328 + $0x58] sm:$0xff]
        %v838 = vld [vmem:[%s328 + $0x60] sm:$0xff]
        %v839 = vld [vmem:[%s328 + $0x68] sm:$0xff]
        %v840 = vld [vmem:[%s328 + $0x70] sm:$0xff]
        %v841 = vld [vmem:[%s328 + $0x78] sm:$0xff]
        %v842 = vld [vmem:[%s328 + $0x80] sm:$0xff]
        %v843 = vld [vmem:[%s328 + $0x88] sm:$0xff]
        %v844 = vld [vmem:[%s328 + $0x90] sm:$0xff]
        %v845 = vld [vmem:[%s328 + $0x98] sm:$0xff]
        %v846 = vld [vmem:[%s328 + $0xa0] sm:$0xff]
        %v847 = vld [vmem:[%s328 + $0xa8] sm:$0xff]
        %v848 = vld [vmem:[%s328 + $0xb0] sm:$0xff]
        %v849 = vld [vmem:[%s328 + $0xb8] sm:$0xff]
        %v850 = vld [vmem:[%s328 + $0xc0] sm:$0xff]
        %v851 = vld [vmem:[%s328 + $0xc8] sm:$0xff]
        %v852 = vld [vmem:[%s328 + $0xd0] sm:$0xff]
        %v853 = vld [vmem:[%s328 + $0xd8] sm:$0xff]
        %v854 = vld [vmem:[%s328 + $0xe0] sm:$0xff]
        %v855 = vld [vmem:[%s328 + $0xe8] sm:$0xff]
        %v856 = vld [vmem:[%s328 + $0xf0] sm:$0xff]
        %v857 = vld [vmem:[%s328 + $0xf8] sm:$0xff]
        %v858 = vld [vmem:[%s328 + $0x100] sm:$0xff]
        %v859 = vld [vmem:[%s328 + $0x108] sm:$0xff]
        %v860 = vld [vmem:[%s328 + $0x110] sm:$0xff]
        %v861 = vld [vmem:[%s328 + $0x118] sm:$0xff]
        %v862 = vld [vmem:[%s328 + $0x120] sm:$0xff]
        %v863 = vld [vmem:[%s328 + $0x128] sm:$0xff]
        %v864 = vld [vmem:[%s328 + $0x130] sm:$0xff]
        %v865 = vld [vmem:[%s328 + $0x138] sm:$0xff]
        %v866 = vld [vmem:[%s328 + $0x140] sm:$0xff]
        %v867 = vld [vmem:[%s328 + $0x148] sm:$0xff]
        %v868 = vld [vmem:[%s328 + $0x150] sm:$0xff]
        %v869 = vld [vmem:[%s328 + $0x158] sm:$0xff]
        %v870 = vld [vmem:[%s328 + $0x160] sm:$0xff]
        %v871 = vld [vmem:[%s328 + $0x168] sm:$0xff]
        %v872 = vld [vmem:[%s328 + $0x170] sm:$0xff]
        %v873 = vld [vmem:[%s328 + $0x178] sm:$0xff]
        %v874 = vld [vmem:[%s328 + $0x180] sm:$0xff]
        %v875 = vld [vmem:[%s328 + $0x188] sm:$0xff]
        %v876 = vld [vmem:[%s328 + $0x190] sm:$0xff]
        %v877 = vld [vmem:[%s328 + $0x198] sm:$0xff]
        %v878 = vld [vmem:[%s328 + $0x1a0] sm:$0xff]
        %v879 = vld [vmem:[%s328 + $0x1a8] sm:$0xff]
        %v880 = vld [vmem:[%s328 + $0x1b0] sm:$0xff]
        %v881 = vld [vmem:[%s328 + $0x1b8] sm:$0xff]
        %v882 = vld [vmem:[%s328 + $0x1c0] sm:$0xff]
        %v883 = vld [vmem:[%s328 + $0x1c8] sm:$0xff]
        %v884 = vld [vmem:[%s328 + $0x1d0] sm:$0xff]
        %v885 = vld [vmem:[%s328 + $0x1d8] sm:$0xff]
        %v886 = vld [vmem:[%s328 + $0x1e0] sm:$0xff]
        %v887 = vld [vmem:[%s328 + $0x1e8] sm:$0xff]
        %v888 = vld [vmem:[%s328 + $0x1f0] sm:$0xff]
        %v889 = vld [vmem:[%s328 + $0x1f8] sm:$0xff]
        %v890 = vld [vmem:[%s328 + $0x200] sm:$0xff]
        %v891 = vld [vmem:[%s328 + $0x208] sm:$0xff]
        %v892 = vld [vmem:[%s328 + $0x210] sm:$0xff]
        %v893 = vld [vmem:[%s328 + $0x218] sm:$0xff]
        %v894 = vld [vmem:[%s328 + $0x220] sm:$0xff]
        %v895 = vld [vmem:[%s328 + $0x228] sm:$0xff]
        %v896 = vld [vmem:[%s328 + $0x230] sm:$0xff]
        %v897 = vld [vmem:[%s328 + $0x238] sm:$0xff]
        %v898 = vld [vmem:[%s328 + $0x240] sm:$0xff]
        %v899 = vld [vmem:[%s328 + $0x248] sm:$0xff]
        %v900 = vld [vmem:[%s328 + $0x250] sm:$0xff]
        %v901 = vld [vmem:[%s328 + $0x258] sm:$0xff]
        %v902 = vld [vmem:[%s328 + $0x260] sm:$0xff]
        %v903 = vld [vmem:[%s328 + $0x268] sm:$0xff]
        %v904 = vld [vmem:[%s328 + $0x270] sm:$0xff]
        %v905 = vld [vmem:[%s328 + $0x278] sm:$0xff]
        %v906 = vld [vmem:[%s328 + $0x280] sm:$0xff]
        %v907 = vld [vmem:[%s328 + $0x288] sm:$0xff]
        %v908 = vld [vmem:[%s328 + $0x290] sm:$0xff]
        %v909 = vld [vmem:[%s328 + $0x298] sm:$0xff]
        %v910 = vld [vmem:[%s328 + $0x2a0] sm:$0xff]
        %v911 = vld [vmem:[%s328 + $0x2a8] sm:$0xff]
        %v912 = vld [vmem:[%s328 + $0x2b0] sm:$0xff]
        %v913 = vld [vmem:[%s328 + $0x2b8] sm:$0xff]
        %v914 = vld [vmem:[%s328 + $0x2c0] sm:$0xff]
        %v915 = vld [vmem:[%s328 + $0x2c8] sm:$0xff]
        %v916 = vld [vmem:[%s328 + $0x2d0] sm:$0xff]
        %v917 = vld [vmem:[%s328 + $0x2d8] sm:$0xff]
        %v918 = vld [vmem:[%s328 + $0x2e0] sm:$0xff]
        %v919 = vld [vmem:[%s328 + $0x2e8] sm:$0xff]
        %v920 = vld [vmem:[%s328 + $0x2f0] sm:$0xff]
        %v921 = vld [vmem:[%s328 + $0x2f8] sm:$0xff]
        %v922 = vld [vmem:[%s328 + $0x300] sm:$0xff]
        %v923 = vld [vmem:[%s328 + $0x308] sm:$0xff]
        %v924 = vld [vmem:[%s328 + $0x310] sm:$0xff]
        %v925 = vld [vmem:[%s328 + $0x318] sm:$0xff]
        %v926 = vld [vmem:[%s328 + $0x320] sm:$0xff]
        %v927 = vld [vmem:[%s328 + $0x328] sm:$0xff]
        %v928 = vld [vmem:[%s328 + $0x330] sm:$0xff]
        %v929 = vld [vmem:[%s328 + $0x338] sm:$0xff]
        %v930 = vld [vmem:[%s328 + $0x340] sm:$0xff]
        %v931 = vld [vmem:[%s328 + $0x348] sm:$0xff]
        %v932 = vld [vmem:[%s328 + $0x350] sm:$0xff]
        %v933 = vld [vmem:[%s328 + $0x358] sm:$0xff]
        %v934 = vld [vmem:[%s328 + $0x360] sm:$0xff]
        %v935 = vld [vmem:[%s328 + $0x368] sm:$0xff]
        %v936 = vld [vmem:[%s328 + $0x370] sm:$0xff]
        %v937 = vld [vmem:[%s328 + $0x378] sm:$0xff]
        %v938 = vld [vmem:[%s328 + $0x380] sm:$0xff]
        %v939 = vld [vmem:[%s328 + $0x388] sm:$0xff]
        %v940 = vld [vmem:[%s328 + $0x390] sm:$0xff]
        %v941 = vld [vmem:[%s328 + $0x398] sm:$0xff]
        %v942 = vld [vmem:[%s328 + $0x3a0] sm:$0xff]
        %v943 = vld [vmem:[%s328 + $0x3a8] sm:$0xff]
        %v944 = vld [vmem:[%s328 + $0x3b0] sm:$0xff]
        %v945 = vld [vmem:[%s328 + $0x3b8] sm:$0xff]
        %v946 = vld [vmem:[%s328 + $0x3c0] sm:$0xff]
        %v947 = vld [vmem:[%s328 + $0x3c8] sm:$0xff]
        %v948 = vld [vmem:[%s328 + $0x3d0] sm:$0xff]
        %v949 = vld [vmem:[%s328 + $0x3d8] sm:$0xff]
        %v950 = vld [vmem:[%s328 + $0x3e0] sm:$0xff]
        %v951 = vld [vmem:[%s328 + $0x3e8] sm:$0xff]
        %v952 = vld [vmem:[%s328 + $0x3f0] sm:$0xff]
        %v953 = vld [vmem:[%s328 + $0x3f8] sm:$0xff]
        %v954 = vld [vmem:[%s328 + $0x400] sm:$0xff]
        %v955 = vld [vmem:[%s328 + $0x408] sm:$0xff]
        %v956 = vld [vmem:[%s328 + $0x410] sm:$0xff]
        %v957 = vld [vmem:[%s328 + $0x418] sm:$0xff]
        %v958 = vld [vmem:[%s328 + $0x420] sm:$0xff]
        %v959 = vld [vmem:[%s328 + $0x428] sm:$0xff]
        %v960 = vld [vmem:[%s328 + $0x430] sm:$0xff]
        %v961 = vld [vmem:[%s328 + $0x438] sm:$0xff]
        %v962 = vld [vmem:[%s328 + $0x440] sm:$0xff]
        %v963 = vld [vmem:[%s328 + $0x448] sm:$0xff]
        %v964 = vld [vmem:[%s328 + $0x450] sm:$0xff]
        %v965 = vld [vmem:[%s328 + $0x458] sm:$0xff]
        %v966 = vld [vmem:[%s328 + $0x460] sm:$0xff]
        %v967 = vld [vmem:[%s328 + $0x468] sm:$0xff]
        %v968 = vld [vmem:[%s328 + $0x470] sm:$0xff]
        %v969 = vld [vmem:[%s328 + $0x478] sm:$0xff]
        %v970 = vld [vmem:[%s328 + $0x480] sm:$0xff]
        %v971 = vld [vmem:[%s328 + $0x488] sm:$0xff]
        %v972 = vld [vmem:[%s328 + $0x490] sm:$0xff]
        %v973 = vld [vmem:[%s328 + $0x498] sm:$0xff]
        %v974 = vld [vmem:[%s328 + $0x4a0] sm:$0xff]
        %v975 = vld [vmem:[%s328 + $0x4a8] sm:$0xff]
        %v976 = vld [vmem:[%s328 + $0x4b0] sm:$0xff]
        %v977 = vld [vmem:[%s328 + $0x4b8] sm:$0xff]
        %v978 = vld [vmem:[%s328 + $0x4c0] sm:$0xff]
        %v979 = vld [vmem:[%s328 + $0x4c8] sm:$0xff]
        %v980 = vld [vmem:[%s328 + $0x4d0] sm:$0xff]
        %v981 = vld [vmem:[%s328 + $0x4d8] sm:$0xff]
        %v982 = vld [vmem:[%s328 + $0x4e0] sm:$0xff]
        %v983 = vld [vmem:[%s328 + $0x4e8] sm:$0xff]
        %v984 = vld [vmem:[%s328 + $0x4f0] sm:$0xff]
        %v985 = vld [vmem:[%s328 + $0x4f8] sm:$0xff]
        %v986 = vld [vmem:[%s328 + $0x500] sm:$0xff]
        %v987 = vld [vmem:[%s328 + $0x508] sm:$0xff]
        %v988 = vld [vmem:[%s328 + $0x510] sm:$0xff]
        %v989 = vld [vmem:[%s328 + $0x518] sm:$0xff]
        %v990 = vld [vmem:[%s328 + $0x520] sm:$0xff]
        %v991 = vld [vmem:[%s328 + $0x528] sm:$0xff]
        %v992 = vld [vmem:[%s328 + $0x530] sm:$0xff]
        %v993 = vld [vmem:[%s328 + $0x538] sm:$0xff]
        %v994 = vld [vmem:[%s328 + $0x540] sm:$0xff]
        %v995 = vld [vmem:[%s328 + $0x548] sm:$0xff]
        %v996 = vld [vmem:[%s328 + $0x550] sm:$0xff]
        %v997 = vld [vmem:[%s328 + $0x558] sm:$0xff]
        %v998 = vld [vmem:[%s328 + $0x560] sm:$0xff]
        %v999 = vld [vmem:[%s328 + $0x568] sm:$0xff]
        %v1000 = vld [vmem:[%s328 + $0x570] sm:$0xff]
        %v1001 = vld [vmem:[%s328 + $0x578] sm:$0xff]
        %v1002 = vld [vmem:[%s328 + $0x580] sm:$0xff]
        %v1003 = vld [vmem:[%s328 + $0x588] sm:$0xff]
        %v1004 = vld [vmem:[%s328 + $0x590] sm:$0xff]
        %v1005 = vld [vmem:[%s328 + $0x598] sm:$0xff]
        %v1006 = vld [vmem:[%s328 + $0x5a0] sm:$0xff]
        %v1007 = vld [vmem:[%s328 + $0x5a8] sm:$0xff]
        %v1008 = vld [vmem:[%s328 + $0x5b0] sm:$0xff]
        %v1009 = vld [vmem:[%s328 + $0x5b8] sm:$0xff]
        %v1010 = vld [vmem:[%s328 + $0x5c0] sm:$0xff]
        %v1011 = vld [vmem:[%s328 + $0x5c8] sm:$0xff]
        %v1012 = vld [vmem:[%s328 + $0x5d0] sm:$0xff]
        %v1013 = vld [vmem:[%s328 + $0x5d8] sm:$0xff]
        %v1014 = vld [vmem:[%s328 + $0x5e0] sm:$0xff]
        %v1015 = vld [vmem:[%s328 + $0x5e8] sm:$0xff]
        %v1016 = vld [vmem:[%s328 + $0x5f0] sm:$0xff]
        %v1017 = vld [vmem:[%s328 + $0x5f8] sm:$0xff]
        %v1018 = vld [vmem:[%s328 + $0x600] sm:$0xff]
        %v1019 = vld [vmem:[%s328 + $0x608] sm:$0xff]
        %v1020 = vld [vmem:[%s328 + $0x610] sm:$0xff]
        %v1021 = vld [vmem:[%s328 + $0x618] sm:$0xff]
        %v1022 = vld [vmem:[%s328 + $0x620] sm:$0xff]
        %v1023 = vld [vmem:[%s328 + $0x628] sm:$0xff]
        %v1024 = vld [vmem:[%s328 + $0x630] sm:$0xff]
        %v1025 = vld [vmem:[%s328 + $0x638] sm:$0xff]
        %v1026 = vld [vmem:[%s328 + $0x640] sm:$0xff]
        %v1027 = vld [vmem:[%s328 + $0x648] sm:$0xff]
        %v1028 = vld [vmem:[%s328 + $0x650] sm:$0xff]
        %v1029 = vld [vmem:[%s328 + $0x658] sm:$0xff]
        %v1030 = vld [vmem:[%s328 + $0x660] sm:$0xff]
        %v1031 = vld [vmem:[%s328 + $0x668] sm:$0xff]
        %v1032 = vld [vmem:[%s328 + $0x670] sm:$0xff]
        %v1033 = vld [vmem:[%s328 + $0x678] sm:$0xff]
        %v1034 = vld [vmem:[%s328 + $0x680] sm:$0xff]
        %v1035 = vld [vmem:[%s328 + $0x688] sm:$0xff]
        %v1036 = vld [vmem:[%s328 + $0x690] sm:$0xff]
        %v1037 = vld [vmem:[%s328 + $0x698] sm:$0xff]
        %v1038 = vld [vmem:[%s328 + $0x6a0] sm:$0xff]
        %v1039 = vld [vmem:[%s328 + $0x6a8] sm:$0xff]
        %v1040 = vld [vmem:[%s328 + $0x6b0] sm:$0xff]
        %v1041 = vld [vmem:[%s328 + $0x6b8] sm:$0xff]
        %v1042 = vld [vmem:[%s328 + $0x6c0] sm:$0xff]
        %v1043 = vld [vmem:[%s328 + $0x6c8] sm:$0xff]
        %v1044 = vld [vmem:[%s328 + $0x6d0] sm:$0xff]
        %v1045 = vld [vmem:[%s328 + $0x6d8] sm:$0xff]
        %v1046 = vld [vmem:[%s328 + $0x6e0] sm:$0xff]
        %v1047 = vld [vmem:[%s328 + $0x6e8] sm:$0xff]
        %v1048 = vld [vmem:[%s328 + $0x6f0] sm:$0xff]
        %v1049 = vld [vmem:[%s328 + $0x6f8] sm:$0xff]
        %v1050 = vld [vmem:[%s328 + $0x700] sm:$0xff]
        %v1051 = vld [vmem:[%s328 + $0x708] sm:$0xff]
        %v1052 = vld [vmem:[%s328 + $0x710] sm:$0xff]
        %v1053 = vld [vmem:[%s328 + $0x718] sm:$0xff]
        %v1054 = vld [vmem:[%s328 + $0x720] sm:$0xff]
        %v1055 = vld [vmem:[%s328 + $0x728] sm:$0xff]
        %v1056 = vld [vmem:[%s328 + $0x730] sm:$0xff]
        %v1057 = vld [vmem:[%s328 + $0x738] sm:$0xff]
        %v1058 = vld [vmem:[%s328 + $0x740] sm:$0xff]
        %v1059 = vld [vmem:[%s328 + $0x748] sm:$0xff]
        %v1060 = vld [vmem:[%s328 + $0x750] sm:$0xff]
        %v1061 = vld [vmem:[%s328 + $0x758] sm:$0xff]
        %v1062 = vld [vmem:[%s328 + $0x760] sm:$0xff]
        %v1063 = vld [vmem:[%s328 + $0x768] sm:$0xff]
        %v1064 = vld [vmem:[%s328 + $0x770] sm:$0xff]
        %v1065 = vld [vmem:[%s328 + $0x778] sm:$0xff]
        %v1066 = vld [vmem:[%s328 + $0x780] sm:$0xff]
        %v1067 = vld [vmem:[%s328 + $0x788] sm:$0xff]
        %v1068 = vld [vmem:[%s328 + $0x790] sm:$0xff]
        %v1069 = vld [vmem:[%s328 + $0x798] sm:$0xff]
        %v1070 = vld [vmem:[%s328 + $0x7a0] sm:$0xff]
        %v1071 = vld [vmem:[%s328 + $0x7a8] sm:$0xff]
        %v1072 = vld [vmem:[%s328 + $0x7b0] sm:$0xff]
        %v1073 = vld [vmem:[%s328 + $0x7b8] sm:$0xff]
        %v1074 = vld [vmem:[%s328 + $0x7c0] sm:$0xff]
        %v1075 = vld [vmem:[%s328 + $0x7c8] sm:$0xff]
        %v1076 = vld [vmem:[%s328 + $0x7d0] sm:$0xff]
        %v1077 = vld [vmem:[%s328 + $0x7d8] sm:$0xff]
        %v1078 = vld [vmem:[%s328 + $0x7e0] sm:$0xff]
        %v1079 = vld [vmem:[%s328 + $0x7e8] sm:$0xff]
        %v1080 = vld [vmem:[%s328 + $0x7f0] sm:$0xff]
        %v1081 = vld [vmem:[%s328 + $0x7f8] sm:$0xff]
        %v1338 = vunpack.c.l.b16 %v826
        %v1339 = vunpack.c.h.b16 %v826
        %v1340 = vunpack.c.l.b16 %v827
        %v1341 = vunpack.c.h.b16 %v827
        %v1342 = vunpack.c.l.b16 %v828
        %v1343 = vunpack.c.h.b16 %v828
        %v1344 = vunpack.c.l.b16 %v829
        %v1345 = vunpack.c.h.b16 %v829
        %v1346 = vunpack.c.l.b16 %v830
        %v1347 = vunpack.c.h.b16 %v830
        %v1348 = vunpack.c.l.b16 %v831
        %v1349 = vunpack.c.h.b16 %v831
        %v1350 = vunpack.c.l.b16 %v832
        %v1351 = vunpack.c.h.b16 %v832
        %v1352 = vunpack.c.l.b16 %v833
        %v1353 = vunpack.c.h.b16 %v833
        %v1354 = vunpack.c.l.b16 %v834
        %v1355 = vunpack.c.h.b16 %v834
        %v1356 = vunpack.c.l.b16 %v835
        %v1357 = vunpack.c.h.b16 %v835
        %v1358 = vunpack.c.l.b16 %v836
        %v1359 = vunpack.c.h.b16 %v836
        %v1360 = vunpack.c.l.b16 %v837
        %v1361 = vunpack.c.h.b16 %v837
        %v1362 = vunpack.c.l.b16 %v838
        %v1363 = vunpack.c.h.b16 %v838
        %v1364 = vunpack.c.l.b16 %v839
        %v1365 = vunpack.c.h.b16 %v839
        %v1366 = vunpack.c.l.b16 %v840
        %v1367 = vunpack.c.h.b16 %v840
        %v1368 = vunpack.c.l.b16 %v841
        %v1369 = vunpack.c.h.b16 %v841
        %v1370 = vunpack.c.l.b16 %v842
        %v1371 = vunpack.c.h.b16 %v842
        %v1372 = vunpack.c.l.b16 %v843
        %v1373 = vunpack.c.h.b16 %v843
        %v1374 = vunpack.c.l.b16 %v844
        %v1375 = vunpack.c.h.b16 %v844
        %v1376 = vunpack.c.l.b16 %v845
        %v1377 = vunpack.c.h.b16 %v845
        %v1378 = vunpack.c.l.b16 %v846
        %v1379 = vunpack.c.h.b16 %v846
        %v1380 = vunpack.c.l.b16 %v847
        %v1381 = vunpack.c.h.b16 %v847
        %v1382 = vunpack.c.l.b16 %v848
        %v1383 = vunpack.c.h.b16 %v848
        %v1384 = vunpack.c.l.b16 %v849
        %v1385 = vunpack.c.h.b16 %v849
        %v1386 = vunpack.c.l.b16 %v850
        %v1387 = vunpack.c.h.b16 %v850
        %v1388 = vunpack.c.l.b16 %v851
        %v1389 = vunpack.c.h.b16 %v851
        %v1390 = vunpack.c.l.b16 %v852
        %v1391 = vunpack.c.h.b16 %v852
        %v1392 = vunpack.c.l.b16 %v853
        %v1393 = vunpack.c.h.b16 %v853
        %v1394 = vunpack.c.l.b16 %v854
        %v1395 = vunpack.c.h.b16 %v854
        %v1396 = vunpack.c.l.b16 %v855
        %v1397 = vunpack.c.h.b16 %v855
        %v1398 = vunpack.c.l.b16 %v856
        %v1399 = vunpack.c.h.b16 %v856
        %v1400 = vunpack.c.l.b16 %v857
        %v1401 = vunpack.c.h.b16 %v857
        %v1402 = vunpack.c.l.b16 %v858
        %v1403 = vunpack.c.h.b16 %v858
        %v1404 = vunpack.c.l.b16 %v859
        %v1405 = vunpack.c.h.b16 %v859
        %v1406 = vunpack.c.l.b16 %v860
        %v1407 = vunpack.c.h.b16 %v860
        %v1408 = vunpack.c.l.b16 %v861
        %v1409 = vunpack.c.h.b16 %v861
        %v1410 = vunpack.c.l.b16 %v862
        %v1411 = vunpack.c.h.b16 %v862
        %v1412 = vunpack.c.l.b16 %v863
        %v1413 = vunpack.c.h.b16 %v863
        %v1414 = vunpack.c.l.b16 %v864
        %v1415 = vunpack.c.h.b16 %v864
        %v1416 = vunpack.c.l.b16 %v865
        %v1417 = vunpack.c.h.b16 %v865
        %v1418 = vunpack.c.l.b16 %v866
        %v1419 = vunpack.c.h.b16 %v866
        %v1420 = vunpack.c.l.b16 %v867
        %v1421 = vunpack.c.h.b16 %v867
        %v1422 = vunpack.c.l.b16 %v868
        %v1423 = vunpack.c.h.b16 %v868
        %v1424 = vunpack.c.l.b16 %v869
        %v1425 = vunpack.c.h.b16 %v869
        %v1426 = vunpack.c.l.b16 %v870
        %v1427 = vunpack.c.h.b16 %v870
        %v1428 = vunpack.c.l.b16 %v871
        %v1429 = vunpack.c.h.b16 %v871
        %v1430 = vunpack.c.l.b16 %v872
        %v1431 = vunpack.c.h.b16 %v872
        %v1432 = vunpack.c.l.b16 %v873
        %v1433 = vunpack.c.h.b16 %v873
        %v1434 = vunpack.c.l.b16 %v874
        %v1435 = vunpack.c.h.b16 %v874
        %v1436 = vunpack.c.l.b16 %v875
        %v1437 = vunpack.c.h.b16 %v875
        %v1438 = vunpack.c.l.b16 %v876
        %v1439 = vunpack.c.h.b16 %v876
        %v1440 = vunpack.c.l.b16 %v877
        %v1441 = vunpack.c.h.b16 %v877
        %v1442 = vunpack.c.l.b16 %v878
        %v1443 = vunpack.c.h.b16 %v878
        %v1444 = vunpack.c.l.b16 %v879
        %v1445 = vunpack.c.h.b16 %v879
        %v1446 = vunpack.c.l.b16 %v880
        %v1447 = vunpack.c.h.b16 %v880
        %v1448 = vunpack.c.l.b16 %v881
        %v1449 = vunpack.c.h.b16 %v881
        %v1450 = vunpack.c.l.b16 %v882
        %v1451 = vunpack.c.h.b16 %v882
        %v1452 = vunpack.c.l.b16 %v883
        %v1453 = vunpack.c.h.b16 %v883
        %v1454 = vunpack.c.l.b16 %v884
        %v1455 = vunpack.c.h.b16 %v884
        %v1456 = vunpack.c.l.b16 %v885
        %v1457 = vunpack.c.h.b16 %v885
        %v1458 = vunpack.c.l.b16 %v886
        %v1459 = vunpack.c.h.b16 %v886
        %v1460 = vunpack.c.l.b16 %v887
        %v1461 = vunpack.c.h.b16 %v887
        %v1462 = vunpack.c.l.b16 %v888
        %v1463 = vunpack.c.h.b16 %v888
        %v1464 = vunpack.c.l.b16 %v889
        %v1465 = vunpack.c.h.b16 %v889
        %v1466 = vunpack.c.l.b16 %v890
        %v1467 = vunpack.c.h.b16 %v890
        %v1468 = vunpack.c.l.b16 %v891
        %v1469 = vunpack.c.h.b16 %v891
        %v1470 = vunpack.c.l.b16 %v892
        %v1471 = vunpack.c.h.b16 %v892
        %v1472 = vunpack.c.l.b16 %v893
        %v1473 = vunpack.c.h.b16 %v893
        %v1474 = vunpack.c.l.b16 %v894
        %v1475 = vunpack.c.h.b16 %v894
        %v1476 = vunpack.c.l.b16 %v895
        %v1477 = vunpack.c.h.b16 %v895
        %v1478 = vunpack.c.l.b16 %v896
        %v1479 = vunpack.c.h.b16 %v896
        %v1480 = vunpack.c.l.b16 %v897
        %v1481 = vunpack.c.h.b16 %v897
        %v1482 = vunpack.c.l.b16 %v898
        %v1483 = vunpack.c.h.b16 %v898
        %v1484 = vunpack.c.l.b16 %v899
        %v1485 = vunpack.c.h.b16 %v899
        %v1486 = vunpack.c.l.b16 %v900
        %v1487 = vunpack.c.h.b16 %v900
        %v1488 = vunpack.c.l.b16 %v901
        %v1489 = vunpack.c.h.b16 %v901
        %v1490 = vunpack.c.l.b16 %v902
        %v1491 = vunpack.c.h.b16 %v902
        %v1492 = vunpack.c.l.b16 %v903
        %v1493 = vunpack.c.h.b16 %v903
        %v1494 = vunpack.c.l.b16 %v904
        %v1495 = vunpack.c.h.b16 %v904
        %v1496 = vunpack.c.l.b16 %v905
        %v1497 = vunpack.c.h.b16 %v905
        %v1498 = vunpack.c.l.b16 %v906
        %v1499 = vunpack.c.h.b16 %v906
        %v1500 = vunpack.c.l.b16 %v907
        %v1501 = vunpack.c.h.b16 %v907
        %v1502 = vunpack.c.l.b16 %v908
        %v1503 = vunpack.c.h.b16 %v908
        %v1504 = vunpack.c.l.b16 %v909
        %v1505 = vunpack.c.h.b16 %v909
        %v1506 = vunpack.c.l.b16 %v910
        %v1507 = vunpack.c.h.b16 %v910
        %v1508 = vunpack.c.l.b16 %v911
        %v1509 = vunpack.c.h.b16 %v911
        %v1510 = vunpack.c.l.b16 %v912
        %v1511 = vunpack.c.h.b16 %v912
        %v1512 = vunpack.c.l.b16 %v913
        %v1513 = vunpack.c.h.b16 %v913
        %v1514 = vunpack.c.l.b16 %v914
        %v1515 = vunpack.c.h.b16 %v914
        %v1516 = vunpack.c.l.b16 %v915
        %v1517 = vunpack.c.h.b16 %v915
        %v1518 = vunpack.c.l.b16 %v916
        %v1519 = vunpack.c.h.b16 %v916
        %v1520 = vunpack.c.l.b16 %v917
        %v1521 = vunpack.c.h.b16 %v917
        %v1522 = vunpack.c.l.b16 %v918
        %v1523 = vunpack.c.h.b16 %v918
        %v1524 = vunpack.c.l.b16 %v919
        %v1525 = vunpack.c.h.b16 %v919
        %v1526 = vunpack.c.l.b16 %v920
        %v1527 = vunpack.c.h.b16 %v920
        %v1528 = vunpack.c.l.b16 %v921
        %v1529 = vunpack.c.h.b16 %v921
        %v1530 = vunpack.c.l.b16 %v922
        %v1531 = vunpack.c.h.b16 %v922
        %v1532 = vunpack.c.l.b16 %v923
        %v1533 = vunpack.c.h.b16 %v923
        %v1534 = vunpack.c.l.b16 %v924
        %v1535 = vunpack.c.h.b16 %v924
        %v1536 = vunpack.c.l.b16 %v925
        %v1537 = vunpack.c.h.b16 %v925
        %v1538 = vunpack.c.l.b16 %v926
        %v1539 = vunpack.c.h.b16 %v926
        %v1540 = vunpack.c.l.b16 %v927
        %v1541 = vunpack.c.h.b16 %v927
        %v1542 = vunpack.c.l.b16 %v928
        %v1543 = vunpack.c.h.b16 %v928
        %v1544 = vunpack.c.l.b16 %v929
        %v1545 = vunpack.c.h.b16 %v929
        %v1546 = vunpack.c.l.b16 %v930
        %v1547 = vunpack.c.h.b16 %v930
        %v1548 = vunpack.c.l.b16 %v931
        %v1549 = vunpack.c.h.b16 %v931
        %v1550 = vunpack.c.l.b16 %v932
        %v1551 = vunpack.c.h.b16 %v932
        %v1552 = vunpack.c.l.b16 %v933
        %v1553 = vunpack.c.h.b16 %v933
        %v1554 = vunpack.c.l.b16 %v934
        %v1555 = vunpack.c.h.b16 %v934
        %v1556 = vunpack.c.l.b16 %v935
        %v1557 = vunpack.c.h.b16 %v935
        %v1558 = vunpack.c.l.b16 %v936
        %v1559 = vunpack.c.h.b16 %v936
        %v1560 = vunpack.c.l.b16 %v937
        %v1561 = vunpack.c.h.b16 %v937
        %v1562 = vunpack.c.l.b16 %v938
        %v1563 = vunpack.c.h.b16 %v938
        %v1564 = vunpack.c.l.b16 %v939
        %v1565 = vunpack.c.h.b16 %v939
        %v1566 = vunpack.c.l.b16 %v940
        %v1567 = vunpack.c.h.b16 %v940
        %v1568 = vunpack.c.l.b16 %v941
        %v1569 = vunpack.c.h.b16 %v941
        %v1570 = vunpack.c.l.b16 %v942
        %v1571 = vunpack.c.h.b16 %v942
        %v1572 = vunpack.c.l.b16 %v943
        %v1573 = vunpack.c.h.b16 %v943
        %v1574 = vunpack.c.l.b16 %v944
        %v1575 = vunpack.c.h.b16 %v944
        %v1576 = vunpack.c.l.b16 %v945
        %v1577 = vunpack.c.h.b16 %v945
        %v1578 = vunpack.c.l.b16 %v946
        %v1579 = vunpack.c.h.b16 %v946
        %v1580 = vunpack.c.l.b16 %v947
        %v1581 = vunpack.c.h.b16 %v947
        %v1582 = vunpack.c.l.b16 %v948
        %v1583 = vunpack.c.h.b16 %v948
        %v1584 = vunpack.c.l.b16 %v949
        %v1585 = vunpack.c.h.b16 %v949
        %v1586 = vunpack.c.l.b16 %v950
        %v1587 = vunpack.c.h.b16 %v950
        %v1588 = vunpack.c.l.b16 %v951
        %v1589 = vunpack.c.h.b16 %v951
        %v1590 = vunpack.c.l.b16 %v952
        %v1591 = vunpack.c.h.b16 %v952
        %v1592 = vunpack.c.l.b16 %v953
        %v1593 = vunpack.c.h.b16 %v953
        %v1594 = vunpack.c.l.b16 %v954
        %v1595 = vunpack.c.h.b16 %v954
        %v1596 = vunpack.c.l.b16 %v955
        %v1597 = vunpack.c.h.b16 %v955
        %v1598 = vunpack.c.l.b16 %v956
        %v1599 = vunpack.c.h.b16 %v956
        %v1600 = vunpack.c.l.b16 %v957
        %v1601 = vunpack.c.h.b16 %v957
        %v1602 = vunpack.c.l.b16 %v958
        %v1603 = vunpack.c.h.b16 %v958
        %v1604 = vunpack.c.l.b16 %v959
        %v1605 = vunpack.c.h.b16 %v959
        %v1606 = vunpack.c.l.b16 %v960
        %v1607 = vunpack.c.h.b16 %v960
        %v1608 = vunpack.c.l.b16 %v961
        %v1609 = vunpack.c.h.b16 %v961
        %v1610 = vunpack.c.l.b16 %v962
        %v1611 = vunpack.c.h.b16 %v962
        %v1612 = vunpack.c.l.b16 %v963
        %v1613 = vunpack.c.h.b16 %v963
        %v1614 = vunpack.c.l.b16 %v964
        %v1615 = vunpack.c.h.b16 %v964
        %v1616 = vunpack.c.l.b16 %v965
        %v1617 = vunpack.c.h.b16 %v965
        %v1618 = vunpack.c.l.b16 %v966
        %v1619 = vunpack.c.h.b16 %v966
        %v1620 = vunpack.c.l.b16 %v967
        %v1621 = vunpack.c.h.b16 %v967
        %v1622 = vunpack.c.l.b16 %v968
        %v1623 = vunpack.c.h.b16 %v968
        %v1624 = vunpack.c.l.b16 %v969
        %v1625 = vunpack.c.h.b16 %v969
        %v1626 = vunpack.c.l.b16 %v970
        %v1627 = vunpack.c.h.b16 %v970
        %v1628 = vunpack.c.l.b16 %v971
        %v1629 = vunpack.c.h.b16 %v971
        %v1630 = vunpack.c.l.b16 %v972
        %v1631 = vunpack.c.h.b16 %v972
        %v1632 = vunpack.c.l.b16 %v973
        %v1633 = vunpack.c.h.b16 %v973
        %v1634 = vunpack.c.l.b16 %v974
        %v1635 = vunpack.c.h.b16 %v974
        %v1636 = vunpack.c.l.b16 %v975
        %v1637 = vunpack.c.h.b16 %v975
        %v1638 = vunpack.c.l.b16 %v976
        %v1639 = vunpack.c.h.b16 %v976
        %v1640 = vunpack.c.l.b16 %v977
        %v1641 = vunpack.c.h.b16 %v977
        %v1642 = vunpack.c.l.b16 %v978
        %v1643 = vunpack.c.h.b16 %v978
        %v1644 = vunpack.c.l.b16 %v979
        %v1645 = vunpack.c.h.b16 %v979
        %v1646 = vunpack.c.l.b16 %v980
        %v1647 = vunpack.c.h.b16 %v980
        %v1648 = vunpack.c.l.b16 %v981
        %v1649 = vunpack.c.h.b16 %v981
        %v1650 = vunpack.c.l.b16 %v982
        %v1651 = vunpack.c.h.b16 %v982
        %v1652 = vunpack.c.l.b16 %v983
        %v1653 = vunpack.c.h.b16 %v983
        %v1654 = vunpack.c.l.b16 %v984
        %v1655 = vunpack.c.h.b16 %v984
        %v1656 = vunpack.c.l.b16 %v985
        %v1657 = vunpack.c.h.b16 %v985
        %v1658 = vunpack.c.l.b16 %v986
        %v1659 = vunpack.c.h.b16 %v986
        %v1660 = vunpack.c.l.b16 %v987
        %v1661 = vunpack.c.h.b16 %v987
        %v1662 = vunpack.c.l.b16 %v988
        %v1663 = vunpack.c.h.b16 %v988
        %v1664 = vunpack.c.l.b16 %v989
        %v1665 = vunpack.c.h.b16 %v989
        %v1666 = vunpack.c.l.b16 %v990
        %v1667 = vunpack.c.h.b16 %v990
        %v1668 = vunpack.c.l.b16 %v991
        %v1669 = vunpack.c.h.b16 %v991
        %v1670 = vunpack.c.l.b16 %v992
        %v1671 = vunpack.c.h.b16 %v992
        %v1672 = vunpack.c.l.b16 %v993
        %v1673 = vunpack.c.h.b16 %v993
        %v1674 = vunpack.c.l.b16 %v994
        %v1675 = vunpack.c.h.b16 %v994
        %v1676 = vunpack.c.l.b16 %v995
        %v1677 = vunpack.c.h.b16 %v995
        %v1678 = vunpack.c.l.b16 %v996
        %v1679 = vunpack.c.h.b16 %v996
        %v1680 = vunpack.c.l.b16 %v997
        %v1681 = vunpack.c.h.b16 %v997
        %v1682 = vunpack.c.l.b16 %v998
        %v1683 = vunpack.c.h.b16 %v998
        %v1684 = vunpack.c.l.b16 %v999
        %v1685 = vunpack.c.h.b16 %v999
        %v1686 = vunpack.c.l.b16 %v1000
        %v1687 = vunpack.c.h.b16 %v1000
        %v1688 = vunpack.c.l.b16 %v1001
        %v1689 = vunpack.c.h.b16 %v1001
        %v1690 = vunpack.c.l.b16 %v1002
        %v1691 = vunpack.c.h.b16 %v1002
        %v1692 = vunpack.c.l.b16 %v1003
        %v1693 = vunpack.c.h.b16 %v1003
        %v1694 = vunpack.c.l.b16 %v1004
        %v1695 = vunpack.c.h.b16 %v1004
        %v1696 = vunpack.c.l.b16 %v1005
        %v1697 = vunpack.c.h.b16 %v1005
        %v1698 = vunpack.c.l.b16 %v1006
        %v1699 = vunpack.c.h.b16 %v1006
        %v1700 = vunpack.c.l.b16 %v1007
        %v1701 = vunpack.c.h.b16 %v1007
        %v1702 = vunpack.c.l.b16 %v1008
        %v1703 = vunpack.c.h.b16 %v1008
        %v1704 = vunpack.c.l.b16 %v1009
        %v1705 = vunpack.c.h.b16 %v1009
        %v1706 = vunpack.c.l.b16 %v1010
        %v1707 = vunpack.c.h.b16 %v1010
        %v1708 = vunpack.c.l.b16 %v1011
        %v1709 = vunpack.c.h.b16 %v1011
        %v1710 = vunpack.c.l.b16 %v1012
        %v1711 = vunpack.c.h.b16 %v1012
        %v1712 = vunpack.c.l.b16 %v1013
        %v1713 = vunpack.c.h.b16 %v1013
        %v1714 = vunpack.c.l.b16 %v1014
        %v1715 = vunpack.c.h.b16 %v1014
        %v1716 = vunpack.c.l.b16 %v1015
        %v1717 = vunpack.c.h.b16 %v1015
        %v1718 = vunpack.c.l.b16 %v1016
        %v1719 = vunpack.c.h.b16 %v1016
        %v1720 = vunpack.c.l.b16 %v1017
        %v1721 = vunpack.c.h.b16 %v1017
        %v1722 = vunpack.c.l.b16 %v1018
        %v1723 = vunpack.c.h.b16 %v1018
        %v1724 = vunpack.c.l.b16 %v1019
        %v1725 = vunpack.c.h.b16 %v1019
        %v1726 = vunpack.c.l.b16 %v1020
        %v1727 = vunpack.c.h.b16 %v1020
        %v1728 = vunpack.c.l.b16 %v1021
        %v1729 = vunpack.c.h.b16 %v1021
        %v1730 = vunpack.c.l.b16 %v1022
        %v1731 = vunpack.c.h.b16 %v1022
        %v1732 = vunpack.c.l.b16 %v1023
        %v1733 = vunpack.c.h.b16 %v1023
        %v1734 = vunpack.c.l.b16 %v1024
        %v1735 = vunpack.c.h.b16 %v1024
        %v1736 = vunpack.c.l.b16 %v1025
        %v1737 = vunpack.c.h.b16 %v1025
        %v1738 = vunpack.c.l.b16 %v1026
        %v1739 = vunpack.c.h.b16 %v1026
        %v1740 = vunpack.c.l.b16 %v1027
        %v1741 = vunpack.c.h.b16 %v1027
        %v1742 = vunpack.c.l.b16 %v1028
        %v1743 = vunpack.c.h.b16 %v1028
        %v1744 = vunpack.c.l.b16 %v1029
        %v1745 = vunpack.c.h.b16 %v1029
        %v1746 = vunpack.c.l.b16 %v1030
        %v1747 = vunpack.c.h.b16 %v1030
        %v1748 = vunpack.c.l.b16 %v1031
        %v1749 = vunpack.c.h.b16 %v1031
        %v1750 = vunpack.c.l.b16 %v1032
        %v1751 = vunpack.c.h.b16 %v1032
        %v1752 = vunpack.c.l.b16 %v1033
        %v1753 = vunpack.c.h.b16 %v1033
        %v1754 = vunpack.c.l.b16 %v1034
        %v1755 = vunpack.c.h.b16 %v1034
        %v1756 = vunpack.c.l.b16 %v1035
        %v1757 = vunpack.c.h.b16 %v1035
        %v1758 = vunpack.c.l.b16 %v1036
        %v1759 = vunpack.c.h.b16 %v1036
        %v1760 = vunpack.c.l.b16 %v1037
        %v1761 = vunpack.c.h.b16 %v1037
        %v1762 = vunpack.c.l.b16 %v1038
        %v1763 = vunpack.c.h.b16 %v1038
        %v1764 = vunpack.c.l.b16 %v1039
        %v1765 = vunpack.c.h.b16 %v1039
        %v1766 = vunpack.c.l.b16 %v1040
        %v1767 = vunpack.c.h.b16 %v1040
        %v1768 = vunpack.c.l.b16 %v1041
        %v1769 = vunpack.c.h.b16 %v1041
        %v1770 = vunpack.c.l.b16 %v1042
        %v1771 = vunpack.c.h.b16 %v1042
        %v1772 = vunpack.c.l.b16 %v1043
        %v1773 = vunpack.c.h.b16 %v1043
        %v1774 = vunpack.c.l.b16 %v1044
        %v1775 = vunpack.c.h.b16 %v1044
        %v1776 = vunpack.c.l.b16 %v1045
        %v1777 = vunpack.c.h.b16 %v1045
        %v1778 = vunpack.c.l.b16 %v1046
        %v1779 = vunpack.c.h.b16 %v1046
        %v1780 = vunpack.c.l.b16 %v1047
        %v1781 = vunpack.c.h.b16 %v1047
        %v1782 = vunpack.c.l.b16 %v1048
        %v1783 = vunpack.c.h.b16 %v1048
        %v1784 = vunpack.c.l.b16 %v1049
        %v1785 = vunpack.c.h.b16 %v1049
        %v1786 = vunpack.c.l.b16 %v1050
        %v1787 = vunpack.c.h.b16 %v1050
        %v1788 = vunpack.c.l.b16 %v1051
        %v1789 = vunpack.c.h.b16 %v1051
        %v1790 = vunpack.c.l.b16 %v1052
        %v1791 = vunpack.c.h.b16 %v1052
        %v1792 = vunpack.c.l.b16 %v1053
        %v1793 = vunpack.c.h.b16 %v1053
        %v1794 = vunpack.c.l.b16 %v1054
        %v1795 = vunpack.c.h.b16 %v1054
        %v1796 = vunpack.c.l.b16 %v1055
        %v1797 = vunpack.c.h.b16 %v1055
        %v1798 = vunpack.c.l.b16 %v1056
        %v1799 = vunpack.c.h.b16 %v1056
        %v1800 = vunpack.c.l.b16 %v1057
        %v1801 = vunpack.c.h.b16 %v1057
        %v1802 = vunpack.c.l.b16 %v1058
        %v1803 = vunpack.c.h.b16 %v1058
        %v1804 = vunpack.c.l.b16 %v1059
        %v1805 = vunpack.c.h.b16 %v1059
        %v1806 = vunpack.c.l.b16 %v1060
        %v1807 = vunpack.c.h.b16 %v1060
        %v1808 = vunpack.c.l.b16 %v1061
        %v1809 = vunpack.c.h.b16 %v1061
        %v1810 = vunpack.c.l.b16 %v1062
        %v1811 = vunpack.c.h.b16 %v1062
        %v1812 = vunpack.c.l.b16 %v1063
        %v1813 = vunpack.c.h.b16 %v1063
        %v1814 = vunpack.c.l.b16 %v1064
        %v1815 = vunpack.c.h.b16 %v1064
        %v1816 = vunpack.c.l.b16 %v1065
        %v1817 = vunpack.c.h.b16 %v1065
        %v1818 = vunpack.c.l.b16 %v1066
        %v1819 = vunpack.c.h.b16 %v1066
        %v1820 = vunpack.c.l.b16 %v1067
        %v1821 = vunpack.c.h.b16 %v1067
        %v1822 = vunpack.c.l.b16 %v1068
        %v1823 = vunpack.c.h.b16 %v1068
        %v1824 = vunpack.c.l.b16 %v1069
        %v1825 = vunpack.c.h.b16 %v1069
        %v1826 = vunpack.c.l.b16 %v1070
        %v1827 = vunpack.c.h.b16 %v1070
        %v1828 = vunpack.c.l.b16 %v1071
        %v1829 = vunpack.c.h.b16 %v1071
        %v1830 = vunpack.c.l.b16 %v1072
        %v1831 = vunpack.c.h.b16 %v1072
        %v1832 = vunpack.c.l.b16 %v1073
        %v1833 = vunpack.c.h.b16 %v1073
        %v1834 = vunpack.c.l.b16 %v1074
        %v1835 = vunpack.c.h.b16 %v1074
        %v1836 = vunpack.c.l.b16 %v1075
        %v1837 = vunpack.c.h.b16 %v1075
        %v1838 = vunpack.c.l.b16 %v1076
        %v1839 = vunpack.c.h.b16 %v1076
        %v1840 = vunpack.c.l.b16 %v1077
        %v1841 = vunpack.c.h.b16 %v1077
        %v1842 = vunpack.c.l.b16 %v1078
        %v1843 = vunpack.c.h.b16 %v1078
        %v1844 = vunpack.c.l.b16 %v1079
        %v1845 = vunpack.c.h.b16 %v1079
        %v1846 = vunpack.c.l.b16 %v1080
        %v1847 = vunpack.c.h.b16 %v1080
        %v1848 = vunpack.c.l.b16 %v1081
        %v1849 = vunpack.c.h.b16 %v1081
        %v1850 = vpack.c.b16 %v1340, %v1338
        %v1851 = vpack.c.b16 %v1341, %v1339
        %v1852 = vpack.c.b16 %v1344, %v1342
        %v1853 = vpack.c.b16 %v1345, %v1343
        %v1854 = vpack.c.b16 %v1348, %v1346
        %v1855 = vpack.c.b16 %v1349, %v1347
        %v1856 = vpack.c.b16 %v1352, %v1350
        %v1857 = vpack.c.b16 %v1353, %v1351
        %v1858 = vpack.c.b16 %v1356, %v1354
        %v1859 = vpack.c.b16 %v1357, %v1355
        %v1860 = vpack.c.b16 %v1360, %v1358
        %v1861 = vpack.c.b16 %v1361, %v1359
        %v1862 = vpack.c.b16 %v1364, %v1362
        %v1863 = vpack.c.b16 %v1365, %v1363
        %v1864 = vpack.c.b16 %v1368, %v1366
        %v1865 = vpack.c.b16 %v1369, %v1367
        %v1866 = vpack.c.b16 %v1372, %v1370
        %v1867 = vpack.c.b16 %v1373, %v1371
        %v1868 = vpack.c.b16 %v1376, %v1374
        %v1869 = vpack.c.b16 %v1377, %v1375
        %v1870 = vpack.c.b16 %v1380, %v1378
        %v1871 = vpack.c.b16 %v1381, %v1379
        %v1872 = vpack.c.b16 %v1384, %v1382
        %v1873 = vpack.c.b16 %v1385, %v1383
        %v1874 = vpack.c.b16 %v1388, %v1386
        %v1875 = vpack.c.b16 %v1389, %v1387
        %v1876 = vpack.c.b16 %v1392, %v1390
        %v1877 = vpack.c.b16 %v1393, %v1391
        %v1878 = vpack.c.b16 %v1396, %v1394
        %v1879 = vpack.c.b16 %v1397, %v1395
        %v1880 = vpack.c.b16 %v1400, %v1398
        %v1881 = vpack.c.b16 %v1401, %v1399
        %v1882 = vpack.c.b16 %v1404, %v1402
        %v1883 = vpack.c.b16 %v1405, %v1403
        %v1884 = vpack.c.b16 %v1408, %v1406
        %v1885 = vpack.c.b16 %v1409, %v1407
        %v1886 = vpack.c.b16 %v1412, %v1410
        %v1887 = vpack.c.b16 %v1413, %v1411
        %v1888 = vpack.c.b16 %v1416, %v1414
        %v1889 = vpack.c.b16 %v1417, %v1415
        %v1890 = vpack.c.b16 %v1420, %v1418
        %v1891 = vpack.c.b16 %v1421, %v1419
        %v1892 = vpack.c.b16 %v1424, %v1422
        %v1893 = vpack.c.b16 %v1425, %v1423
        %v1894 = vpack.c.b16 %v1428, %v1426
        %v1895 = vpack.c.b16 %v1429, %v1427
        %v1896 = vpack.c.b16 %v1432, %v1430
        %v1897 = vpack.c.b16 %v1433, %v1431
        %v1898 = vpack.c.b16 %v1436, %v1434
        %v1899 = vpack.c.b16 %v1437, %v1435
        %v1900 = vpack.c.b16 %v1440, %v1438
        %v1901 = vpack.c.b16 %v1441, %v1439
        %v1902 = vpack.c.b16 %v1444, %v1442
        %v1903 = vpack.c.b16 %v1445, %v1443
        %v1904 = vpack.c.b16 %v1448, %v1446
        %v1905 = vpack.c.b16 %v1449, %v1447
        %v1906 = vpack.c.b16 %v1452, %v1450
        %v1907 = vpack.c.b16 %v1453, %v1451
        %v1908 = vpack.c.b16 %v1456, %v1454
        %v1909 = vpack.c.b16 %v1457, %v1455
        %v1910 = vpack.c.b16 %v1460, %v1458
        %v1911 = vpack.c.b16 %v1461, %v1459
        %v1912 = vpack.c.b16 %v1464, %v1462
        %v1913 = vpack.c.b16 %v1465, %v1463
        %v1914 = vpack.c.b16 %v1468, %v1466
        %v1915 = vpack.c.b16 %v1469, %v1467
        %v1916 = vpack.c.b16 %v1472, %v1470
        %v1917 = vpack.c.b16 %v1473, %v1471
        %v1918 = vpack.c.b16 %v1476, %v1474
        %v1919 = vpack.c.b16 %v1477, %v1475
        %v1920 = vpack.c.b16 %v1480, %v1478
        %v1921 = vpack.c.b16 %v1481, %v1479
        %v1922 = vpack.c.b16 %v1484, %v1482
        %v1923 = vpack.c.b16 %v1485, %v1483
        %v1924 = vpack.c.b16 %v1488, %v1486
        %v1925 = vpack.c.b16 %v1489, %v1487
        %v1926 = vpack.c.b16 %v1492, %v1490
        %v1927 = vpack.c.b16 %v1493, %v1491
        %v1928 = vpack.c.b16 %v1496, %v1494
        %v1929 = vpack.c.b16 %v1497, %v1495
        %v1930 = vpack.c.b16 %v1500, %v1498
        %v1931 = vpack.c.b16 %v1501, %v1499
        %v1932 = vpack.c.b16 %v1504, %v1502
        %v1933 = vpack.c.b16 %v1505, %v1503
        %v1934 = vpack.c.b16 %v1508, %v1506
        %v1935 = vpack.c.b16 %v1509, %v1507
        %v1936 = vpack.c.b16 %v1512, %v1510
        %v1937 = vpack.c.b16 %v1513, %v1511
        %v1938 = vpack.c.b16 %v1516, %v1514
        %v1939 = vpack.c.b16 %v1517, %v1515
        %v1940 = vpack.c.b16 %v1520, %v1518
        %v1941 = vpack.c.b16 %v1521, %v1519
        %v1942 = vpack.c.b16 %v1524, %v1522
        %v1943 = vpack.c.b16 %v1525, %v1523
        %v1944 = vpack.c.b16 %v1528, %v1526
        %v1945 = vpack.c.b16 %v1529, %v1527
        %v1946 = vpack.c.b16 %v1532, %v1530
        %v1947 = vpack.c.b16 %v1533, %v1531
        %v1948 = vpack.c.b16 %v1536, %v1534
        %v1949 = vpack.c.b16 %v1537, %v1535
        %v1950 = vpack.c.b16 %v1540, %v1538
        %v1951 = vpack.c.b16 %v1541, %v1539
        %v1952 = vpack.c.b16 %v1544, %v1542
        %v1953 = vpack.c.b16 %v1545, %v1543
        %v1954 = vpack.c.b16 %v1548, %v1546
        %v1955 = vpack.c.b16 %v1549, %v1547
        %v1956 = vpack.c.b16 %v1552, %v1550
        %v1957 = vpack.c.b16 %v1553, %v1551
        %v1958 = vpack.c.b16 %v1556, %v1554
        %v1959 = vpack.c.b16 %v1557, %v1555
        %v1960 = vpack.c.b16 %v1560, %v1558
        %v1961 = vpack.c.b16 %v1561, %v1559
        %v1962 = vpack.c.b16 %v1564, %v1562
        %v1963 = vpack.c.b16 %v1565, %v1563
        %v1964 = vpack.c.b16 %v1568, %v1566
        %v1965 = vpack.c.b16 %v1569, %v1567
        %v1966 = vpack.c.b16 %v1572, %v1570
        %v1967 = vpack.c.b16 %v1573, %v1571
        %v1968 = vpack.c.b16 %v1576, %v1574
        %v1969 = vpack.c.b16 %v1577, %v1575
        %v1970 = vpack.c.b16 %v1580, %v1578
        %v1971 = vpack.c.b16 %v1581, %v1579
        %v1972 = vpack.c.b16 %v1584, %v1582
        %v1973 = vpack.c.b16 %v1585, %v1583
        %v1974 = vpack.c.b16 %v1588, %v1586
        %v1975 = vpack.c.b16 %v1589, %v1587
        %v1976 = vpack.c.b16 %v1592, %v1590
        %v1977 = vpack.c.b16 %v1593, %v1591
        %v1978 = vpack.c.b16 %v1596, %v1594
        %v1979 = vpack.c.b16 %v1597, %v1595
        %v1980 = vpack.c.b16 %v1600, %v1598
        %v1981 = vpack.c.b16 %v1601, %v1599
        %v1982 = vpack.c.b16 %v1604, %v1602
        %v1983 = vpack.c.b16 %v1605, %v1603
        %v1984 = vpack.c.b16 %v1608, %v1606
        %v1985 = vpack.c.b16 %v1609, %v1607
        %v1986 = vpack.c.b16 %v1612, %v1610
        %v1987 = vpack.c.b16 %v1613, %v1611
        %v1988 = vpack.c.b16 %v1616, %v1614
        %v1989 = vpack.c.b16 %v1617, %v1615
        %v1990 = vpack.c.b16 %v1620, %v1618
        %v1991 = vpack.c.b16 %v1621, %v1619
        %v1992 = vpack.c.b16 %v1624, %v1622
        %v1993 = vpack.c.b16 %v1625, %v1623
        %v1994 = vpack.c.b16 %v1628, %v1626
        %v1995 = vpack.c.b16 %v1629, %v1627
        %v1996 = vpack.c.b16 %v1632, %v1630
        %v1997 = vpack.c.b16 %v1633, %v1631
        %v1998 = vpack.c.b16 %v1636, %v1634
        %v1999 = vpack.c.b16 %v1637, %v1635
        %v2000 = vpack.c.b16 %v1640, %v1638
        %v2001 = vpack.c.b16 %v1641, %v1639
        %v2002 = vpack.c.b16 %v1644, %v1642
        %v2003 = vpack.c.b16 %v1645, %v1643
        %v2004 = vpack.c.b16 %v1648, %v1646
        %v2005 = vpack.c.b16 %v1649, %v1647
        %v2006 = vpack.c.b16 %v1652, %v1650
        %v2007 = vpack.c.b16 %v1653, %v1651
        %v2008 = vpack.c.b16 %v1656, %v1654
        %v2009 = vpack.c.b16 %v1657, %v1655
        %v2010 = vpack.c.b16 %v1660, %v1658
        %v2011 = vpack.c.b16 %v1661, %v1659
        %v2012 = vpack.c.b16 %v1664, %v1662
        %v2013 = vpack.c.b16 %v1665, %v1663
        %v2014 = vpack.c.b16 %v1668, %v1666
        %v2015 = vpack.c.b16 %v1669, %v1667
        %v2016 = vpack.c.b16 %v1672, %v1670
        %v2017 = vpack.c.b16 %v1673, %v1671
        %v2018 = vpack.c.b16 %v1676, %v1674
        %v2019 = vpack.c.b16 %v1677, %v1675
        %v2020 = vpack.c.b16 %v1680, %v1678
        %v2021 = vpack.c.b16 %v1681, %v1679
        %v2022 = vpack.c.b16 %v1684, %v1682
        %v2023 = vpack.c.b16 %v1685, %v1683
        %v2024 = vpack.c.b16 %v1688, %v1686
        %v2025 = vpack.c.b16 %v1689, %v1687
        %v2026 = vpack.c.b16 %v1692, %v1690
        %v2027 = vpack.c.b16 %v1693, %v1691
        %v2028 = vpack.c.b16 %v1696, %v1694
        %v2029 = vpack.c.b16 %v1697, %v1695
        %v2030 = vpack.c.b16 %v1700, %v1698
        %v2031 = vpack.c.b16 %v1701, %v1699
        %v2032 = vpack.c.b16 %v1704, %v1702
        %v2033 = vpack.c.b16 %v1705, %v1703
        %v2034 = vpack.c.b16 %v1708, %v1706
        %v2035 = vpack.c.b16 %v1709, %v1707
        %v2036 = vpack.c.b16 %v1712, %v1710
        %v2037 = vpack.c.b16 %v1713, %v1711
        %v2038 = vpack.c.b16 %v1716, %v1714
        %v2039 = vpack.c.b16 %v1717, %v1715
        %v2040 = vpack.c.b16 %v1720, %v1718
        %v2041 = vpack.c.b16 %v1721, %v1719
        %v2042 = vpack.c.b16 %v1724, %v1722
        %v2043 = vpack.c.b16 %v1725, %v1723
        %v2044 = vpack.c.b16 %v1728, %v1726
        %v2045 = vpack.c.b16 %v1729, %v1727
        %v2046 = vpack.c.b16 %v1732, %v1730
        %v2047 = vpack.c.b16 %v1733, %v1731
        %v2048 = vpack.c.b16 %v1736, %v1734
        %v2049 = vpack.c.b16 %v1737, %v1735
        %v2050 = vpack.c.b16 %v1740, %v1738
        %v2051 = vpack.c.b16 %v1741, %v1739
        %v2052 = vpack.c.b16 %v1744, %v1742
        %v2053 = vpack.c.b16 %v1745, %v1743
        %v2054 = vpack.c.b16 %v1748, %v1746
        %v2055 = vpack.c.b16 %v1749, %v1747
        %v2056 = vpack.c.b16 %v1752, %v1750
        %v2057 = vpack.c.b16 %v1753, %v1751
        %v2058 = vpack.c.b16 %v1756, %v1754
        %v2059 = vpack.c.b16 %v1757, %v1755
        %v2060 = vpack.c.b16 %v1760, %v1758
        %v2061 = vpack.c.b16 %v1761, %v1759
        %v2062 = vpack.c.b16 %v1764, %v1762
        %v2063 = vpack.c.b16 %v1765, %v1763
        %v2064 = vpack.c.b16 %v1768, %v1766
        %v2065 = vpack.c.b16 %v1769, %v1767
        %v2066 = vpack.c.b16 %v1772, %v1770
        %v2067 = vpack.c.b16 %v1773, %v1771
        %v2068 = vpack.c.b16 %v1776, %v1774
        %v2069 = vpack.c.b16 %v1777, %v1775
        %v2070 = vpack.c.b16 %v1780, %v1778
        %v2071 = vpack.c.b16 %v1781, %v1779
        %v2072 = vpack.c.b16 %v1784, %v1782
        %v2073 = vpack.c.b16 %v1785, %v1783
        %v2074 = vpack.c.b16 %v1788, %v1786
        %v2075 = vpack.c.b16 %v1789, %v1787
        %v2076 = vpack.c.b16 %v1792, %v1790
        %v2077 = vpack.c.b16 %v1793, %v1791
        %v2078 = vpack.c.b16 %v1796, %v1794
        %v2079 = vpack.c.b16 %v1797, %v1795
        %v2080 = vpack.c.b16 %v1800, %v1798
        %v2081 = vpack.c.b16 %v1801, %v1799
        %v2082 = vpack.c.b16 %v1804, %v1802
        %v2083 = vpack.c.b16 %v1805, %v1803
        %v2084 = vpack.c.b16 %v1808, %v1806
        %v2085 = vpack.c.b16 %v1809, %v1807
        %v2086 = vpack.c.b16 %v1812, %v1810
        %v2087 = vpack.c.b16 %v1813, %v1811
        %v2088 = vpack.c.b16 %v1816, %v1814
        %v2089 = vpack.c.b16 %v1817, %v1815
        %v2090 = vpack.c.b16 %v1820, %v1818
        %v2091 = vpack.c.b16 %v1821, %v1819
        %v2092 = vpack.c.b16 %v1824, %v1822
        %v2093 = vpack.c.b16 %v1825, %v1823
        %v2094 = vpack.c.b16 %v1828, %v1826
        %v2095 = vpack.c.b16 %v1829, %v1827
        %v2096 = vpack.c.b16 %v1832, %v1830
        %v2097 = vpack.c.b16 %v1833, %v1831
        %v2098 = vpack.c.b16 %v1836, %v1834
        %v2099 = vpack.c.b16 %v1837, %v1835
        %v2100 = vpack.c.b16 %v1840, %v1838
        %v2101 = vpack.c.b16 %v1841, %v1839
        %v2102 = vpack.c.b16 %v1844, %v1842
        %v2103 = vpack.c.b16 %v1845, %v1843
        %v2104 = vpack.c.b16 %v1848, %v1846
        %v2105 = vpack.c.b16 %v1849, %v1847
        %2362 = vmatprep.subr.bf16.mxu0 %v1851
        %2363 = vmatpush1.bf16.msra.mxu0 %v1850
        %2364 = vmatprep.subr.bf16.mxu0 %v1853
        %2365 = vmatpush1.bf16.msra.mxu0 %v1852
        %2366 = vmatprep.subr.bf16.mxu0 %v1855
        %2367 = vmatpush1.bf16.msra.mxu0 %v1854
        %2368 = vmatprep.subr.bf16.mxu0 %v1857
        %2369 = vmatpush1.bf16.msra.mxu0 %v1856
        %2370 = vmatprep.subr.bf16.mxu0 %v1859
        %2371 = vmatpush1.bf16.msra.mxu0 %v1858
        %2372 = vmatprep.subr.bf16.mxu0 %v1861
        %2373 = vmatpush1.bf16.msra.mxu0 %v1860
        %2374 = vmatprep.subr.bf16.mxu0 %v1863
        %2375 = vmatpush1.bf16.msra.mxu0 %v1862
        %2376 = vmatprep.subr.bf16.mxu0 %v1865
        %2377 = vmatpush1.bf16.msra.mxu0 %v1864
        %2378 = vmatprep.subr.bf16.mxu0 %v1867
        %2379 = vmatpush1.bf16.msra.mxu0 %v1866
        %2380 = vmatprep.subr.bf16.mxu0 %v1869
        %2381 = vmatpush1.bf16.msra.mxu0 %v1868
        %2382 = vmatprep.subr.bf16.mxu0 %v1871
        %2383 = vmatpush1.bf16.msra.mxu0 %v1870
        %2384 = vmatprep.subr.bf16.mxu0 %v1873
        %2385 = vmatpush1.bf16.msra.mxu0 %v1872
        %2386 = vmatprep.subr.bf16.mxu0 %v1875
        %2387 = vmatpush1.bf16.msra.mxu0 %v1874
        %2388 = vmatprep.subr.bf16.mxu0 %v1877
        %2389 = vmatpush1.bf16.msra.mxu0 %v1876
        %2390 = vmatprep.subr.bf16.mxu0 %v1879
        %2391 = vmatpush1.bf16.msra.mxu0 %v1878
        %2392 = vmatprep.subr.bf16.mxu0 %v1881
        %2393 = vmatpush1.bf16.msra.mxu0 %v1880
        %2394 = vmatprep.mubr.bf16.mxu0 %v811
        %2395 = vmatmul.mubr.bf16.gmra.mrb[0].mxu0 %v810
        %v2396 = vpop.f32.mrb[0].mxu0
        %v2397 = vadd.f32 0.0, %v2396
        %v2398 = vpop.f32.mrb[0].mxu0
        %v2399 = vadd.f32 0.0, %v2398
        %v2400 = vpop.f32.mrb[0].mxu0
        %v2401 = vpop.f32.mrb[0].mxu0
        %2402 = vdwg.mxu0
        %2403 = vmatprep.subr.bf16.mxu0 %v1883
        %2404 = vmatpush1.bf16.msra.mxu0 %v1882
        %2405 = vmatprep.subr.bf16.mxu0 %v1885
        %2406 = vmatpush1.bf16.msra.mxu0 %v1884
        %2407 = vmatprep.subr.bf16.mxu0 %v1887
        %2408 = vmatpush1.bf16.msra.mxu0 %v1886
        %2409 = vmatprep.subr.bf16.mxu0 %v1889
        %2410 = vmatpush1.bf16.msra.mxu0 %v1888
        %2411 = vmatprep.subr.bf16.mxu0 %v1891
        %2412 = vmatpush1.bf16.msra.mxu0 %v1890
        %2413 = vmatprep.subr.bf16.mxu0 %v1893
        %2414 = vmatpush1.bf16.msra.mxu0 %v1892
        %2415 = vmatprep.subr.bf16.mxu0 %v1895
        %2416 = vmatpush1.bf16.msra.mxu0 %v1894
        %2417 = vmatprep.subr.bf16.mxu0 %v1897
        %2418 = vmatpush1.bf16.msra.mxu0 %v1896
        %2419 = vmatprep.subr.bf16.mxu0 %v1899
        %2420 = vmatpush1.bf16.msra.mxu0 %v1898
        %2421 = vmatprep.subr.bf16.mxu0 %v1901
        %2422 = vmatpush1.bf16.msra.mxu0 %v1900
        %2423 = vmatprep.subr.bf16.mxu0 %v1903
        %2424 = vmatpush1.bf16.msra.mxu0 %v1902
        %2425 = vmatprep.subr.bf16.mxu0 %v1905
        %2426 = vmatpush1.bf16.msra.mxu0 %v1904
        %2427 = vmatprep.subr.bf16.mxu0 %v1907
        %2428 = vmatpush1.bf16.msra.mxu0 %v1906
        %2429 = vmatprep.subr.bf16.mxu0 %v1909
        %2430 = vmatpush1.bf16.msra.mxu0 %v1908
        %2431 = vmatprep.subr.bf16.mxu0 %v1911
        %2432 = vmatpush1.bf16.msra.mxu0 %v1910
        %2433 = vmatprep.subr.bf16.mxu0 %v1913
        %2434 = vmatpush1.bf16.msra.mxu0 %v1912
        %2435 = vmatprep.mubr.bf16.mxu0 %v813
        %2436 = vmatmul.mubr.bf16.gmra.mrb[0].mxu0 %v812
        %v2437 = vpop.f32.mrb[0].mxu0
        %v2438 = vadd.f32 %v2397, %v2437
        %v2439 = vpop.f32.mrb[0].mxu0
        %v2440 = vadd.f32 %v2399, %v2439
        %v2441 = vpop.f32.mrb[0].mxu0
        %v2442 = vpop.f32.mrb[0].mxu0
        %2443 = vdwg.mxu0
        %2444 = vmatprep.subr.bf16.mxu0 %v1915
        %2445 = vmatpush1.bf16.msra.mxu0 %v1914
        %2446 = vmatprep.subr.bf16.mxu0 %v1917
        %2447 = vmatpush1.bf16.msra.mxu0 %v1916
        %2448 = vmatprep.subr.bf16.mxu0 %v1919
        %2449 = vmatpush1.bf16.msra.mxu0 %v1918
        %2450 = vmatprep.subr.bf16.mxu0 %v1921
        %2451 = vmatpush1.bf16.msra.mxu0 %v1920
        %2452 = vmatprep.subr.bf16.mxu0 %v1923
        %2453 = vmatpush1.bf16.msra.mxu0 %v1922
        %2454 = vmatprep.subr.bf16.mxu0 %v1925
        %2455 = vmatpush1.bf16.msra.mxu0 %v1924
        %2456 = vmatprep.subr.bf16.mxu0 %v1927
        %2457 = vmatpush1.bf16.msra.mxu0 %v1926
        %2458 = vmatprep.subr.bf16.mxu0 %v1929
        %2459 = vmatpush1.bf16.msra.mxu0 %v1928
        %2460 = vmatprep.subr.bf16.mxu0 %v1931
        %2461 = vmatpush1.bf16.msra.mxu0 %v1930
        %2462 = vmatprep.subr.bf16.mxu0 %v1933
        %2463 = vmatpush1.bf16.msra.mxu0 %v1932
        %2464 = vmatprep.subr.bf16.mxu0 %v1935
        %2465 = vmatpush1.bf16.msra.mxu0 %v1934
        %2466 = vmatprep.subr.bf16.mxu0 %v1937
        %2467 = vmatpush1.bf16.msra.mxu0 %v1936
        %2468 = vmatprep.subr.bf16.mxu0 %v1939
        %2469 = vmatpush1.bf16.msra.mxu0 %v1938
        %2470 = vmatprep.subr.bf16.mxu0 %v1941
        %2471 = vmatpush1.bf16.msra.mxu0 %v1940
        %2472 = vmatprep.subr.bf16.mxu0 %v1943
        %2473 = vmatpush1.bf16.msra.mxu0 %v1942
        %2474 = vmatprep.subr.bf16.mxu0 %v1945
        %2475 = vmatpush1.bf16.msra.mxu0 %v1944
        %2476 = vmatprep.mubr.bf16.mxu0 %v815
        %2477 = vmatmul.mubr.bf16.gmra.mrb[0].mxu0 %v814
        %v2478 = vpop.f32.mrb[0].mxu0
        %v2479 = vadd.f32 %v2438, %v2478
        %v2480 = vpop.f32.mrb[0].mxu0
        %v2481 = vadd.f32 %v2440, %v2480
        %v2482 = vpop.f32.mrb[0].mxu0
        %v2483 = vpop.f32.mrb[0].mxu0
        %2484 = vdwg.mxu0
        %2485 = vmatprep.subr.bf16.mxu0 %v1947
        %2486 = vmatpush1.bf16.msra.mxu0 %v1946
        %2487 = vmatprep.subr.bf16.mxu0 %v1949
        %2488 = vmatpush1.bf16.msra.mxu0 %v1948
        %2489 = vmatprep.subr.bf16.mxu0 %v1951
        %2490 = vmatpush1.bf16.msra.mxu0 %v1950
        %2491 = vmatprep.subr.bf16.mxu0 %v1953
        %2492 = vmatpush1.bf16.msra.mxu0 %v1952
        %2493 = vmatprep.subr.bf16.mxu0 %v1955
        %2494 = vmatpush1.bf16.msra.mxu0 %v1954
        %2495 = vmatprep.subr.bf16.mxu0 %v1957
        %2496 = vmatpush1.bf16.msra.mxu0 %v1956
        %2497 = vmatprep.subr.bf16.mxu0 %v1959
        %2498 = vmatpush1.bf16.msra.mxu0 %v1958
        %2499 = vmatprep.subr.bf16.mxu0 %v1961
        %2500 = vmatpush1.bf16.msra.mxu0 %v1960
        %2501 = vmatprep.subr.bf16.mxu0 %v1963
        %2502 = vmatpush1.bf16.msra.mxu0 %v1962
        %2503 = vmatprep.subr.bf16.mxu0 %v1965
        %2504 = vmatpush1.bf16.msra.mxu0 %v1964
        %2505 = vmatprep.subr.bf16.mxu0 %v1967
        %2506 = vmatpush1.bf16.msra.mxu0 %v1966
        %2507 = vmatprep.subr.bf16.mxu0 %v1969
        %2508 = vmatpush1.bf16.msra.mxu0 %v1968
        %2509 = vmatprep.subr.bf16.mxu0 %v1971
        %2510 = vmatpush1.bf16.msra.mxu0 %v1970
        %2511 = vmatprep.subr.bf16.mxu0 %v1973
        %2512 = vmatpush1.bf16.msra.mxu0 %v1972
        %2513 = vmatprep.subr.bf16.mxu0 %v1975
        %2514 = vmatpush1.bf16.msra.mxu0 %v1974
        %2515 = vmatprep.subr.bf16.mxu0 %v1977
        %2516 = vmatpush1.bf16.msra.mxu0 %v1976
        %2517 = vmatprep.mubr.bf16.mxu0 %v817
        %2518 = vmatmul.mubr.bf16.gmra.mrb[0].mxu0 %v816
        %v2519 = vpop.f32.mrb[0].mxu0
        %v2520 = vadd.f32 %v2479, %v2519
        %v2521 = vpop.f32.mrb[0].mxu0
        %v2522 = vadd.f32 %v2481, %v2521
        %v2523 = vpop.f32.mrb[0].mxu0
        %v2524 = vpop.f32.mrb[0].mxu0
        %2525 = vdwg.mxu0
        %2526 = vmatprep.subr.bf16.mxu0 %v1979
        %2527 = vmatpush1.bf16.msra.mxu0 %v1978
        %2528 = vmatprep.subr.bf16.mxu0 %v1981
        %2529 = vmatpush1.bf16.msra.mxu0 %v1980
        %2530 = vmatprep.subr.bf16.mxu0 %v1983
        %2531 = vmatpush1.bf16.msra.mxu0 %v1982
        %2532 = vmatprep.subr.bf16.mxu0 %v1985
        %2533 = vmatpush1.bf16.msra.mxu0 %v1984
        %2534 = vmatprep.subr.bf16.mxu0 %v1987
        %2535 = vmatpush1.bf16.msra.mxu0 %v1986
        %2536 = vmatprep.subr.bf16.mxu0 %v1989
        %2537 = vmatpush1.bf16.msra.mxu0 %v1988
        %2538 = vmatprep.subr.bf16.mxu0 %v1991
        %2539 = vmatpush1.bf16.msra.mxu0 %v1990
        %2540 = vmatprep.subr.bf16.mxu0 %v1993
        %2541 = vmatpush1.bf16.msra.mxu0 %v1992
        %2542 = vmatprep.subr.bf16.mxu0 %v1995
        %2543 = vmatpush1.bf16.msra.mxu0 %v1994
        %2544 = vmatprep.subr.bf16.mxu0 %v1997
        %2545 = vmatpush1.bf16.msra.mxu0 %v1996
        %2546 = vmatprep.subr.bf16.mxu0 %v1999
        %2547 = vmatpush1.bf16.msra.mxu0 %v1998
        %2548 = vmatprep.subr.bf16.mxu0 %v2001
        %2549 = vmatpush1.bf16.msra.mxu0 %v2000
        %2550 = vmatprep.subr.bf16.mxu0 %v2003
        %2551 = vmatpush1.bf16.msra.mxu0 %v2002
        %2552 = vmatprep.subr.bf16.mxu0 %v2005
        %2553 = vmatpush1.bf16.msra.mxu0 %v2004
        %2554 = vmatprep.subr.bf16.mxu0 %v2007
        %2555 = vmatpush1.bf16.msra.mxu0 %v2006
        %2556 = vmatprep.subr.bf16.mxu0 %v2009
        %2557 = vmatpush1.bf16.msra.mxu0 %v2008
        %2558 = vmatprep.mubr.bf16.mxu0 %v819
        %2559 = vmatmul.mubr.bf16.gmra.mrb[0].mxu0 %v818
        %v2560 = vpop.f32.mrb[0].mxu0
        %v2561 = vadd.f32 %v2520, %v2560
        %v2562 = vpop.f32.mrb[0].mxu0
        %v2563 = vadd.f32 %v2522, %v2562
        %v2564 = vpop.f32.mrb[0].mxu0
        %v2565 = vpop.f32.mrb[0].mxu0
        %2566 = vdwg.mxu0
        %2567 = vmatprep.subr.bf16.mxu0 %v2011
        %2568 = vmatpush1.bf16.msra.mxu0 %v2010
        %2569 = vmatprep.subr.bf16.mxu0 %v2013
        %2570 = vmatpush1.bf16.msra.mxu0 %v2012
        %2571 = vmatprep.subr.bf16.mxu0 %v2015
        %2572 = vmatpush1.bf16.msra.mxu0 %v2014
        %2573 = vmatprep.subr.bf16.mxu0 %v2017
        %2574 = vmatpush1.bf16.msra.mxu0 %v2016
        %2575 = vmatprep.subr.bf16.mxu0 %v2019
        %2576 = vmatpush1.bf16.msra.mxu0 %v2018
        %2577 = vmatprep.subr.bf16.mxu0 %v2021
        %2578 = vmatpush1.bf16.msra.mxu0 %v2020
        %2579 = vmatprep.subr.bf16.mxu0 %v2023
        %2580 = vmatpush1.bf16.msra.mxu0 %v2022
        %2581 = vmatprep.subr.bf16.mxu0 %v2025
        %2582 = vmatpush1.bf16.msra.mxu0 %v2024
        %2583 = vmatprep.subr.bf16.mxu0 %v2027
        %2584 = vmatpush1.bf16.msra.mxu0 %v2026
        %2585 = vmatprep.subr.bf16.mxu0 %v2029
        %2586 = vmatpush1.bf16.msra.mxu0 %v2028
        %2587 = vmatprep.subr.bf16.mxu0 %v2031
        %2588 = vmatpush1.bf16.msra.mxu0 %v2030
        %2589 = vmatprep.subr.bf16.mxu0 %v2033
        %2590 = vmatpush1.bf16.msra.mxu0 %v2032
        %2591 = vmatprep.subr.bf16.mxu0 %v2035
        %2592 = vmatpush1.bf16.msra.mxu0 %v2034
        %2593 = vmatprep.subr.bf16.mxu0 %v2037
        %2594 = vmatpush1.bf16.msra.mxu0 %v2036
        %2595 = vmatprep.subr.bf16.mxu0 %v2039
        %2596 = vmatpush1.bf16.msra.mxu0 %v2038
        %2597 = vmatprep.subr.bf16.mxu0 %v2041
        %2598 = vmatpush1.bf16.msra.mxu0 %v2040
        %2599 = vmatprep.mubr.bf16.mxu0 %v821
        %2600 = vmatmul.mubr.bf16.gmra.mrb[0].mxu0 %v820
        %v2601 = vpop.f32.mrb[0].mxu0
        %v2602 = vadd.f32 %v2561, %v2601
        %v2603 = vpop.f32.mrb[0].mxu0
        %v2604 = vadd.f32 %v2563, %v2603
        %v2605 = vpop.f32.mrb[0].mxu0
        %v2606 = vpop.f32.mrb[0].mxu0
        %2607 = vdwg.mxu0
        %2608 = vmatprep.subr.bf16.mxu0 %v2043
        %2609 = vmatpush1.bf16.msra.mxu0 %v2042
        %2610 = vmatprep.subr.bf16.mxu0 %v2045
        %2611 = vmatpush1.bf16.msra.mxu0 %v2044
        %2612 = vmatprep.subr.bf16.mxu0 %v2047
        %2613 = vmatpush1.bf16.msra.mxu0 %v2046
        %2614 = vmatprep.subr.bf16.mxu0 %v2049
        %2615 = vmatpush1.bf16.msra.mxu0 %v2048
        %2616 = vmatprep.subr.bf16.mxu0 %v2051
        %2617 = vmatpush1.bf16.msra.mxu0 %v2050
        %2618 = vmatprep.subr.bf16.mxu0 %v2053
        %2619 = vmatpush1.bf16.msra.mxu0 %v2052
        %2620 = vmatprep.subr.bf16.mxu0 %v2055
        %2621 = vmatpush1.bf16.msra.mxu0 %v2054
        %2622 = vmatprep.subr.bf16.mxu0 %v2057
        %2623 = vmatpush1.bf16.msra.mxu0 %v2056
        %2624 = vmatprep.subr.bf16.mxu0 %v2059
        %2625 = vmatpush1.bf16.msra.mxu0 %v2058
        %2626 = vmatprep.subr.bf16.mxu0 %v2061
        %2627 = vmatpush1.bf16.msra.mxu0 %v2060
        %2628 = vmatprep.subr.bf16.mxu0 %v2063
        %2629 = vmatpush1.bf16.msra.mxu0 %v2062
        %2630 = vmatprep.subr.bf16.mxu0 %v2065
        %2631 = vmatpush1.bf16.msra.mxu0 %v2064
        %2632 = vmatprep.subr.bf16.mxu0 %v2067
        %2633 = vmatpush1.bf16.msra.mxu0 %v2066
        %2634 = vmatprep.subr.bf16.mxu0 %v2069
        %2635 = vmatpush1.bf16.msra.mxu0 %v2068
        %2636 = vmatprep.subr.bf16.mxu0 %v2071
        %2637 = vmatpush1.bf16.msra.mxu0 %v2070
        %2638 = vmatprep.subr.bf16.mxu0 %v2073
        %2639 = vmatpush1.bf16.msra.mxu0 %v2072
        %2640 = vmatprep.mubr.bf16.mxu0 %v823
        %2641 = vmatmul.mubr.bf16.gmra.mrb[0].mxu0 %v822
        %v2642 = vpop.f32.mrb[0].mxu0
        %v2643 = vadd.f32 %v2602, %v2642
        %v2644 = vpop.f32.mrb[0].mxu0
        %v2645 = vadd.f32 %v2604, %v2644
        %v2646 = vpop.f32.mrb[0].mxu0
        %v2647 = vpop.f32.mrb[0].mxu0
        %2648 = vdwg.mxu0
        %2649 = vmatprep.subr.bf16.mxu0 %v2075
        %2650 = vmatpush1.bf16.msra.mxu0 %v2074
        %2651 = vmatprep.subr.bf16.mxu0 %v2077
        %2652 = vmatpush1.bf16.msra.mxu0 %v2076
        %2653 = vmatprep.subr.bf16.mxu0 %v2079
        %2654 = vmatpush1.bf16.msra.mxu0 %v2078
        %2655 = vmatprep.subr.bf16.mxu0 %v2081
        %2656 = vmatpush1.bf16.msra.mxu0 %v2080
        %2657 = vmatprep.subr.bf16.mxu0 %v2083
        %2658 = vmatpush1.bf16.msra.mxu0 %v2082
        %2659 = vmatprep.subr.bf16.mxu0 %v2085
        %2660 = vmatpush1.bf16.msra.mxu0 %v2084
        %2661 = vmatprep.subr.bf16.mxu0 %v2087
        %2662 = vmatpush1.bf16.msra.mxu0 %v2086
        %2663 = vmatprep.subr.bf16.mxu0 %v2089
        %2664 = vmatpush1.bf16.msra.mxu0 %v2088
        %2665 = vmatprep.subr.bf16.mxu0 %v2091
        %2666 = vmatpush1.bf16.msra.mxu0 %v2090
        %2667 = vmatprep.subr.bf16.mxu0 %v2093
        %2668 = vmatpush1.bf16.msra.mxu0 %v2092
        %2669 = vmatprep.subr.bf16.mxu0 %v2095
        %2670 = vmatpush1.bf16.msra.mxu0 %v2094
        %2671 = vmatprep.subr.bf16.mxu0 %v2097
        %2672 = vmatpush1.bf16.msra.mxu0 %v2096
        %2673 = vmatprep.subr.bf16.mxu0 %v2099
        %2674 = vmatpush1.bf16.msra.mxu0 %v2098
        %2675 = vmatprep.subr.bf16.mxu0 %v2101
        %2676 = vmatpush1.bf16.msra.mxu0 %v2100
        %2677 = vmatprep.subr.bf16.mxu0 %v2103
        %2678 = vmatpush1.bf16.msra.mxu0 %v2102
        %2679 = vmatprep.subr.bf16.mxu0 %v2105
        %2680 = vmatpush1.bf16.msra.mxu0 %v2104
        %2681 = vmatprep.mubr.bf16.mxu0 %v825
        %2682 = vmatmul.mubr.bf16.gmra.mrb[0].mxu0 %v824
        %v2683 = vpop.f32.mrb[0].mxu0
        %v2684 = vadd.f32 %v2643, %v2683
        %v2685 = vpop.f32.mrb[0].mxu0
        %v2686 = vadd.f32 %v2645, %v2685
        %v2687 = vpop.f32.mrb[0].mxu0
        %v2688 = vpop.f32.mrb[0].mxu0
        %2689 = vdwg.mxu0
        %v2692 = vcombine.low %v2684, %v2686
        %v2694 = vunpack.c.l.s4 1983009808
        %v2695 = vunpack.c.0.s8 %v2694
        %v2696 = vlaneseq
        %v2697 = vshrl.u32 %v2696, 7
        %v2698 = vsub.s32 %v2695, %v2697
        %v2699 = vrot.slane %v2692, %v2698
        %v2701 = vadd.f32 %v721, %v2699
        %2702 = vst [vmem:[%s399] sm:$0xf] %v2701
        %s2703 = smul.u32 2, %s29
        %p2704 = scmp.lt.s32.totalorder %s2703, 3
        %s2705 = scalar_select %p2704, %s2703, 3
        %s2706 = smul.addr %s2705, 2
        %s2707 = scalar_lea.vmem %s5, %s2706
        // Predicated region
        $region61: #{deepstn_pallas_forward.7} parent=39 // pred_check
          %p2708 = pneg %p187
        $region62: #{deepstn_pallas_forward.7} parent=39 // pred_check_branch
          %2710 = sbr.rel (%p2708) target = $region64
        $region63: #{deepstn_pallas_forward.7} parent=39 // pred_region
          %s2711 = smul.u32 2, %s29
        $region64: #{deepstn_pallas_forward.7} parent=39 // pred_fallthru
          _
      $region40: #{deepstn_pallas_forward.7} parent=5 // pred_fallthru
        _
      %p2712 = scmp.le.s32.totalorder 2, %s20
      // Predicated region
      $region65: #{deepstn_pallas_forward.7} parent=5 // pred_check
        %p2713 = pneg %p2712
      $region66: #{deepstn_pallas_forward.7} parent=5 // pred_check_branch
        %2715 = sbr.rel (%p2713) target = $region68
      $region67: #{deepstn_pallas_forward.7} parent=5 // pred_region
        %s2716 = ssub.s32 %s20, 2
        // Predicated region
        $region69: #{deepstn_pallas_forward.7} parent=67 // pred_check
          %p2717 = pneg %p193
        $region70: #{deepstn_pallas_forward.7} parent=67 // pred_check_branch
          %2719 = sbr.rel (%p2717) target = $region72
        $region71: #{deepstn_pallas_forward.7} parent=67 // pred_region
          %s2720 = smul.u32 2, %s31
          %p2721 = scmp.lt.s32.totalorder %s2720, 3
          %s2722 = scalar_select %p2721, %s2720, 3
          %s2723 = smul.addr %s2722, 2
          %s2724 = scalar_lea.vmem %s5, %s2723
        $region72: #{deepstn_pallas_forward.7} parent=67 // pred_fallthru
          _
      $region68: #{deepstn_pallas_forward.7} parent=5 // pred_fallthru
        _
    $region6: #{deepstn_pallas_forward.7} parent=1 // loop_footer
      %s24 = sadd.s32 1, %s20
    $region7: #{deepstn_pallas_forward.7} parent=1 // loop_footer_branch
      %19 = sbr.rel target = $region3
    $region8: #{deepstn_pallas_forward.7} parent=1 // loop_exit
      _
    %2725 = vsyncpa [#allocation3], 1
    %s2726 = scalar_lea.sflag [#allocation3], 1
    %2727 = vsyncpa %s2726, 1
    %2728 = vsyncpa [#allocation5], 1
    %s2729 = scalar_lea.sflag [#allocation5], 1
    %2730 = vsyncpa %s2729, 1
    %2731 = vsyncpa [#allocation8], 1
    %s2732 = scalar_lea.sflag [#allocation8], 1
    %2733 = vsyncpa %s2732, 1

// kernel: deepstn_pallas_forward.11
$region0: #{deepstn_pallas_forward.11}
  #allocation0 [shape = 'u32[]', space=smem, size = 0x4, offset = 0x4, fixed_abs, tag = 'smem constant byte address 0x4 - core index']
  #allocation1 [shape = 'u32[144,128]{1,0:T(1,128)}', space=vmem, size = 0x12000, scoped, tag = 'internal scratch']
  %s0 = inlined_call_operand.vmem [shape: f32[128,64], index: 0, kind: input, shape index: {}]
  %s1 = inlined_call_operand.vmem [shape: f32[1,64], index: 1, kind: input, shape index: {}]
  %s2 = inlined_call_operand.vmem [shape: f32[1,64], index: 2, kind: input, shape index: {}]
  %s3 = inlined_call_operand.vmem [shape: f32[64,2], index: 3, kind: input, shape index: {}]
  %s4 = inlined_call_operand.vmem [shape: f32[1,2], index: 4, kind: input, shape index: {}]
  %s5 = inlined_call_operand.vmem [shape: f32[128,2], index: 5, kind: output, shape index: {}]
  %s6 = sld [smem:[#allocation0]]
  $region53: #{deepstn_pallas_forward.11} parent=0
    _
  %s8 = ssub.s32 1, %s6
  %s9 = scalar_select 0, %s8, %s6
  loop: start=0, step=1, limit=4
  $region2: #{deepstn_pallas_forward.11} parent=0 // loop_pre_header
    _
  $region3: #{deepstn_pallas_forward.11} parent=0 // loop_header
    %s11 = sphi 0, %s15
    %p12 = scmp.ge.s32.totalorder %s11, 4
    %s21 = sphi 0, %s23
    %s24 = sphi 0, %s21
    %s25 = sphi 0, %s24
    %s41 = sphi 0, %s25
    %s45 = sphi 0, %s45
    %s47 = sphi 0, %s45
    %s48 = sphi 0, %s47
    %s62 = sphi 0, %s48
    %s66 = sphi 0, %s66
    %s68 = sphi 0, %s66
    %s69 = sphi 0, %s68
    %s83 = sphi 0, %s69
    %s87 = sphi 0, %s87
    %s89 = sphi 0, %s87
    %s90 = sphi 0, %s89
    %s104 = sphi 0, %s90
    %s108 = sphi 0, %s108
    %s110 = sphi 0, %s108
    %s111 = sphi 0, %s110
    %s125 = sphi 0, %s111
    %s131 = sphi 0, %s133
    %s134 = sphi 0, %s131
    %s135 = sphi 0, %s134
    %s151 = sphi 0, %s135
  $region4: #{deepstn_pallas_forward.11} parent=0 // loop_header_branch
    %14 = sbr.rel (%p12) target = $region8
  $region5: #{deepstn_pallas_forward.11} parent=0 // loop_body
    %s16 = ssub.s32 %s11, 1
    %s17 = ssub.s32 %s11, 2
    %s18 = sadd.s32 %s11, 1
    %s19 = ssub.s32 %s11, %s18
    %p20 = scmp.eq.s32.totalorder %s19, 0
    %s22 = sadd.s32 %s21, 1
    %s23 = scalar_select %p20, %s21, %s22
    %p26 = pneg %p20
    %p27 = scmp.eq.s32.totalorder %s11, 1
    %p28 = por %p26, %p27
    %p29 = scmp.ne.s32.totalorder %s21, %s24
    %p30 = scmp.eq.s32.totalorder %s11, 0
    %p31 = por %p29, %p30
    %p32 = scmp.ne.s32.totalorder %s21, %s24
    %p33 = scmp.eq.s32.totalorder %s16, 1
    %p34 = por %p32, %p33
    %p35 = scmp.ne.s32.totalorder %s24, %s25
    %p36 = scmp.eq.s32.totalorder %s16, 0
    %p37 = por %p35, %p36
    %p38 = scmp.ne.s32.totalorder %s24, %s25
    %p39 = scmp.eq.s32.totalorder %s17, 1
    %p40 = por %p38, %p39
    %p42 = scmp.ne.s32.totalorder %s25, %s41
    %p43 = scmp.eq.s32.totalorder %s17, 0
    %p44 = por %p42, %p43
    %s46 = sadd.s32 %s45, 1
    %p49 = scmp.eq.s32.totalorder %s11, 1
    %p50 = scmp.ne.s32.totalorder %s45, %s47
    %p51 = scmp.eq.s32.totalorder %s11, 0
    %p52 = por %p50, %p51
    %p53 = scmp.ne.s32.totalorder %s45, %s47
    %p54 = scmp.eq.s32.totalorder %s16, 1
    %p55 = por %p53, %p54
    %p56 = scmp.ne.s32.totalorder %s47, %s48
    %p57 = scmp.eq.s32.totalorder %s16, 0
    %p58 = por %p56, %p57
    %p59 = scmp.ne.s32.totalorder %s47, %s48
    %p60 = scmp.eq.s32.totalorder %s17, 1
    %p61 = por %p59, %p60
    %p63 = scmp.ne.s32.totalorder %s48, %s62
    %p64 = scmp.eq.s32.totalorder %s17, 0
    %p65 = por %p63, %p64
    %s67 = sadd.s32 %s66, 1
    %p70 = scmp.eq.s32.totalorder %s11, 1
    %p71 = scmp.ne.s32.totalorder %s66, %s68
    %p72 = scmp.eq.s32.totalorder %s11, 0
    %p73 = por %p71, %p72
    %p74 = scmp.ne.s32.totalorder %s66, %s68
    %p75 = scmp.eq.s32.totalorder %s16, 1
    %p76 = por %p74, %p75
    %p77 = scmp.ne.s32.totalorder %s68, %s69
    %p78 = scmp.eq.s32.totalorder %s16, 0
    %p79 = por %p77, %p78
    %p80 = scmp.ne.s32.totalorder %s68, %s69
    %p81 = scmp.eq.s32.totalorder %s17, 1
    %p82 = por %p80, %p81
    %p84 = scmp.ne.s32.totalorder %s69, %s83
    %p85 = scmp.eq.s32.totalorder %s17, 0
    %p86 = por %p84, %p85
    %s88 = sadd.s32 %s87, 1
    %p91 = scmp.eq.s32.totalorder %s11, 1
    %p92 = scmp.ne.s32.totalorder %s87, %s89
    %p93 = scmp.eq.s32.totalorder %s11, 0
    %p94 = por %p92, %p93
    %p95 = scmp.ne.s32.totalorder %s87, %s89
    %p96 = scmp.eq.s32.totalorder %s16, 1
    %p97 = por %p95, %p96
    %p98 = scmp.ne.s32.totalorder %s89, %s90
    %p99 = scmp.eq.s32.totalorder %s16, 0
    %p100 = por %p98, %p99
    %p101 = scmp.ne.s32.totalorder %s89, %s90
    %p102 = scmp.eq.s32.totalorder %s17, 1
    %p103 = por %p101, %p102
    %p105 = scmp.ne.s32.totalorder %s90, %s104
    %p106 = scmp.eq.s32.totalorder %s17, 0
    %p107 = por %p105, %p106
    %s109 = sadd.s32 %s108, 1
    %p112 = scmp.eq.s32.totalorder %s11, 1
    %p113 = scmp.ne.s32.totalorder %s108, %s110
    %p114 = scmp.eq.s32.totalorder %s11, 0
    %p115 = por %p113, %p114
    %p116 = scmp.ne.s32.totalorder %s108, %s110
    %p117 = scmp.eq.s32.totalorder %s16, 1
    %p118 = por %p116, %p117
    %p119 = scmp.ne.s32.totalorder %s110, %s111
    %p120 = scmp.eq.s32.totalorder %s16, 0
    %p121 = por %p119, %p120
    %p122 = scmp.ne.s32.totalorder %s110, %s111
    %p123 = scmp.eq.s32.totalorder %s17, 1
    %p124 = por %p122, %p123
    %p126 = scmp.ne.s32.totalorder %s111, %s125
    %p127 = scmp.eq.s32.totalorder %s17, 0
    %p128 = por %p126, %p127
    %s129 = ssub.s32 %s11, %s18
    %p130 = scmp.eq.s32.totalorder %s129, 0
    %s132 = sadd.s32 %s131, 1
    %s133 = scalar_select %p130, %s131, %s132
    %p136 = pneg %p130
    %p137 = scmp.eq.s32.totalorder %s11, 1
    %p138 = por %p136, %p137
    %p139 = scmp.ne.s32.totalorder %s131, %s134
    %p140 = scmp.eq.s32.totalorder %s11, 0
    %p141 = por %p139, %p140
    %p142 = scmp.ne.s32.totalorder %s131, %s134
    %p143 = scmp.eq.s32.totalorder %s16, 1
    %p144 = por %p142, %p143
    %p145 = scmp.ne.s32.totalorder %s134, %s135
    %p146 = scmp.eq.s32.totalorder %s16, 0
    %p147 = por %p145, %p146
    %p148 = scmp.ne.s32.totalorder %s134, %s135
    %p149 = scmp.eq.s32.totalorder %s17, 1
    %p150 = por %p148, %p149
    %p152 = scmp.ne.s32.totalorder %s135, %s151
    %p153 = scmp.eq.s32.totalorder %s17, 0
    %p154 = por %p152, %p153
    %p155 = scmp.le.s32.totalorder 1, %s11
    %p156 = scmp.lt.s32.totalorder %s11, 3
    %p157 = pnand %p155, %p156
    %p158 = pneg %p157
    // Predicated region
    $region9: #{deepstn_pallas_forward.11} parent=5 // pred_check
      _
    $region10: #{deepstn_pallas_forward.11} parent=5 // pred_check_branch
      %160 = sbr.rel (%p157) target = $region12
    $region11: #{deepstn_pallas_forward.11} parent=5 // pred_region
      %s161 = ssub.s32 %s11, 1
      // Predicated region
      $region13: #{deepstn_pallas_forward.11} parent=11 // pred_check
        %p162 = pneg %p58
      $region14: #{deepstn_pallas_forward.11} parent=11 // pred_check_branch
        %164 = sbr.rel (%p162) target = $region16
      $region15: #{deepstn_pallas_forward.11} parent=11 // pred_region
        _
      $region16: #{deepstn_pallas_forward.11} parent=11 // pred_fallthru
        _
      // Predicated region
      $region17: #{deepstn_pallas_forward.11} parent=11 // pred_check
        %p165 = pneg %p79
      $region18: #{deepstn_pallas_forward.11} parent=11 // pred_check_branch
        %167 = sbr.rel (%p165) target = $region20
      $region19: #{deepstn_pallas_forward.11} parent=11 // pred_region
        _
      $region20: #{deepstn_pallas_forward.11} parent=11 // pred_fallthru
        _
      // Predicated region
      $region21: #{deepstn_pallas_forward.11} parent=11 // pred_check
        %p168 = pneg %p100
      $region22: #{deepstn_pallas_forward.11} parent=11 // pred_check_branch
        %170 = sbr.rel (%p168) target = $region24
      $region23: #{deepstn_pallas_forward.11} parent=11 // pred_region
        _
      $region24: #{deepstn_pallas_forward.11} parent=11 // pred_fallthru
        _
      // Predicated region
      $region25: #{deepstn_pallas_forward.11} parent=11 // pred_check
        %p171 = pneg %p121
      $region26: #{deepstn_pallas_forward.11} parent=11 // pred_check_branch
        %173 = sbr.rel (%p171) target = $region28
      $region27: #{deepstn_pallas_forward.11} parent=11 // pred_region
        _
      $region28: #{deepstn_pallas_forward.11} parent=11 // pred_fallthru
        _
    $region12: #{deepstn_pallas_forward.11} parent=5 // pred_fallthru
      _
    %p174 = scmp.lt.s32.totalorder %s11, 2
    // Predicated region
    $region29: #{deepstn_pallas_forward.11} parent=5 // pred_check
      %p175 = pneg %p174
    $region30: #{deepstn_pallas_forward.11} parent=5 // pred_check_branch
      %177 = sbr.rel (%p175) target = $region32
    $region31: #{deepstn_pallas_forward.11} parent=5 // pred_region
      // Predicated region
      $region33: #{deepstn_pallas_forward.11} parent=31 // pred_check
        %p178 = pneg %p31
      $region34: #{deepstn_pallas_forward.11} parent=31 // pred_check_branch
        %180 = sbr.rel (%p178) target = $region36
      $region35: #{deepstn_pallas_forward.11} parent=31 // pred_region
        %s181 = smul.u32 8, %s11
        %p182 = scmp.lt.s32.totalorder %s181, 15
        %s183 = scalar_select %p182, %s181, 15
        %s184 = smul.addr %s183, 8
        %s185 = scalar_lea.vmem %s0, %s184
        %s186 = smul.u32 8, %s11
      $region36: #{deepstn_pallas_forward.11} parent=31 // pred_fallthru
        _
    $region32: #{deepstn_pallas_forward.11} parent=5 // pred_fallthru
      _
    %p187 = scmp.le.s32.totalorder 1, %s11
    %p188 = scmp.lt.s32.totalorder %s11, 3
    %p189 = pnand %p187, %p188
    %p190 = pneg %p189
    // Predicated region
    $region37: #{deepstn_pallas_forward.11} parent=5 // pred_check
      _
    $region38: #{deepstn_pallas_forward.11} parent=5 // pred_check_branch
      %192 = sbr.rel (%p189) target = $region40
    $region39: #{deepstn_pallas_forward.11} parent=5 // pred_region
      %s193 = ssub.s32 %s11, 1
      %s194 = smul.u32 8, %s16
      %p195 = scmp.lt.s32.totalorder %s194, 15
      %s196 = scalar_select %p195, %s194, 15
      %s197 = smul.addr %s196, 8
      %s198 = scalar_lea.vmem %s0, %s197
      %p199 = pneg %p37
      %p200 = pneg %p34
      %p201 = pneg %p58
      %p202 = pneg %p55
      %p203 = pneg %p79
      %p204 = pneg %p76
      %p205 = pneg %p100
      %p206 = pneg %p97
      %p207 = pneg %p121
      %p208 = pneg %p118
      %p209 = pneg %p147
      %p210 = pneg %p144
      %s211 = smul.u32 8, %s16
      %p212 = scmp.lt.s32.totalorder %s211, 15
      %s213 = scalar_select %p212, %s211, 15
      %s214 = smul.addr %s213, 8
      %s215 = scalar_lea.vmem %s5, %s214
      %s216 = smul.u32 8, %s16
      %p217 = scmp.lt.s32.totalorder %s216, 15
      %s218 = scalar_select %p217, %s216, 15
      %s219 = smul.addr %s218, 8
      %s220 = scalar_lea.vmem %s0, %s219
      %s221 = smul.u32 8, %s16
      %s222 = smul.u32 8, %s16
      %p223 = scmp.lt.s32.totalorder %s222, 15
      %s224 = scalar_select %p223, %s222, 15
      %s225 = smul.addr %s224, 8
      %s226 = scalar_lea.vmem %s5, %s225
      %s227 = smul.u32 8, %s16
      %v228 = vld [vmem:[%s220] sm:$0xff]
      %v229 = vld [vmem:[%s220 + $0x8] sm:$0xff]
      %v230 = vld [vmem:[%s220 + $0x10] sm:$0xff]
      %v231 = vld [vmem:[%s220 + $0x18] sm:$0xff]
      %v232 = vld [vmem:[%s220 + $0x20] sm:$0xff]
      %v233 = vld [vmem:[%s220 + $0x28] sm:$0xff]
      %v234 = vld [vmem:[%s220 + $0x30] sm:$0xff]
      %v235 = vld [vmem:[%s220 + $0x38] sm:$0xff]
      %v236 = vmax.f32 %v228, 0.0
      %v237 = vmax.f32 %v229, 0.0
      %v238 = vmax.f32 %v230, 0.0
      %v239 = vmax.f32 %v231, 0.0
      %v240 = vmax.f32 %v232, 0.0
      %v241 = vmax.f32 %v233, 0.0
      %v242 = vmax.f32 %v234, 0.0
      %v243 = vmax.f32 %v235, 0.0
      %v244 = vld [vmem:[%s1] sm:$0x1]
      %v246 = vlaneseq
      %v247 = vshrl.u32 %v246, 7
      %v248 = vsub.s32 0, %v247
      %v249 = vrot.slane %v244, %v248
      %v251 = vmul.f32 %v236, %v249
      %v252 = vmul.f32 %v237, %v249
      %v253 = vmul.f32 %v238, %v249
      %v254 = vmul.f32 %v239, %v249
      %v255 = vmul.f32 %v240, %v249
      %v256 = vmul.f32 %v241, %v249
      %v257 = vmul.f32 %v242, %v249
      %v258 = vmul.f32 %v243, %v249
      %v259 = vld [vmem:[%s2] sm:$0x1]
      %v261 = vlaneseq
      %v262 = vshrl.u32 %v261, 7
      %v263 = vsub.s32 0, %v262
      %v264 = vrot.slane %v259, %v263
      %v266 = vadd.f32 %v251, %v264
      %v267 = vadd.f32 %v252, %v264
      %v268 = vadd.f32 %v253, %v264
      %v269 = vadd.f32 %v254, %v264
      %v270 = vadd.f32 %v255, %v264
      %v271 = vadd.f32 %v256, %v264
      %v272 = vadd.f32 %v257, %v264
      %v273 = vadd.f32 %v258, %v264
      %v274 = vld [vmem:[%s3] sm:$0xff]
      %v275 = vld [vmem:[%s3 + $0x8] sm:$0xff]
      %v276 = vld [vmem:[%s3 + $0x10] sm:$0xff]
      %v277 = vld [vmem:[%s3 + $0x18] sm:$0xff]
      %v278 = vld [vmem:[%s3 + $0x20] sm:$0xff]
      %v279 = vld [vmem:[%s3 + $0x28] sm:$0xff]
      %v280 = vld [vmem:[%s3 + $0x30] sm:$0xff]
      %v281 = vld [vmem:[%s3 + $0x38] sm:$0xff]
      %v282 = vld [vmem:[%s4] sm:$0x1]
      %v284 = vlaneseq
      %v285 = vshrl.u32 %v284, 7
      %v286 = vsub.s32 0, %v285
      %v287 = vrot.slane %v282, %v286
      %vm289 = vcmask 523264
      %v291 = vsel %vm289, %v266, 0
      %v294 = vsel %vm289, %v267, 0
      %v297 = vsel %vm289, %v268, 0
      %v300 = vsel %vm289, %v269, 0
      %v303 = vsel %vm289, %v270, 0
      %v306 = vsel %vm289, %v271, 0
      %v309 = vsel %vm289, %v272, 0
      %v312 = vsel %vm289, %v273, 0
      %314 = vmatprep.subr.mxu0 0.0
      %315 = vmatpush1.msra.mxu0 %v274
      %316 = vmatprep.subr.mxu0 0.0
      %317 = vmatpush1.msra.mxu0 %v275
      %318 = vmatprep.subr.mxu0 0.0
      %319 = vmatpush1.msra.mxu0 %v276
      %320 = vmatprep.subr.mxu0 0.0
      %321 = vmatpush1.msra.mxu0 %v277
      %322 = vmatprep.subr.mxu0 0.0
      %323 = vmatpush1.msra.mxu0 %v278
      %324 = vmatprep.subr.mxu0 0.0
      %325 = vmatpush1.msra.mxu0 %v279
      %326 = vmatprep.subr.mxu0 0.0
      %327 = vmatpush1.msra.mxu0 %v280
      %328 = vmatprep.subr.mxu0 0.0
      %329 = vmatpush1.msra.mxu0 %v281
      %330 = vmatprep.subr.mxu0 0.0
      %331 = vmatpush1.msra.mxu0 0.0
      %332 = vmatprep.subr.mxu0 0.0
      %333 = vmatpush1.msra.mxu0 0.0
      %334 = vmatprep.subr.mxu0 0.0
      %335 = vmatpush1.msra.mxu0 0.0
      %336 = vmatprep.subr.mxu0 0.0
      %337 = vmatpush1.msra.mxu0 0.0
      %338 = vmatprep.subr.mxu0 0.0
      %339 = vmatpush1.msra.mxu0 0.0
      %340 = vmatprep.subr.mxu0 0.0
      %341 = vmatpush1.msra.mxu0 0.0
      %342 = vmatprep.subr.mxu0 0.0
      %343 = vmatpush1.msra.mxu0 0.0
      %344 = vmatprep.subr.mxu0 0.0
      %345 = vmatpush1.msra.mxu0 0.0
      %346 = vmatprep.subr.mxu0 0.0
      %347 = vmatpush1.msra.mxu0 0.0
      %348 = vmatprep.subr.mxu0 0.0
      %349 = vmatpush1.msra.mxu0 0.0
      %350 = vmatprep.subr.mxu0 0.0
      %351 = vmatpush1.msra.mxu0 0.0
      %352 = vmatprep.subr.mxu0 0.0
      %353 = vmatpush1.msra.mxu0 0.0
      %354 = vmatprep.subr.mxu0 0.0
      %355 = vmatpush1.msra.mxu0 0.0
      %356 = vmatprep.subr.mxu0 0.0
      %357 = vmatpush1.msra.mxu0 0.0
      %358 = vmatprep.subr.mxu0 0.0
      %359 = vmatpush1.msra.mxu0 0.0
      %360 = vmatprep.subr.mxu0 0.0
      %361 = vmatpush1.msra.mxu0 0.0
      %362 = vmatprep.subr.mxu0 0.0
      %363 = vmatpush1.msra.mxu0 0.0
      %364 = vmatprep.subr.mxu0 0.0
      %365 = vmatpush1.msra.mxu0 0.0
      %366 = vmatprep.subr.mxu0 0.0
      %367 = vmatpush1.msra.mxu0 0.0
      %368 = vmatprep.subr.mxu0 0.0
      %369 = vmatpush1.msra.mxu0 0.0
      %370 = vmatprep.subr.mxu0 0.0
      %371 = vmatpush1.msra.mxu0 0.0
      %372 = vmatprep.subr.mxu0 0.0
      %373 = vmatpush1.msra.mxu0 0.0
      %374 = vmatprep.subr.mxu0 0.0
      %375 = vmatpush1.msra.mxu0 0.0
      %376 = vmatprep.subr.mxu0 0.0
      %377 = vmatpush1.msra.mxu0 0.0
      %378 = vmatprep.mubr.f32.mxu0 0.0
      %379 = vmatmul.mubr.f32.gmra.mrb[0].mxu0 %v291
      %v380 = vpop.f32.mrb[0].mxu0
      %v381 = vadd.f32 %v287, %v380
      %v382 = vpop.f32.mrb[0].mxu0
      %383 = vmatprep.mubr.f32.mxu0 0.0
      %384 = vmatmul.mubr.f32.gmra.mrb[0].mxu0 %v294
      %v385 = vpop.f32.mrb[0].mxu0
      %v386 = vadd.f32 %v287, %v385
      %v387 = vpop.f32.mrb[0].mxu0
      %388 = vmatprep.mubr.f32.mxu0 0.0
      %389 = vmatmul.mubr.f32.gmra.mrb[0].mxu0 %v297
      %v390 = vpop.f32.mrb[0].mxu0
      %v391 = vadd.f32 %v287, %v390
      %v392 = vpop.f32.mrb[0].mxu0
      %393 = vmatprep.mubr.f32.mxu0 0.0
      %394 = vmatmul.mubr.f32.gmra.mrb[0].mxu0 %v300
      %v395 = vpop.f32.mrb[0].mxu0
      %v396 = vadd.f32 %v287, %v395
      %v397 = vpop.f32.mrb[0].mxu0
      %398 = vmatprep.mubr.f32.mxu0 0.0
      %399 = vmatmul.mubr.f32.gmra.mrb[0].mxu0 %v303
      %v400 = vpop.f32.mrb[0].mxu0
      %v401 = vadd.f32 %v287, %v400
      %v402 = vpop.f32.mrb[0].mxu0
      %403 = vmatprep.mubr.f32.mxu0 0.0
      %404 = vmatmul.mubr.f32.gmra.mrb[0].mxu0 %v306
      %v405 = vpop.f32.mrb[0].mxu0
      %v406 = vadd.f32 %v287, %v405
      %v407 = vpop.f32.mrb[0].mxu0
      %408 = vmatprep.mubr.f32.mxu0 0.0
      %409 = vmatmul.mubr.f32.gmra.mrb[0].mxu0 %v309
      %v410 = vpop.f32.mrb[0].mxu0
      %v411 = vadd.f32 %v287, %v410
      %v412 = vpop.f32.mrb[0].mxu0
      %413 = vmatprep.mubr.f32.mxu0 0.0
      %414 = vmatmul.mubr.f32.gmra.mrb[0].mxu0 %v312
      %v415 = vpop.f32.mrb[0].mxu0
      %v416 = vadd.f32 %v287, %v415
      %v417 = vpop.f32.mrb[0].mxu0
      %418 = vdwg.mxu0
      %v419 = vtanh.pop %v381
      %v420 = vtanh.pop %v386
      %v421 = vtanh.pop %v391
      %v422 = vtanh.pop %v396
      %v423 = vtanh.pop %v401
      %v424 = vtanh.pop %v406
      %v425 = vtanh.pop %v411
      %v426 = vtanh.pop %v416
      %vm427 = vcmask 15360
      %428 = vst.msk [vmem:[%s226] sm:$0xff] %vm427, %v419
      %429 = vst.msk [vmem:[%s226 + $0x8] sm:$0xff] %vm427, %v420
      %430 = vst.msk [vmem:[%s226 + $0x10] sm:$0xff] %vm427, %v421
      %431 = vst.msk [vmem:[%s226 + $0x18] sm:$0xff] %vm427, %v422
      %432 = vst.msk [vmem:[%s226 + $0x20] sm:$0xff] %vm427, %v423
      %433 = vst.msk [vmem:[%s226 + $0x28] sm:$0xff] %vm427, %v424
      %434 = vst.msk [vmem:[%s226 + $0x30] sm:$0xff] %vm427, %v425
      %435 = vst.msk [vmem:[%s226 + $0x38] sm:$0xff] %vm427, %v426
      %s436 = smul.u32 8, %s16
      %p437 = scmp.lt.s32.totalorder %s436, 15
      %s438 = scalar_select %p437, %s436, 15
      %s439 = smul.addr %s438, 8
      %s440 = scalar_lea.vmem %s5, %s439
      // Predicated region
      $region41: #{deepstn_pallas_forward.11} parent=39 // pred_check
        %p441 = pneg %p144
      $region42: #{deepstn_pallas_forward.11} parent=39 // pred_check_branch
        %443 = sbr.rel (%p441) target = $region44
      $region43: #{deepstn_pallas_forward.11} parent=39 // pred_region
        %s444 = smul.u32 8, %s16
      $region44: #{deepstn_pallas_forward.11} parent=39 // pred_fallthru
        _
    $region40: #{deepstn_pallas_forward.11} parent=5 // pred_fallthru
      _
    %p445 = scmp.le.s32.totalorder 2, %s11
    // Predicated region
    $region45: #{deepstn_pallas_forward.11} parent=5 // pred_check
      %p446 = pneg %p445
    $region46: #{deepstn_pallas_forward.11} parent=5 // pred_check_branch
      %448 = sbr.rel (%p446) target = $region48
    $region47: #{deepstn_pallas_forward.11} parent=5 // pred_region
      %s449 = ssub.s32 %s11, 2
      // Predicated region
      $region49: #{deepstn_pallas_forward.11} parent=47 // pred_check
        %p450 = pneg %p150
      $region50: #{deepstn_pallas_forward.11} parent=47 // pred_check_branch
        %452 = sbr.rel (%p450) target = $region52
      $region51: #{deepstn_pallas_forward.11} parent=47 // pred_region
        %s453 = smul.u32 8, %s17
        %p454 = scmp.lt.s32.totalorder %s453, 15
        %s455 = scalar_select %p454, %s453, 15
        %s456 = smul.addr %s455, 8
        %s457 = scalar_lea.vmem %s5, %s456
      $region52: #{deepstn_pallas_forward.11} parent=47 // pred_fallthru
        _
    $region48: #{deepstn_pallas_forward.11} parent=5 // pred_fallthru
      _
  $region6: #{deepstn_pallas_forward.11} parent=0 // loop_footer
    %s15 = sadd.s32 1, %s11
  $region7: #{deepstn_pallas_forward.11} parent=0 // loop_footer_branch
    %10 = sbr.rel target = $region3
  $region8: #{deepstn_pallas_forward.11} parent=0 // loop_exit
    _

// kernel: deepstn_pallas_forward.8
$region0: #{deepstn_pallas_forward.8}
  #allocation0 [shape = 'u32[]', space=smem, size = 0x4, offset = 0x4, fixed_abs, tag = 'smem constant byte address 0x4 - core index']
  #allocation1 [shape = 'u32[144,128]{1,0:T(1,128)}', space=vmem, size = 0x12000, scoped, tag = 'internal scratch']
  %s0 = inlined_call_operand.vmem [shape: f32[128,64], index: 0, kind: input, shape index: {}]
  %s1 = inlined_call_operand.vmem [shape: f32[128,8], index: 1, kind: input, shape index: {}]
  %s2 = inlined_call_operand.vmem [shape: f32[64,9], index: 2, kind: input, shape index: {}]
  %s3 = inlined_call_operand.vmem [shape: bf16[576,56], index: 3, kind: input, shape index: {}]
  %s4 = inlined_call_operand.vmem [shape: f32[1,56], index: 4, kind: input, shape index: {}]
  %s5 = inlined_call_operand.vmem [shape: bf16[576,64], index: 5, kind: input, shape index: {}]
  %s6 = inlined_call_operand.vmem [shape: f32[1,64], index: 6, kind: input, shape index: {}]
  %s7 = inlined_call_operand.vmem [shape: f32[1,64], index: 7, kind: input, shape index: {}]
  %s8 = inlined_call_operand.vmem [shape: f32[1,64], index: 8, kind: input, shape index: {}]
  %s9 = inlined_call_operand.vmem [shape: f32[1,64], index: 9, kind: input, shape index: {}]
  %s10 = inlined_call_operand.vmem [shape: f32[1,64], index: 10, kind: input, shape index: {}]
  %s11 = inlined_call_operand.vmem [shape: f32[128,64], index: 11, kind: output, shape index: {}]
  %s12 = sld [smem:[#allocation0]]
  $region77: #{deepstn_pallas_forward.8} parent=0
    _
  %s14 = ssub.s32 1, %s12
  %s15 = scalar_select 0, %s14, %s12
  loop: start=0, step=1, limit=4
  $region2: #{deepstn_pallas_forward.8} parent=0 // loop_pre_header
    _
  $region3: #{deepstn_pallas_forward.8} parent=0 // loop_header
    %s17 = sphi 0, %s21
    %p18 = scmp.ge.s32.totalorder %s17, 4
    %s27 = sphi 0, %s29
    %s30 = sphi 0, %s27
    %s31 = sphi 0, %s30
    %s47 = sphi 0, %s31
    %s53 = sphi 0, %s55
    %s56 = sphi 0, %s53
    %s57 = sphi 0, %s56
    %s73 = sphi 0, %s57
    %s77 = sphi 0, %s77
    %s79 = sphi 0, %s77
    %s80 = sphi 0, %s79
    %s94 = sphi 0, %s80
    %s98 = sphi 0, %s98
    %s100 = sphi 0, %s98
    %s101 = sphi 0, %s100
    %s115 = sphi 0, %s101
    %s119 = sphi 0, %s119
    %s121 = sphi 0, %s119
    %s122 = sphi 0, %s121
    %s136 = sphi 0, %s122
    %s140 = sphi 0, %s140
    %s142 = sphi 0, %s140
    %s143 = sphi 0, %s142
    %s157 = sphi 0, %s143
    %s161 = sphi 0, %s161
    %s163 = sphi 0, %s161
    %s164 = sphi 0, %s163
    %s178 = sphi 0, %s164
    %s182 = sphi 0, %s182
    %s184 = sphi 0, %s182
    %s185 = sphi 0, %s184
    %s199 = sphi 0, %s185
    %s203 = sphi 0, %s203
    %s205 = sphi 0, %s203
    %s206 = sphi 0, %s205
    %s220 = sphi 0, %s206
    %s224 = sphi 0, %s224
    %s226 = sphi 0, %s224
    %s227 = sphi 0, %s226
    %s241 = sphi 0, %s227
    %s245 = sphi 0, %s245
    %s247 = sphi 0, %s245
    %s248 = sphi 0, %s247
    %s262 = sphi 0, %s248
    %s268 = sphi 0, %s270
    %s271 = sphi 0, %s268
    %s272 = sphi 0, %s271
    %s288 = sphi 0, %s272
  $region4: #{deepstn_pallas_forward.8} parent=0 // loop_header_branch
    %20 = sbr.rel (%p18) target = $region8
  $region5: #{deepstn_pallas_forward.8} parent=0 // loop_body
    %s22 = ssub.s32 %s17, 1
    %s23 = ssub.s32 %s17, 2
    %s24 = sadd.s32 %s17, 1
    %s25 = ssub.s32 %s17, %s24
    %p26 = scmp.eq.s32.totalorder %s25, 0
    %s28 = sadd.s32 %s27, 1
    %s29 = scalar_select %p26, %s27, %s28
    %p32 = pneg %p26
    %p33 = scmp.eq.s32.totalorder %s17, 1
    %p34 = por %p32, %p33
    %p35 = scmp.ne.s32.totalorder %s27, %s30
    %p36 = scmp.eq.s32.totalorder %s17, 0
    %p37 = por %p35, %p36
    %p38 = scmp.ne.s32.totalorder %s27, %s30
    %p39 = scmp.eq.s32.totalorder %s22, 1
    %p40 = por %p38, %p39
    %p41 = scmp.ne.s32.totalorder %s30, %s31
    %p42 = scmp.eq.s32.totalorder %s22, 0
    %p43 = por %p41, %p42
    %p44 = scmp.ne.s32.totalorder %s30, %s31
    %p45 = scmp.eq.s32.totalorder %s23, 1
    %p46 = por %p44, %p45
    %p48 = scmp.ne.s32.totalorder %s31, %s47
    %p49 = scmp.eq.s32.totalorder %s23, 0
    %p50 = por %p48, %p49
    %s51 = ssub.s32 %s17, %s24
    %p52 = scmp.eq.s32.totalorder %s51, 0
    %s54 = sadd.s32 %s53, 1
    %s55 = scalar_select %p52, %s53, %s54
    %p58 = pneg %p52
    %p59 = scmp.eq.s32.totalorder %s17, 1
    %p60 = por %p58, %p59
    %p61 = scmp.ne.s32.totalorder %s53, %s56
    %p62 = scmp.eq.s32.totalorder %s17, 0
    %p63 = por %p61, %p62
    %p64 = scmp.ne.s32.totalorder %s53, %s56
    %p65 = scmp.eq.s32.totalorder %s22, 1
    %p66 = por %p64, %p65
    %p67 = scmp.ne.s32.totalorder %s56, %s57
    %p68 = scmp.eq.s32.totalorder %s22, 0
    %p69 = por %p67, %p68
    %p70 = scmp.ne.s32.totalorder %s56, %s57
    %p71 = scmp.eq.s32.totalorder %s23, 1
    %p72 = por %p70, %p71
    %p74 = scmp.ne.s32.totalorder %s57, %s73
    %p75 = scmp.eq.s32.totalorder %s23, 0
    %p76 = por %p74, %p75
    %s78 = sadd.s32 %s77, 1
    %p81 = scmp.eq.s32.totalorder %s17, 1
    %p82 = scmp.ne.s32.totalorder %s77, %s79
    %p83 = scmp.eq.s32.totalorder %s17, 0
    %p84 = por %p82, %p83
    %p85 = scmp.ne.s32.totalorder %s77, %s79
    %p86 = scmp.eq.s32.totalorder %s22, 1
    %p87 = por %p85, %p86
    %p88 = scmp.ne.s32.totalorder %s79, %s80
    %p89 = scmp.eq.s32.totalorder %s22, 0
    %p90 = por %p88, %p89
    %p91 = scmp.ne.s32.totalorder %s79, %s80
    %p92 = scmp.eq.s32.totalorder %s23, 1
    %p93 = por %p91, %p92
    %p95 = scmp.ne.s32.totalorder %s80, %s94
    %p96 = scmp.eq.s32.totalorder %s23, 0
    %p97 = por %p95, %p96
    %s99 = sadd.s32 %s98, 1
    %p102 = scmp.eq.s32.totalorder %s17, 1
    %p103 = scmp.ne.s32.totalorder %s98, %s100
    %p104 = scmp.eq.s32.totalorder %s17, 0
    %p105 = por %p103, %p104
    %p106 = scmp.ne.s32.totalorder %s98, %s100
    %p107 = scmp.eq.s32.totalorder %s22, 1
    %p108 = por %p106, %p107
    %p109 = scmp.ne.s32.totalorder %s100, %s101
    %p110 = scmp.eq.s32.totalorder %s22, 0
    %p111 = por %p109, %p110
    %p112 = scmp.ne.s32.totalorder %s100, %s101
    %p113 = scmp.eq.s32.totalorder %s23, 1
    %p114 = por %p112, %p113
    %p116 = scmp.ne.s32.totalorder %s101, %s115
    %p117 = scmp.eq.s32.totalorder %s23, 0
    %p118 = por %p116, %p117
    %s120 = sadd.s32 %s119, 1
    %p123 = scmp.eq.s32.totalorder %s17, 1
    %p124 = scmp.ne.s32.totalorder %s119, %s121
    %p125 = scmp.eq.s32.totalorder %s17, 0
    %p126 = por %p124, %p125
    %p127 = scmp.ne.s32.totalorder %s119, %s121
    %p128 = scmp.eq.s32.totalorder %s22, 1
    %p129 = por %p127, %p128
    %p130 = scmp.ne.s32.totalorder %s121, %s122
    %p131 = scmp.eq.s32.totalorder %s22, 0
    %p132 = por %p130, %p131
    %p133 = scmp.ne.s32.totalorder %s121, %s122
    %p134 = scmp.eq.s32.totalorder %s23, 1
    %p135 = por %p133, %p134
    %p137 = scmp.ne.s32.totalorder %s122, %s136
    %p138 = scmp.eq.s32.totalorder %s23, 0
    %p139 = por %p137, %p138
    %s141 = sadd.s32 %s140, 1
    %p144 = scmp.eq.s32.totalorder %s17, 1
    %p145 = scmp.ne.s32.totalorder %s140, %s142
    %p146 = scmp.eq.s32.totalorder %s17, 0
    %p147 = por %p145, %p146
    %p148 = scmp.ne.s32.totalorder %s140, %s142
    %p149 = scmp.eq.s32.totalorder %s22, 1
    %p150 = por %p148, %p149
    %p151 = scmp.ne.s32.totalorder %s142, %s143
    %p152 = scmp.eq.s32.totalorder %s22, 0
    %p153 = por %p151, %p152
    %p154 = scmp.ne.s32.totalorder %s142, %s143
    %p155 = scmp.eq.s32.totalorder %s23, 1
    %p156 = por %p154, %p155
    %p158 = scmp.ne.s32.totalorder %s143, %s157
    %p159 = scmp.eq.s32.totalorder %s23, 0
    %p160 = por %p158, %p159
    %s162 = sadd.s32 %s161, 1
    %p165 = scmp.eq.s32.totalorder %s17, 1
    %p166 = scmp.ne.s32.totalorder %s161, %s163
    %p167 = scmp.eq.s32.totalorder %s17, 0
    %p168 = por %p166, %p167
    %p169 = scmp.ne.s32.totalorder %s161, %s163
    %p170 = scmp.eq.s32.totalorder %s22, 1
    %p171 = por %p169, %p170
    %p172 = scmp.ne.s32.totalorder %s163, %s164
    %p173 = scmp.eq.s32.totalorder %s22, 0
    %p174 = por %p172, %p173
    %p175 = scmp.ne.s32.totalorder %s163, %s164
    %p176 = scmp.eq.s32.totalorder %s23, 1
    %p177 = por %p175, %p176
    %p179 = scmp.ne.s32.totalorder %s164, %s178
    %p180 = scmp.eq.s32.totalorder %s23, 0
    %p181 = por %p179, %p180
    %s183 = sadd.s32 %s182, 1
    %p186 = scmp.eq.s32.totalorder %s17, 1
    %p187 = scmp.ne.s32.totalorder %s182, %s184
    %p188 = scmp.eq.s32.totalorder %s17, 0
    %p189 = por %p187, %p188
    %p190 = scmp.ne.s32.totalorder %s182, %s184
    %p191 = scmp.eq.s32.totalorder %s22, 1
    %p192 = por %p190, %p191
    %p193 = scmp.ne.s32.totalorder %s184, %s185
    %p194 = scmp.eq.s32.totalorder %s22, 0
    %p195 = por %p193, %p194
    %p196 = scmp.ne.s32.totalorder %s184, %s185
    %p197 = scmp.eq.s32.totalorder %s23, 1
    %p198 = por %p196, %p197
    %p200 = scmp.ne.s32.totalorder %s185, %s199
    %p201 = scmp.eq.s32.totalorder %s23, 0
    %p202 = por %p200, %p201
    %s204 = sadd.s32 %s203, 1
    %p207 = scmp.eq.s32.totalorder %s17, 1
    %p208 = scmp.ne.s32.totalorder %s203, %s205
    %p209 = scmp.eq.s32.totalorder %s17, 0
    %p210 = por %p208, %p209
    %p211 = scmp.ne.s32.totalorder %s203, %s205
    %p212 = scmp.eq.s32.totalorder %s22, 1
    %p213 = por %p211, %p212
    %p214 = scmp.ne.s32.totalorder %s205, %s206
    %p215 = scmp.eq.s32.totalorder %s22, 0
    %p216 = por %p214, %p215
    %p217 = scmp.ne.s32.totalorder %s205, %s206
    %p218 = scmp.eq.s32.totalorder %s23, 1
    %p219 = por %p217, %p218
    %p221 = scmp.ne.s32.totalorder %s206, %s220
    %p222 = scmp.eq.s32.totalorder %s23, 0
    %p223 = por %p221, %p222
    %s225 = sadd.s32 %s224, 1
    %p228 = scmp.eq.s32.totalorder %s17, 1
    %p229 = scmp.ne.s32.totalorder %s224, %s226
    %p230 = scmp.eq.s32.totalorder %s17, 0
    %p231 = por %p229, %p230
    %p232 = scmp.ne.s32.totalorder %s224, %s226
    %p233 = scmp.eq.s32.totalorder %s22, 1
    %p234 = por %p232, %p233
    %p235 = scmp.ne.s32.totalorder %s226, %s227
    %p236 = scmp.eq.s32.totalorder %s22, 0
    %p237 = por %p235, %p236
    %p238 = scmp.ne.s32.totalorder %s226, %s227
    %p239 = scmp.eq.s32.totalorder %s23, 1
    %p240 = por %p238, %p239
    %p242 = scmp.ne.s32.totalorder %s227, %s241
    %p243 = scmp.eq.s32.totalorder %s23, 0
    %p244 = por %p242, %p243
    %s246 = sadd.s32 %s245, 1
    %p249 = scmp.eq.s32.totalorder %s17, 1
    %p250 = scmp.ne.s32.totalorder %s245, %s247
    %p251 = scmp.eq.s32.totalorder %s17, 0
    %p252 = por %p250, %p251
    %p253 = scmp.ne.s32.totalorder %s245, %s247
    %p254 = scmp.eq.s32.totalorder %s22, 1
    %p255 = por %p253, %p254
    %p256 = scmp.ne.s32.totalorder %s247, %s248
    %p257 = scmp.eq.s32.totalorder %s22, 0
    %p258 = por %p256, %p257
    %p259 = scmp.ne.s32.totalorder %s247, %s248
    %p260 = scmp.eq.s32.totalorder %s23, 1
    %p261 = por %p259, %p260
    %p263 = scmp.ne.s32.totalorder %s248, %s262
    %p264 = scmp.eq.s32.totalorder %s23, 0
    %p265 = por %p263, %p264
    %s266 = ssub.s32 %s17, %s24
    %p267 = scmp.eq.s32.totalorder %s266, 0
    %s269 = sadd.s32 %s268, 1
    %s270 = scalar_select %p267, %s268, %s269
    %p273 = pneg %p267
    %p274 = scmp.eq.s32.totalorder %s17, 1
    %p275 = por %p273, %p274
    %p276 = scmp.ne.s32.totalorder %s268, %s271
    %p277 = scmp.eq.s32.totalorder %s17, 0
    %p278 = por %p276, %p277
    %p279 = scmp.ne.s32.totalorder %s268, %s271
    %p280 = scmp.eq.s32.totalorder %s22, 1
    %p281 = por %p279, %p280
    %p282 = scmp.ne.s32.totalorder %s271, %s272
    %p283 = scmp.eq.s32.totalorder %s22, 0
    %p284 = por %p282, %p283
    %p285 = scmp.ne.s32.totalorder %s271, %s272
    %p286 = scmp.eq.s32.totalorder %s23, 1
    %p287 = por %p285, %p286
    %p289 = scmp.ne.s32.totalorder %s272, %s288
    %p290 = scmp.eq.s32.totalorder %s23, 0
    %p291 = por %p289, %p290
    %p292 = scmp.le.s32.totalorder 1, %s17
    %p293 = scmp.lt.s32.totalorder %s17, 3
    %p294 = pnand %p292, %p293
    %p295 = pneg %p294
    // Predicated region
    $region9: #{deepstn_pallas_forward.8} parent=5 // pred_check
      _
    $region10: #{deepstn_pallas_forward.8} parent=5 // pred_check_branch
      %297 = sbr.rel (%p294) target = $region12
    $region11: #{deepstn_pallas_forward.8} parent=5 // pred_region
      %s298 = ssub.s32 %s17, 1
      // Predicated region
      $region13: #{deepstn_pallas_forward.8} parent=11 // pred_check
        %p299 = pneg %p90
      $region14: #{deepstn_pallas_forward.8} parent=11 // pred_check_branch
        %301 = sbr.rel (%p299) target = $region16
      $region15: #{deepstn_pallas_forward.8} parent=11 // pred_region
        _
      $region16: #{deepstn_pallas_forward.8} parent=11 // pred_fallthru
        _
      // Predicated region
      $region17: #{deepstn_pallas_forward.8} parent=11 // pred_check
        %p302 = pneg %p111
      $region18: #{deepstn_pallas_forward.8} parent=11 // pred_check_branch
        %304 = sbr.rel (%p302) target = $region20
      $region19: #{deepstn_pallas_forward.8} parent=11 // pred_region
        _
      $region20: #{deepstn_pallas_forward.8} parent=11 // pred_fallthru
        _
      // Predicated region
      $region21: #{deepstn_pallas_forward.8} parent=11 // pred_check
        %p305 = pneg %p132
      $region22: #{deepstn_pallas_forward.8} parent=11 // pred_check_branch
        %307 = sbr.rel (%p305) target = $region24
      $region23: #{deepstn_pallas_forward.8} parent=11 // pred_region
        _
      $region24: #{deepstn_pallas_forward.8} parent=11 // pred_fallthru
        _
      // Predicated region
      $region25: #{deepstn_pallas_forward.8} parent=11 // pred_check
        %p308 = pneg %p153
      $region26: #{deepstn_pallas_forward.8} parent=11 // pred_check_branch
        %310 = sbr.rel (%p308) target = $region28
      $region27: #{deepstn_pallas_forward.8} parent=11 // pred_region
        _
      $region28: #{deepstn_pallas_forward.8} parent=11 // pred_fallthru
        _
      // Predicated region
      $region29: #{deepstn_pallas_forward.8} parent=11 // pred_check
        %p311 = pneg %p174
      $region30: #{deepstn_pallas_forward.8} parent=11 // pred_check_branch
        %313 = sbr.rel (%p311) target = $region32
      $region31: #{deepstn_pallas_forward.8} parent=11 // pred_region
        _
      $region32: #{deepstn_pallas_forward.8} parent=11 // pred_fallthru
        _
      // Predicated region
      $region33: #{deepstn_pallas_forward.8} parent=11 // pred_check
        %p314 = pneg %p195
      $region34: #{deepstn_pallas_forward.8} parent=11 // pred_check_branch
        %316 = sbr.rel (%p314) target = $region36
      $region35: #{deepstn_pallas_forward.8} parent=11 // pred_region
        _
      $region36: #{deepstn_pallas_forward.8} parent=11 // pred_fallthru
        _
      // Predicated region
      $region37: #{deepstn_pallas_forward.8} parent=11 // pred_check
        %p317 = pneg %p216
      $region38: #{deepstn_pallas_forward.8} parent=11 // pred_check_branch
        %319 = sbr.rel (%p317) target = $region40
      $region39: #{deepstn_pallas_forward.8} parent=11 // pred_region
        _
      $region40: #{deepstn_pallas_forward.8} parent=11 // pred_fallthru
        _
      // Predicated region
      $region41: #{deepstn_pallas_forward.8} parent=11 // pred_check
        %p320 = pneg %p237
      $region42: #{deepstn_pallas_forward.8} parent=11 // pred_check_branch
        %322 = sbr.rel (%p320) target = $region44
      $region43: #{deepstn_pallas_forward.8} parent=11 // pred_region
        _
      $region44: #{deepstn_pallas_forward.8} parent=11 // pred_fallthru
        _
      // Predicated region
      $region45: #{deepstn_pallas_forward.8} parent=11 // pred_check
        %p323 = pneg %p258
      $region46: #{deepstn_pallas_forward.8} parent=11 // pred_check_branch
        %325 = sbr.rel (%p323) target = $region48
      $region47: #{deepstn_pallas_forward.8} parent=11 // pred_region
        _
      $region48: #{deepstn_pallas_forward.8} parent=11 // pred_fallthru
        _
    $region12: #{deepstn_pallas_forward.8} parent=5 // pred_fallthru
      _
    %p326 = scmp.lt.s32.totalorder %s17, 2
    // Predicated region
    $region49: #{deepstn_pallas_forward.8} parent=5 // pred_check
      %p327 = pneg %p326
    $region50: #{deepstn_pallas_forward.8} parent=5 // pred_check_branch
      %329 = sbr.rel (%p327) target = $region52
    $region51: #{deepstn_pallas_forward.8} parent=5 // pred_region
      // Predicated region
      $region53: #{deepstn_pallas_forward.8} parent=51 // pred_check
        %p330 = pneg %p37
      $region54: #{deepstn_pallas_forward.8} parent=51 // pred_check_branch
        %332 = sbr.rel (%p330) target = $region56
      $region55: #{deepstn_pallas_forward.8} parent=51 // pred_region
        %s333 = smul.u32 8, %s17
        %p334 = scmp.lt.s32.totalorder %s333, 15
        %s335 = scalar_select %p334, %s333, 15
        %s336 = smul.addr %s335, 8
        %s337 = scalar_lea.vmem %s0, %s336
        %s338 = smul.u32 8, %s17
      $region56: #{deepstn_pallas_forward.8} parent=51 // pred_fallthru
        _
      // Predicated region
      $region57: #{deepstn_pallas_forward.8} parent=51 // pred_check
        %p339 = pneg %p63
      $region58: #{deepstn_pallas_forward.8} parent=51 // pred_check_branch
        %341 = sbr.rel (%p339) target = $region60
      $region59: #{deepstn_pallas_forward.8} parent=51 // pred_region
        %s342 = smul.u32 8, %s17
        %p343 = scmp.lt.s32.totalorder %s342, 15
        %s344 = scalar_select %p343, %s342, 15
        %s345 = smul.addr %s344, 8
        %s346 = scalar_lea.vmem %s1, %s345
        %s347 = smul.u32 8, %s17
      $region60: #{deepstn_pallas_forward.8} parent=51 // pred_fallthru
        _
    $region52: #{deepstn_pallas_forward.8} parent=5 // pred_fallthru
      _
    %p348 = scmp.le.s32.totalorder 1, %s17
    %p349 = scmp.lt.s32.totalorder %s17, 3
    %p350 = pnand %p348, %p349
    %p351 = pneg %p350
    // Predicated region
    $region61: #{deepstn_pallas_forward.8} parent=5 // pred_check
      _
    $region62: #{deepstn_pallas_forward.8} parent=5 // pred_check_branch
      %353 = sbr.rel (%p350) target = $region64
    $region63: #{deepstn_pallas_forward.8} parent=5 // pred_region
      %s354 = ssub.s32 %s17, 1
      %s355 = smul.u32 8, %s22
      %p356 = scmp.lt.s32.totalorder %s355, 15
      %s357 = scalar_select %p356, %s355, 15
      %s358 = smul.addr %s357, 8
      %s359 = scalar_lea.vmem %s0, %s358
      %p360 = pneg %p43
      %p361 = pneg %p40
      %s362 = smul.u32 8, %s22
      %p363 = scmp.lt.s32.totalorder %s362, 15
      %s364 = scalar_select %p363, %s362, 15
      %s365 = smul.addr %s364, 8
      %s366 = scalar_lea.vmem %s1, %s365
      %p367 = pneg %p69
      %p368 = pneg %p66
      %p369 = pneg %p90
      %p370 = pneg %p87
      %p371 = pneg %p111
      %p372 = pneg %p108
      %p373 = pneg %p132
      %p374 = pneg %p129
      %p375 = pneg %p153
      %p376 = pneg %p150
      %p377 = pneg %p174
      %p378 = pneg %p171
      %p379 = pneg %p195
      %p380 = pneg %p192
      %p381 = pneg %p216
      %p382 = pneg %p213
      %p383 = pneg %p237
      %p384 = pneg %p234
      %p385 = pneg %p258
      %p386 = pneg %p255
      %p387 = pneg %p284
      %p388 = pneg %p281
      %s389 = smul.u32 8, %s22
      %p390 = scmp.lt.s32.totalorder %s389, 15
      %s391 = scalar_select %p390, %s389, 15
      %s392 = smul.addr %s391, 8
      %s393 = scalar_lea.vmem %s11, %s392
      %s394 = smul.u32 8, %s22
      %p395 = scmp.lt.s32.totalorder %s394, 15
      %s396 = scalar_select %p395, %s394, 15
      %s397 = smul.addr %s396, 8
      %s398 = scalar_lea.vmem %s0, %s397
      %s399 = smul.u32 8, %s22
      %s400 = smul.u32 8, %s22
      %p401 = scmp.lt.s32.totalorder %s400, 15
      %s402 = scalar_select %p401, %s400, 15
      %s403 = smul.addr %s402, 8
      %s404 = scalar_lea.vmem %s1, %s403
      %s405 = smul.u32 8, %s22
      %s406 = smul.u32 8, %s22
      %p407 = scmp.lt.s32.totalorder %s406, 15
      %s408 = scalar_select %p407, %s406, 15
      %s409 = smul.addr %s408, 8
      %s410 = scalar_lea.vmem %s11, %s409
      %s411 = smul.u32 8, %s22
      %v413 = vld [vmem:[%s398] sm:$0xff]
      %v414 = vld [vmem:[%s398 + $0x8] sm:$0xff]
      %v415 = vld [vmem:[%s398 + $0x10] sm:$0xff]
      %v416 = vld [vmem:[%s398 + $0x18] sm:$0xff]
      %v417 = vld [vmem:[%s398 + $0x20] sm:$0xff]
      %v418 = vld [vmem:[%s398 + $0x28] sm:$0xff]
      %v419 = vld [vmem:[%s398 + $0x30] sm:$0xff]
      %v420 = vld [vmem:[%s398 + $0x38] sm:$0xff]
      %v421 = vld [vmem:[%s2] sm:$0xff]
      %v422 = vld [vmem:[%s2 + $0x8] sm:$0xff]
      %v423 = vld [vmem:[%s2 + $0x10] sm:$0xff]
      %v424 = vld [vmem:[%s2 + $0x18] sm:$0xff]
      %v425 = vld [vmem:[%s2 + $0x20] sm:$0xff]
      %v426 = vld [vmem:[%s2 + $0x28] sm:$0xff]
      %v427 = vld [vmem:[%s2 + $0x30] sm:$0xff]
      %v428 = vld [vmem:[%s2 + $0x38] sm:$0xff]
      %v429 = vld [vmem:[%s7] sm:$0x1]
      %v431 = vlaneseq
      %v432 = vshrl.u32 %v431, 7
      %v433 = vsub.s32 0, %v432
      %v434 = vrot.slane %v429, %v433
      %v436 = vmul.f32 %v413, %v434
      %v437 = vmul.f32 %v414, %v434
      %v438 = vmul.f32 %v415, %v434
      %v439 = vmul.f32 %v416, %v434
      %v440 = vmul.f32 %v417, %v434
      %v441 = vmul.f32 %v418, %v434
      %v442 = vmul.f32 %v419, %v434
      %v443 = vmul.f32 %v420, %v434
      %v444 = vld [vmem:[%s8] sm:$0x1]
      %v446 = vlaneseq
      %v447 = vshrl.u32 %v446, 7
      %v448 = vsub.s32 0, %v447
      %v449 = vrot.slane %v444, %v448
      %v451 = vadd.f32 %v436, %v449
      %v452 = vadd.f32 %v437, %v449
      %v453 = vadd.f32 %v438, %v449
      %v454 = vadd.f32 %v439, %v449
      %v455 = vadd.f32 %v440, %v449
      %v456 = vadd.f32 %v441, %v449
      %v457 = vadd.f32 %v442, %v449
      %v458 = vadd.f32 %v443, %v449
      %v459 = vmax.f32 %v451, 0.0
      %v460 = vmax.f32 %v452, 0.0
      %v461 = vmax.f32 %v453, 0.0
      %v462 = vmax.f32 %v454, 0.0
      %v463 = vmax.f32 %v455, 0.0
      %v464 = vmax.f32 %v456, 0.0
      %v465 = vmax.f32 %v457, 0.0
      %v466 = vmax.f32 %v458, 0.0
      %v467 = vrot.slane %v459, 7
      %v468 = vrot.slane %v460, 7
      %v469 = vrot.slane %v461, 7
      %v470 = vrot.slane %v462, 7
      %v471 = vrot.slane %v463, 7
      %v472 = vrot.slane %v464, 7
      %v473 = vrot.slane %v465, 7
      %v474 = vrot.slane %v466, 7
      %v475 = vlaneseq
      %v476 = vshrl.u32 %v475, 7
      %vm477 = vcmp.lt.s32.totalorder %v476, 1
      %v478 = vsel %vm477, %v473, %v474
      %v479 = vsel %vm477, %v472, %v473
      %v480 = vsel %vm477, %v471, %v472
      %v481 = vsel %vm477, %v470, %v471
      %v482 = vsel %vm477, %v469, %v470
      %v483 = vsel %vm477, %v468, %v469
      %v484 = vsel %vm477, %v467, %v468
      %v485 = vsel %vm477, %v474, %v467
      %487 = vset.pattern.permute.xlu0 0
      %488 = vperm.xlu0 %487, %v421
      %v489 = vpop.permute.xlu0 %488
      %492 = vset.pattern.permute.xlu0 0
      %493 = vperm.xlu0 %492, %v422
      %v494 = vpop.permute.xlu0 %493
      %497 = vset.pattern.permute.xlu0 0
      %498 = vperm.xlu0 %497, %v423
      %v499 = vpop.permute.xlu0 %498
      %502 = vset.pattern.permute.xlu0 0
      %503 = vperm.xlu0 %502, %v424
      %v504 = vpop.permute.xlu0 %503
      %507 = vset.pattern.permute.xlu0 0
      %508 = vperm.xlu0 %507, %v425
      %v509 = vpop.permute.xlu0 %508
      %512 = vset.pattern.permute.xlu0 0
      %513 = vperm.xlu0 %512, %v426
      %v514 = vpop.permute.xlu0 %513
      %517 = vset.pattern.permute.xlu0 0
      %518 = vperm.xlu0 %517, %v427
      %v519 = vpop.permute.xlu0 %518
      %522 = vset.pattern.permute.xlu0 0
      %523 = vperm.xlu0 %522, %v428
      %v524 = vpop.permute.xlu0 %523
      %v526 = vmul.f32 %v478, %v489
      %v527 = vmul.f32 %v485, %v494
      %v528 = vmul.f32 %v484, %v499
      %v529 = vmul.f32 %v483, %v504
      %v530 = vmul.f32 %v482, %v509
      %v531 = vmul.f32 %v481, %v514
      %v532 = vmul.f32 %v480, %v519
      %v533 = vmul.f32 %v479, %v524
      %v534 = vpack.c.bf16 %v527, %v526
      %v535 = vpack.c.bf16 %v529, %v528
      %v536 = vpack.c.bf16 %v531, %v530
      %v537 = vpack.c.bf16 %v533, %v532
      %538 = vset.pattern.permute.xlu0 1
      %539 = vperm.xlu0 %538, %v421
      %v540 = vpop.permute.xlu0 %539
      %542 = vset.pattern.permute.xlu0 1
      %543 = vperm.xlu0 %542, %v422
      %v544 = vpop.permute.xlu0 %543
      %546 = vset.pattern.permute.xlu0 1
      %547 = vperm.xlu0 %546, %v423
      %v548 = vpop.permute.xlu0 %547
      %550 = vset.pattern.permute.xlu0 1
      %551 = vperm.xlu0 %550, %v424
      %v552 = vpop.permute.xlu0 %551
      %554 = vset.pattern.permute.xlu0 1
      %555 = vperm.xlu0 %554, %v425
      %v556 = vpop.permute.xlu0 %555
      %558 = vset.pattern.permute.xlu0 1
      %559 = vperm.xlu0 %558, %v426
      %v560 = vpop.permute.xlu0 %559
      %562 = vset.pattern.permute.xlu0 1
      %563 = vperm.xlu0 %562, %v427
      %v564 = vpop.permute.xlu0 %563
      %566 = vset.pattern.permute.xlu0 1
      %567 = vperm.xlu0 %566, %v428
      %v568 = vpop.permute.xlu0 %567
      %v570 = vmul.f32 %v466, %v540
      %v571 = vmul.f32 %v459, %v544
      %v572 = vmul.f32 %v460, %v548
      %v573 = vmul.f32 %v461, %v552
      %v574 = vmul.f32 %v462, %v556
      %v575 = vmul.f32 %v463, %v560
      %v576 = vmul.f32 %v464, %v564
      %v577 = vmul.f32 %v465, %v568
      %v578 = vpack.c.bf16 %v571, %v570
      %v579 = vpack.c.bf16 %v573, %v572
      %v580 = vpack.c.bf16 %v575, %v574
      %v581 = vpack.c.bf16 %v577, %v576
      %v582 = vrot.slane %v459, 1
      %v583 = vrot.slane %v460, 1
      %v584 = vrot.slane %v461, 1
      %v585 = vrot.slane %v462, 1
      %v586 = vrot.slane %v463, 1
      %v587 = vrot.slane %v464, 1
      %v588 = vrot.slane %v465, 1
      %v589 = vrot.slane %v466, 1
      %vm590 = vcmp.lt.s32.totalorder %v476, 7
      %v591 = vsel %vm590, %v588, %v589
      %v592 = vsel %vm590, %v587, %v588
      %v593 = vsel %vm590, %v586, %v587
      %v594 = vsel %vm590, %v585, %v586
      %v595 = vsel %vm590, %v584, %v585
      %v596 = vsel %vm590, %v583, %v584
      %v597 = vsel %vm590, %v582, %v583
      %v598 = vsel %vm590, %v589, %v582
      %599 = vset.pattern.permute.xlu0 2
      %600 = vperm.xlu0 %599, %v421
      %v601 = vpop.permute.xlu0 %600
      %603 = vset.pattern.permute.xlu0 2
      %604 = vperm.xlu0 %603, %v422
      %v605 = vpop.permute.xlu0 %604
      %607 = vset.pattern.permute.xlu0 2
      %608 = vperm.xlu0 %607, %v423
      %v609 = vpop.permute.xlu0 %608
      %611 = vset.pattern.permute.xlu0 2
      %612 = vperm.xlu0 %611, %v424
      %v613 = vpop.permute.xlu0 %612
      %615 = vset.pattern.permute.xlu0 2
      %616 = vperm.xlu0 %615, %v425
      %v617 = vpop.permute.xlu0 %616
      %619 = vset.pattern.permute.xlu0 2
      %620 = vperm.xlu0 %619, %v426
      %v621 = vpop.permute.xlu0 %620
      %623 = vset.pattern.permute.xlu0 2
      %624 = vperm.xlu0 %623, %v427
      %v625 = vpop.permute.xlu0 %624
      %627 = vset.pattern.permute.xlu0 2
      %628 = vperm.xlu0 %627, %v428
      %v629 = vpop.permute.xlu0 %628
      %v631 = vmul.f32 %v598, %v601
      %v632 = vmul.f32 %v597, %v605
      %v633 = vmul.f32 %v596, %v609
      %v634 = vmul.f32 %v595, %v613
      %v635 = vmul.f32 %v594, %v617
      %v636 = vmul.f32 %v593, %v621
      %v637 = vmul.f32 %v592, %v625
      %v638 = vmul.f32 %v591, %v629
      %v639 = vpack.c.bf16 %v632, %v631
      %v640 = vpack.c.bf16 %v634, %v633
      %v641 = vpack.c.bf16 %v636, %v635
      %v642 = vpack.c.bf16 %v638, %v637
      %643 = vset.pattern.permute.xlu0 3
      %644 = vperm.xlu0 %643, %v421
      %v645 = vpop.permute.xlu0 %644
      %647 = vset.pattern.permute.xlu0 3
      %648 = vperm.xlu0 %647, %v422
      %v649 = vpop.permute.xlu0 %648
      %651 = vset.pattern.permute.xlu0 3
      %652 = vperm.xlu0 %651, %v423
      %v653 = vpop.permute.xlu0 %652
      %655 = vset.pattern.permute.xlu0 3
      %656 = vperm.xlu0 %655, %v424
      %v657 = vpop.permute.xlu0 %656
      %659 = vset.pattern.permute.xlu0 3
      %660 = vperm.xlu0 %659, %v425
      %v661 = vpop.permute.xlu0 %660
      %663 = vset.pattern.permute.xlu0 3
      %664 = vperm.xlu0 %663, %v426
      %v665 = vpop.permute.xlu0 %664
      %667 = vset.pattern.permute.xlu0 3
      %668 = vperm.xlu0 %667, %v427
      %v669 = vpop.permute.xlu0 %668
      %671 = vset.pattern.permute.xlu0 3
      %672 = vperm.xlu0 %671, %v428
      %v673 = vpop.permute.xlu0 %672
      %v675 = vmul.f32 %v485, %v645
      %v676 = vmul.f32 %v484, %v649
      %v677 = vmul.f32 %v483, %v653
      %v678 = vmul.f32 %v482, %v657
      %v679 = vmul.f32 %v481, %v661
      %v680 = vmul.f32 %v480, %v665
      %v681 = vmul.f32 %v479, %v669
      %v682 = vmul.f32 %v478, %v673
      %v683 = vpack.c.bf16 %v676, %v675
      %v684 = vpack.c.bf16 %v678, %v677
      %v685 = vpack.c.bf16 %v680, %v679
      %v686 = vpack.c.bf16 %v682, %v681
      %687 = vset.pattern.permute.xlu0 4
      %688 = vperm.xlu0 %687, %v421
      %v689 = vpop.permute.xlu0 %688
      %691 = vset.pattern.permute.xlu0 4
      %692 = vperm.xlu0 %691, %v422
      %v693 = vpop.permute.xlu0 %692
      %695 = vset.pattern.permute.xlu0 4
      %696 = vperm.xlu0 %695, %v423
      %v697 = vpop.permute.xlu0 %696
      %699 = vset.pattern.permute.xlu0 4
      %700 = vperm.xlu0 %699, %v424
      %v701 = vpop.permute.xlu0 %700
      %703 = vset.pattern.permute.xlu0 4
      %704 = vperm.xlu0 %703, %v425
      %v705 = vpop.permute.xlu0 %704
      %707 = vset.pattern.permute.xlu0 4
      %708 = vperm.xlu0 %707, %v426
      %v709 = vpop.permute.xlu0 %708
      %711 = vset.pattern.permute.xlu0 4
      %712 = vperm.xlu0 %711, %v427
      %v713 = vpop.permute.xlu0 %712
      %715 = vset.pattern.permute.xlu0 4
      %716 = vperm.xlu0 %715, %v428
      %v717 = vpop.permute.xlu0 %716
      %v719 = vmul.f32 %v459, %v689
      %v720 = vmul.f32 %v460, %v693
      %v721 = vmul.f32 %v461, %v697
      %v722 = vmul.f32 %v462, %v701
      %v723 = vmul.f32 %v463, %v705
      %v724 = vmul.f32 %v464, %v709
      %v725 = vmul.f32 %v465, %v713
      %v726 = vmul.f32 %v466, %v717
      %v727 = vpack.c.bf16 %v720, %v719
      %v728 = vpack.c.bf16 %v722, %v721
      %v729 = vpack.c.bf16 %v724, %v723
      %v730 = vpack.c.bf16 %v726, %v725
      %731 = vset.pattern.permute.xlu0 5
      %732 = vperm.xlu0 %731, %v421
      %v733 = vpop.permute.xlu0 %732
      %735 = vset.pattern.permute.xlu0 5
      %736 = vperm.xlu0 %735, %v422
      %v737 = vpop.permute.xlu0 %736
      %739 = vset.pattern.permute.xlu0 5
      %740 = vperm.xlu0 %739, %v423
      %v741 = vpop.permute.xlu0 %740
      %743 = vset.pattern.permute.xlu0 5
      %744 = vperm.xlu0 %743, %v424
      %v745 = vpop.permute.xlu0 %744
      %747 = vset.pattern.permute.xlu0 5
      %748 = vperm.xlu0 %747, %v425
      %v749 = vpop.permute.xlu0 %748
      %751 = vset.pattern.permute.xlu0 5
      %752 = vperm.xlu0 %751, %v426
      %v753 = vpop.permute.xlu0 %752
      %755 = vset.pattern.permute.xlu0 5
      %756 = vperm.xlu0 %755, %v427
      %v757 = vpop.permute.xlu0 %756
      %759 = vset.pattern.permute.xlu0 5
      %760 = vperm.xlu0 %759, %v428
      %v761 = vpop.permute.xlu0 %760
      %v763 = vmul.f32 %v597, %v733
      %v764 = vmul.f32 %v596, %v737
      %v765 = vmul.f32 %v595, %v741
      %v766 = vmul.f32 %v594, %v745
      %v767 = vmul.f32 %v593, %v749
      %v768 = vmul.f32 %v592, %v753
      %v769 = vmul.f32 %v591, %v757
      %v770 = vmul.f32 %v598, %v761
      %v771 = vpack.c.bf16 %v764, %v763
      %v772 = vpack.c.bf16 %v766, %v765
      %v773 = vpack.c.bf16 %v768, %v767
      %v774 = vpack.c.bf16 %v770, %v769
      %775 = vset.pattern.permute.xlu0 6
      %776 = vperm.xlu0 %775, %v421
      %v777 = vpop.permute.xlu0 %776
      %779 = vset.pattern.permute.xlu0 6
      %780 = vperm.xlu0 %779, %v422
      %v781 = vpop.permute.xlu0 %780
      %783 = vset.pattern.permute.xlu0 6
      %784 = vperm.xlu0 %783, %v423
      %v785 = vpop.permute.xlu0 %784
      %787 = vset.pattern.permute.xlu0 6
      %788 = vperm.xlu0 %787, %v424
      %v789 = vpop.permute.xlu0 %788
      %791 = vset.pattern.permute.xlu0 6
      %792 = vperm.xlu0 %791, %v425
      %v793 = vpop.permute.xlu0 %792
      %795 = vset.pattern.permute.xlu0 6
      %796 = vperm.xlu0 %795, %v426
      %v797 = vpop.permute.xlu0 %796
      %799 = vset.pattern.permute.xlu0 6
      %800 = vperm.xlu0 %799, %v427
      %v801 = vpop.permute.xlu0 %800
      %803 = vset.pattern.permute.xlu0 6
      %804 = vperm.xlu0 %803, %v428
      %v805 = vpop.permute.xlu0 %804
      %v807 = vmul.f32 %v484, %v777
      %v808 = vmul.f32 %v483, %v781
      %v809 = vmul.f32 %v482, %v785
      %v810 = vmul.f32 %v481, %v789
      %v811 = vmul.f32 %v480, %v793
      %v812 = vmul.f32 %v479, %v797
      %v813 = vmul.f32 %v478, %v801
      %v814 = vmul.f32 %v485, %v805
      %v815 = vpack.c.bf16 %v808, %v807
      %v816 = vpack.c.bf16 %v810, %v809
      %v817 = vpack.c.bf16 %v812, %v811
      %v818 = vpack.c.bf16 %v814, %v813
      %819 = vset.pattern.permute.xlu0 7
      %820 = vperm.xlu0 %819, %v421
      %v821 = vpop.permute.xlu0 %820
      %823 = vset.pattern.permute.xlu0 7
      %824 = vperm.xlu0 %823, %v422
      %v825 = vpop.permute.xlu0 %824
      %827 = vset.pattern.permute.xlu0 7
      %828 = vperm.xlu0 %827, %v423
      %v829 = vpop.permute.xlu0 %828
      %831 = vset.pattern.permute.xlu0 7
      %832 = vperm.xlu0 %831, %v424
      %v833 = vpop.permute.xlu0 %832
      %835 = vset.pattern.permute.xlu0 7
      %836 = vperm.xlu0 %835, %v425
      %v837 = vpop.permute.xlu0 %836
      %839 = vset.pattern.permute.xlu0 7
      %840 = vperm.xlu0 %839, %v426
      %v841 = vpop.permute.xlu0 %840
      %843 = vset.pattern.permute.xlu0 7
      %844 = vperm.xlu0 %843, %v427
      %v845 = vpop.permute.xlu0 %844
      %847 = vset.pattern.permute.xlu0 7
      %848 = vperm.xlu0 %847, %v428
      %v849 = vpop.permute.xlu0 %848
      %v851 = vmul.f32 %v460, %v821
      %v852 = vmul.f32 %v461, %v825
      %v853 = vmul.f32 %v462, %v829
      %v854 = vmul.f32 %v463, %v833
      %v855 = vmul.f32 %v464, %v837
      %v856 = vmul.f32 %v465, %v841
      %v857 = vmul.f32 %v466, %v845
      %v858 = vmul.f32 %v459, %v849
      %v859 = vpack.c.bf16 %v852, %v851
      %v860 = vpack.c.bf16 %v854, %v853
      %v861 = vpack.c.bf16 %v856, %v855
      %v862 = vpack.c.bf16 %v858, %v857
      %863 = vset.pattern.permute.xlu0 8
      %864 = vperm.xlu0 %863, %v421
      %v865 = vpop.permute.xlu0 %864
      %867 = vset.pattern.permute.xlu0 8
      %868 = vperm.xlu0 %867, %v422
      %v869 = vpop.permute.xlu0 %868
      %871 = vset.pattern.permute.xlu0 8
      %872 = vperm.xlu0 %871, %v423
      %v873 = vpop.permute.xlu0 %872
      %875 = vset.pattern.permute.xlu0 8
      %876 = vperm.xlu0 %875, %v424
      %v877 = vpop.permute.xlu0 %876
      %879 = vset.pattern.permute.xlu0 8
      %880 = vperm.xlu0 %879, %v425
      %v881 = vpop.permute.xlu0 %880
      %883 = vset.pattern.permute.xlu0 8
      %884 = vperm.xlu0 %883, %v426
      %v885 = vpop.permute.xlu0 %884
      %887 = vset.pattern.permute.xlu0 8
      %888 = vperm.xlu0 %887, %v427
      %v889 = vpop.permute.xlu0 %888
      %891 = vset.pattern.permute.xlu0 8
      %892 = vperm.xlu0 %891, %v428
      %v893 = vpop.permute.xlu0 %892
      %v895 = vmul.f32 %v596, %v865
      %v896 = vmul.f32 %v595, %v869
      %v897 = vmul.f32 %v594, %v873
      %v898 = vmul.f32 %v593, %v877
      %v899 = vmul.f32 %v592, %v881
      %v900 = vmul.f32 %v591, %v885
      %v901 = vmul.f32 %v598, %v889
      %v902 = vmul.f32 %v597, %v893
      %v903 = vpack.c.bf16 %v896, %v895
      %v904 = vpack.c.bf16 %v898, %v897
      %v905 = vpack.c.bf16 %v900, %v899
      %v906 = vpack.c.bf16 %v902, %v901
      %911 = vrot.lane.b32.xlu0 %v578, 64
      %v912 = vpop.permute.xlu0 %911
      %913 = vrot.lane.b32.xlu0 %v579, 64
      %v914 = vpop.permute.xlu0 %913
      %915 = vrot.lane.b32.xlu0 %v580, 64
      %v916 = vpop.permute.xlu0 %915
      %917 = vrot.lane.b32.xlu0 %v581, 64
      %v918 = vpop.permute.xlu0 %917
      %923 = vrot.lane.b32.xlu0 %v683, 64
      %v924 = vpop.permute.xlu0 %923
      %925 = vrot.lane.b32.xlu0 %v684, 64
      %v926 = vpop.permute.xlu0 %925
      %927 = vrot.lane.b32.xlu0 %v685, 64
      %v928 = vpop.permute.xlu0 %927
      %929 = vrot.lane.b32.xlu0 %v686, 64
      %v930 = vpop.permute.xlu0 %929
      %935 = vrot.lane.b32.xlu0 %v771, 64
      %v936 = vpop.permute.xlu0 %935
      %937 = vrot.lane.b32.xlu0 %v772, 64
      %v938 = vpop.permute.xlu0 %937
      %939 = vrot.lane.b32.xlu0 %v773, 64
      %v940 = vpop.permute.xlu0 %939
      %941 = vrot.lane.b32.xlu0 %v774, 64
      %v942 = vpop.permute.xlu0 %941
      %947 = vrot.lane.b32.xlu0 %v859, 64
      %v948 = vpop.permute.xlu0 %947
      %949 = vrot.lane.b32.xlu0 %v860, 64
      %v950 = vpop.permute.xlu0 %949
      %951 = vrot.lane.b32.xlu0 %v861, 64
      %v952 = vpop.permute.xlu0 %951
      %953 = vrot.lane.b32.xlu0 %v862, 64
      %v954 = vpop.permute.xlu0 %953
      %vm955 = vcmask 523264
      %v958 = vsel %vm955, %v534, %v912
      %v962 = vsel %vm955, %v535, %v914
      %v966 = vsel %vm955, %v536, %v916
      %v970 = vsel %vm955, %v537, %v918
      %v974 = vsel %vm955, %v639, %v924
      %v978 = vsel %vm955, %v640, %v926
      %v982 = vsel %vm955, %v641, %v928
      %v986 = vsel %vm955, %v642, %v930
      %v990 = vsel %vm955, %v727, %v936
      %v994 = vsel %vm955, %v728, %v938
      %v998 = vsel %vm955, %v729, %v940
      %v1002 = vsel %vm955, %v730, %v942
      %v1006 = vsel %vm955, %v815, %v948
      %v1010 = vsel %vm955, %v816, %v950
      %v1014 = vsel %vm955, %v817, %v952
      %v1018 = vsel %vm955, %v818, %v954
      %v1020 = vld [vmem:[%s3] sm:$0xf]
      %v1021 = vld [vmem:[%s3 + $0x4] sm:$0xf]
      %v1022 = vld [vmem:[%s3 + $0x8] sm:$0xf]
      %v1023 = vld [vmem:[%s3 + $0xc] sm:$0xf]
      %v1024 = vld [vmem:[%s3 + $0x10] sm:$0xf]
      %v1025 = vld [vmem:[%s3 + $0x14] sm:$0xf]
      %v1026 = vld [vmem:[%s3 + $0x18] sm:$0xf]
      %v1027 = vld [vmem:[%s3 + $0x1c] sm:$0xf]
      %v1028 = vld [vmem:[%s3 + $0x20] sm:$0xf]
      %v1029 = vld [vmem:[%s3 + $0x24] sm:$0xf]
      %v1030 = vld [vmem:[%s3 + $0x28] sm:$0xf]
      %v1031 = vld [vmem:[%s3 + $0x2c] sm:$0xf]
      %v1032 = vld [vmem:[%s3 + $0x30] sm:$0xf]
      %v1033 = vld [vmem:[%s3 + $0x34] sm:$0xf]
      %v1034 = vld [vmem:[%s3 + $0x38] sm:$0xf]
      %v1035 = vld [vmem:[%s3 + $0x3c] sm:$0xf]
      %v1036 = vld [vmem:[%s3 + $0x40] sm:$0xf]
      %v1037 = vld [vmem:[%s3 + $0x44] sm:$0xf]
      %v1038 = vld [vmem:[%s3 + $0x48] sm:$0xf]
      %v1039 = vld [vmem:[%s3 + $0x4c] sm:$0xf]
      %v1040 = vld [vmem:[%s3 + $0x50] sm:$0xf]
      %v1041 = vld [vmem:[%s3 + $0x54] sm:$0xf]
      %v1042 = vld [vmem:[%s3 + $0x58] sm:$0xf]
      %v1043 = vld [vmem:[%s3 + $0x5c] sm:$0xf]
      %v1044 = vld [vmem:[%s3 + $0x60] sm:$0xf]
      %v1045 = vld [vmem:[%s3 + $0x64] sm:$0xf]
      %v1046 = vld [vmem:[%s3 + $0x68] sm:$0xf]
      %v1047 = vld [vmem:[%s3 + $0x6c] sm:$0xf]
      %v1048 = vld [vmem:[%s3 + $0x70] sm:$0xf]
      %v1049 = vld [vmem:[%s3 + $0x74] sm:$0xf]
      %v1050 = vld [vmem:[%s3 + $0x78] sm:$0xf]
      %v1051 = vld [vmem:[%s3 + $0x7c] sm:$0xf]
      %v1052 = vld [vmem:[%s3 + $0x80] sm:$0xf]
      %v1053 = vld [vmem:[%s3 + $0x84] sm:$0xf]
      %v1054 = vld [vmem:[%s3 + $0x88] sm:$0xf]
      %v1055 = vld [vmem:[%s3 + $0x8c] sm:$0xf]
      %v1056 = vld [vmem:[%s3 + $0x90] sm:$0xf]
      %v1057 = vld [vmem:[%s3 + $0x94] sm:$0xf]
      %v1058 = vld [vmem:[%s3 + $0x98] sm:$0xf]
      %v1059 = vld [vmem:[%s3 + $0x9c] sm:$0xf]
      %v1060 = vld [vmem:[%s3 + $0xa0] sm:$0xf]
      %v1061 = vld [vmem:[%s3 + $0xa4] sm:$0xf]
      %v1062 = vld [vmem:[%s3 + $0xa8] sm:$0xf]
      %v1063 = vld [vmem:[%s3 + $0xac] sm:$0xf]
      %v1064 = vld [vmem:[%s3 + $0xb0] sm:$0xf]
      %v1065 = vld [vmem:[%s3 + $0xb4] sm:$0xf]
      %v1066 = vld [vmem:[%s3 + $0xb8] sm:$0xf]
      %v1067 = vld [vmem:[%s3 + $0xbc] sm:$0xf]
      %v1068 = vld [vmem:[%s3 + $0xc0] sm:$0xf]
      %v1069 = vld [vmem:[%s3 + $0xc4] sm:$0xf]
      %v1070 = vld [vmem:[%s3 + $0xc8] sm:$0xf]
      %v1071 = vld [vmem:[%s3 + $0xcc] sm:$0xf]
      %v1072 = vld [vmem:[%s3 + $0xd0] sm:$0xf]
      %v1073 = vld [vmem:[%s3 + $0xd4] sm:$0xf]
      %v1074 = vld [vmem:[%s3 + $0xd8] sm:$0xf]
      %v1075 = vld [vmem:[%s3 + $0xdc] sm:$0xf]
      %v1076 = vld [vmem:[%s3 + $0xe0] sm:$0xf]
      %v1077 = vld [vmem:[%s3 + $0xe4] sm:$0xf]
      %v1078 = vld [vmem:[%s3 + $0xe8] sm:$0xf]
      %v1079 = vld [vmem:[%s3 + $0xec] sm:$0xf]
      %v1080 = vld [vmem:[%s3 + $0xf0] sm:$0xf]
      %v1081 = vld [vmem:[%s3 + $0xf4] sm:$0xf]
      %v1082 = vld [vmem:[%s3 + $0xf8] sm:$0xf]
      %v1083 = vld [vmem:[%s3 + $0xfc] sm:$0xf]
      %v1084 = vld [vmem:[%s3 + $0x100] sm:$0xf]
      %v1085 = vld [vmem:[%s3 + $0x104] sm:$0xf]
      %v1086 = vld [vmem:[%s3 + $0x108] sm:$0xf]
      %v1087 = vld [vmem:[%s3 + $0x10c] sm:$0xf]
      %v1088 = vld [vmem:[%s3 + $0x110] sm:$0xf]
      %v1089 = vld [vmem:[%s3 + $0x114] sm:$0xf]
      %v1090 = vld [vmem:[%s3 + $0x118] sm:$0xf]
      %v1091 = vld [vmem:[%s3 + $0x11c] sm:$0xf]
      %v1092 = vld [vmem:[%s4] sm:$0x1]
      %v1094 = vlaneseq
      %v1095 = vshrl.u32 %v1094, 7
      %v1096 = vsub.s32 0, %v1095
      %v1097 = vrot.slane %v1092, %v1096
      %v1171 = vunpack.c.l.b16 %v1020
      %v1172 = vunpack.c.l.b16 %v1021
      %v1173 = vunpack.c.l.b16 %v1022
      %v1174 = vunpack.c.l.b16 %v1023
      %v1175 = vunpack.c.l.b16 %v1024
      %v1176 = vunpack.c.l.b16 %v1025
      %v1177 = vunpack.c.l.b16 %v1026
      %v1178 = vunpack.c.l.b16 %v1027
      %v1179 = vunpack.c.l.b16 %v1028
      %v1180 = vunpack.c.l.b16 %v1029
      %v1181 = vunpack.c.l.b16 %v1030
      %v1182 = vunpack.c.l.b16 %v1031
      %v1183 = vunpack.c.l.b16 %v1032
      %v1184 = vunpack.c.l.b16 %v1033
      %v1185 = vunpack.c.l.b16 %v1034
      %v1186 = vunpack.c.l.b16 %v1035
      %v1187 = vunpack.c.l.b16 %v1036
      %v1188 = vunpack.c.l.b16 %v1037
      %v1189 = vunpack.c.l.b16 %v1038
      %v1190 = vunpack.c.l.b16 %v1039
      %v1191 = vunpack.c.l.b16 %v1040
      %v1192 = vunpack.c.l.b16 %v1041
      %v1193 = vunpack.c.l.b16 %v1042
      %v1194 = vunpack.c.l.b16 %v1043
      %v1195 = vunpack.c.l.b16 %v1044
      %v1196 = vunpack.c.l.b16 %v1045
      %v1197 = vunpack.c.l.b16 %v1046
      %v1198 = vunpack.c.l.b16 %v1047
      %v1199 = vunpack.c.l.b16 %v1048
      %v1200 = vunpack.c.l.b16 %v1049
      %v1201 = vunpack.c.l.b16 %v1050
      %v1202 = vunpack.c.l.b16 %v1051
      %v1203 = vunpack.c.l.b16 %v1052
      %v1204 = vunpack.c.l.b16 %v1053
      %v1205 = vunpack.c.l.b16 %v1054
      %v1206 = vunpack.c.l.b16 %v1055
      %v1207 = vunpack.c.l.b16 %v1056
      %v1208 = vunpack.c.l.b16 %v1057
      %v1209 = vunpack.c.l.b16 %v1058
      %v1210 = vunpack.c.l.b16 %v1059
      %v1211 = vunpack.c.l.b16 %v1060
      %v1212 = vunpack.c.l.b16 %v1061
      %v1213 = vunpack.c.l.b16 %v1062
      %v1214 = vunpack.c.l.b16 %v1063
      %v1215 = vunpack.c.l.b16 %v1064
      %v1216 = vunpack.c.l.b16 %v1065
      %v1217 = vunpack.c.l.b16 %v1066
      %v1218 = vunpack.c.l.b16 %v1067
      %v1219 = vunpack.c.l.b16 %v1068
      %v1220 = vunpack.c.l.b16 %v1069
      %v1221 = vunpack.c.l.b16 %v1070
      %v1222 = vunpack.c.l.b16 %v1071
      %v1223 = vunpack.c.l.b16 %v1072
      %v1224 = vunpack.c.l.b16 %v1073
      %v1225 = vunpack.c.l.b16 %v1074
      %v1226 = vunpack.c.l.b16 %v1075
      %v1227 = vunpack.c.l.b16 %v1076
      %v1228 = vunpack.c.l.b16 %v1077
      %v1229 = vunpack.c.l.b16 %v1078
      %v1230 = vunpack.c.l.b16 %v1079
      %v1231 = vunpack.c.l.b16 %v1080
      %v1232 = vunpack.c.l.b16 %v1081
      %v1233 = vunpack.c.l.b16 %v1082
      %v1234 = vunpack.c.l.b16 %v1083
      %v1235 = vunpack.c.l.b16 %v1084
      %v1236 = vunpack.c.l.b16 %v1085
      %v1237 = vunpack.c.l.b16 %v1086
      %v1238 = vunpack.c.l.b16 %v1087
      %v1239 = vunpack.c.l.b16 %v1088
      %v1240 = vunpack.c.l.b16 %v1089
      %v1241 = vunpack.c.l.b16 %v1090
      %v1242 = vunpack.c.l.b16 %v1091
      %v1243 = vpack.c.b16 %v1172, %v1171
      %v1244 = vpack.c.b16 %v1174, %v1173
      %v1245 = vpack.c.b16 %v1176, %v1175
      %v1246 = vpack.c.b16 %v1178, %v1177
      %v1247 = vpack.c.b16 %v1180, %v1179
      %v1248 = vpack.c.b16 %v1182, %v1181
      %v1249 = vpack.c.b16 %v1184, %v1183
      %v1250 = vpack.c.b16 %v1186, %v1185
      %v1251 = vpack.c.b16 %v1188, %v1187
      %v1252 = vpack.c.b16 %v1190, %v1189
      %v1253 = vpack.c.b16 %v1192, %v1191
      %v1254 = vpack.c.b16 %v1194, %v1193
      %v1255 = vpack.c.b16 %v1196, %v1195
      %v1256 = vpack.c.b16 %v1198, %v1197
      %v1257 = vpack.c.b16 %v1200, %v1199
      %v1258 = vpack.c.b16 %v1202, %v1201
      %v1259 = vpack.c.b16 %v1204, %v1203
      %v1260 = vpack.c.b16 %v1206, %v1205
      %v1261 = vpack.c.b16 %v1208, %v1207
      %v1262 = vpack.c.b16 %v1210, %v1209
      %v1263 = vpack.c.b16 %v1212, %v1211
      %v1264 = vpack.c.b16 %v1214, %v1213
      %v1265 = vpack.c.b16 %v1216, %v1215
      %v1266 = vpack.c.b16 %v1218, %v1217
      %v1267 = vpack.c.b16 %v1220, %v1219
      %v1268 = vpack.c.b16 %v1222, %v1221
      %v1269 = vpack.c.b16 %v1224, %v1223
      %v1270 = vpack.c.b16 %v1226, %v1225
      %v1271 = vpack.c.b16 %v1228, %v1227
      %v1272 = vpack.c.b16 %v1230, %v1229
      %v1273 = vpack.c.b16 %v1232, %v1231
      %v1274 = vpack.c.b16 %v1234, %v1233
      %v1275 = vpack.c.b16 %v1236, %v1235
      %v1276 = vpack.c.b16 %v1238, %v1237
      %v1277 = vpack.c.b16 %v1240, %v1239
      %v1278 = vpack.c.b16 %v1242, %v1241
      %v1316 = vsel %vm955, %v903, 0
      %v1319 = vsel %vm955, %v904, 0
      %v1322 = vsel %vm955, %v905, 0
      %v1325 = vsel %vm955, %v906, 0
      %1327 = vmatprep.subr.bf16.mxu0 0
      %1328 = vmatpush1.bf16.msra.mxu0 %v1243
      %1329 = vmatprep.subr.bf16.mxu0 0
      %1330 = vmatpush1.bf16.msra.mxu0 %v1244
      %1331 = vmatprep.subr.bf16.mxu0 0
      %1332 = vmatpush1.bf16.msra.mxu0 %v1245
      %1333 = vmatprep.subr.bf16.mxu0 0
      %1334 = vmatpush1.bf16.msra.mxu0 %v1246
      %1335 = vmatprep.subr.bf16.mxu0 0
      %1336 = vmatpush1.bf16.msra.mxu0 %v1247
      %1337 = vmatprep.subr.bf16.mxu0 0
      %1338 = vmatpush1.bf16.msra.mxu0 %v1248
      %1339 = vmatprep.subr.bf16.mxu0 0
      %1340 = vmatpush1.bf16.msra.mxu0 %v1249
      %1341 = vmatprep.subr.bf16.mxu0 0
      %1342 = vmatpush1.bf16.msra.mxu0 %v1250
      %1343 = vmatprep.subr.bf16.mxu0 0
      %1344 = vmatpush1.bf16.msra.mxu0 %v1251
      %1345 = vmatprep.subr.bf16.mxu0 0
      %1346 = vmatpush1.bf16.msra.mxu0 %v1252
      %1347 = vmatprep.subr.bf16.mxu0 0
      %1348 = vmatpush1.bf16.msra.mxu0 %v1253
      %1349 = vmatprep.subr.bf16.mxu0 0
      %1350 = vmatpush1.bf16.msra.mxu0 %v1254
      %1351 = vmatprep.subr.bf16.mxu0 0
      %1352 = vmatpush1.bf16.msra.mxu0 %v1255
      %1353 = vmatprep.subr.bf16.mxu0 0
      %1354 = vmatpush1.bf16.msra.mxu0 %v1256
      %1355 = vmatprep.subr.bf16.mxu0 0
      %1356 = vmatpush1.bf16.msra.mxu0 %v1257
      %1357 = vmatprep.subr.bf16.mxu0 0
      %1358 = vmatpush1.bf16.msra.mxu0 %v1258
      %1359 = vmatprep.mubr.bf16.mxu0 %v974
      %1360 = vmatmul.mubr.bf16.gmra.mrb[0].mxu0 %v958
      %v1361 = vpop.f32.mrb[0].mxu0
      %v1362 = vadd.f32 %v1097, %v1361
      %v1363 = vpop.f32.mrb[0].mxu0
      %v1364 = vpop.f32.mrb[0].mxu0
      %v1365 = vadd.f32 %v1097, %v1364
      %v1366 = vpop.f32.mrb[0].mxu0
      %1367 = vmatprep.mubr.bf16.mxu0 %v978
      %1368 = vmatmul.mubr.bf16.gmra.mrb[0].mxu0 %v962
      %v1369 = vpop.f32.mrb[0].mxu0
      %v1370 = vadd.f32 %v1097, %v1369
      %v1371 = vpop.f32.mrb[0].mxu0
      %v1372 = vpop.f32.mrb[0].mxu0
      %v1373 = vadd.f32 %v1097, %v1372
      %v1374 = vpop.f32.mrb[0].mxu0
      %1375 = vmatprep.mubr.bf16.mxu0 %v982
      %1376 = vmatmul.mubr.bf16.gmra.mrb[0].mxu0 %v966
      %v1377 = vpop.f32.mrb[0].mxu0
      %v1378 = vadd.f32 %v1097, %v1377
      %v1379 = vpop.f32.mrb[0].mxu0
      %v1380 = vpop.f32.mrb[0].mxu0
      %v1381 = vadd.f32 %v1097, %v1380
      %v1382 = vpop.f32.mrb[0].mxu0
      %1383 = vmatprep.mubr.bf16.mxu0 %v986
      %1384 = vmatmul.mubr.bf16.gmra.mrb[0].mxu0 %v970
      %v1385 = vpop.f32.mrb[0].mxu0
      %v1386 = vadd.f32 %v1097, %v1385
      %v1387 = vpop.f32.mrb[0].mxu0
      %v1388 = vpop.f32.mrb[0].mxu0
      %v1389 = vadd.f32 %v1097, %v1388
      %v1390 = vpop.f32.mrb[0].mxu0
      %1391 = vdwg.mxu0
      %1392 = vmatprep.subr.bf16.mxu0 0
      %1393 = vmatpush1.bf16.msra.mxu0 %v1259
      %1394 = vmatprep.subr.bf16.mxu0 0
      %1395 = vmatpush1.bf16.msra.mxu0 %v1260
      %1396 = vmatprep.subr.bf16.mxu0 0
      %1397 = vmatpush1.bf16.msra.mxu0 %v1261
      %1398 = vmatprep.subr.bf16.mxu0 0
      %1399 = vmatpush1.bf16.msra.mxu0 %v1262
      %1400 = vmatprep.subr.bf16.mxu0 0
      %1401 = vmatpush1.bf16.msra.mxu0 %v1263
      %1402 = vmatprep.subr.bf16.mxu0 0
      %1403 = vmatpush1.bf16.msra.mxu0 %v1264
      %1404 = vmatprep.subr.bf16.mxu0 0
      %1405 = vmatpush1.bf16.msra.mxu0 %v1265
      %1406 = vmatprep.subr.bf16.mxu0 0
      %1407 = vmatpush1.bf16.msra.mxu0 %v1266
      %1408 = vmatprep.subr.bf16.mxu0 0
      %1409 = vmatpush1.bf16.msra.mxu0 %v1267
      %1410 = vmatprep.subr.bf16.mxu0 0
      %1411 = vmatpush1.bf16.msra.mxu0 %v1268
      %1412 = vmatprep.subr.bf16.mxu0 0
      %1413 = vmatpush1.bf16.msra.mxu0 %v1269
      %1414 = vmatprep.subr.bf16.mxu0 0
      %1415 = vmatpush1.bf16.msra.mxu0 %v1270
      %1416 = vmatprep.subr.bf16.mxu0 0
      %1417 = vmatpush1.bf16.msra.mxu0 %v1271
      %1418 = vmatprep.subr.bf16.mxu0 0
      %1419 = vmatpush1.bf16.msra.mxu0 %v1272
      %1420 = vmatprep.subr.bf16.mxu0 0
      %1421 = vmatpush1.bf16.msra.mxu0 %v1273
      %1422 = vmatprep.subr.bf16.mxu0 0
      %1423 = vmatpush1.bf16.msra.mxu0 %v1274
      %1424 = vmatprep.mubr.bf16.mxu0 %v1006
      %1425 = vmatmul.mubr.bf16.gmra.mrb[0].mxu0 %v990
      %v1426 = vpop.f32.mrb[0].mxu0
      %v1427 = vadd.f32 %v1362, %v1426
      %v1428 = vpop.f32.mrb[0].mxu0
      %v1429 = vpop.f32.mrb[0].mxu0
      %v1430 = vadd.f32 %v1365, %v1429
      %v1431 = vpop.f32.mrb[0].mxu0
      %1432 = vmatprep.mubr.bf16.mxu0 %v1010
      %1433 = vmatmul.mubr.bf16.gmra.mrb[0].mxu0 %v994
      %v1434 = vpop.f32.mrb[0].mxu0
      %v1435 = vadd.f32 %v1370, %v1434
      %v1436 = vpop.f32.mrb[0].mxu0
      %v1437 = vpop.f32.mrb[0].mxu0
      %v1438 = vadd.f32 %v1373, %v1437
      %v1439 = vpop.f32.mrb[0].mxu0
      %1440 = vmatprep.mubr.bf16.mxu0 %v1014
      %1441 = vmatmul.mubr.bf16.gmra.mrb[0].mxu0 %v998
      %v1442 = vpop.f32.mrb[0].mxu0
      %v1443 = vadd.f32 %v1378, %v1442
      %v1444 = vpop.f32.mrb[0].mxu0
      %v1445 = vpop.f32.mrb[0].mxu0
      %v1446 = vadd.f32 %v1381, %v1445
      %v1447 = vpop.f32.mrb[0].mxu0
      %1448 = vmatprep.mubr.bf16.mxu0 %v1018
      %1449 = vmatmul.mubr.bf16.gmra.mrb[0].mxu0 %v1002
      %v1450 = vpop.f32.mrb[0].mxu0
      %v1451 = vadd.f32 %v1386, %v1450
      %v1452 = vpop.f32.mrb[0].mxu0
      %v1453 = vpop.f32.mrb[0].mxu0
      %v1454 = vadd.f32 %v1389, %v1453
      %v1455 = vpop.f32.mrb[0].mxu0
      %1456 = vdwg.mxu0
      %1457 = vmatprep.subr.bf16.mxu0 0
      %1458 = vmatpush1.bf16.msra.mxu0 %v1275
      %1459 = vmatprep.subr.bf16.mxu0 0
      %1460 = vmatpush1.bf16.msra.mxu0 %v1276
      %1461 = vmatprep.subr.bf16.mxu0 0
      %1462 = vmatpush1.bf16.msra.mxu0 %v1277
      %1463 = vmatprep.subr.bf16.mxu0 0
      %1464 = vmatpush1.bf16.msra.mxu0 %v1278
      %1465 = vmatprep.subr.bf16.mxu0 0
      %1466 = vmatpush1.bf16.msra.mxu0 0
      %1467 = vmatprep.subr.bf16.mxu0 0
      %1468 = vmatpush1.bf16.msra.mxu0 0
      %1469 = vmatprep.subr.bf16.mxu0 0
      %1470 = vmatpush1.bf16.msra.mxu0 0
      %1471 = vmatprep.subr.bf16.mxu0 0
      %1472 = vmatpush1.bf16.msra.mxu0 0
      %1473 = vmatprep.subr.bf16.mxu0 0
      %1474 = vmatpush1.bf16.msra.mxu0 0
      %1475 = vmatprep.subr.bf16.mxu0 0
      %1476 = vmatpush1.bf16.msra.mxu0 0
      %1477 = vmatprep.subr.bf16.mxu0 0
      %1478 = vmatpush1.bf16.msra.mxu0 0
      %1479 = vmatprep.subr.bf16.mxu0 0
      %1480 = vmatpush1.bf16.msra.mxu0 0
      %1481 = vmatprep.subr.bf16.mxu0 0
      %1482 = vmatpush1.bf16.msra.mxu0 0
      %1483 = vmatprep.subr.bf16.mxu0 0
      %1484 = vmatpush1.bf16.msra.mxu0 0
      %1485 = vmatprep.subr.bf16.mxu0 0
      %1486 = vmatpush1.bf16.msra.mxu0 0
      %1487 = vmatprep.subr.bf16.mxu0 0
      %1488 = vmatpush1.bf16.msra.mxu0 0
      %1489 = vmatprep.mubr.bf16.mxu0 0
      %1490 = vmatmul.mubr.bf16.gmra.mrb[0].mxu0 %v1316
      %v1491 = vpop.f32.mrb[0].mxu0
      %v1492 = vadd.f32 %v1427, %v1491
      %v1493 = vpop.f32.mrb[0].mxu0
      %v1494 = vpop.f32.mrb[0].mxu0
      %v1495 = vadd.f32 %v1430, %v1494
      %v1496 = vpop.f32.mrb[0].mxu0
      %1497 = vmatprep.mubr.bf16.mxu0 0
      %1498 = vmatmul.mubr.bf16.gmra.mrb[0].mxu0 %v1319
      %v1499 = vpop.f32.mrb[0].mxu0
      %v1500 = vadd.f32 %v1435, %v1499
      %v1501 = vpop.f32.mrb[0].mxu0
      %v1502 = vpop.f32.mrb[0].mxu0
      %v1503 = vadd.f32 %v1438, %v1502
      %v1504 = vpop.f32.mrb[0].mxu0
      %1505 = vmatprep.mubr.bf16.mxu0 0
      %1506 = vmatmul.mubr.bf16.gmra.mrb[0].mxu0 %v1322
      %v1507 = vpop.f32.mrb[0].mxu0
      %v1508 = vadd.f32 %v1443, %v1507
      %v1509 = vpop.f32.mrb[0].mxu0
      %v1510 = vpop.f32.mrb[0].mxu0
      %v1511 = vadd.f32 %v1446, %v1510
      %v1512 = vpop.f32.mrb[0].mxu0
      %1513 = vmatprep.mubr.bf16.mxu0 0
      %1514 = vmatmul.mubr.bf16.gmra.mrb[0].mxu0 %v1325
      %v1515 = vpop.f32.mrb[0].mxu0
      %v1516 = vadd.f32 %v1451, %v1515
      %v1517 = vpop.f32.mrb[0].mxu0
      %v1518 = vpop.f32.mrb[0].mxu0
      %v1519 = vadd.f32 %v1454, %v1518
      %v1520 = vpop.f32.mrb[0].mxu0
      %1521 = vdwg.mxu0
      %v1522 = vld [vmem:[%s404] sm:$0xff]
      %v1523 = vld [vmem:[%s404 + $0x8] sm:$0xff]
      %v1524 = vld [vmem:[%s404 + $0x10] sm:$0xff]
      %v1525 = vld [vmem:[%s404 + $0x18] sm:$0xff]
      %v1526 = vld [vmem:[%s404 + $0x20] sm:$0xff]
      %v1527 = vld [vmem:[%s404 + $0x28] sm:$0xff]
      %v1528 = vld [vmem:[%s404 + $0x30] sm:$0xff]
      %v1529 = vld [vmem:[%s404 + $0x38] sm:$0xff]
      %1538 = vrot.lane.b32.xlu0 %v1522, 56
      %v1539 = vpop.permute.xlu0 %1538
      %1540 = vrot.lane.b32.xlu0 %v1523, 56
      %v1541 = vpop.permute.xlu0 %1540
      %1542 = vrot.lane.b32.xlu0 %v1524, 56
      %v1543 = vpop.permute.xlu0 %1542
      %1544 = vrot.lane.b32.xlu0 %v1525, 56
      %v1545 = vpop.permute.xlu0 %1544
      %1546 = vrot.lane.b32.xlu0 %v1526, 56
      %v1547 = vpop.permute.xlu0 %1546
      %1548 = vrot.lane.b32.xlu0 %v1527, 56
      %v1549 = vpop.permute.xlu0 %1548
      %1550 = vrot.lane.b32.xlu0 %v1528, 56
      %v1551 = vpop.permute.xlu0 %1550
      %1552 = vrot.lane.b32.xlu0 %v1529, 56
      %v1553 = vpop.permute.xlu0 %1552
      %vm1562 = vcmask 457728
      %v1563 = vsel %vm1562, %v1492, %v1539
      %v1564 = vsel %vm1562, %v1495, %v1541
      %v1565 = vsel %vm1562, %v1500, %v1543
      %v1566 = vsel %vm1562, %v1503, %v1545
      %v1567 = vsel %vm1562, %v1508, %v1547
      %v1568 = vsel %vm1562, %v1511, %v1549
      %v1569 = vsel %vm1562, %v1516, %v1551
      %v1570 = vsel %vm1562, %v1519, %v1553
      %v1571 = vld [vmem:[%s9] sm:$0x1]
      %v1573 = vlaneseq
      %v1574 = vshrl.u32 %v1573, 7
      %v1575 = vsub.s32 0, %v1574
      %v1576 = vrot.slane %v1571, %v1575
      %v1578 = vmul.f32 %v1563, %v1576
      %v1579 = vmul.f32 %v1564, %v1576
      %v1580 = vmul.f32 %v1565, %v1576
      %v1581 = vmul.f32 %v1566, %v1576
      %v1582 = vmul.f32 %v1567, %v1576
      %v1583 = vmul.f32 %v1568, %v1576
      %v1584 = vmul.f32 %v1569, %v1576
      %v1585 = vmul.f32 %v1570, %v1576
      %v1586 = vld [vmem:[%s10] sm:$0x1]
      %v1588 = vlaneseq
      %v1589 = vshrl.u32 %v1588, 7
      %v1590 = vsub.s32 0, %v1589
      %v1591 = vrot.slane %v1586, %v1590
      %v1593 = vadd.f32 %v1578, %v1591
      %v1594 = vadd.f32 %v1579, %v1591
      %v1595 = vadd.f32 %v1580, %v1591
      %v1596 = vadd.f32 %v1581, %v1591
      %v1597 = vadd.f32 %v1582, %v1591
      %v1598 = vadd.f32 %v1583, %v1591
      %v1599 = vadd.f32 %v1584, %v1591
      %v1600 = vadd.f32 %v1585, %v1591
      %v1601 = vmax.f32 %v1593, 0.0
      %v1602 = vmax.f32 %v1594, 0.0
      %v1603 = vmax.f32 %v1595, 0.0
      %v1604 = vmax.f32 %v1596, 0.0
      %v1605 = vmax.f32 %v1597, 0.0
      %v1606 = vmax.f32 %v1598, 0.0
      %v1607 = vmax.f32 %v1599, 0.0
      %v1608 = vmax.f32 %v1600, 0.0
      %v1609 = vrot.slane %v1601, 7
      %v1610 = vrot.slane %v1602, 7
      %v1611 = vrot.slane %v1603, 7
      %v1612 = vrot.slane %v1604, 7
      %v1613 = vrot.slane %v1605, 7
      %v1614 = vrot.slane %v1606, 7
      %v1615 = vrot.slane %v1607, 7
      %v1616 = vrot.slane %v1608, 7
      %v1617 = vsel %vm477, %v1615, %v1616
      %v1618 = vsel %vm477, %v1614, %v1615
      %v1619 = vsel %vm477, %v1613, %v1614
      %v1620 = vsel %vm477, %v1612, %v1613
      %v1621 = vsel %vm477, %v1611, %v1612
      %v1622 = vsel %vm477, %v1610, %v1611
      %v1623 = vsel %vm477, %v1609, %v1610
      %v1624 = vsel %vm477, %v1616, %v1609
      %v1625 = vmul.f32 %v1617, %v489
      %v1626 = vmul.f32 %v1624, %v494
      %v1627 = vmul.f32 %v1623, %v499
      %v1628 = vmul.f32 %v1622, %v504
      %v1629 = vmul.f32 %v1621, %v509
      %v1630 = vmul.f32 %v1620, %v514
      %v1631 = vmul.f32 %v1619, %v519
      %v1632 = vmul.f32 %v1618, %v524
      %v1633 = vpack.c.bf16 %v1626, %v1625
      %v1634 = vpack.c.bf16 %v1628, %v1627
      %v1635 = vpack.c.bf16 %v1630, %v1629
      %v1636 = vpack.c.bf16 %v1632, %v1631
      %v1637 = vmul.f32 %v1608, %v540
      %v1638 = vmul.f32 %v1601, %v544
      %v1639 = vmul.f32 %v1602, %v548
      %v1640 = vmul.f32 %v1603, %v552
      %v1641 = vmul.f32 %v1604, %v556
      %v1642 = vmul.f32 %v1605, %v560
      %v1643 = vmul.f32 %v1606, %v564
      %v1644 = vmul.f32 %v1607, %v568
      %v1645 = vpack.c.bf16 %v1638, %v1637
      %v1646 = vpack.c.bf16 %v1640, %v1639
      %v1647 = vpack.c.bf16 %v1642, %v1641
      %v1648 = vpack.c.bf16 %v1644, %v1643
      %v1649 = vrot.slane %v1601, 1
      %v1650 = vrot.slane %v1602, 1
      %v1651 = vrot.slane %v1603, 1
      %v1652 = vrot.slane %v1604, 1
      %v1653 = vrot.slane %v1605, 1
      %v1654 = vrot.slane %v1606, 1
      %v1655 = vrot.slane %v1607, 1
      %v1656 = vrot.slane %v1608, 1
      %v1657 = vsel %vm590, %v1655, %v1656
      %v1658 = vsel %vm590, %v1654, %v1655
      %v1659 = vsel %vm590, %v1653, %v1654
      %v1660 = vsel %vm590, %v1652, %v1653
      %v1661 = vsel %vm590, %v1651, %v1652
      %v1662 = vsel %vm590, %v1650, %v1651
      %v1663 = vsel %vm590, %v1649, %v1650
      %v1664 = vsel %vm590, %v1656, %v1649
      %v1665 = vmul.f32 %v1664, %v601
      %v1666 = vmul.f32 %v1663, %v605
      %v1667 = vmul.f32 %v1662, %v609
      %v1668 = vmul.f32 %v1661, %v613
      %v1669 = vmul.f32 %v1660, %v617
      %v1670 = vmul.f32 %v1659, %v621
      %v1671 = vmul.f32 %v1658, %v625
      %v1672 = vmul.f32 %v1657, %v629
      %v1673 = vpack.c.bf16 %v1666, %v1665
      %v1674 = vpack.c.bf16 %v1668, %v1667
      %v1675 = vpack.c.bf16 %v1670, %v1669
      %v1676 = vpack.c.bf16 %v1672, %v1671
      %v1677 = vmul.f32 %v1624, %v645
      %v1678 = vmul.f32 %v1623, %v649
      %v1679 = vmul.f32 %v1622, %v653
      %v1680 = vmul.f32 %v1621, %v657
      %v1681 = vmul.f32 %v1620, %v661
      %v1682 = vmul.f32 %v1619, %v665
      %v1683 = vmul.f32 %v1618, %v669
      %v1684 = vmul.f32 %v1617, %v673
      %v1685 = vpack.c.bf16 %v1678, %v1677
      %v1686 = vpack.c.bf16 %v1680, %v1679
      %v1687 = vpack.c.bf16 %v1682, %v1681
      %v1688 = vpack.c.bf16 %v1684, %v1683
      %v1689 = vmul.f32 %v1601, %v689
      %v1690 = vmul.f32 %v1602, %v693
      %v1691 = vmul.f32 %v1603, %v697
      %v1692 = vmul.f32 %v1604, %v701
      %v1693 = vmul.f32 %v1605, %v705
      %v1694 = vmul.f32 %v1606, %v709
      %v1695 = vmul.f32 %v1607, %v713
      %v1696 = vmul.f32 %v1608, %v717
      %v1697 = vpack.c.bf16 %v1690, %v1689
      %v1698 = vpack.c.bf16 %v1692, %v1691
      %v1699 = vpack.c.bf16 %v1694, %v1693
      %v1700 = vpack.c.bf16 %v1696, %v1695
      %v1701 = vmul.f32 %v1663, %v733
      %v1702 = vmul.f32 %v1662, %v737
      %v1703 = vmul.f32 %v1661, %v741
      %v1704 = vmul.f32 %v1660, %v745
      %v1705 = vmul.f32 %v1659, %v749
      %v1706 = vmul.f32 %v1658, %v753
      %v1707 = vmul.f32 %v1657, %v757
      %v1708 = vmul.f32 %v1664, %v761
      %v1709 = vpack.c.bf16 %v1702, %v1701
      %v1710 = vpack.c.bf16 %v1704, %v1703
      %v1711 = vpack.c.bf16 %v1706, %v1705
      %v1712 = vpack.c.bf16 %v1708, %v1707
      %v1713 = vmul.f32 %v1623, %v777
      %v1714 = vmul.f32 %v1622, %v781
      %v1715 = vmul.f32 %v1621, %v785
      %v1716 = vmul.f32 %v1620, %v789
      %v1717 = vmul.f32 %v1619, %v793
      %v1718 = vmul.f32 %v1618, %v797
      %v1719 = vmul.f32 %v1617, %v801
      %v1720 = vmul.f32 %v1624, %v805
      %v1721 = vpack.c.bf16 %v1714, %v1713
      %v1722 = vpack.c.bf16 %v1716, %v1715
      %v1723 = vpack.c.bf16 %v1718, %v1717
      %v1724 = vpack.c.bf16 %v1720, %v1719
      %v1725 = vmul.f32 %v1602, %v821
      %v1726 = vmul.f32 %v1603, %v825
      %v1727 = vmul.f32 %v1604, %v829
      %v1728 = vmul.f32 %v1605, %v833
      %v1729 = vmul.f32 %v1606, %v837
      %v1730 = vmul.f32 %v1607, %v841
      %v1731 = vmul.f32 %v1608, %v845
      %v1732 = vmul.f32 %v1601, %v849
      %v1733 = vpack.c.bf16 %v1726, %v1725
      %v1734 = vpack.c.bf16 %v1728, %v1727
      %v1735 = vpack.c.bf16 %v1730, %v1729
      %v1736 = vpack.c.bf16 %v1732, %v1731
      %v1737 = vmul.f32 %v1662, %v865
      %v1738 = vmul.f32 %v1661, %v869
      %v1739 = vmul.f32 %v1660, %v873
      %v1740 = vmul.f32 %v1659, %v877
      %v1741 = vmul.f32 %v1658, %v881
      %v1742 = vmul.f32 %v1657, %v885
      %v1743 = vmul.f32 %v1664, %v889
      %v1744 = vmul.f32 %v1663, %v893
      %v1745 = vpack.c.bf16 %v1738, %v1737
      %v1746 = vpack.c.bf16 %v1740, %v1739
      %v1747 = vpack.c.bf16 %v1742, %v1741
      %v1748 = vpack.c.bf16 %v1744, %v1743
      %1753 = vrot.lane.b32.xlu0 %v1645, 64
      %v1754 = vpop.permute.xlu0 %1753
      %1755 = vrot.lane.b32.xlu0 %v1646, 64
      %v1756 = vpop.permute.xlu0 %1755
      %1757 = vrot.lane.b32.xlu0 %v1647, 64
      %v1758 = vpop.permute.xlu0 %1757
      %1759 = vrot.lane.b32.xlu0 %v1648, 64
      %v1760 = vpop.permute.xlu0 %1759
      %1765 = vrot.lane.b32.xlu0 %v1685, 64
      %v1766 = vpop.permute.xlu0 %1765
      %1767 = vrot.lane.b32.xlu0 %v1686, 64
      %v1768 = vpop.permute.xlu0 %1767
      %1769 = vrot.lane.b32.xlu0 %v1687, 64
      %v1770 = vpop.permute.xlu0 %1769
      %1771 = vrot.lane.b32.xlu0 %v1688, 64
      %v1772 = vpop.permute.xlu0 %1771
      %1777 = vrot.lane.b32.xlu0 %v1709, 64
      %v1778 = vpop.permute.xlu0 %1777
      %1779 = vrot.lane.b32.xlu0 %v1710, 64
      %v1780 = vpop.permute.xlu0 %1779
      %1781 = vrot.lane.b32.xlu0 %v1711, 64
      %v1782 = vpop.permute.xlu0 %1781
      %1783 = vrot.lane.b32.xlu0 %v1712, 64
      %v1784 = vpop.permute.xlu0 %1783
      %1789 = vrot.lane.b32.xlu0 %v1733, 64
      %v1790 = vpop.permute.xlu0 %1789
      %1791 = vrot.lane.b32.xlu0 %v1734, 64
      %v1792 = vpop.permute.xlu0 %1791
      %1793 = vrot.lane.b32.xlu0 %v1735, 64
      %v1794 = vpop.permute.xlu0 %1793
      %1795 = vrot.lane.b32.xlu0 %v1736, 64
      %v1796 = vpop.permute.xlu0 %1795
      %v1799 = vsel %vm955, %v1633, %v1754
      %v1803 = vsel %vm955, %v1634, %v1756
      %v1807 = vsel %vm955, %v1635, %v1758
      %v1811 = vsel %vm955, %v1636, %v1760
      %v1815 = vsel %vm955, %v1673, %v1766
      %v1819 = vsel %vm955, %v1674, %v1768
      %v1823 = vsel %vm955, %v1675, %v1770
      %v1827 = vsel %vm955, %v1676, %v1772
      %v1831 = vsel %vm955, %v1697, %v1778
      %v1835 = vsel %vm955, %v1698, %v1780
      %v1839 = vsel %vm955, %v1699, %v1782
      %v1843 = vsel %vm955, %v1700, %v1784
      %v1847 = vsel %vm955, %v1721, %v1790
      %v1851 = vsel %vm955, %v1722, %v1792
      %v1855 = vsel %vm955, %v1723, %v1794
      %v1859 = vsel %vm955, %v1724, %v1796
      %v1861 = vld [vmem:[%s5] sm:$0xf]
      %v1862 = vld [vmem:[%s5 + $0x4] sm:$0xf]
      %v1863 = vld [vmem:[%s5 + $0x8] sm:$0xf]
      %v1864 = vld [vmem:[%s5 + $0xc] sm:$0xf]
      %v1865 = vld [vmem:[%s5 + $0x10] sm:$0xf]
      %v1866 = vld [vmem:[%s5 + $0x14] sm:$0xf]
      %v1867 = vld [vmem:[%s5 + $0x18] sm:$0xf]
      %v1868 = vld [vmem:[%s5 + $0x1c] sm:$0xf]
      %v1869 = vld [vmem:[%s5 + $0x20] sm:$0xf]
      %v1870 = vld [vmem:[%s5 + $0x24] sm:$0xf]
      %v1871 = vld [vmem:[%s5 + $0x28] sm:$0xf]
      %v1872 = vld [vmem:[%s5 + $0x2c] sm:$0xf]
      %v1873 = vld [vmem:[%s5 + $0x30] sm:$0xf]
      %v1874 = vld [vmem:[%s5 + $0x34] sm:$0xf]
      %v1875 = vld [vmem:[%s5 + $0x38] sm:$0xf]
      %v1876 = vld [vmem:[%s5 + $0x3c] sm:$0xf]
      %v1877 = vld [vmem:[%s5 + $0x40] sm:$0xf]
      %v1878 = vld [vmem:[%s5 + $0x44] sm:$0xf]
      %v1879 = vld [vmem:[%s5 + $0x48] sm:$0xf]
      %v1880 = vld [vmem:[%s5 + $0x4c] sm:$0xf]
      %v1881 = vld [vmem:[%s5 + $0x50] sm:$0xf]
      %v1882 = vld [vmem:[%s5 + $0x54] sm:$0xf]
      %v1883 = vld [vmem:[%s5 + $0x58] sm:$0xf]
      %v1884 = vld [vmem:[%s5 + $0x5c] sm:$0xf]
      %v1885 = vld [vmem:[%s5 + $0x60] sm:$0xf]
      %v1886 = vld [vmem:[%s5 + $0x64] sm:$0xf]
      %v1887 = vld [vmem:[%s5 + $0x68] sm:$0xf]
      %v1888 = vld [vmem:[%s5 + $0x6c] sm:$0xf]
      %v1889 = vld [vmem:[%s5 + $0x70] sm:$0xf]
      %v1890 = vld [vmem:[%s5 + $0x74] sm:$0xf]
      %v1891 = vld [vmem:[%s5 + $0x78] sm:$0xf]
      %v1892 = vld [vmem:[%s5 + $0x7c] sm:$0xf]
      %v1893 = vld [vmem:[%s5 + $0x80] sm:$0xf]
      %v1894 = vld [vmem:[%s5 + $0x84] sm:$0xf]
      %v1895 = vld [vmem:[%s5 + $0x88] sm:$0xf]
      %v1896 = vld [vmem:[%s5 + $0x8c] sm:$0xf]
      %v1897 = vld [vmem:[%s5 + $0x90] sm:$0xf]
      %v1898 = vld [vmem:[%s5 + $0x94] sm:$0xf]
      %v1899 = vld [vmem:[%s5 + $0x98] sm:$0xf]
      %v1900 = vld [vmem:[%s5 + $0x9c] sm:$0xf]
      %v1901 = vld [vmem:[%s5 + $0xa0] sm:$0xf]
      %v1902 = vld [vmem:[%s5 + $0xa4] sm:$0xf]
      %v1903 = vld [vmem:[%s5 + $0xa8] sm:$0xf]
      %v1904 = vld [vmem:[%s5 + $0xac] sm:$0xf]
      %v1905 = vld [vmem:[%s5 + $0xb0] sm:$0xf]
      %v1906 = vld [vmem:[%s5 + $0xb4] sm:$0xf]
      %v1907 = vld [vmem:[%s5 + $0xb8] sm:$0xf]
      %v1908 = vld [vmem:[%s5 + $0xbc] sm:$0xf]
      %v1909 = vld [vmem:[%s5 + $0xc0] sm:$0xf]
      %v1910 = vld [vmem:[%s5 + $0xc4] sm:$0xf]
      %v1911 = vld [vmem:[%s5 + $0xc8] sm:$0xf]
      %v1912 = vld [vmem:[%s5 + $0xcc] sm:$0xf]
      %v1913 = vld [vmem:[%s5 + $0xd0] sm:$0xf]
      %v1914 = vld [vmem:[%s5 + $0xd4] sm:$0xf]
      %v1915 = vld [vmem:[%s5 + $0xd8] sm:$0xf]
      %v1916 = vld [vmem:[%s5 + $0xdc] sm:$0xf]
      %v1917 = vld [vmem:[%s5 + $0xe0] sm:$0xf]
      %v1918 = vld [vmem:[%s5 + $0xe4] sm:$0xf]
      %v1919 = vld [vmem:[%s5 + $0xe8] sm:$0xf]
      %v1920 = vld [vmem:[%s5 + $0xec] sm:$0xf]
      %v1921 = vld [vmem:[%s5 + $0xf0] sm:$0xf]
      %v1922 = vld [vmem:[%s5 + $0xf4] sm:$0xf]
      %v1923 = vld [vmem:[%s5 + $0xf8] sm:$0xf]
      %v1924 = vld [vmem:[%s5 + $0xfc] sm:$0xf]
      %v1925 = vld [vmem:[%s5 + $0x100] sm:$0xf]
      %v1926 = vld [vmem:[%s5 + $0x104] sm:$0xf]
      %v1927 = vld [vmem:[%s5 + $0x108] sm:$0xf]
      %v1928 = vld [vmem:[%s5 + $0x10c] sm:$0xf]
      %v1929 = vld [vmem:[%s5 + $0x110] sm:$0xf]
      %v1930 = vld [vmem:[%s5 + $0x114] sm:$0xf]
      %v1931 = vld [vmem:[%s5 + $0x118] sm:$0xf]
      %v1932 = vld [vmem:[%s5 + $0x11c] sm:$0xf]
      %v1933 = vld [vmem:[%s6] sm:$0x1]
      %v1935 = vlaneseq
      %v1936 = vshrl.u32 %v1935, 7
      %v1937 = vsub.s32 0, %v1936
      %v1938 = vrot.slane %v1933, %v1937
      %v2012 = vunpack.c.l.b16 %v1861
      %v2013 = vunpack.c.l.b16 %v1862
      %v2014 = vunpack.c.l.b16 %v1863
      %v2015 = vunpack.c.l.b16 %v1864
      %v2016 = vunpack.c.l.b16 %v1865
      %v2017 = vunpack.c.l.b16 %v1866
      %v2018 = vunpack.c.l.b16 %v1867
      %v2019 = vunpack.c.l.b16 %v1868
      %v2020 = vunpack.c.l.b16 %v1869
      %v2021 = vunpack.c.l.b16 %v1870
      %v2022 = vunpack.c.l.b16 %v1871
      %v2023 = vunpack.c.l.b16 %v1872
      %v2024 = vunpack.c.l.b16 %v1873
      %v2025 = vunpack.c.l.b16 %v1874
      %v2026 = vunpack.c.l.b16 %v1875
      %v2027 = vunpack.c.l.b16 %v1876
      %v2028 = vunpack.c.l.b16 %v1877
      %v2029 = vunpack.c.l.b16 %v1878
      %v2030 = vunpack.c.l.b16 %v1879
      %v2031 = vunpack.c.l.b16 %v1880
      %v2032 = vunpack.c.l.b16 %v1881
      %v2033 = vunpack.c.l.b16 %v1882
      %v2034 = vunpack.c.l.b16 %v1883
      %v2035 = vunpack.c.l.b16 %v1884
      %v2036 = vunpack.c.l.b16 %v1885
      %v2037 = vunpack.c.l.b16 %v1886
      %v2038 = vunpack.c.l.b16 %v1887
      %v2039 = vunpack.c.l.b16 %v1888
      %v2040 = vunpack.c.l.b16 %v1889
      %v2041 = vunpack.c.l.b16 %v1890
      %v2042 = vunpack.c.l.b16 %v1891
      %v2043 = vunpack.c.l.b16 %v1892
      %v2044 = vunpack.c.l.b16 %v1893
      %v2045 = vunpack.c.l.b16 %v1894
      %v2046 = vunpack.c.l.b16 %v1895
      %v2047 = vunpack.c.l.b16 %v1896
      %v2048 = vunpack.c.l.b16 %v1897
      %v2049 = vunpack.c.l.b16 %v1898
      %v2050 = vunpack.c.l.b16 %v1899
      %v2051 = vunpack.c.l.b16 %v1900
      %v2052 = vunpack.c.l.b16 %v1901
      %v2053 = vunpack.c.l.b16 %v1902
      %v2054 = vunpack.c.l.b16 %v1903
      %v2055 = vunpack.c.l.b16 %v1904
      %v2056 = vunpack.c.l.b16 %v1905
      %v2057 = vunpack.c.l.b16 %v1906
      %v2058 = vunpack.c.l.b16 %v1907
      %v2059 = vunpack.c.l.b16 %v1908
      %v2060 = vunpack.c.l.b16 %v1909
      %v2061 = vunpack.c.l.b16 %v1910
      %v2062 = vunpack.c.l.b16 %v1911
      %v2063 = vunpack.c.l.b16 %v1912
      %v2064 = vunpack.c.l.b16 %v1913
      %v2065 = vunpack.c.l.b16 %v1914
      %v2066 = vunpack.c.l.b16 %v1915
      %v2067 = vunpack.c.l.b16 %v1916
      %v2068 = vunpack.c.l.b16 %v1917
      %v2069 = vunpack.c.l.b16 %v1918
      %v2070 = vunpack.c.l.b16 %v1919
      %v2071 = vunpack.c.l.b16 %v1920
      %v2072 = vunpack.c.l.b16 %v1921
      %v2073 = vunpack.c.l.b16 %v1922
      %v2074 = vunpack.c.l.b16 %v1923
      %v2075 = vunpack.c.l.b16 %v1924
      %v2076 = vunpack.c.l.b16 %v1925
      %v2077 = vunpack.c.l.b16 %v1926
      %v2078 = vunpack.c.l.b16 %v1927
      %v2079 = vunpack.c.l.b16 %v1928
      %v2080 = vunpack.c.l.b16 %v1929
      %v2081 = vunpack.c.l.b16 %v1930
      %v2082 = vunpack.c.l.b16 %v1931
      %v2083 = vunpack.c.l.b16 %v1932
      %v2084 = vpack.c.b16 %v2013, %v2012
      %v2085 = vpack.c.b16 %v2015, %v2014
      %v2086 = vpack.c.b16 %v2017, %v2016
      %v2087 = vpack.c.b16 %v2019, %v2018
      %v2088 = vpack.c.b16 %v2021, %v2020
      %v2089 = vpack.c.b16 %v2023, %v2022
      %v2090 = vpack.c.b16 %v2025, %v2024
      %v2091 = vpack.c.b16 %v2027, %v2026
      %v2092 = vpack.c.b16 %v2029, %v2028
      %v2093 = vpack.c.b16 %v2031, %v2030
      %v2094 = vpack.c.b16 %v2033, %v2032
      %v2095 = vpack.c.b16 %v2035, %v2034
      %v2096 = vpack.c.b16 %v2037, %v2036
      %v2097 = vpack.c.b16 %v2039, %v2038
      %v2098 = vpack.c.b16 %v2041, %v2040
      %v2099 = vpack.c.b16 %v2043, %v2042
      %v2100 = vpack.c.b16 %v2045, %v2044
      %v2101 = vpack.c.b16 %v2047, %v2046
      %v2102 = vpack.c.b16 %v2049, %v2048
      %v2103 = vpack.c.b16 %v2051, %v2050
      %v2104 = vpack.c.b16 %v2053, %v2052
      %v2105 = vpack.c.b16 %v2055, %v2054
      %v2106 = vpack.c.b16 %v2057, %v2056
      %v2107 = vpack.c.b16 %v2059, %v2058
      %v2108 = vpack.c.b16 %v2061, %v2060
      %v2109 = vpack.c.b16 %v2063, %v2062
      %v2110 = vpack.c.b16 %v2065, %v2064
      %v2111 = vpack.c.b16 %v2067, %v2066
      %v2112 = vpack.c.b16 %v2069, %v2068
      %v2113 = vpack.c.b16 %v2071, %v2070
      %v2114 = vpack.c.b16 %v2073, %v2072
      %v2115 = vpack.c.b16 %v2075, %v2074
      %v2116 = vpack.c.b16 %v2077, %v2076
      %v2117 = vpack.c.b16 %v2079, %v2078
      %v2118 = vpack.c.b16 %v2081, %v2080
      %v2119 = vpack.c.b16 %v2083, %v2082
      %v2157 = vsel %vm955, %v1745, 0
      %v2160 = vsel %vm955, %v1746, 0
      %v2163 = vsel %vm955, %v1747, 0
      %v2166 = vsel %vm955, %v1748, 0
      %2168 = vmatprep.subr.bf16.mxu0 0
      %2169 = vmatpush1.bf16.msra.mxu0 %v2084
      %2170 = vmatprep.subr.bf16.mxu0 0
      %2171 = vmatpush1.bf16.msra.mxu0 %v2085
      %2172 = vmatprep.subr.bf16.mxu0 0
      %2173 = vmatpush1.bf16.msra.mxu0 %v2086
      %2174 = vmatprep.subr.bf16.mxu0 0
      %2175 = vmatpush1.bf16.msra.mxu0 %v2087
      %2176 = vmatprep.subr.bf16.mxu0 0
      %2177 = vmatpush1.bf16.msra.mxu0 %v2088
      %2178 = vmatprep.subr.bf16.mxu0 0
      %2179 = vmatpush1.bf16.msra.mxu0 %v2089
      %2180 = vmatprep.subr.bf16.mxu0 0
      %2181 = vmatpush1.bf16.msra.mxu0 %v2090
      %2182 = vmatprep.subr.bf16.mxu0 0
      %2183 = vmatpush1.bf16.msra.mxu0 %v2091
      %2184 = vmatprep.subr.bf16.mxu0 0
      %2185 = vmatpush1.bf16.msra.mxu0 %v2092
      %2186 = vmatprep.subr.bf16.mxu0 0
      %2187 = vmatpush1.bf16.msra.mxu0 %v2093
      %2188 = vmatprep.subr.bf16.mxu0 0
      %2189 = vmatpush1.bf16.msra.mxu0 %v2094
      %2190 = vmatprep.subr.bf16.mxu0 0
      %2191 = vmatpush1.bf16.msra.mxu0 %v2095
      %2192 = vmatprep.subr.bf16.mxu0 0
      %2193 = vmatpush1.bf16.msra.mxu0 %v2096
      %2194 = vmatprep.subr.bf16.mxu0 0
      %2195 = vmatpush1.bf16.msra.mxu0 %v2097
      %2196 = vmatprep.subr.bf16.mxu0 0
      %2197 = vmatpush1.bf16.msra.mxu0 %v2098
      %2198 = vmatprep.subr.bf16.mxu0 0
      %2199 = vmatpush1.bf16.msra.mxu0 %v2099
      %2200 = vmatprep.mubr.bf16.mxu0 %v1815
      %2201 = vmatmul.mubr.bf16.gmra.mrb[0].mxu0 %v1799
      %v2202 = vpop.f32.mrb[0].mxu0
      %v2203 = vadd.f32 %v1938, %v2202
      %v2204 = vpop.f32.mrb[0].mxu0
      %v2205 = vpop.f32.mrb[0].mxu0
      %v2206 = vadd.f32 %v1938, %v2205
      %v2207 = vpop.f32.mrb[0].mxu0
      %2208 = vmatprep.mubr.bf16.mxu0 %v1819
      %2209 = vmatmul.mubr.bf16.gmra.mrb[0].mxu0 %v1803
      %v2210 = vpop.f32.mrb[0].mxu0
      %v2211 = vadd.f32 %v1938, %v2210
      %v2212 = vpop.f32.mrb[0].mxu0
      %v2213 = vpop.f32.mrb[0].mxu0
      %v2214 = vadd.f32 %v1938, %v2213
      %v2215 = vpop.f32.mrb[0].mxu0
      %2216 = vmatprep.mubr.bf16.mxu0 %v1823
      %2217 = vmatmul.mubr.bf16.gmra.mrb[0].mxu0 %v1807
      %v2218 = vpop.f32.mrb[0].mxu0
      %v2219 = vadd.f32 %v1938, %v2218
      %v2220 = vpop.f32.mrb[0].mxu0
      %v2221 = vpop.f32.mrb[0].mxu0
      %v2222 = vadd.f32 %v1938, %v2221
      %v2223 = vpop.f32.mrb[0].mxu0
      %2224 = vmatprep.mubr.bf16.mxu0 %v1827
      %2225 = vmatmul.mubr.bf16.gmra.mrb[0].mxu0 %v1811
      %v2226 = vpop.f32.mrb[0].mxu0
      %v2227 = vadd.f32 %v1938, %v2226
      %v2228 = vpop.f32.mrb[0].mxu0
      %v2229 = vpop.f32.mrb[0].mxu0
      %v2230 = vadd.f32 %v1938, %v2229
      %v2231 = vpop.f32.mrb[0].mxu0
      %2232 = vdwg.mxu0
      %2233 = vmatprep.subr.bf16.mxu0 0
      %2234 = vmatpush1.bf16.msra.mxu0 %v2100
      %2235 = vmatprep.subr.bf16.mxu0 0
      %2236 = vmatpush1.bf16.msra.mxu0 %v2101
      %2237 = vmatprep.subr.bf16.mxu0 0
      %2238 = vmatpush1.bf16.msra.mxu0 %v2102
      %2239 = vmatprep.subr.bf16.mxu0 0
      %2240 = vmatpush1.bf16.msra.mxu0 %v2103
      %2241 = vmatprep.subr.bf16.mxu0 0
      %2242 = vmatpush1.bf16.msra.mxu0 %v2104
      %2243 = vmatprep.subr.bf16.mxu0 0
      %2244 = vmatpush1.bf16.msra.mxu0 %v2105
      %2245 = vmatprep.subr.bf16.mxu0 0
      %2246 = vmatpush1.bf16.msra.mxu0 %v2106
      %2247 = vmatprep.subr.bf16.mxu0 0
      %2248 = vmatpush1.bf16.msra.mxu0 %v2107
      %2249 = vmatprep.subr.bf16.mxu0 0
      %2250 = vmatpush1.bf16.msra.mxu0 %v2108
      %2251 = vmatprep.subr.bf16.mxu0 0
      %2252 = vmatpush1.bf16.msra.mxu0 %v2109
      %2253 = vmatprep.subr.bf16.mxu0 0
      %2254 = vmatpush1.bf16.msra.mxu0 %v2110
      %2255 = vmatprep.subr.bf16.mxu0 0
      %2256 = vmatpush1.bf16.msra.mxu0 %v2111
      %2257 = vmatprep.subr.bf16.mxu0 0
      %2258 = vmatpush1.bf16.msra.mxu0 %v2112
      %2259 = vmatprep.subr.bf16.mxu0 0
      %2260 = vmatpush1.bf16.msra.mxu0 %v2113
      %2261 = vmatprep.subr.bf16.mxu0 0
      %2262 = vmatpush1.bf16.msra.mxu0 %v2114
      %2263 = vmatprep.subr.bf16.mxu0 0
      %2264 = vmatpush1.bf16.msra.mxu0 %v2115
      %2265 = vmatprep.mubr.bf16.mxu0 %v1847
      %2266 = vmatmul.mubr.bf16.gmra.mrb[0].mxu0 %v1831
      %v2267 = vpop.f32.mrb[0].mxu0
      %v2268 = vadd.f32 %v2203, %v2267
      %v2269 = vpop.f32.mrb[0].mxu0
      %v2270 = vpop.f32.mrb[0].mxu0
      %v2271 = vadd.f32 %v2206, %v2270
      %v2272 = vpop.f32.mrb[0].mxu0
      %2273 = vmatprep.mubr.bf16.mxu0 %v1851
      %2274 = vmatmul.mubr.bf16.gmra.mrb[0].mxu0 %v1835
      %v2275 = vpop.f32.mrb[0].mxu0
      %v2276 = vadd.f32 %v2211, %v2275
      %v2277 = vpop.f32.mrb[0].mxu0
      %v2278 = vpop.f32.mrb[0].mxu0
      %v2279 = vadd.f32 %v2214, %v2278
      %v2280 = vpop.f32.mrb[0].mxu0
      %2281 = vmatprep.mubr.bf16.mxu0 %v1855
      %2282 = vmatmul.mubr.bf16.gmra.mrb[0].mxu0 %v1839
      %v2283 = vpop.f32.mrb[0].mxu0
      %v2284 = vadd.f32 %v2219, %v2283
      %v2285 = vpop.f32.mrb[0].mxu0
      %v2286 = vpop.f32.mrb[0].mxu0
      %v2287 = vadd.f32 %v2222, %v2286
      %v2288 = vpop.f32.mrb[0].mxu0
      %2289 = vmatprep.mubr.bf16.mxu0 %v1859
      %2290 = vmatmul.mubr.bf16.gmra.mrb[0].mxu0 %v1843
      %v2291 = vpop.f32.mrb[0].mxu0
      %v2292 = vadd.f32 %v2227, %v2291
      %v2293 = vpop.f32.mrb[0].mxu0
      %v2294 = vpop.f32.mrb[0].mxu0
      %v2295 = vadd.f32 %v2230, %v2294
      %v2296 = vpop.f32.mrb[0].mxu0
      %2297 = vdwg.mxu0
      %2298 = vmatprep.subr.bf16.mxu0 0
      %2299 = vmatpush1.bf16.msra.mxu0 %v2116
      %2300 = vmatprep.subr.bf16.mxu0 0
      %2301 = vmatpush1.bf16.msra.mxu0 %v2117
      %2302 = vmatprep.subr.bf16.mxu0 0
      %2303 = vmatpush1.bf16.msra.mxu0 %v2118
      %2304 = vmatprep.subr.bf16.mxu0 0
      %2305 = vmatpush1.bf16.msra.mxu0 %v2119
      %2306 = vmatprep.subr.bf16.mxu0 0
      %2307 = vmatpush1.bf16.msra.mxu0 0
      %2308 = vmatprep.subr.bf16.mxu0 0
      %2309 = vmatpush1.bf16.msra.mxu0 0
      %2310 = vmatprep.subr.bf16.mxu0 0
      %2311 = vmatpush1.bf16.msra.mxu0 0
      %2312 = vmatprep.subr.bf16.mxu0 0
      %2313 = vmatpush1.bf16.msra.mxu0 0
      %2314 = vmatprep.subr.bf16.mxu0 0
      %2315 = vmatpush1.bf16.msra.mxu0 0
      %2316 = vmatprep.subr.bf16.mxu0 0
      %2317 = vmatpush1.bf16.msra.mxu0 0
      %2318 = vmatprep.subr.bf16.mxu0 0
      %2319 = vmatpush1.bf16.msra.mxu0 0
      %2320 = vmatprep.subr.bf16.mxu0 0
      %2321 = vmatpush1.bf16.msra.mxu0 0
      %2322 = vmatprep.subr.bf16.mxu0 0
      %2323 = vmatpush1.bf16.msra.mxu0 0
      %2324 = vmatprep.subr.bf16.mxu0 0
      %2325 = vmatpush1.bf16.msra.mxu0 0
      %2326 = vmatprep.subr.bf16.mxu0 0
      %2327 = vmatpush1.bf16.msra.mxu0 0
      %2328 = vmatprep.subr.bf16.mxu0 0
      %2329 = vmatpush1.bf16.msra.mxu0 0
      %2330 = vmatprep.mubr.bf16.mxu0 0
      %2331 = vmatmul.mubr.bf16.gmra.mrb[0].mxu0 %v2157
      %v2332 = vpop.f32.mrb[0].mxu0
      %v2333 = vadd.f32 %v2268, %v2332
      %v2334 = vpop.f32.mrb[0].mxu0
      %v2335 = vpop.f32.mrb[0].mxu0
      %v2336 = vadd.f32 %v2271, %v2335
      %v2337 = vpop.f32.mrb[0].mxu0
      %2338 = vmatprep.mubr.bf16.mxu0 0
      %2339 = vmatmul.mubr.bf16.gmra.mrb[0].mxu0 %v2160
      %v2340 = vpop.f32.mrb[0].mxu0
      %v2341 = vadd.f32 %v2276, %v2340
      %v2342 = vpop.f32.mrb[0].mxu0
      %v2343 = vpop.f32.mrb[0].mxu0
      %v2344 = vadd.f32 %v2279, %v2343
      %v2345 = vpop.f32.mrb[0].mxu0
      %2346 = vmatprep.mubr.bf16.mxu0 0
      %2347 = vmatmul.mubr.bf16.gmra.mrb[0].mxu0 %v2163
      %v2348 = vpop.f32.mrb[0].mxu0
      %v2349 = vadd.f32 %v2284, %v2348
      %v2350 = vpop.f32.mrb[0].mxu0
      %v2351 = vpop.f32.mrb[0].mxu0
      %v2352 = vadd.f32 %v2287, %v2351
      %v2353 = vpop.f32.mrb[0].mxu0
      %2354 = vmatprep.mubr.bf16.mxu0 0
      %2355 = vmatmul.mubr.bf16.gmra.mrb[0].mxu0 %v2166
      %v2356 = vpop.f32.mrb[0].mxu0
      %v2357 = vadd.f32 %v2292, %v2356
      %v2358 = vpop.f32.mrb[0].mxu0
      %v2359 = vpop.f32.mrb[0].mxu0
      %v2360 = vadd.f32 %v2295, %v2359
      %v2361 = vpop.f32.mrb[0].mxu0
      %2362 = vdwg.mxu0
      %v2363 = vadd.f32 %v2333, %v413
      %v2364 = vadd.f32 %v2336, %v414
      %v2365 = vadd.f32 %v2341, %v415
      %v2366 = vadd.f32 %v2344, %v416
      %v2367 = vadd.f32 %v2349, %v417
      %v2368 = vadd.f32 %v2352, %v418
      %v2369 = vadd.f32 %v2357, %v419
      %v2370 = vadd.f32 %v2360, %v420
      %2371 = vst.msk [vmem:[%s410] sm:$0xff] %vm955, %v2363
      %2372 = vst.msk [vmem:[%s410 + $0x8] sm:$0xff] %vm955, %v2364
      %2373 = vst.msk [vmem:[%s410 + $0x10] sm:$0xff] %vm955, %v2365
      %2374 = vst.msk [vmem:[%s410 + $0x18] sm:$0xff] %vm955, %v2366
      %2375 = vst.msk [vmem:[%s410 + $0x20] sm:$0xff] %vm955, %v2367
      %2376 = vst.msk [vmem:[%s410 + $0x28] sm:$0xff] %vm955, %v2368
      %2377 = vst.msk [vmem:[%s410 + $0x30] sm:$0xff] %vm955, %v2369
      %2378 = vst.msk [vmem:[%s410 + $0x38] sm:$0xff] %vm955, %v2370
      %s2379 = smul.u32 8, %s22
      %p2380 = scmp.lt.s32.totalorder %s2379, 15
      %s2381 = scalar_select %p2380, %s2379, 15
      %s2382 = smul.addr %s2381, 8
      %s2383 = scalar_lea.vmem %s11, %s2382
      // Predicated region
      $region65: #{deepstn_pallas_forward.8} parent=63 // pred_check
        %p2384 = pneg %p281
      $region66: #{deepstn_pallas_forward.8} parent=63 // pred_check_branch
        %2386 = sbr.rel (%p2384) target = $region68
      $region67: #{deepstn_pallas_forward.8} parent=63 // pred_region
        %s2387 = smul.u32 8, %s22
      $region68: #{deepstn_pallas_forward.8} parent=63 // pred_fallthru
        _
    $region64: #{deepstn_pallas_forward.8} parent=5 // pred_fallthru
      _
    %p2388 = scmp.le.s32.totalorder 2, %s17
    // Predicated region
    $region69: #{deepstn_pallas_forward.8} parent=5 // pred_check
      %p2389 = pneg %p2388
    $region70: #{deepstn_pallas_forward.8} parent=5 // pred_check_branch
      %2391 = sbr.rel (%p2389) target = $region72
    $region71: #{deepstn_pallas_forward.8} parent=5 // pred_region
      %s2392 = ssub.s32 %s17, 2
      // Predicated region
      $region73: #{deepstn_pallas_forward.8} parent=71 // pred_check
        %p2393 = pneg %p287
      $region74: #{deepstn_pallas_forward.8} parent=71 // pred_check_branch
        %2395 = sbr.rel (%p2393) target = $region76
      $region75: #{deepstn_pallas_forward.8} parent=71 // pred_region
        %s2396 = smul.u32 8, %s23
        %p2397 = scmp.lt.s32.totalorder %s2396, 15
        %s2398 = scalar_select %p2397, %s2396, 15
        %s2399 = smul.addr %s2398, 8
        %s2400 = scalar_lea.vmem %s11, %s2399
      $region76: #{deepstn_pallas_forward.8} parent=71 // pred_fallthru
        _
    $region72: #{deepstn_pallas_forward.8} parent=5 // pred_fallthru
      _
  $region6: #{deepstn_pallas_forward.8} parent=0 // loop_footer
    %s21 = sadd.s32 1, %s17
  $region7: #{deepstn_pallas_forward.8} parent=0 // loop_footer_branch
    %16 = sbr.rel target = $region3
  $region8: #{deepstn_pallas_forward.8} parent=0 // loop_exit
    _

// kernel: deepstn_pallas_forward.9
$region0: #{deepstn_pallas_forward.9}
  #allocation0 [shape = 'u32[]', space=smem, size = 0x4, offset = 0x4, fixed_abs, tag = 'smem constant byte address 0x4 - core index']
  #allocation1 [shape = 'u32[144,128]{1,0:T(1,128)}', space=vmem, size = 0x12000, scoped, tag = 'internal scratch']
  %s0 = inlined_call_operand.vmem [shape: f32[2,4096], index: 0, kind: input, shape index: {}]
  %s1 = inlined_call_operand.vmem [shape: f32[1,4096], index: 1, kind: input, shape index: {}]
  %s2 = inlined_call_operand.vmem [shape: f32[1,4096], index: 2, kind: input, shape index: {}]
  %s3 = inlined_call_operand.vmem [shape: bf16[4096,512], index: 3, kind: input, shape index: {}]
  %s4 = inlined_call_operand.vmem [shape: f32[1,512], index: 4, kind: input, shape index: {}]
  %s5 = inlined_call_operand.vmem [shape: f32[2,512], index: 5, kind: output, shape index: {}]
  %s6 = sld [smem:[#allocation0]]
  $region95: #{deepstn_pallas_forward.9} parent=0
    _
  %s8 = ssub.s32 1, %s6
  %s9 = scalar_select 0, %s8, %s6
  $region1: #{deepstn_pallas_forward.9} parent=0
    #allocation2 [shape = 'u8[2097152]{0}', space=vmem, size = 0x200000, scoped, tag = 'input window, operand 3']
    loop: start=0, step=1, limit=6
    $region2: #{deepstn_pallas_forward.9} parent=1 // loop_pre_header
      _
    $region3: #{deepstn_pallas_forward.9} parent=1 // loop_header
      %s11 = sphi 0, %s15
      %p12 = scmp.ge.s32.totalorder %s11, 6
      %s18 = sphi 0, %s30
      %s19 = sphi 0, %s26
      %s20 = sphi 0, %s18
      %s21 = sphi 0, %s19
      %s22 = sphi 0, %s20
      %s23 = sphi 0, %s21
      %s33 = sphi 0, %s35
      %s36 = sphi 0, %s33
      %s37 = sphi 0, %s36
      %s53 = sphi 0, %s37
      %s59 = sphi 0, %s61
      %s62 = sphi 0, %s59
      %s63 = sphi 0, %s62
      %s79 = sphi 0, %s63
      %s85 = sphi 0, %s87
      %s88 = sphi 0, %s85
      %s89 = sphi 0, %s88
      %s105 = sphi 0, %s89
      %s113 = sphi 0, %s115
      %s116 = sphi 0, %s113
      %s117 = sphi 0, %s116
      %s133 = sphi 0, %s117
      %s139 = sphi 0, %s141
      %s142 = sphi 0, %s139
      %s143 = sphi 0, %s142
      %s159 = sphi 0, %s143
      %s165 = sphi 0, %s167
      %s168 = sphi 0, %s165
      %s169 = sphi 0, %s168
      %s185 = sphi 0, %s169
    $region4: #{deepstn_pallas_forward.9} parent=1 // loop_header_branch
      %14 = sbr.rel (%p12) target = $region8
    $region5: #{deepstn_pallas_forward.9} parent=1 // loop_body
      %s16 = ssub.s32 %s11, 1
      %s17 = ssub.s32 %s11, 2
      %s24 = sadd.s32 1, %s19
      %p25 = scmp.ge.s32.totalorder %s24, 2
      %s26 = scalar_select %p25, 0, %s24
      %s27 = sadd.s32 1, %s18
      %s28 = scalar_select %p25, %s27, %s18
      %p29 = scmp.ge.s32.totalorder %s28, 2
      %s30 = scalar_select %p29, 0, %s28
      %s31 = ssub.s32 %s19, %s26
      %p32 = scmp.eq.s32.totalorder %s31, 0
      %s34 = sadd.s32 %s33, 1
      %s35 = scalar_select %p32, %s33, %s34
      %p38 = pneg %p32
      %p39 = scmp.eq.s32.totalorder %s11, 3
      %p40 = por %p38, %p39
      %p41 = scmp.ne.s32.totalorder %s33, %s36
      %p42 = scmp.eq.s32.totalorder %s11, 0
      %p43 = por %p41, %p42
      %p44 = scmp.ne.s32.totalorder %s33, %s36
      %p45 = scmp.eq.s32.totalorder %s16, 3
      %p46 = por %p44, %p45
      %p47 = scmp.ne.s32.totalorder %s36, %s37
      %p48 = scmp.eq.s32.totalorder %s16, 0
      %p49 = por %p47, %p48
      %p50 = scmp.ne.s32.totalorder %s36, %s37
      %p51 = scmp.eq.s32.totalorder %s17, 3
      %p52 = por %p50, %p51
      %p54 = scmp.ne.s32.totalorder %s37, %s53
      %p55 = scmp.eq.s32.totalorder %s17, 0
      %p56 = por %p54, %p55
      %s57 = ssub.s32 %s19, %s26
      %p58 = scmp.eq.s32.totalorder %s57, 0
      %s60 = sadd.s32 %s59, 1
      %s61 = scalar_select %p58, %s59, %s60
      %p64 = pneg %p58
      %p65 = scmp.eq.s32.totalorder %s11, 3
      %p66 = por %p64, %p65
      %p67 = scmp.ne.s32.totalorder %s59, %s62
      %p68 = scmp.eq.s32.totalorder %s11, 0
      %p69 = por %p67, %p68
      %p70 = scmp.ne.s32.totalorder %s59, %s62
      %p71 = scmp.eq.s32.totalorder %s16, 3
      %p72 = por %p70, %p71
      %p73 = scmp.ne.s32.totalorder %s62, %s63
      %p74 = scmp.eq.s32.totalorder %s16, 0
      %p75 = por %p73, %p74
      %p76 = scmp.ne.s32.totalorder %s62, %s63
      %p77 = scmp.eq.s32.totalorder %s17, 3
      %p78 = por %p76, %p77
      %p80 = scmp.ne.s32.totalorder %s63, %s79
      %p81 = scmp.eq.s32.totalorder %s17, 0
      %p82 = por %p80, %p81
      %s83 = ssub.s32 %s19, %s26
      %p84 = scmp.eq.s32.totalorder %s83, 0
      %s86 = sadd.s32 %s85, 1
      %s87 = scalar_select %p84, %s85, %s86
      %p90 = pneg %p84
      %p91 = scmp.eq.s32.totalorder %s11, 3
      %p92 = por %p90, %p91
      %p93 = scmp.ne.s32.totalorder %s85, %s88
      %p94 = scmp.eq.s32.totalorder %s11, 0
      %p95 = por %p93, %p94
      %p96 = scmp.ne.s32.totalorder %s85, %s88
      %p97 = scmp.eq.s32.totalorder %s16, 3
      %p98 = por %p96, %p97
      %p99 = scmp.ne.s32.totalorder %s88, %s89
      %p100 = scmp.eq.s32.totalorder %s16, 0
      %p101 = por %p99, %p100
      %p102 = scmp.ne.s32.totalorder %s88, %s89
      %p103 = scmp.eq.s32.totalorder %s17, 3
      %p104 = por %p102, %p103
      %p106 = scmp.ne.s32.totalorder %s89, %s105
      %p107 = scmp.eq.s32.totalorder %s17, 0
      %p108 = por %p106, %p107
      %s109 = ssub.s32 %s19, %s26
      %s110 = ssub.s32 %s18, %s30
      %s111 = sor.u32 %s109, %s110
      %p112 = scmp.eq.s32.totalorder %s111, 0
      %s114 = sadd.s32 %s113, 1
      %s115 = scalar_select %p112, %s113, %s114
      %p118 = pneg %p112
      %p119 = scmp.eq.s32.totalorder %s11, 3
      %p120 = por %p118, %p119
      %p121 = scmp.ne.s32.totalorder %s113, %s116
      %p122 = scmp.eq.s32.totalorder %s11, 0
      %p123 = por %p121, %p122
      %p124 = scmp.ne.s32.totalorder %s113, %s116
      %p125 = scmp.eq.s32.totalorder %s16, 3
      %p126 = por %p124, %p125
      %p127 = scmp.ne.s32.totalorder %s116, %s117
      %p128 = scmp.eq.s32.totalorder %s16, 0
      %p129 = por %p127, %p128
      %p130 = scmp.ne.s32.totalorder %s116, %s117
      %p131 = scmp.eq.s32.totalorder %s17, 3
      %p132 = por %p130, %p131
      %p134 = scmp.ne.s32.totalorder %s117, %s133
      %p135 = scmp.eq.s32.totalorder %s17, 0
      %p136 = por %p134, %p135
      %s137 = ssub.s32 %s18, %s30
      %p138 = scmp.eq.s32.totalorder %s137, 0
      %s140 = sadd.s32 %s139, 1
      %s141 = scalar_select %p138, %s139, %s140
      %p144 = pneg %p138
      %p145 = scmp.eq.s32.totalorder %s11, 3
      %p146 = por %p144, %p145
      %p147 = scmp.ne.s32.totalorder %s139, %s142
      %p148 = scmp.eq.s32.totalorder %s11, 0
      %p149 = por %p147, %p148
      %p150 = scmp.ne.s32.totalorder %s139, %s142
      %p151 = scmp.eq.s32.totalorder %s16, 3
      %p152 = por %p150, %p151
      %p153 = scmp.ne.s32.totalorder %s142, %s143
      %p154 = scmp.eq.s32.totalorder %s16, 0
      %p155 = por %p153, %p154
      %p156 = scmp.ne.s32.totalorder %s142, %s143
      %p157 = scmp.eq.s32.totalorder %s17, 3
      %p158 = por %p156, %p157
      %p160 = scmp.ne.s32.totalorder %s143, %s159
      %p161 = scmp.eq.s32.totalorder %s17, 0
      %p162 = por %p160, %p161
      %s163 = ssub.s32 %s18, %s30
      %p164 = scmp.eq.s32.totalorder %s163, 0
      %s166 = sadd.s32 %s165, 1
      %s167 = scalar_select %p164, %s165, %s166
      %p170 = pneg %p164
      %p171 = scmp.eq.s32.totalorder %s11, 3
      %p172 = por %p170, %p171
      %p173 = scmp.ne.s32.totalorder %s165, %s168
      %p174 = scmp.eq.s32.totalorder %s11, 0
      %p175 = por %p173, %p174
      %p176 = scmp.ne.s32.totalorder %s165, %s168
      %p177 = scmp.eq.s32.totalorder %s16, 3
      %p178 = por %p176, %p177
      %p179 = scmp.ne.s32.totalorder %s168, %s169
      %p180 = scmp.eq.s32.totalorder %s16, 0
      %p181 = por %p179, %p180
      %p182 = scmp.ne.s32.totalorder %s168, %s169
      %p183 = scmp.eq.s32.totalorder %s17, 3
      %p184 = por %p182, %p183
      %p186 = scmp.ne.s32.totalorder %s169, %s185
      %p187 = scmp.eq.s32.totalorder %s17, 0
      %p188 = por %p186, %p187
      %p189 = scmp.le.s32.totalorder 1, %s11
      %p190 = scmp.lt.s32.totalorder %s11, 5
      %p191 = pnand %p189, %p190
      %p192 = pneg %p191
      // Predicated region
      $region9: #{deepstn_pallas_forward.9} parent=5 // pred_check
        _
      $region10: #{deepstn_pallas_forward.9} parent=5 // pred_check_branch
        %194 = sbr.rel (%p191) target = $region12
      $region11: #{deepstn_pallas_forward.9} parent=5 // pred_region
        %s195 = ssub.s32 %s11, 1
      $region12: #{deepstn_pallas_forward.9} parent=5 // pred_fallthru
        _
      %p196 = scmp.lt.s32.totalorder %s11, 4
      // Predicated region
      $region13: #{deepstn_pallas_forward.9} parent=5 // pred_check
        %p197 = pneg %p196
      $region14: #{deepstn_pallas_forward.9} parent=5 // pred_check_branch
        %199 = sbr.rel (%p197) target = $region16
      $region15: #{deepstn_pallas_forward.9} parent=5 // pred_region
        // Predicated region
        $region17: #{deepstn_pallas_forward.9} parent=15 // pred_check
          %p200 = pneg %p43
        $region18: #{deepstn_pallas_forward.9} parent=15 // pred_check_branch
          %202 = sbr.rel (%p200) target = $region20
        $region19: #{deepstn_pallas_forward.9} parent=15 // pred_region
          %s203 = smul.u32 16, %s19
          %p204 = scmp.lt.s32.totalorder %s203, 31
          %s205 = scalar_select %p204, %s203, 31
          %s206 = smul.addr %s205, 2
          %s207 = scalar_lea.vmem %s0, %s206
          %s208 = smul.u32 16, %s19
        $region20: #{deepstn_pallas_forward.9} parent=15 // pred_fallthru
          _
        // Predicated region
        $region21: #{deepstn_pallas_forward.9} parent=15 // pred_check
          %p209 = pneg %p69
        $region22: #{deepstn_pallas_forward.9} parent=15 // pred_check_branch
          %211 = sbr.rel (%p209) target = $region24
        $region23: #{deepstn_pallas_forward.9} parent=15 // pred_region
          %s212 = smul.u32 16, %s19
          %p213 = scmp.lt.s32.totalorder %s212, 31
          %s214 = scalar_select %p213, %s212, 31
          %s215 = scalar_lea.vmem %s1, %s214
          %s216 = smul.u32 16, %s19
        $region24: #{deepstn_pallas_forward.9} parent=15 // pred_fallthru
          _
        // Predicated region
        $region25: #{deepstn_pallas_forward.9} parent=15 // pred_check
          %p217 = pneg %p95
        $region26: #{deepstn_pallas_forward.9} parent=15 // pred_check_branch
          %219 = sbr.rel (%p217) target = $region28
        $region27: #{deepstn_pallas_forward.9} parent=15 // pred_region
          %s220 = smul.u32 16, %s19
          %p221 = scmp.lt.s32.totalorder %s220, 31
          %s222 = scalar_select %p221, %s220, 31
          %s223 = scalar_lea.vmem %s2, %s222
          %s224 = smul.u32 16, %s19
        $region28: #{deepstn_pallas_forward.9} parent=15 // pred_fallthru
          _
        // Predicated region
        $region29: #{deepstn_pallas_forward.9} parent=15 // pred_check
          %p225 = pneg %p123
        $region30: #{deepstn_pallas_forward.9} parent=15 // pred_check_branch
          %227 = sbr.rel (%p225) target = $region32
        $region31: #{deepstn_pallas_forward.9} parent=15 // pred_region
          %s228 = sand.u32 %s113, 1
          %s229 = sand.u32 %s113, 1
          %s230 = smul.addr %s229, 2048
          %s231 = scalar_lea.vmem [#allocation2], %s230
          %s232 = smul.u32 256, %s19
          %s233 = smul.u32 2, %s18
          %s234 = smul.addr %s232, 4
          %s235 = sadd.s32 %s233, %s234
          %s236 = smul.addr %s235, 4
          %s237 = scalar_lea.vmem %s3, %s236
          // Predicated region
          $region33: #{deepstn_pallas_forward.9} parent=31 // pred_check
            _
          $region34: #{deepstn_pallas_forward.9} parent=31 // pred_check_branch
            %239 = sbr.rel (0) target = $region36
          $region35: #{deepstn_pallas_forward.9} parent=31 // pred_region
            // Predicated region
            $region37: #{deepstn_pallas_forward.9} parent=35 // pred_check
              _
            $region38: #{deepstn_pallas_forward.9} parent=35 // pred_check_branch
              %241 = sbr.rel (0) target = $region40
            $region39: #{deepstn_pallas_forward.9} parent=35 // pred_region
              // Predicated region
              $region52: #{deepstn_pallas_forward.9} parent=39 // pred_check
                _
              $region53: #{deepstn_pallas_forward.9} parent=39 // pred_check_branch
                %766 = sbr.rel (0) target = $region55
              $region54: #{deepstn_pallas_forward.9} parent=39 // pred_region
                loop: start=0, step=1, limit=1
                $region56: #{deepstn_pallas_forward.9} parent=54 // loop_pre_header
                  _
                $region57: #{deepstn_pallas_forward.9} parent=54 // loop_header
                  %s768 = sphi 0, %s772
                  %p769 = scmp.ge.s32.totalorder %s768, 1
                  %s773 = sphi %s237, %s237
                  %s774 = sphi %s231, %s231
                $region58: #{deepstn_pallas_forward.9} parent=54 // loop_header_branch
                  %771 = sbr.rel (%p769) target = $region62
                $region59: #{deepstn_pallas_forward.9} parent=54 // loop_body
                  %v775 = vld [vmem:[%s773] sm:$0xff]
                  %776 = vst [vmem:[%s774] sm:$0xff] %v775
                  %v777 = vld [vmem:[%s773 + $0x10] sm:$0xff]
                  %778 = vst [vmem:[%s774 + $0x8] sm:$0xff] %v777
                  %v779 = vld [vmem:[%s773 + $0x20] sm:$0xff]
                  %780 = vst [vmem:[%s774 + $0x10] sm:$0xff] %v779
                  %v781 = vld [vmem:[%s773 + $0x30] sm:$0xff]
                  %782 = vst [vmem:[%s774 + $0x18] sm:$0xff] %v781
                  %v783 = vld [vmem:[%s773 + $0x40] sm:$0xff]
                  %784 = vst [vmem:[%s774 + $0x20] sm:$0xff] %v783
                  %v785 = vld [vmem:[%s773 + $0x50] sm:$0xff]
                  %786 = vst [vmem:[%s774 + $0x28] sm:$0xff] %v785
                  %v787 = vld [vmem:[%s773 + $0x60] sm:$0xff]
                  %788 = vst [vmem:[%s774 + $0x30] sm:$0xff] %v787
                  %v789 = vld [vmem:[%s773 + $0x70] sm:$0xff]
                  %790 = vst [vmem:[%s774 + $0x38] sm:$0xff] %v789
                  %v791 = vld [vmem:[%s773 + $0x80] sm:$0xff]
                  %792 = vst [vmem:[%s774 + $0x40] sm:$0xff] %v791
                  %v793 = vld [vmem:[%s773 + $0x90] sm:$0xff]
                  %794 = vst [vmem:[%s774 + $0x48] sm:$0xff] %v793
                  %v795 = vld [vmem:[%s773 + $0xa0] sm:$0xff]
                  %796 = vst [vmem:[%s774 + $0x50] sm:$0xff] %v795
                  %v797 = vld [vmem:[%s773 + $0xb0] sm:$0xff]
                  %798 = vst [vmem:[%s774 + $0x58] sm:$0xff] %v797
                  %v799 = vld [vmem:[%s773 + $0xc0] sm:$0xff]
                  %800 = vst [vmem:[%s774 + $0x60] sm:$0xff] %v799
                  %v801 = vld [vmem:[%s773 + $0xd0] sm:$0xff]
                  %802 = vst [vmem:[%s774 + $0x68] sm:$0xff] %v801
                  %v803 = vld [vmem:[%s773 + $0xe0] sm:$0xff]
                  %804 = vst [vmem:[%s774 + $0x70] sm:$0xff] %v803
                  %v805 = vld [vmem:[%s773 + $0xf0] sm:$0xff]
                  %806 = vst [vmem:[%s774 + $0x78] sm:$0xff] %v805
                  %v807 = vld [vmem:[%s773 + $0x100] sm:$0xff]
                  %808 = vst [vmem:[%s774 + $0x80] sm:$0xff] %v807
                  %v809 = vld [vmem:[%s773 + $0x110] sm:$0xff]
                  %810 = vst [vmem:[%s774 + $0x88] sm:$0xff] %v809
                  %v811 = vld [vmem:[%s773 + $0x120] sm:$0xff]
                  %812 = vst [vmem:[%s774 + $0x90] sm:$0xff] %v811
                  %v813 = vld [vmem:[%s773 + $0x130] sm:$0xff]
                  %814 = vst [vmem:[%s774 + $0x98] sm:$0xff] %v813
                  %v815 = vld [vmem:[%s773 + $0x140] sm:$0xff]
                  %816 = vst [vmem:[%s774 + $0xa0] sm:$0xff] %v815
                  %v817 = vld [vmem:[%s773 + $0x150] sm:$0xff]
                  %818 = vst [vmem:[%s774 + $0xa8] sm:$0xff] %v817
                  %v819 = vld [vmem:[%s773 + $0x160] sm:$0xff]
                  %820 = vst [vmem:[%s774 + $0xb0] sm:$0xff] %v819
                  %v821 = vld [vmem:[%s773 + $0x170] sm:$0xff]
                  %822 = vst [vmem:[%s774 + $0xb8] sm:$0xff] %v821
                  %v823 = vld [vmem:[%s773 + $0x180] sm:$0xff]
                  %824 = vst [vmem:[%s774 + $0xc0] sm:$0xff] %v823
                  %v825 = vld [vmem:[%s773 + $0x190] sm:$0xff]
                  %826 = vst [vmem:[%s774 + $0xc8] sm:$0xff] %v825
                  %v827 = vld [vmem:[%s773 + $0x1a0] sm:$0xff]
                  %828 = vst [vmem:[%s774 + $0xd0] sm:$0xff] %v827
                  %v829 = vld [vmem:[%s773 + $0x1b0] sm:$0xff]
                  %830 = vst [vmem:[%s774 + $0xd8] sm:$0xff] %v829
                  %v831 = vld [vmem:[%s773 + $0x1c0] sm:$0xff]
                  %832 = vst [vmem:[%s774 + $0xe0] sm:$0xff] %v831
                  %v833 = vld [vmem:[%s773 + $0x1d0] sm:$0xff]
                  %834 = vst [vmem:[%s774 + $0xe8] sm:$0xff] %v833
                  %v835 = vld [vmem:[%s773 + $0x1e0] sm:$0xff]
                  %836 = vst [vmem:[%s774 + $0xf0] sm:$0xff] %v835
                  %v837 = vld [vmem:[%s773 + $0x1f0] sm:$0xff]
                  %838 = vst [vmem:[%s774 + $0xf8] sm:$0xff] %v837
                  %v839 = vld [vmem:[%s773 + $0x200] sm:$0xff]
                  %840 = vst [vmem:[%s774 + $0x100] sm:$0xff] %v839
                  %v841 = vld [vmem:[%s773 + $0x210] sm:$0xff]
                  %842 = vst [vmem:[%s774 + $0x108] sm:$0xff] %v841
                  %v843 = vld [vmem:[%s773 + $0x220] sm:$0xff]
                  %844 = vst [vmem:[%s774 + $0x110] sm:$0xff] %v843
                  %v845 = vld [vmem:[%s773 + $0x230] sm:$0xff]
                  %846 = vst [vmem:[%s774 + $0x118] sm:$0xff] %v845
                  %v847 = vld [vmem:[%s773 + $0x240] sm:$0xff]
                  %848 = vst [vmem:[%s774 + $0x120] sm:$0xff] %v847
                  %v849 = vld [vmem:[%s773 + $0x250] sm:$0xff]
                  %850 = vst [vmem:[%s774 + $0x128] sm:$0xff] %v849
                  %v851 = vld [vmem:[%s773 + $0x260] sm:$0xff]
                  %852 = vst [vmem:[%s774 + $0x130] sm:$0xff] %v851
                  %v853 = vld [vmem:[%s773 + $0x270] sm:$0xff]
                  %854 = vst [vmem:[%s774 + $0x138] sm:$0xff] %v853
                  %v855 = vld [vmem:[%s773 + $0x280] sm:$0xff]
                  %856 = vst [vmem:[%s774 + $0x140] sm:$0xff] %v855
                  %v857 = vld [vmem:[%s773 + $0x290] sm:$0xff]
                  %858 = vst [vmem:[%s774 + $0x148] sm:$0xff] %v857
                  %v859 = vld [vmem:[%s773 + $0x2a0] sm:$0xff]
                  %860 = vst [vmem:[%s774 + $0x150] sm:$0xff] %v859
                  %v861 = vld [vmem:[%s773 + $0x2b0] sm:$0xff]
                  %862 = vst [vmem:[%s774 + $0x158] sm:$0xff] %v861
                  %v863 = vld [vmem:[%s773 + $0x2c0] sm:$0xff]
                  %864 = vst [vmem:[%s774 + $0x160] sm:$0xff] %v863
                  %v865 = vld [vmem:[%s773 + $0x2d0] sm:$0xff]
                  %866 = vst [vmem:[%s774 + $0x168] sm:$0xff] %v865
                  %v867 = vld [vmem:[%s773 + $0x2e0] sm:$0xff]
                  %868 = vst [vmem:[%s774 + $0x170] sm:$0xff] %v867
                  %v869 = vld [vmem:[%s773 + $0x2f0] sm:$0xff]
                  %870 = vst [vmem:[%s774 + $0x178] sm:$0xff] %v869
                  %v871 = vld [vmem:[%s773 + $0x300] sm:$0xff]
                  %872 = vst [vmem:[%s774 + $0x180] sm:$0xff] %v871
                  %v873 = vld [vmem:[%s773 + $0x310] sm:$0xff]
                  %874 = vst [vmem:[%s774 + $0x188] sm:$0xff] %v873
                  %v875 = vld [vmem:[%s773 + $0x320] sm:$0xff]
                  %876 = vst [vmem:[%s774 + $0x190] sm:$0xff] %v875
                  %v877 = vld [vmem:[%s773 + $0x330] sm:$0xff]
                  %878 = vst [vmem:[%s774 + $0x198] sm:$0xff] %v877
                  %v879 = vld [vmem:[%s773 + $0x340] sm:$0xff]
                  %880 = vst [vmem:[%s774 + $0x1a0] sm:$0xff] %v879
                  %v881 = vld [vmem:[%s773 + $0x350] sm:$0xff]
                  %882 = vst [vmem:[%s774 + $0x1a8] sm:$0xff] %v881
                  %v883 = vld [vmem:[%s773 + $0x360] sm:$0xff]
                  %884 = vst [vmem:[%s774 + $0x1b0] sm:$0xff] %v883
                  %v885 = vld [vmem:[%s773 + $0x370] sm:$0xff]
                  %886 = vst [vmem:[%s774 + $0x1b8] sm:$0xff] %v885
                  %v887 = vld [vmem:[%s773 + $0x380] sm:$0xff]
                  %888 = vst [vmem:[%s774 + $0x1c0] sm:$0xff] %v887
                  %v889 = vld [vmem:[%s773 + $0x390] sm:$0xff]
                  %890 = vst [vmem:[%s774 + $0x1c8] sm:$0xff] %v889
                  %v891 = vld [vmem:[%s773 + $0x3a0] sm:$0xff]
                  %892 = vst [vmem:[%s774 + $0x1d0] sm:$0xff] %v891
                  %v893 = vld [vmem:[%s773 + $0x3b0] sm:$0xff]
                  %894 = vst [vmem:[%s774 + $0x1d8] sm:$0xff] %v893
                  %v895 = vld [vmem:[%s773 + $0x3c0] sm:$0xff]
                  %896 = vst [vmem:[%s774 + $0x1e0] sm:$0xff] %v895
                  %v897 = vld [vmem:[%s773 + $0x3d0] sm:$0xff]
                  %898 = vst [vmem:[%s774 + $0x1e8] sm:$0xff] %v897
                  %v899 = vld [vmem:[%s773 + $0x3e0] sm:$0xff]
                  %900 = vst [vmem:[%s774 + $0x1f0] sm:$0xff] %v899
                  %v901 = vld [vmem:[%s773 + $0x3f0] sm:$0xff]
                  %902 = vst [vmem:[%s774 + $0x1f8] sm:$0xff] %v901
                  %v903 = vld [vmem:[%s773 + $0x400] sm:$0xff]
                  %904 = vst [vmem:[%s774 + $0x200] sm:$0xff] %v903
                  %v905 = vld [vmem:[%s773 + $0x410] sm:$0xff]
                  %906 = vst [vmem:[%s774 + $0x208] sm:$0xff] %v905
                  %v907 = vld [vmem:[%s773 + $0x420] sm:$0xff]
                  %908 = vst [vmem:[%s774 + $0x210] sm:$0xff] %v907
                  %v909 = vld [vmem:[%s773 + $0x430] sm:$0xff]
                  %910 = vst [vmem:[%s774 + $0x218] sm:$0xff] %v909
                  %v911 = vld [vmem:[%s773 + $0x440] sm:$0xff]
                  %912 = vst [vmem:[%s774 + $0x220] sm:$0xff] %v911
                  %v913 = vld [vmem:[%s773 + $0x450] sm:$0xff]
                  %914 = vst [vmem:[%s774 + $0x228] sm:$0xff] %v913
                  %v915 = vld [vmem:[%s773 + $0x460] sm:$0xff]
                  %916 = vst [vmem:[%s774 + $0x230] sm:$0xff] %v915
                  %v917 = vld [vmem:[%s773 + $0x470] sm:$0xff]
                  %918 = vst [vmem:[%s774 + $0x238] sm:$0xff] %v917
                  %v919 = vld [vmem:[%s773 + $0x480] sm:$0xff]
                  %920 = vst [vmem:[%s774 + $0x240] sm:$0xff] %v919
                  %v921 = vld [vmem:[%s773 + $0x490] sm:$0xff]
                  %922 = vst [vmem:[%s774 + $0x248] sm:$0xff] %v921
                  %v923 = vld [vmem:[%s773 + $0x4a0] sm:$0xff]
                  %924 = vst [vmem:[%s774 + $0x250] sm:$0xff] %v923
                  %v925 = vld [vmem:[%s773 + $0x4b0] sm:$0xff]
                  %926 = vst [vmem:[%s774 + $0x258] sm:$0xff] %v925
                  %v927 = vld [vmem:[%s773 + $0x4c0] sm:$0xff]
                  %928 = vst [vmem:[%s774 + $0x260] sm:$0xff] %v927
                  %v929 = vld [vmem:[%s773 + $0x4d0] sm:$0xff]
                  %930 = vst [vmem:[%s774 + $0x268] sm:$0xff] %v929
                  %v931 = vld [vmem:[%s773 + $0x4e0] sm:$0xff]
                  %932 = vst [vmem:[%s774 + $0x270] sm:$0xff] %v931
                  %v933 = vld [vmem:[%s773 + $0x4f0] sm:$0xff]
                  %934 = vst [vmem:[%s774 + $0x278] sm:$0xff] %v933
                  %v935 = vld [vmem:[%s773 + $0x500] sm:$0xff]
                  %936 = vst [vmem:[%s774 + $0x280] sm:$0xff] %v935
                  %v937 = vld [vmem:[%s773 + $0x510] sm:$0xff]
                  %938 = vst [vmem:[%s774 + $0x288] sm:$0xff] %v937
                  %v939 = vld [vmem:[%s773 + $0x520] sm:$0xff]
                  %940 = vst [vmem:[%s774 + $0x290] sm:$0xff] %v939
                  %v941 = vld [vmem:[%s773 + $0x530] sm:$0xff]
                  %942 = vst [vmem:[%s774 + $0x298] sm:$0xff] %v941
                  %v943 = vld [vmem:[%s773 + $0x540] sm:$0xff]
                  %944 = vst [vmem:[%s774 + $0x2a0] sm:$0xff] %v943
                  %v945 = vld [vmem:[%s773 + $0x550] sm:$0xff]
                  %946 = vst [vmem:[%s774 + $0x2a8] sm:$0xff] %v945
                  %v947 = vld [vmem:[%s773 + $0x560] sm:$0xff]
                  %948 = vst [vmem:[%s774 + $0x2b0] sm:$0xff] %v947
                  %v949 = vld [vmem:[%s773 + $0x570] sm:$0xff]
                  %950 = vst [vmem:[%s774 + $0x2b8] sm:$0xff] %v949
                  %v951 = vld [vmem:[%s773 + $0x580] sm:$0xff]
                  %952 = vst [vmem:[%s774 + $0x2c0] sm:$0xff] %v951
                  %v953 = vld [vmem:[%s773 + $0x590] sm:$0xff]
                  %954 = vst [vmem:[%s774 + $0x2c8] sm:$0xff] %v953
                  %v955 = vld [vmem:[%s773 + $0x5a0] sm:$0xff]
                  %956 = vst [vmem:[%s774 + $0x2d0] sm:$0xff] %v955
                  %v957 = vld [vmem:[%s773 + $0x5b0] sm:$0xff]
                  %958 = vst [vmem:[%s774 + $0x2d8] sm:$0xff] %v957
                  %v959 = vld [vmem:[%s773 + $0x5c0] sm:$0xff]
                  %960 = vst [vmem:[%s774 + $0x2e0] sm:$0xff] %v959
                  %v961 = vld [vmem:[%s773 + $0x5d0] sm:$0xff]
                  %962 = vst [vmem:[%s774 + $0x2e8] sm:$0xff] %v961
                  %v963 = vld [vmem:[%s773 + $0x5e0] sm:$0xff]
                  %964 = vst [vmem:[%s774 + $0x2f0] sm:$0xff] %v963
                  %v965 = vld [vmem:[%s773 + $0x5f0] sm:$0xff]
                  %966 = vst [vmem:[%s774 + $0x2f8] sm:$0xff] %v965
                  %v967 = vld [vmem:[%s773 + $0x600] sm:$0xff]
                  %968 = vst [vmem:[%s774 + $0x300] sm:$0xff] %v967
                  %v969 = vld [vmem:[%s773 + $0x610] sm:$0xff]
                  %970 = vst [vmem:[%s774 + $0x308] sm:$0xff] %v969
                  %v971 = vld [vmem:[%s773 + $0x620] sm:$0xff]
                  %972 = vst [vmem:[%s774 + $0x310] sm:$0xff] %v971
                  %v973 = vld [vmem:[%s773 + $0x630] sm:$0xff]
                  %974 = vst [vmem:[%s774 + $0x318] sm:$0xff] %v973
                  %v975 = vld [vmem:[%s773 + $0x640] sm:$0xff]
                  %976 = vst [vmem:[%s774 + $0x320] sm:$0xff] %v975
                  %v977 = vld [vmem:[%s773 + $0x650] sm:$0xff]
                  %978 = vst [vmem:[%s774 + $0x328] sm:$0xff] %v977
                  %v979 = vld [vmem:[%s773 + $0x660] sm:$0xff]
                  %980 = vst [vmem:[%s774 + $0x330] sm:$0xff] %v979
                  %v981 = vld [vmem:[%s773 + $0x670] sm:$0xff]
                  %982 = vst [vmem:[%s774 + $0x338] sm:$0xff] %v981
                  %v983 = vld [vmem:[%s773 + $0x680] sm:$0xff]
                  %984 = vst [vmem:[%s774 + $0x340] sm:$0xff] %v983
                  %v985 = vld [vmem:[%s773 + $0x690] sm:$0xff]
                  %986 = vst [vmem:[%s774 + $0x348] sm:$0xff] %v985
                  %v987 = vld [vmem:[%s773 + $0x6a0] sm:$0xff]
                  %988 = vst [vmem:[%s774 + $0x350] sm:$0xff] %v987
                  %v989 = vld [vmem:[%s773 + $0x6b0] sm:$0xff]
                  %990 = vst [vmem:[%s774 + $0x358] sm:$0xff] %v989
                  %v991 = vld [vmem:[%s773 + $0x6c0] sm:$0xff]
                  %992 = vst [vmem:[%s774 + $0x360] sm:$0xff] %v991
                  %v993 = vld [vmem:[%s773 + $0x6d0] sm:$0xff]
                  %994 = vst [vmem:[%s774 + $0x368] sm:$0xff] %v993
                  %v995 = vld [vmem:[%s773 + $0x6e0] sm:$0xff]
                  %996 = vst [vmem:[%s774 + $0x370] sm:$0xff] %v995
                  %v997 = vld [vmem:[%s773 + $0x6f0] sm:$0xff]
                  %998 = vst [vmem:[%s774 + $0x378] sm:$0xff] %v997
                  %v999 = vld [vmem:[%s773 + $0x700] sm:$0xff]
                  %1000 = vst [vmem:[%s774 + $0x380] sm:$0xff] %v999
                  %v1001 = vld [vmem:[%s773 + $0x710] sm:$0xff]
                  %1002 = vst [vmem:[%s774 + $0x388] sm:$0xff] %v1001
                  %v1003 = vld [vmem:[%s773 + $0x720] sm:$0xff]
                  %1004 = vst [vmem:[%s774 + $0x390] sm:$0xff] %v1003
                  %v1005 = vld [vmem:[%s773 + $0x730] sm:$0xff]
                  %1006 = vst [vmem:[%s774 + $0x398] sm:$0xff] %v1005
                  %v1007 = vld [vmem:[%s773 + $0x740] sm:$0xff]
                  %1008 = vst [vmem:[%s774 + $0x3a0] sm:$0xff] %v1007
                  %v1009 = vld [vmem:[%s773 + $0x750] sm:$0xff]
                  %1010 = vst [vmem:[%s774 + $0x3a8] sm:$0xff] %v1009
                  %v1011 = vld [vmem:[%s773 + $0x760] sm:$0xff]
                  %1012 = vst [vmem:[%s774 + $0x3b0] sm:$0xff] %v1011
                  %v1013 = vld [vmem:[%s773 + $0x770] sm:$0xff]
                  %1014 = vst [vmem:[%s774 + $0x3b8] sm:$0xff] %v1013
                  %v1015 = vld [vmem:[%s773 + $0x780] sm:$0xff]
                  %1016 = vst [vmem:[%s774 + $0x3c0] sm:$0xff] %v1015
                  %v1017 = vld [vmem:[%s773 + $0x790] sm:$0xff]
                  %1018 = vst [vmem:[%s774 + $0x3c8] sm:$0xff] %v1017
                  %v1019 = vld [vmem:[%s773 + $0x7a0] sm:$0xff]
                  %1020 = vst [vmem:[%s774 + $0x3d0] sm:$0xff] %v1019
                  %v1021 = vld [vmem:[%s773 + $0x7b0] sm:$0xff]
                  %1022 = vst [vmem:[%s774 + $0x3d8] sm:$0xff] %v1021
                  %v1023 = vld [vmem:[%s773 + $0x7c0] sm:$0xff]
                  %1024 = vst [vmem:[%s774 + $0x3e0] sm:$0xff] %v1023
                  %v1025 = vld [vmem:[%s773 + $0x7d0] sm:$0xff]
                  %1026 = vst [vmem:[%s774 + $0x3e8] sm:$0xff] %v1025
                  %v1027 = vld [vmem:[%s773 + $0x7e0] sm:$0xff]
                  %1028 = vst [vmem:[%s774 + $0x3f0] sm:$0xff] %v1027
                  %v1029 = vld [vmem:[%s773 + $0x7f0] sm:$0xff]
                  %1030 = vst [vmem:[%s774 + $0x3f8] sm:$0xff] %v1029
                  %v1031 = vld [vmem:[%s773 + $0x800] sm:$0xff]
                  %1032 = vst [vmem:[%s774 + $0x400] sm:$0xff] %v1031
                  %v1033 = vld [vmem:[%s773 + $0x810] sm:$0xff]
                  %1034 = vst [vmem:[%s774 + $0x408] sm:$0xff] %v1033
                  %v1035 = vld [vmem:[%s773 + $0x820] sm:$0xff]
                  %1036 = vst [vmem:[%s774 + $0x410] sm:$0xff] %v1035
                  %v1037 = vld [vmem:[%s773 + $0x830] sm:$0xff]
                  %1038 = vst [vmem:[%s774 + $0x418] sm:$0xff] %v1037
                  %v1039 = vld [vmem:[%s773 + $0x840] sm:$0xff]
                  %1040 = vst [vmem:[%s774 + $0x420] sm:$0xff] %v1039
                  %v1041 = vld [vmem:[%s773 + $0x850] sm:$0xff]
                  %1042 = vst [vmem:[%s774 + $0x428] sm:$0xff] %v1041
                  %v1043 = vld [vmem:[%s773 + $0x860] sm:$0xff]
                  %1044 = vst [vmem:[%s774 + $0x430] sm:$0xff] %v1043
                  %v1045 = vld [vmem:[%s773 + $0x870] sm:$0xff]
                  %1046 = vst [vmem:[%s774 + $0x438] sm:$0xff] %v1045
                  %v1047 = vld [vmem:[%s773 + $0x880] sm:$0xff]
                  %1048 = vst [vmem:[%s774 + $0x440] sm:$0xff] %v1047
                  %v1049 = vld [vmem:[%s773 + $0x890] sm:$0xff]
                  %1050 = vst [vmem:[%s774 + $0x448] sm:$0xff] %v1049
                  %v1051 = vld [vmem:[%s773 + $0x8a0] sm:$0xff]
                  %1052 = vst [vmem:[%s774 + $0x450] sm:$0xff] %v1051
                  %v1053 = vld [vmem:[%s773 + $0x8b0] sm:$0xff]
                  %1054 = vst [vmem:[%s774 + $0x458] sm:$0xff] %v1053
                  %v1055 = vld [vmem:[%s773 + $0x8c0] sm:$0xff]
                  %1056 = vst [vmem:[%s774 + $0x460] sm:$0xff] %v1055
                  %v1057 = vld [vmem:[%s773 + $0x8d0] sm:$0xff]
                  %1058 = vst [vmem:[%s774 + $0x468] sm:$0xff] %v1057
                  %v1059 = vld [vmem:[%s773 + $0x8e0] sm:$0xff]
                  %1060 = vst [vmem:[%s774 + $0x470] sm:$0xff] %v1059
                  %v1061 = vld [vmem:[%s773 + $0x8f0] sm:$0xff]
                  %1062 = vst [vmem:[%s774 + $0x478] sm:$0xff] %v1061
                  %v1063 = vld [vmem:[%s773 + $0x900] sm:$0xff]
                  %1064 = vst [vmem:[%s774 + $0x480] sm:$0xff] %v1063
                  %v1065 = vld [vmem:[%s773 + $0x910] sm:$0xff]
                  %1066 = vst [vmem:[%s774 + $0x488] sm:$0xff] %v1065
                  %v1067 = vld [vmem:[%s773 + $0x920] sm:$0xff]
                  %1068 = vst [vmem:[%s774 + $0x490] sm:$0xff] %v1067
                  %v1069 = vld [vmem:[%s773 + $0x930] sm:$0xff]
                  %1070 = vst [vmem:[%s774 + $0x498] sm:$0xff] %v1069
                  %v1071 = vld [vmem:[%s773 + $0x940] sm:$0xff]
                  %1072 = vst [vmem:[%s774 + $0x4a0] sm:$0xff] %v1071
                  %v1073 = vld [vmem:[%s773 + $0x950] sm:$0xff]
                  %1074 = vst [vmem:[%s774 + $0x4a8] sm:$0xff] %v1073
                  %v1075 = vld [vmem:[%s773 + $0x960] sm:$0xff]
                  %1076 = vst [vmem:[%s774 + $0x4b0] sm:$0xff] %v1075
                  %v1077 = vld [vmem:[%s773 + $0x970] sm:$0xff]
                  %1078 = vst [vmem:[%s774 + $0x4b8] sm:$0xff] %v1077
                  %v1079 = vld [vmem:[%s773 + $0x980] sm:$0xff]
                  %1080 = vst [vmem:[%s774 + $0x4c0] sm:$0xff] %v1079
                  %v1081 = vld [vmem:[%s773 + $0x990] sm:$0xff]
                  %1082 = vst [vmem:[%s774 + $0x4c8] sm:$0xff] %v1081
                  %v1083 = vld [vmem:[%s773 + $0x9a0] sm:$0xff]
                  %1084 = vst [vmem:[%s774 + $0x4d0] sm:$0xff] %v1083
                  %v1085 = vld [vmem:[%s773 + $0x9b0] sm:$0xff]
                  %1086 = vst [vmem:[%s774 + $0x4d8] sm:$0xff] %v1085
                  %v1087 = vld [vmem:[%s773 + $0x9c0] sm:$0xff]
                  %1088 = vst [vmem:[%s774 + $0x4e0] sm:$0xff] %v1087
                  %v1089 = vld [vmem:[%s773 + $0x9d0] sm:$0xff]
                  %1090 = vst [vmem:[%s774 + $0x4e8] sm:$0xff] %v1089
                  %v1091 = vld [vmem:[%s773 + $0x9e0] sm:$0xff]
                  %1092 = vst [vmem:[%s774 + $0x4f0] sm:$0xff] %v1091
                  %v1093 = vld [vmem:[%s773 + $0x9f0] sm:$0xff]
                  %1094 = vst [vmem:[%s774 + $0x4f8] sm:$0xff] %v1093
                  %v1095 = vld [vmem:[%s773 + $0xa00] sm:$0xff]
                  %1096 = vst [vmem:[%s774 + $0x500] sm:$0xff] %v1095
                  %v1097 = vld [vmem:[%s773 + $0xa10] sm:$0xff]
                  %1098 = vst [vmem:[%s774 + $0x508] sm:$0xff] %v1097
                  %v1099 = vld [vmem:[%s773 + $0xa20] sm:$0xff]
                  %1100 = vst [vmem:[%s774 + $0x510] sm:$0xff] %v1099
                  %v1101 = vld [vmem:[%s773 + $0xa30] sm:$0xff]
                  %1102 = vst [vmem:[%s774 + $0x518] sm:$0xff] %v1101
                  %v1103 = vld [vmem:[%s773 + $0xa40] sm:$0xff]
                  %1104 = vst [vmem:[%s774 + $0x520] sm:$0xff] %v1103
                  %v1105 = vld [vmem:[%s773 + $0xa50] sm:$0xff]
                  %1106 = vst [vmem:[%s774 + $0x528] sm:$0xff] %v1105
                  %v1107 = vld [vmem:[%s773 + $0xa60] sm:$0xff]
                  %1108 = vst [vmem:[%s774 + $0x530] sm:$0xff] %v1107
                  %v1109 = vld [vmem:[%s773 + $0xa70] sm:$0xff]
                  %1110 = vst [vmem:[%s774 + $0x538] sm:$0xff] %v1109
                  %v1111 = vld [vmem:[%s773 + $0xa80] sm:$0xff]
                  %1112 = vst [vmem:[%s774 + $0x540] sm:$0xff] %v1111
                  %v1113 = vld [vmem:[%s773 + $0xa90] sm:$0xff]
                  %1114 = vst [vmem:[%s774 + $0x548] sm:$0xff] %v1113
                  %v1115 = vld [vmem:[%s773 + $0xaa0] sm:$0xff]
                  %1116 = vst [vmem:[%s774 + $0x550] sm:$0xff] %v1115
                  %v1117 = vld [vmem:[%s773 + $0xab0] sm:$0xff]
                  %1118 = vst [vmem:[%s774 + $0x558] sm:$0xff] %v1117
                  %v1119 = vld [vmem:[%s773 + $0xac0] sm:$0xff]
                  %1120 = vst [vmem:[%s774 + $0x560] sm:$0xff] %v1119
                  %v1121 = vld [vmem:[%s773 + $0xad0] sm:$0xff]
                  %1122 = vst [vmem:[%s774 + $0x568] sm:$0xff] %v1121
                  %v1123 = vld [vmem:[%s773 + $0xae0] sm:$0xff]
                  %1124 = vst [vmem:[%s774 + $0x570] sm:$0xff] %v1123
                  %v1125 = vld [vmem:[%s773 + $0xaf0] sm:$0xff]
                  %1126 = vst [vmem:[%s774 + $0x578] sm:$0xff] %v1125
                  %v1127 = vld [vmem:[%s773 + $0xb00] sm:$0xff]
                  %1128 = vst [vmem:[%s774 + $0x580] sm:$0xff] %v1127
                  %v1129 = vld [vmem:[%s773 + $0xb10] sm:$0xff]
                  %1130 = vst [vmem:[%s774 + $0x588] sm:$0xff] %v1129
                  %v1131 = vld [vmem:[%s773 + $0xb20] sm:$0xff]
                  %1132 = vst [vmem:[%s774 + $0x590] sm:$0xff] %v1131
                  %v1133 = vld [vmem:[%s773 + $0xb30] sm:$0xff]
                  %1134 = vst [vmem:[%s774 + $0x598] sm:$0xff] %v1133
                  %v1135 = vld [vmem:[%s773 + $0xb40] sm:$0xff]
                  %1136 = vst [vmem:[%s774 + $0x5a0] sm:$0xff] %v1135
                  %v1137 = vld [vmem:[%s773 + $0xb50] sm:$0xff]
                  %1138 = vst [vmem:[%s774 + $0x5a8] sm:$0xff] %v1137
                  %v1139 = vld [vmem:[%s773 + $0xb60] sm:$0xff]
                  %1140 = vst [vmem:[%s774 + $0x5b0] sm:$0xff] %v1139
                  %v1141 = vld [vmem:[%s773 + $0xb70] sm:$0xff]
                  %1142 = vst [vmem:[%s774 + $0x5b8] sm:$0xff] %v1141
                  %v1143 = vld [vmem:[%s773 + $0xb80] sm:$0xff]
                  %1144 = vst [vmem:[%s774 + $0x5c0] sm:$0xff] %v1143
                  %v1145 = vld [vmem:[%s773 + $0xb90] sm:$0xff]
                  %1146 = vst [vmem:[%s774 + $0x5c8] sm:$0xff] %v1145
                  %v1147 = vld [vmem:[%s773 + $0xba0] sm:$0xff]
                  %1148 = vst [vmem:[%s774 + $0x5d0] sm:$0xff] %v1147
                  %v1149 = vld [vmem:[%s773 + $0xbb0] sm:$0xff]
                  %1150 = vst [vmem:[%s774 + $0x5d8] sm:$0xff] %v1149
                  %v1151 = vld [vmem:[%s773 + $0xbc0] sm:$0xff]
                  %1152 = vst [vmem:[%s774 + $0x5e0] sm:$0xff] %v1151
                  %v1153 = vld [vmem:[%s773 + $0xbd0] sm:$0xff]
                  %1154 = vst [vmem:[%s774 + $0x5e8] sm:$0xff] %v1153
                  %v1155 = vld [vmem:[%s773 + $0xbe0] sm:$0xff]
                  %1156 = vst [vmem:[%s774 + $0x5f0] sm:$0xff] %v1155
                  %v1157 = vld [vmem:[%s773 + $0xbf0] sm:$0xff]
                  %1158 = vst [vmem:[%s774 + $0x5f8] sm:$0xff] %v1157
                  %v1159 = vld [vmem:[%s773 + $0xc00] sm:$0xff]
                  %1160 = vst [vmem:[%s774 + $0x600] sm:$0xff] %v1159
                  %v1161 = vld [vmem:[%s773 + $0xc10] sm:$0xff]
                  %1162 = vst [vmem:[%s774 + $0x608] sm:$0xff] %v1161
                  %v1163 = vld [vmem:[%s773 + $0xc20] sm:$0xff]
                  %1164 = vst [vmem:[%s774 + $0x610] sm:$0xff] %v1163
                  %v1165 = vld [vmem:[%s773 + $0xc30] sm:$0xff]
                  %1166 = vst [vmem:[%s774 + $0x618] sm:$0xff] %v1165
                  %v1167 = vld [vmem:[%s773 + $0xc40] sm:$0xff]
                  %1168 = vst [vmem:[%s774 + $0x620] sm:$0xff] %v1167
                  %v1169 = vld [vmem:[%s773 + $0xc50] sm:$0xff]
                  %1170 = vst [vmem:[%s774 + $0x628] sm:$0xff] %v1169
                  %v1171 = vld [vmem:[%s773 + $0xc60] sm:$0xff]
                  %1172 = vst [vmem:[%s774 + $0x630] sm:$0xff] %v1171
                  %v1173 = vld [vmem:[%s773 + $0xc70] sm:$0xff]
                  %1174 = vst [vmem:[%s774 + $0x638] sm:$0xff] %v1173
                  %v1175 = vld [vmem:[%s773 + $0xc80] sm:$0xff]
                  %1176 = vst [vmem:[%s774 + $0x640] sm:$0xff] %v1175
                  %v1177 = vld [vmem:[%s773 + $0xc90] sm:$0xff]
                  %1178 = vst [vmem:[%s774 + $0x648] sm:$0xff] %v1177
                  %v1179 = vld [vmem:[%s773 + $0xca0] sm:$0xff]
                  %1180 = vst [vmem:[%s774 + $0x650] sm:$0xff] %v1179
                  %v1181 = vld [vmem:[%s773 + $0xcb0] sm:$0xff]
                  %1182 = vst [vmem:[%s774 + $0x658] sm:$0xff] %v1181
                  %v1183 = vld [vmem:[%s773 + $0xcc0] sm:$0xff]
                  %1184 = vst [vmem:[%s774 + $0x660] sm:$0xff] %v1183
                  %v1185 = vld [vmem:[%s773 + $0xcd0] sm:$0xff]
                  %1186 = vst [vmem:[%s774 + $0x668] sm:$0xff] %v1185
                  %v1187 = vld [vmem:[%s773 + $0xce0] sm:$0xff]
                  %1188 = vst [vmem:[%s774 + $0x670] sm:$0xff] %v1187
                  %v1189 = vld [vmem:[%s773 + $0xcf0] sm:$0xff]
                  %1190 = vst [vmem:[%s774 + $0x678] sm:$0xff] %v1189
                  %v1191 = vld [vmem:[%s773 + $0xd00] sm:$0xff]
                  %1192 = vst [vmem:[%s774 + $0x680] sm:$0xff] %v1191
                  %v1193 = vld [vmem:[%s773 + $0xd10] sm:$0xff]
                  %1194 = vst [vmem:[%s774 + $0x688] sm:$0xff] %v1193
                  %v1195 = vld [vmem:[%s773 + $0xd20] sm:$0xff]
                  %1196 = vst [vmem:[%s774 + $0x690] sm:$0xff] %v1195
                  %v1197 = vld [vmem:[%s773 + $0xd30] sm:$0xff]
                  %1198 = vst [vmem:[%s774 + $0x698] sm:$0xff] %v1197
                  %v1199 = vld [vmem:[%s773 + $0xd40] sm:$0xff]
                  %1200 = vst [vmem:[%s774 + $0x6a0] sm:$0xff] %v1199
                  %v1201 = vld [vmem:[%s773 + $0xd50] sm:$0xff]
                  %1202 = vst [vmem:[%s774 + $0x6a8] sm:$0xff] %v1201
                  %v1203 = vld [vmem:[%s773 + $0xd60] sm:$0xff]
                  %1204 = vst [vmem:[%s774 + $0x6b0] sm:$0xff] %v1203
                  %v1205 = vld [vmem:[%s773 + $0xd70] sm:$0xff]
                  %1206 = vst [vmem:[%s774 + $0x6b8] sm:$0xff] %v1205
                  %v1207 = vld [vmem:[%s773 + $0xd80] sm:$0xff]
                  %1208 = vst [vmem:[%s774 + $0x6c0] sm:$0xff] %v1207
                  %v1209 = vld [vmem:[%s773 + $0xd90] sm:$0xff]
                  %1210 = vst [vmem:[%s774 + $0x6c8] sm:$0xff] %v1209
                  %v1211 = vld [vmem:[%s773 + $0xda0] sm:$0xff]
                  %1212 = vst [vmem:[%s774 + $0x6d0] sm:$0xff] %v1211
                  %v1213 = vld [vmem:[%s773 + $0xdb0] sm:$0xff]
                  %1214 = vst [vmem:[%s774 + $0x6d8] sm:$0xff] %v1213
                  %v1215 = vld [vmem:[%s773 + $0xdc0] sm:$0xff]
                  %1216 = vst [vmem:[%s774 + $0x6e0] sm:$0xff] %v1215
                  %v1217 = vld [vmem:[%s773 + $0xdd0] sm:$0xff]
                  %1218 = vst [vmem:[%s774 + $0x6e8] sm:$0xff] %v1217
                  %v1219 = vld [vmem:[%s773 + $0xde0] sm:$0xff]
                  %1220 = vst [vmem:[%s774 + $0x6f0] sm:$0xff] %v1219
                  %v1221 = vld [vmem:[%s773 + $0xdf0] sm:$0xff]
                  %1222 = vst [vmem:[%s774 + $0x6f8] sm:$0xff] %v1221
                  %v1223 = vld [vmem:[%s773 + $0xe00] sm:$0xff]
                  %1224 = vst [vmem:[%s774 + $0x700] sm:$0xff] %v1223
                  %v1225 = vld [vmem:[%s773 + $0xe10] sm:$0xff]
                  %1226 = vst [vmem:[%s774 + $0x708] sm:$0xff] %v1225
                  %v1227 = vld [vmem:[%s773 + $0xe20] sm:$0xff]
                  %1228 = vst [vmem:[%s774 + $0x710] sm:$0xff] %v1227
                  %v1229 = vld [vmem:[%s773 + $0xe30] sm:$0xff]
                  %1230 = vst [vmem:[%s774 + $0x718] sm:$0xff] %v1229
                  %v1231 = vld [vmem:[%s773 + $0xe40] sm:$0xff]
                  %1232 = vst [vmem:[%s774 + $0x720] sm:$0xff] %v1231
                  %v1233 = vld [vmem:[%s773 + $0xe50] sm:$0xff]
                  %1234 = vst [vmem:[%s774 + $0x728] sm:$0xff] %v1233
                  %v1235 = vld [vmem:[%s773 + $0xe60] sm:$0xff]
                  %1236 = vst [vmem:[%s774 + $0x730] sm:$0xff] %v1235
                  %v1237 = vld [vmem:[%s773 + $0xe70] sm:$0xff]
                  %1238 = vst [vmem:[%s774 + $0x738] sm:$0xff] %v1237
                  %v1239 = vld [vmem:[%s773 + $0xe80] sm:$0xff]
                  %1240 = vst [vmem:[%s774 + $0x740] sm:$0xff] %v1239
                  %v1241 = vld [vmem:[%s773 + $0xe90] sm:$0xff]
                  %1242 = vst [vmem:[%s774 + $0x748] sm:$0xff] %v1241
                  %v1243 = vld [vmem:[%s773 + $0xea0] sm:$0xff]
                  %1244 = vst [vmem:[%s774 + $0x750] sm:$0xff] %v1243
                  %v1245 = vld [vmem:[%s773 + $0xeb0] sm:$0xff]
                  %1246 = vst [vmem:[%s774 + $0x758] sm:$0xff] %v1245
                  %v1247 = vld [vmem:[%s773 + $0xec0] sm:$0xff]
                  %1248 = vst [vmem:[%s774 + $0x760] sm:$0xff] %v1247
                  %v1249 = vld [vmem:[%s773 + $0xed0] sm:$0xff]
                  %1250 = vst [vmem:[%s774 + $0x768] sm:$0xff] %v1249
                  %v1251 = vld [vmem:[%s773 + $0xee0] sm:$0xff]
                  %1252 = vst [vmem:[%s774 + $0x770] sm:$0xff] %v1251
                  %v1253 = vld [vmem:[%s773 + $0xef0] sm:$0xff]
                  %1254 = vst [vmem:[%s774 + $0x778] sm:$0xff] %v1253
                  %v1255 = vld [vmem:[%s773 + $0xf00] sm:$0xff]
                  %1256 = vst [vmem:[%s774 + $0x780] sm:$0xff] %v1255
                  %v1257 = vld [vmem:[%s773 + $0xf10] sm:$0xff]
                  %1258 = vst [vmem:[%s774 + $0x788] sm:$0xff] %v1257
                  %v1259 = vld [vmem:[%s773 + $0xf20] sm:$0xff]
                  %1260 = vst [vmem:[%s774 + $0x790] sm:$0xff] %v1259
                  %v1261 = vld [vmem:[%s773 + $0xf30] sm:$0xff]
                  %1262 = vst [vmem:[%s774 + $0x798] sm:$0xff] %v1261
                  %v1263 = vld [vmem:[%s773 + $0xf40] sm:$0xff]
                  %1264 = vst [vmem:[%s774 + $0x7a0] sm:$0xff] %v1263
                  %v1265 = vld [vmem:[%s773 + $0xf50] sm:$0xff]
                  %1266 = vst [vmem:[%s774 + $0x7a8] sm:$0xff] %v1265
                  %v1267 = vld [vmem:[%s773 + $0xf60] sm:$0xff]
                  %1268 = vst [vmem:[%s774 + $0x7b0] sm:$0xff] %v1267
                  %v1269 = vld [vmem:[%s773 + $0xf70] sm:$0xff]
                  %1270 = vst [vmem:[%s774 + $0x7b8] sm:$0xff] %v1269
                  %v1271 = vld [vmem:[%s773 + $0xf80] sm:$0xff]
                  %1272 = vst [vmem:[%s774 + $0x7c0] sm:$0xff] %v1271
                  %v1273 = vld [vmem:[%s773 + $0xf90] sm:$0xff]
                  %1274 = vst [vmem:[%s774 + $0x7c8] sm:$0xff] %v1273
                  %v1275 = vld [vmem:[%s773 + $0xfa0] sm:$0xff]
                  %1276 = vst [vmem:[%s774 + $0x7d0] sm:$0xff] %v1275
                  %v1277 = vld [vmem:[%s773 + $0xfb0] sm:$0xff]
                  %1278 = vst [vmem:[%s774 + $0x7d8] sm:$0xff] %v1277
                  %v1279 = vld [vmem:[%s773 + $0xfc0] sm:$0xff]
                  %1280 = vst [vmem:[%s774 + $0x7e0] sm:$0xff] %v1279
                  %v1281 = vld [vmem:[%s773 + $0xfd0] sm:$0xff]
                  %1282 = vst [vmem:[%s774 + $0x7e8] sm:$0xff] %v1281
                  %v1283 = vld [vmem:[%s773 + $0xfe0] sm:$0xff]
                  %1284 = vst [vmem:[%s774 + $0x7f0] sm:$0xff] %v1283
                  %v1285 = vld [vmem:[%s773 + $0xff0] sm:$0xff]
                  %1286 = vst [vmem:[%s774 + $0x7f8] sm:$0xff] %v1285
                $region60: #{deepstn_pallas_forward.9} parent=54 // loop_footer
                  %s772 = sadd.s32 1, %s768
                $region61: #{deepstn_pallas_forward.9} parent=54 // loop_footer_branch
                  %767 = sbr.rel target = $region57
                $region62: #{deepstn_pallas_forward.9} parent=54 // loop_exit
                  _
              $region55: #{deepstn_pallas_forward.9} parent=39 // pred_fallthru
                _
              // Predicated region
              $region63: #{deepstn_pallas_forward.9} parent=39 // pred_check
                _
              $region64: #{deepstn_pallas_forward.9} parent=39 // pred_check_branch
                %1288 = sbr.rel target = $region66
              $region65: #{deepstn_pallas_forward.9} parent=39 // pred_region
                _
              $region66: #{deepstn_pallas_forward.9} parent=39 // pred_fallthru
                _
            $region40: #{deepstn_pallas_forward.9} parent=35 // pred_fallthru
              _
            // Predicated region
            $region41: #{deepstn_pallas_forward.9} parent=35 // pred_check
              _
            $region42: #{deepstn_pallas_forward.9} parent=35 // pred_check_branch
              %243 = sbr.rel target = $region44
            $region43: #{deepstn_pallas_forward.9} parent=35 // pred_region
              loop: start=0, step=1, limit=1
              $region45: #{deepstn_pallas_forward.9} parent=43 // loop_pre_header
                _
              $region46: #{deepstn_pallas_forward.9} parent=43 // loop_header
                %s246 = sphi 0, %s250
                %p247 = scmp.ge.s32.totalorder %s246, 1
                %s251 = sphi %s237, %s237
                %s252 = sphi %s231, %s231
              $region47: #{deepstn_pallas_forward.9} parent=43 // loop_header_branch
                %249 = sbr.rel (%p247) target = $region51
              $region48: #{deepstn_pallas_forward.9} parent=43 // loop_body
                %v253 = vld [vmem:[%s251] sm:$0xff]
                %254 = vst [vmem:[%s252] sm:$0xff] %v253
                %v255 = vld [vmem:[%s251 + $0x10] sm:$0xff]
                %256 = vst [vmem:[%s252 + $0x8] sm:$0xff] %v255
                %v257 = vld [vmem:[%s251 + $0x20] sm:$0xff]
                %258 = vst [vmem:[%s252 + $0x10] sm:$0xff] %v257
                %v259 = vld [vmem:[%s251 + $0x30] sm:$0xff]
                %260 = vst [vmem:[%s252 + $0x18] sm:$0xff] %v259
                %v261 = vld [vmem:[%s251 + $0x40] sm:$0xff]
                %262 = vst [vmem:[%s252 + $0x20] sm:$0xff] %v261
                %v263 = vld [vmem:[%s251 + $0x50] sm:$0xff]
                %264 = vst [vmem:[%s252 + $0x28] sm:$0xff] %v263
                %v265 = vld [vmem:[%s251 + $0x60] sm:$0xff]
                %266 = vst [vmem:[%s252 + $0x30] sm:$0xff] %v265
                %v267 = vld [vmem:[%s251 + $0x70] sm:$0xff]
                %268 = vst [vmem:[%s252 + $0x38] sm:$0xff] %v267
                %v269 = vld [vmem:[%s251 + $0x80] sm:$0xff]
                %270 = vst [vmem:[%s252 + $0x40] sm:$0xff] %v269
                %v271 = vld [vmem:[%s251 + $0x90] sm:$0xff]
                %272 = vst [vmem:[%s252 + $0x48] sm:$0xff] %v271
                %v273 = vld [vmem:[%s251 + $0xa0] sm:$0xff]
                %274 = vst [vmem:[%s252 + $0x50] sm:$0xff] %v273
                %v275 = vld [vmem:[%s251 + $0xb0] sm:$0xff]
                %276 = vst [vmem:[%s252 + $0x58] sm:$0xff] %v275
                %v277 = vld [vmem:[%s251 + $0xc0] sm:$0xff]
                %278 = vst [vmem:[%s252 + $0x60] sm:$0xff] %v277
                %v279 = vld [vmem:[%s251 + $0xd0] sm:$0xff]
                %280 = vst [vmem:[%s252 + $0x68] sm:$0xff] %v279
                %v281 = vld [vmem:[%s251 + $0xe0] sm:$0xff]
                %282 = vst [vmem:[%s252 + $0x70] sm:$0xff] %v281
                %v283 = vld [vmem:[%s251 + $0xf0] sm:$0xff]
                %284 = vst [vmem:[%s252 + $0x78] sm:$0xff] %v283
                %v285 = vld [vmem:[%s251 + $0x100] sm:$0xff]
                %286 = vst [vmem:[%s252 + $0x80] sm:$0xff] %v285
                %v287 = vld [vmem:[%s251 + $0x110] sm:$0xff]
                %288 = vst [vmem:[%s252 + $0x88] sm:$0xff] %v287
                %v289 = vld [vmem:[%s251 + $0x120] sm:$0xff]
                %290 = vst [vmem:[%s252 + $0x90] sm:$0xff] %v289
                %v291 = vld [vmem:[%s251 + $0x130] sm:$0xff]
                %292 = vst [vmem:[%s252 + $0x98] sm:$0xff] %v291
                %v293 = vld [vmem:[%s251 + $0x140] sm:$0xff]
                %294 = vst [vmem:[%s252 + $0xa0] sm:$0xff] %v293
                %v295 = vld [vmem:[%s251 + $0x150] sm:$0xff]
                %296 = vst [vmem:[%s252 + $0xa8] sm:$0xff] %v295
                %v297 = vld [vmem:[%s251 + $0x160] sm:$0xff]
                %298 = vst [vmem:[%s252 + $0xb0] sm:$0xff] %v297
                %v299 = vld [vmem:[%s251 + $0x170] sm:$0xff]
                %300 = vst [vmem:[%s252 + $0xb8] sm:$0xff] %v299
                %v301 = vld [vmem:[%s251 + $0x180] sm:$0xff]
                %302 = vst [vmem:[%s252 + $0xc0] sm:$0xff] %v301
                %v303 = vld [vmem:[%s251 + $0x190] sm:$0xff]
                %304 = vst [vmem:[%s252 + $0xc8] sm:$0xff] %v303
                %v305 = vld [vmem:[%s251 + $0x1a0] sm:$0xff]
                %306 = vst [vmem:[%s252 + $0xd0] sm:$0xff] %v305
                %v307 = vld [vmem:[%s251 + $0x1b0] sm:$0xff]
                %308 = vst [vmem:[%s252 + $0xd8] sm:$0xff] %v307
                %v309 = vld [vmem:[%s251 + $0x1c0] sm:$0xff]
                %310 = vst [vmem:[%s252 + $0xe0] sm:$0xff] %v309
                %v311 = vld [vmem:[%s251 + $0x1d0] sm:$0xff]
                %312 = vst [vmem:[%s252 + $0xe8] sm:$0xff] %v311
                %v313 = vld [vmem:[%s251 + $0x1e0] sm:$0xff]
                %314 = vst [vmem:[%s252 + $0xf0] sm:$0xff] %v313
                %v315 = vld [vmem:[%s251 + $0x1f0] sm:$0xff]
                %316 = vst [vmem:[%s252 + $0xf8] sm:$0xff] %v315
                %v317 = vld [vmem:[%s251 + $0x200] sm:$0xff]
                %318 = vst [vmem:[%s252 + $0x100] sm:$0xff] %v317
                %v319 = vld [vmem:[%s251 + $0x210] sm:$0xff]
                %320 = vst [vmem:[%s252 + $0x108] sm:$0xff] %v319
                %v321 = vld [vmem:[%s251 + $0x220] sm:$0xff]
                %322 = vst [vmem:[%s252 + $0x110] sm:$0xff] %v321
                %v323 = vld [vmem:[%s251 + $0x230] sm:$0xff]
                %324 = vst [vmem:[%s252 + $0x118] sm:$0xff] %v323
                %v325 = vld [vmem:[%s251 + $0x240] sm:$0xff]
                %326 = vst [vmem:[%s252 + $0x120] sm:$0xff] %v325
                %v327 = vld [vmem:[%s251 + $0x250] sm:$0xff]
                %328 = vst [vmem:[%s252 + $0x128] sm:$0xff] %v327
                %v329 = vld [vmem:[%s251 + $0x260] sm:$0xff]
                %330 = vst [vmem:[%s252 + $0x130] sm:$0xff] %v329
                %v331 = vld [vmem:[%s251 + $0x270] sm:$0xff]
                %332 = vst [vmem:[%s252 + $0x138] sm:$0xff] %v331
                %v333 = vld [vmem:[%s251 + $0x280] sm:$0xff]
                %334 = vst [vmem:[%s252 + $0x140] sm:$0xff] %v333
                %v335 = vld [vmem:[%s251 + $0x290] sm:$0xff]
                %336 = vst [vmem:[%s252 + $0x148] sm:$0xff] %v335
                %v337 = vld [vmem:[%s251 + $0x2a0] sm:$0xff]
                %338 = vst [vmem:[%s252 + $0x150] sm:$0xff] %v337
                %v339 = vld [vmem:[%s251 + $0x2b0] sm:$0xff]
                %340 = vst [vmem:[%s252 + $0x158] sm:$0xff] %v339
                %v341 = vld [vmem:[%s251 + $0x2c0] sm:$0xff]
                %342 = vst [vmem:[%s252 + $0x160] sm:$0xff] %v341
                %v343 = vld [vmem:[%s251 + $0x2d0] sm:$0xff]
                %344 = vst [vmem:[%s252 + $0x168] sm:$0xff] %v343
                %v345 = vld [vmem:[%s251 + $0x2e0] sm:$0xff]
                %346 = vst [vmem:[%s252 + $0x170] sm:$0xff] %v345
                %v347 = vld [vmem:[%s251 + $0x2f0] sm:$0xff]
                %348 = vst [vmem:[%s252 + $0x178] sm:$0xff] %v347
                %v349 = vld [vmem:[%s251 + $0x300] sm:$0xff]
                %350 = vst [vmem:[%s252 + $0x180] sm:$0xff] %v349
                %v351 = vld [vmem:[%s251 + $0x310] sm:$0xff]
                %352 = vst [vmem:[%s252 + $0x188] sm:$0xff] %v351
                %v353 = vld [vmem:[%s251 + $0x320] sm:$0xff]
                %354 = vst [vmem:[%s252 + $0x190] sm:$0xff] %v353
                %v355 = vld [vmem:[%s251 + $0x330] sm:$0xff]
                %356 = vst [vmem:[%s252 + $0x198] sm:$0xff] %v355
                %v357 = vld [vmem:[%s251 + $0x340] sm:$0xff]
                %358 = vst [vmem:[%s252 + $0x1a0] sm:$0xff] %v357
                %v359 = vld [vmem:[%s251 + $0x350] sm:$0xff]
                %360 = vst [vmem:[%s252 + $0x1a8] sm:$0xff] %v359
                %v361 = vld [vmem:[%s251 + $0x360] sm:$0xff]
                %362 = vst [vmem:[%s252 + $0x1b0] sm:$0xff] %v361
                %v363 = vld [vmem:[%s251 + $0x370] sm:$0xff]
                %364 = vst [vmem:[%s252 + $0x1b8] sm:$0xff] %v363
                %v365 = vld [vmem:[%s251 + $0x380] sm:$0xff]
                %366 = vst [vmem:[%s252 + $0x1c0] sm:$0xff] %v365
                %v367 = vld [vmem:[%s251 + $0x390] sm:$0xff]
                %368 = vst [vmem:[%s252 + $0x1c8] sm:$0xff] %v367
                %v369 = vld [vmem:[%s251 + $0x3a0] sm:$0xff]
                %370 = vst [vmem:[%s252 + $0x1d0] sm:$0xff] %v369
                %v371 = vld [vmem:[%s251 + $0x3b0] sm:$0xff]
                %372 = vst [vmem:[%s252 + $0x1d8] sm:$0xff] %v371
                %v373 = vld [vmem:[%s251 + $0x3c0] sm:$0xff]
                %374 = vst [vmem:[%s252 + $0x1e0] sm:$0xff] %v373
                %v375 = vld [vmem:[%s251 + $0x3d0] sm:$0xff]
                %376 = vst [vmem:[%s252 + $0x1e8] sm:$0xff] %v375
                %v377 = vld [vmem:[%s251 + $0x3e0] sm:$0xff]
                %378 = vst [vmem:[%s252 + $0x1f0] sm:$0xff] %v377
                %v379 = vld [vmem:[%s251 + $0x3f0] sm:$0xff]
                %380 = vst [vmem:[%s252 + $0x1f8] sm:$0xff] %v379
                %v381 = vld [vmem:[%s251 + $0x400] sm:$0xff]
                %382 = vst [vmem:[%s252 + $0x200] sm:$0xff] %v381
                %v383 = vld [vmem:[%s251 + $0x410] sm:$0xff]
                %384 = vst [vmem:[%s252 + $0x208] sm:$0xff] %v383
                %v385 = vld [vmem:[%s251 + $0x420] sm:$0xff]
                %386 = vst [vmem:[%s252 + $0x210] sm:$0xff] %v385
                %v387 = vld [vmem:[%s251 + $0x430] sm:$0xff]
                %388 = vst [vmem:[%s252 + $0x218] sm:$0xff] %v387
                %v389 = vld [vmem:[%s251 + $0x440] sm:$0xff]
                %390 = vst [vmem:[%s252 + $0x220] sm:$0xff] %v389
                %v391 = vld [vmem:[%s251 + $0x450] sm:$0xff]
                %392 = vst [vmem:[%s252 + $0x228] sm:$0xff] %v391
                %v393 = vld [vmem:[%s251 + $0x460] sm:$0xff]
                %394 = vst [vmem:[%s252 + $0x230] sm:$0xff] %v393
                %v395 = vld [vmem:[%s251 + $0x470] sm:$0xff]
                %396 = vst [vmem:[%s252 + $0x238] sm:$0xff] %v395
                %v397 = vld [vmem:[%s251 + $0x480] sm:$0xff]
                %398 = vst [vmem:[%s252 + $0x240] sm:$0xff] %v397
                %v399 = vld [vmem:[%s251 + $0x490] sm:$0xff]
                %400 = vst [vmem:[%s252 + $0x248] sm:$0xff] %v399
                %v401 = vld [vmem:[%s251 + $0x4a0] sm:$0xff]
                %402 = vst [vmem:[%s252 + $0x250] sm:$0xff] %v401
                %v403 = vld [vmem:[%s251 + $0x4b0] sm:$0xff]
                %404 = vst [vmem:[%s252 + $0x258] sm:$0xff] %v403
                %v405 = vld [vmem:[%s251 + $0x4c0] sm:$0xff]
                %406 = vst [vmem:[%s252 + $0x260] sm:$0xff] %v405
                %v407 = vld [vmem:[%s251 + $0x4d0] sm:$0xff]
                %408 = vst [vmem:[%s252 + $0x268] sm:$0xff] %v407
                %v409 = vld [vmem:[%s251 + $0x4e0] sm:$0xff]
                %410 = vst [vmem:[%s252 + $0x270] sm:$0xff] %v409
                %v411 = vld [vmem:[%s251 + $0x4f0] sm:$0xff]
                %412 = vst [vmem:[%s252 + $0x278] sm:$0xff] %v411
                %v413 = vld [vmem:[%s251 + $0x500] sm:$0xff]
                %414 = vst [vmem:[%s252 + $0x280] sm:$0xff] %v413
                %v415 = vld [vmem:[%s251 + $0x510] sm:$0xff]
                %416 = vst [vmem:[%s252 + $0x288] sm:$0xff] %v415
                %v417 = vld [vmem:[%s251 + $0x520] sm:$0xff]
                %418 = vst [vmem:[%s252 + $0x290] sm:$0xff] %v417
                %v419 = vld [vmem:[%s251 + $0x530] sm:$0xff]
                %420 = vst [vmem:[%s252 + $0x298] sm:$0xff] %v419
                %v421 = vld [vmem:[%s251 + $0x540] sm:$0xff]
                %422 = vst [vmem:[%s252 + $0x2a0] sm:$0xff] %v421
                %v423 = vld [vmem:[%s251 + $0x550] sm:$0xff]
                %424 = vst [vmem:[%s252 + $0x2a8] sm:$0xff] %v423
                %v425 = vld [vmem:[%s251 + $0x560] sm:$0xff]
                %426 = vst [vmem:[%s252 + $0x2b0] sm:$0xff] %v425
                %v427 = vld [vmem:[%s251 + $0x570] sm:$0xff]
                %428 = vst [vmem:[%s252 + $0x2b8] sm:$0xff] %v427
                %v429 = vld [vmem:[%s251 + $0x580] sm:$0xff]
                %430 = vst [vmem:[%s252 + $0x2c0] sm:$0xff] %v429
                %v431 = vld [vmem:[%s251 + $0x590] sm:$0xff]
                %432 = vst [vmem:[%s252 + $0x2c8] sm:$0xff] %v431
                %v433 = vld [vmem:[%s251 + $0x5a0] sm:$0xff]
                %434 = vst [vmem:[%s252 + $0x2d0] sm:$0xff] %v433
                %v435 = vld [vmem:[%s251 + $0x5b0] sm:$0xff]
                %436 = vst [vmem:[%s252 + $0x2d8] sm:$0xff] %v435
                %v437 = vld [vmem:[%s251 + $0x5c0] sm:$0xff]
                %438 = vst [vmem:[%s252 + $0x2e0] sm:$0xff] %v437
                %v439 = vld [vmem:[%s251 + $0x5d0] sm:$0xff]
                %440 = vst [vmem:[%s252 + $0x2e8] sm:$0xff] %v439
                %v441 = vld [vmem:[%s251 + $0x5e0] sm:$0xff]
                %442 = vst [vmem:[%s252 + $0x2f0] sm:$0xff] %v441
                %v443 = vld [vmem:[%s251 + $0x5f0] sm:$0xff]
                %444 = vst [vmem:[%s252 + $0x2f8] sm:$0xff] %v443
                %v445 = vld [vmem:[%s251 + $0x600] sm:$0xff]
                %446 = vst [vmem:[%s252 + $0x300] sm:$0xff] %v445
                %v447 = vld [vmem:[%s251 + $0x610] sm:$0xff]
                %448 = vst [vmem:[%s252 + $0x308] sm:$0xff] %v447
                %v449 = vld [vmem:[%s251 + $0x620] sm:$0xff]
                %450 = vst [vmem:[%s252 + $0x310] sm:$0xff] %v449
                %v451 = vld [vmem:[%s251 + $0x630] sm:$0xff]
                %452 = vst [vmem:[%s252 + $0x318] sm:$0xff] %v451
                %v453 = vld [vmem:[%s251 + $0x640] sm:$0xff]
                %454 = vst [vmem:[%s252 + $0x320] sm:$0xff] %v453
                %v455 = vld [vmem:[%s251 + $0x650] sm:$0xff]
                %456 = vst [vmem:[%s252 + $0x328] sm:$0xff] %v455
                %v457 = vld [vmem:[%s251 + $0x660] sm:$0xff]
                %458 = vst [vmem:[%s252 + $0x330] sm:$0xff] %v457
                %v459 = vld [vmem:[%s251 + $0x670] sm:$0xff]
                %460 = vst [vmem:[%s252 + $0x338] sm:$0xff] %v459
                %v461 = vld [vmem:[%s251 + $0x680] sm:$0xff]
                %462 = vst [vmem:[%s252 + $0x340] sm:$0xff] %v461
                %v463 = vld [vmem:[%s251 + $0x690] sm:$0xff]
                %464 = vst [vmem:[%s252 + $0x348] sm:$0xff] %v463
                %v465 = vld [vmem:[%s251 + $0x6a0] sm:$0xff]
                %466 = vst [vmem:[%s252 + $0x350] sm:$0xff] %v465
                %v467 = vld [vmem:[%s251 + $0x6b0] sm:$0xff]
                %468 = vst [vmem:[%s252 + $0x358] sm:$0xff] %v467
                %v469 = vld [vmem:[%s251 + $0x6c0] sm:$0xff]
                %470 = vst [vmem:[%s252 + $0x360] sm:$0xff] %v469
                %v471 = vld [vmem:[%s251 + $0x6d0] sm:$0xff]
                %472 = vst [vmem:[%s252 + $0x368] sm:$0xff] %v471
                %v473 = vld [vmem:[%s251 + $0x6e0] sm:$0xff]
                %474 = vst [vmem:[%s252 + $0x370] sm:$0xff] %v473
                %v475 = vld [vmem:[%s251 + $0x6f0] sm:$0xff]
                %476 = vst [vmem:[%s252 + $0x378] sm:$0xff] %v475
                %v477 = vld [vmem:[%s251 + $0x700] sm:$0xff]
                %478 = vst [vmem:[%s252 + $0x380] sm:$0xff] %v477
                %v479 = vld [vmem:[%s251 + $0x710] sm:$0xff]
                %480 = vst [vmem:[%s252 + $0x388] sm:$0xff] %v479
                %v481 = vld [vmem:[%s251 + $0x720] sm:$0xff]
                %482 = vst [vmem:[%s252 + $0x390] sm:$0xff] %v481
                %v483 = vld [vmem:[%s251 + $0x730] sm:$0xff]
                %484 = vst [vmem:[%s252 + $0x398] sm:$0xff] %v483
                %v485 = vld [vmem:[%s251 + $0x740] sm:$0xff]
                %486 = vst [vmem:[%s252 + $0x3a0] sm:$0xff] %v485
                %v487 = vld [vmem:[%s251 + $0x750] sm:$0xff]
                %488 = vst [vmem:[%s252 + $0x3a8] sm:$0xff] %v487
                %v489 = vld [vmem:[%s251 + $0x760] sm:$0xff]
                %490 = vst [vmem:[%s252 + $0x3b0] sm:$0xff] %v489
                %v491 = vld [vmem:[%s251 + $0x770] sm:$0xff]
                %492 = vst [vmem:[%s252 + $0x3b8] sm:$0xff] %v491
                %v493 = vld [vmem:[%s251 + $0x780] sm:$0xff]
                %494 = vst [vmem:[%s252 + $0x3c0] sm:$0xff] %v493
                %v495 = vld [vmem:[%s251 + $0x790] sm:$0xff]
                %496 = vst [vmem:[%s252 + $0x3c8] sm:$0xff] %v495
                %v497 = vld [vmem:[%s251 + $0x7a0] sm:$0xff]
                %498 = vst [vmem:[%s252 + $0x3d0] sm:$0xff] %v497
                %v499 = vld [vmem:[%s251 + $0x7b0] sm:$0xff]
                %500 = vst [vmem:[%s252 + $0x3d8] sm:$0xff] %v499
                %v501 = vld [vmem:[%s251 + $0x7c0] sm:$0xff]
                %502 = vst [vmem:[%s252 + $0x3e0] sm:$0xff] %v501
                %v503 = vld [vmem:[%s251 + $0x7d0] sm:$0xff]
                %504 = vst [vmem:[%s252 + $0x3e8] sm:$0xff] %v503
                %v505 = vld [vmem:[%s251 + $0x7e0] sm:$0xff]
                %506 = vst [vmem:[%s252 + $0x3f0] sm:$0xff] %v505
                %v507 = vld [vmem:[%s251 + $0x7f0] sm:$0xff]
                %508 = vst [vmem:[%s252 + $0x3f8] sm:$0xff] %v507
                %v509 = vld [vmem:[%s251 + $0x800] sm:$0xff]
                %510 = vst [vmem:[%s252 + $0x400] sm:$0xff] %v509
                %v511 = vld [vmem:[%s251 + $0x810] sm:$0xff]
                %512 = vst [vmem:[%s252 + $0x408] sm:$0xff] %v511
                %v513 = vld [vmem:[%s251 + $0x820] sm:$0xff]
                %514 = vst [vmem:[%s252 + $0x410] sm:$0xff] %v513
                %v515 = vld [vmem:[%s251 + $0x830] sm:$0xff]
                %516 = vst [vmem:[%s252 + $0x418] sm:$0xff] %v515
                %v517 = vld [vmem:[%s251 + $0x840] sm:$0xff]
                %518 = vst [vmem:[%s252 + $0x420] sm:$0xff] %v517
                %v519 = vld [vmem:[%s251 + $0x850] sm:$0xff]
                %520 = vst [vmem:[%s252 + $0x428] sm:$0xff] %v519
                %v521 = vld [vmem:[%s251 + $0x860] sm:$0xff]
                %522 = vst [vmem:[%s252 + $0x430] sm:$0xff] %v521
                %v523 = vld [vmem:[%s251 + $0x870] sm:$0xff]
                %524 = vst [vmem:[%s252 + $0x438] sm:$0xff] %v523
                %v525 = vld [vmem:[%s251 + $0x880] sm:$0xff]
                %526 = vst [vmem:[%s252 + $0x440] sm:$0xff] %v525
                %v527 = vld [vmem:[%s251 + $0x890] sm:$0xff]
                %528 = vst [vmem:[%s252 + $0x448] sm:$0xff] %v527
                %v529 = vld [vmem:[%s251 + $0x8a0] sm:$0xff]
                %530 = vst [vmem:[%s252 + $0x450] sm:$0xff] %v529
                %v531 = vld [vmem:[%s251 + $0x8b0] sm:$0xff]
                %532 = vst [vmem:[%s252 + $0x458] sm:$0xff] %v531
                %v533 = vld [vmem:[%s251 + $0x8c0] sm:$0xff]
                %534 = vst [vmem:[%s252 + $0x460] sm:$0xff] %v533
                %v535 = vld [vmem:[%s251 + $0x8d0] sm:$0xff]
                %536 = vst [vmem:[%s252 + $0x468] sm:$0xff] %v535
                %v537 = vld [vmem:[%s251 + $0x8e0] sm:$0xff]
                %538 = vst [vmem:[%s252 + $0x470] sm:$0xff] %v537
                %v539 = vld [vmem:[%s251 + $0x8f0] sm:$0xff]
                %540 = vst [vmem:[%s252 + $0x478] sm:$0xff] %v539
                %v541 = vld [vmem:[%s251 + $0x900] sm:$0xff]
                %542 = vst [vmem:[%s252 + $0x480] sm:$0xff] %v541
                %v543 = vld [vmem:[%s251 + $0x910] sm:$0xff]
                %544 = vst [vmem:[%s252 + $0x488] sm:$0xff] %v543
                %v545 = vld [vmem:[%s251 + $0x920] sm:$0xff]
                %546 = vst [vmem:[%s252 + $0x490] sm:$0xff] %v545
                %v547 = vld [vmem:[%s251 + $0x930] sm:$0xff]
                %548 = vst [vmem:[%s252 + $0x498] sm:$0xff] %v547
                %v549 = vld [vmem:[%s251 + $0x940] sm:$0xff]
                %550 = vst [vmem:[%s252 + $0x4a0] sm:$0xff] %v549
                %v551 = vld [vmem:[%s251 + $0x950] sm:$0xff]
                %552 = vst [vmem:[%s252 + $0x4a8] sm:$0xff] %v551
                %v553 = vld [vmem:[%s251 + $0x960] sm:$0xff]
                %554 = vst [vmem:[%s252 + $0x4b0] sm:$0xff] %v553
                %v555 = vld [vmem:[%s251 + $0x970] sm:$0xff]
                %556 = vst [vmem:[%s252 + $0x4b8] sm:$0xff] %v555
                %v557 = vld [vmem:[%s251 + $0x980] sm:$0xff]
                %558 = vst [vmem:[%s252 + $0x4c0] sm:$0xff] %v557
                %v559 = vld [vmem:[%s251 + $0x990] sm:$0xff]
                %560 = vst [vmem:[%s252 + $0x4c8] sm:$0xff] %v559
                %v561 = vld [vmem:[%s251 + $0x9a0] sm:$0xff]
                %562 = vst [vmem:[%s252 + $0x4d0] sm:$0xff] %v561
                %v563 = vld [vmem:[%s251 + $0x9b0] sm:$0xff]
                %564 = vst [vmem:[%s252 + $0x4d8] sm:$0xff] %v563
                %v565 = vld [vmem:[%s251 + $0x9c0] sm:$0xff]
                %566 = vst [vmem:[%s252 + $0x4e0] sm:$0xff] %v565
                %v567 = vld [vmem:[%s251 + $0x9d0] sm:$0xff]
                %568 = vst [vmem:[%s252 + $0x4e8] sm:$0xff] %v567
                %v569 = vld [vmem:[%s251 + $0x9e0] sm:$0xff]
                %570 = vst [vmem:[%s252 + $0x4f0] sm:$0xff] %v569
                %v571 = vld [vmem:[%s251 + $0x9f0] sm:$0xff]
                %572 = vst [vmem:[%s252 + $0x4f8] sm:$0xff] %v571
                %v573 = vld [vmem:[%s251 + $0xa00] sm:$0xff]
                %574 = vst [vmem:[%s252 + $0x500] sm:$0xff] %v573
                %v575 = vld [vmem:[%s251 + $0xa10] sm:$0xff]
                %576 = vst [vmem:[%s252 + $0x508] sm:$0xff] %v575
                %v577 = vld [vmem:[%s251 + $0xa20] sm:$0xff]
                %578 = vst [vmem:[%s252 + $0x510] sm:$0xff] %v577
                %v579 = vld [vmem:[%s251 + $0xa30] sm:$0xff]
                %580 = vst [vmem:[%s252 + $0x518] sm:$0xff] %v579
                %v581 = vld [vmem:[%s251 + $0xa40] sm:$0xff]
                %582 = vst [vmem:[%s252 + $0x520] sm:$0xff] %v581
                %v583 = vld [vmem:[%s251 + $0xa50] sm:$0xff]
                %584 = vst [vmem:[%s252 + $0x528] sm:$0xff] %v583
                %v585 = vld [vmem:[%s251 + $0xa60] sm:$0xff]
                %586 = vst [vmem:[%s252 + $0x530] sm:$0xff] %v585
                %v587 = vld [vmem:[%s251 + $0xa70] sm:$0xff]
                %588 = vst [vmem:[%s252 + $0x538] sm:$0xff] %v587
                %v589 = vld [vmem:[%s251 + $0xa80] sm:$0xff]
                %590 = vst [vmem:[%s252 + $0x540] sm:$0xff] %v589
                %v591 = vld [vmem:[%s251 + $0xa90] sm:$0xff]
                %592 = vst [vmem:[%s252 + $0x548] sm:$0xff] %v591
                %v593 = vld [vmem:[%s251 + $0xaa0] sm:$0xff]
                %594 = vst [vmem:[%s252 + $0x550] sm:$0xff] %v593
                %v595 = vld [vmem:[%s251 + $0xab0] sm:$0xff]
                %596 = vst [vmem:[%s252 + $0x558] sm:$0xff] %v595
                %v597 = vld [vmem:[%s251 + $0xac0] sm:$0xff]
                %598 = vst [vmem:[%s252 + $0x560] sm:$0xff] %v597
                %v599 = vld [vmem:[%s251 + $0xad0] sm:$0xff]
                %600 = vst [vmem:[%s252 + $0x568] sm:$0xff] %v599
                %v601 = vld [vmem:[%s251 + $0xae0] sm:$0xff]
                %602 = vst [vmem:[%s252 + $0x570] sm:$0xff] %v601
                %v603 = vld [vmem:[%s251 + $0xaf0] sm:$0xff]
                %604 = vst [vmem:[%s252 + $0x578] sm:$0xff] %v603
                %v605 = vld [vmem:[%s251 + $0xb00] sm:$0xff]
                %606 = vst [vmem:[%s252 + $0x580] sm:$0xff] %v605
                %v607 = vld [vmem:[%s251 + $0xb10] sm:$0xff]
                %608 = vst [vmem:[%s252 + $0x588] sm:$0xff] %v607
                %v609 = vld [vmem:[%s251 + $0xb20] sm:$0xff]
                %610 = vst [vmem:[%s252 + $0x590] sm:$0xff] %v609
                %v611 = vld [vmem:[%s251 + $0xb30] sm:$0xff]
                %612 = vst [vmem:[%s252 + $0x598] sm:$0xff] %v611
                %v613 = vld [vmem:[%s251 + $0xb40] sm:$0xff]
                %614 = vst [vmem:[%s252 + $0x5a0] sm:$0xff] %v613
                %v615 = vld [vmem:[%s251 + $0xb50] sm:$0xff]
                %616 = vst [vmem:[%s252 + $0x5a8] sm:$0xff] %v615
                %v617 = vld [vmem:[%s251 + $0xb60] sm:$0xff]
                %618 = vst [vmem:[%s252 + $0x5b0] sm:$0xff] %v617
                %v619 = vld [vmem:[%s251 + $0xb70] sm:$0xff]
                %620 = vst [vmem:[%s252 + $0x5b8] sm:$0xff] %v619
                %v621 = vld [vmem:[%s251 + $0xb80] sm:$0xff]
                %622 = vst [vmem:[%s252 + $0x5c0] sm:$0xff] %v621
                %v623 = vld [vmem:[%s251 + $0xb90] sm:$0xff]
                %624 = vst [vmem:[%s252 + $0x5c8] sm:$0xff] %v623
                %v625 = vld [vmem:[%s251 + $0xba0] sm:$0xff]
                %626 = vst [vmem:[%s252 + $0x5d0] sm:$0xff] %v625
                %v627 = vld [vmem:[%s251 + $0xbb0] sm:$0xff]
                %628 = vst [vmem:[%s252 + $0x5d8] sm:$0xff] %v627
                %v629 = vld [vmem:[%s251 + $0xbc0] sm:$0xff]
                %630 = vst [vmem:[%s252 + $0x5e0] sm:$0xff] %v629
                %v631 = vld [vmem:[%s251 + $0xbd0] sm:$0xff]
                %632 = vst [vmem:[%s252 + $0x5e8] sm:$0xff] %v631
                %v633 = vld [vmem:[%s251 + $0xbe0] sm:$0xff]
                %634 = vst [vmem:[%s252 + $0x5f0] sm:$0xff] %v633
                %v635 = vld [vmem:[%s251 + $0xbf0] sm:$0xff]
                %636 = vst [vmem:[%s252 + $0x5f8] sm:$0xff] %v635
                %v637 = vld [vmem:[%s251 + $0xc00] sm:$0xff]
                %638 = vst [vmem:[%s252 + $0x600] sm:$0xff] %v637
                %v639 = vld [vmem:[%s251 + $0xc10] sm:$0xff]
                %640 = vst [vmem:[%s252 + $0x608] sm:$0xff] %v639
                %v641 = vld [vmem:[%s251 + $0xc20] sm:$0xff]
                %642 = vst [vmem:[%s252 + $0x610] sm:$0xff] %v641
                %v643 = vld [vmem:[%s251 + $0xc30] sm:$0xff]
                %644 = vst [vmem:[%s252 + $0x618] sm:$0xff] %v643
                %v645 = vld [vmem:[%s251 + $0xc40] sm:$0xff]
                %646 = vst [vmem:[%s252 + $0x620] sm:$0xff] %v645
                %v647 = vld [vmem:[%s251 + $0xc50] sm:$0xff]
                %648 = vst [vmem:[%s252 + $0x628] sm:$0xff] %v647
                %v649 = vld [vmem:[%s251 + $0xc60] sm:$0xff]
                %650 = vst [vmem:[%s252 + $0x630] sm:$0xff] %v649
                %v651 = vld [vmem:[%s251 + $0xc70] sm:$0xff]
                %652 = vst [vmem:[%s252 + $0x638] sm:$0xff] %v651
                %v653 = vld [vmem:[%s251 + $0xc80] sm:$0xff]
                %654 = vst [vmem:[%s252 + $0x640] sm:$0xff] %v653
                %v655 = vld [vmem:[%s251 + $0xc90] sm:$0xff]
                %656 = vst [vmem:[%s252 + $0x648] sm:$0xff] %v655
                %v657 = vld [vmem:[%s251 + $0xca0] sm:$0xff]
                %658 = vst [vmem:[%s252 + $0x650] sm:$0xff] %v657
                %v659 = vld [vmem:[%s251 + $0xcb0] sm:$0xff]
                %660 = vst [vmem:[%s252 + $0x658] sm:$0xff] %v659
                %v661 = vld [vmem:[%s251 + $0xcc0] sm:$0xff]
                %662 = vst [vmem:[%s252 + $0x660] sm:$0xff] %v661
                %v663 = vld [vmem:[%s251 + $0xcd0] sm:$0xff]
                %664 = vst [vmem:[%s252 + $0x668] sm:$0xff] %v663
                %v665 = vld [vmem:[%s251 + $0xce0] sm:$0xff]
                %666 = vst [vmem:[%s252 + $0x670] sm:$0xff] %v665
                %v667 = vld [vmem:[%s251 + $0xcf0] sm:$0xff]
                %668 = vst [vmem:[%s252 + $0x678] sm:$0xff] %v667
                %v669 = vld [vmem:[%s251 + $0xd00] sm:$0xff]
                %670 = vst [vmem:[%s252 + $0x680] sm:$0xff] %v669
                %v671 = vld [vmem:[%s251 + $0xd10] sm:$0xff]
                %672 = vst [vmem:[%s252 + $0x688] sm:$0xff] %v671
                %v673 = vld [vmem:[%s251 + $0xd20] sm:$0xff]
                %674 = vst [vmem:[%s252 + $0x690] sm:$0xff] %v673
                %v675 = vld [vmem:[%s251 + $0xd30] sm:$0xff]
                %676 = vst [vmem:[%s252 + $0x698] sm:$0xff] %v675
                %v677 = vld [vmem:[%s251 + $0xd40] sm:$0xff]
                %678 = vst [vmem:[%s252 + $0x6a0] sm:$0xff] %v677
                %v679 = vld [vmem:[%s251 + $0xd50] sm:$0xff]
                %680 = vst [vmem:[%s252 + $0x6a8] sm:$0xff] %v679
                %v681 = vld [vmem:[%s251 + $0xd60] sm:$0xff]
                %682 = vst [vmem:[%s252 + $0x6b0] sm:$0xff] %v681
                %v683 = vld [vmem:[%s251 + $0xd70] sm:$0xff]
                %684 = vst [vmem:[%s252 + $0x6b8] sm:$0xff] %v683
                %v685 = vld [vmem:[%s251 + $0xd80] sm:$0xff]
                %686 = vst [vmem:[%s252 + $0x6c0] sm:$0xff] %v685
                %v687 = vld [vmem:[%s251 + $0xd90] sm:$0xff]
                %688 = vst [vmem:[%s252 + $0x6c8] sm:$0xff] %v687
                %v689 = vld [vmem:[%s251 + $0xda0] sm:$0xff]
                %690 = vst [vmem:[%s252 + $0x6d0] sm:$0xff] %v689
                %v691 = vld [vmem:[%s251 + $0xdb0] sm:$0xff]
                %692 = vst [vmem:[%s252 + $0x6d8] sm:$0xff] %v691
                %v693 = vld [vmem:[%s251 + $0xdc0] sm:$0xff]
                %694 = vst [vmem:[%s252 + $0x6e0] sm:$0xff] %v693
                %v695 = vld [vmem:[%s251 + $0xdd0] sm:$0xff]
                %696 = vst [vmem:[%s252 + $0x6e8] sm:$0xff] %v695
                %v697 = vld [vmem:[%s251 + $0xde0] sm:$0xff]
                %698 = vst [vmem:[%s252 + $0x6f0] sm:$0xff] %v697
                %v699 = vld [vmem:[%s251 + $0xdf0] sm:$0xff]
                %700 = vst [vmem:[%s252 + $0x6f8] sm:$0xff] %v699
                %v701 = vld [vmem:[%s251 + $0xe00] sm:$0xff]
                %702 = vst [vmem:[%s252 + $0x700] sm:$0xff] %v701
                %v703 = vld [vmem:[%s251 + $0xe10] sm:$0xff]
                %704 = vst [vmem:[%s252 + $0x708] sm:$0xff] %v703
                %v705 = vld [vmem:[%s251 + $0xe20] sm:$0xff]
                %706 = vst [vmem:[%s252 + $0x710] sm:$0xff] %v705
                %v707 = vld [vmem:[%s251 + $0xe30] sm:$0xff]
                %708 = vst [vmem:[%s252 + $0x718] sm:$0xff] %v707
                %v709 = vld [vmem:[%s251 + $0xe40] sm:$0xff]
                %710 = vst [vmem:[%s252 + $0x720] sm:$0xff] %v709
                %v711 = vld [vmem:[%s251 + $0xe50] sm:$0xff]
                %712 = vst [vmem:[%s252 + $0x728] sm:$0xff] %v711
                %v713 = vld [vmem:[%s251 + $0xe60] sm:$0xff]
                %714 = vst [vmem:[%s252 + $0x730] sm:$0xff] %v713
                %v715 = vld [vmem:[%s251 + $0xe70] sm:$0xff]
                %716 = vst [vmem:[%s252 + $0x738] sm:$0xff] %v715
                %v717 = vld [vmem:[%s251 + $0xe80] sm:$0xff]
                %718 = vst [vmem:[%s252 + $0x740] sm:$0xff] %v717
                %v719 = vld [vmem:[%s251 + $0xe90] sm:$0xff]
                %720 = vst [vmem:[%s252 + $0x748] sm:$0xff] %v719
                %v721 = vld [vmem:[%s251 + $0xea0] sm:$0xff]
                %722 = vst [vmem:[%s252 + $0x750] sm:$0xff] %v721
                %v723 = vld [vmem:[%s251 + $0xeb0] sm:$0xff]
                %724 = vst [vmem:[%s252 + $0x758] sm:$0xff] %v723
                %v725 = vld [vmem:[%s251 + $0xec0] sm:$0xff]
                %726 = vst [vmem:[%s252 + $0x760] sm:$0xff] %v725
                %v727 = vld [vmem:[%s251 + $0xed0] sm:$0xff]
                %728 = vst [vmem:[%s252 + $0x768] sm:$0xff] %v727
                %v729 = vld [vmem:[%s251 + $0xee0] sm:$0xff]
                %730 = vst [vmem:[%s252 + $0x770] sm:$0xff] %v729
                %v731 = vld [vmem:[%s251 + $0xef0] sm:$0xff]
                %732 = vst [vmem:[%s252 + $0x778] sm:$0xff] %v731
                %v733 = vld [vmem:[%s251 + $0xf00] sm:$0xff]
                %734 = vst [vmem:[%s252 + $0x780] sm:$0xff] %v733
                %v735 = vld [vmem:[%s251 + $0xf10] sm:$0xff]
                %736 = vst [vmem:[%s252 + $0x788] sm:$0xff] %v735
                %v737 = vld [vmem:[%s251 + $0xf20] sm:$0xff]
                %738 = vst [vmem:[%s252 + $0x790] sm:$0xff] %v737
                %v739 = vld [vmem:[%s251 + $0xf30] sm:$0xff]
                %740 = vst [vmem:[%s252 + $0x798] sm:$0xff] %v739
                %v741 = vld [vmem:[%s251 + $0xf40] sm:$0xff]
                %742 = vst [vmem:[%s252 + $0x7a0] sm:$0xff] %v741
                %v743 = vld [vmem:[%s251 + $0xf50] sm:$0xff]
                %744 = vst [vmem:[%s252 + $0x7a8] sm:$0xff] %v743
                %v745 = vld [vmem:[%s251 + $0xf60] sm:$0xff]
                %746 = vst [vmem:[%s252 + $0x7b0] sm:$0xff] %v745
                %v747 = vld [vmem:[%s251 + $0xf70] sm:$0xff]
                %748 = vst [vmem:[%s252 + $0x7b8] sm:$0xff] %v747
                %v749 = vld [vmem:[%s251 + $0xf80] sm:$0xff]
                %750 = vst [vmem:[%s252 + $0x7c0] sm:$0xff] %v749
                %v751 = vld [vmem:[%s251 + $0xf90] sm:$0xff]
                %752 = vst [vmem:[%s252 + $0x7c8] sm:$0xff] %v751
                %v753 = vld [vmem:[%s251 + $0xfa0] sm:$0xff]
                %754 = vst [vmem:[%s252 + $0x7d0] sm:$0xff] %v753
                %v755 = vld [vmem:[%s251 + $0xfb0] sm:$0xff]
                %756 = vst [vmem:[%s252 + $0x7d8] sm:$0xff] %v755
                %v757 = vld [vmem:[%s251 + $0xfc0] sm:$0xff]
                %758 = vst [vmem:[%s252 + $0x7e0] sm:$0xff] %v757
                %v759 = vld [vmem:[%s251 + $0xfd0] sm:$0xff]
                %760 = vst [vmem:[%s252 + $0x7e8] sm:$0xff] %v759
                %v761 = vld [vmem:[%s251 + $0xfe0] sm:$0xff]
                %762 = vst [vmem:[%s252 + $0x7f0] sm:$0xff] %v761
                %v763 = vld [vmem:[%s251 + $0xff0] sm:$0xff]
                %764 = vst [vmem:[%s252 + $0x7f8] sm:$0xff] %v763
              $region49: #{deepstn_pallas_forward.9} parent=43 // loop_footer
                %s250 = sadd.s32 1, %s246
              $region50: #{deepstn_pallas_forward.9} parent=43 // loop_footer_branch
                %245 = sbr.rel target = $region46
              $region51: #{deepstn_pallas_forward.9} parent=43 // loop_exit
                _
            $region44: #{deepstn_pallas_forward.9} parent=35 // pred_fallthru
              _
          $region36: #{deepstn_pallas_forward.9} parent=31 // pred_fallthru
            _
          %1289 = vnop
        $region32: #{deepstn_pallas_forward.9} parent=15 // pred_fallthru
          _
        // Predicated region
        $region67: #{deepstn_pallas_forward.9} parent=15 // pred_check
          %p1290 = pneg %p149
        $region68: #{deepstn_pallas_forward.9} parent=15 // pred_check_branch
          %1292 = sbr.rel (%p1290) target = $region70
        $region69: #{deepstn_pallas_forward.9} parent=15 // pred_region
          %s1293 = smul.u32 2, %s18
          %p1294 = scmp.lt.s32.totalorder %s1293, 3
          %s1295 = scalar_select %p1294, %s1293, 3
          %s1296 = scalar_lea.vmem %s4, %s1295
          %s1297 = smul.u32 2, %s18
        $region70: #{deepstn_pallas_forward.9} parent=15 // pred_fallthru
          _
      $region16: #{deepstn_pallas_forward.9} parent=5 // pred_fallthru
        _
      %p1298 = scmp.le.s32.totalorder 1, %s11
      %p1299 = scmp.lt.s32.totalorder %s11, 5
      %p1300 = pnand %p1298, %p1299
      %p1301 = pneg %p1300
      // Predicated region
      $region71: #{deepstn_pallas_forward.9} parent=5 // pred_check
        _
      $region72: #{deepstn_pallas_forward.9} parent=5 // pred_check_branch
        %1303 = sbr.rel (%p1300) target = $region74
      $region73: #{deepstn_pallas_forward.9} parent=5 // pred_region
        %s1304 = ssub.s32 %s11, 1
        %s1305 = sand.u32 %s116, 1
        %s1306 = sand.u32 %s116, 1
        %s1307 = smul.addr %s1306, 2048
        %s1308 = scalar_lea.vmem [#allocation2], %s1307
        // Predicated region
        $region75: #{deepstn_pallas_forward.9} parent=73 // pred_check
          %p1309 = pneg %p129
        $region76: #{deepstn_pallas_forward.9} parent=73 // pred_check_branch
          %1311 = sbr.rel (%p1309) target = $region78
        $region77: #{deepstn_pallas_forward.9} parent=73 // pred_region
          _
        $region78: #{deepstn_pallas_forward.9} parent=73 // pred_fallthru
          _
        %s1312 = smul.u32 16, %s21
        %p1313 = scmp.lt.s32.totalorder %s1312, 31
        %s1314 = scalar_select %p1313, %s1312, 31
        %s1315 = smul.addr %s1314, 2
        %s1316 = scalar_lea.vmem %s0, %s1315
        %p1317 = pneg %p49
        %p1318 = pneg %p46
        %s1319 = smul.u32 16, %s21
        %p1320 = scmp.lt.s32.totalorder %s1319, 31
        %s1321 = scalar_select %p1320, %s1319, 31
        %s1322 = scalar_lea.vmem %s1, %s1321
        %p1323 = pneg %p75
        %p1324 = pneg %p72
        %s1325 = smul.u32 16, %s21
        %p1326 = scmp.lt.s32.totalorder %s1325, 31
        %s1327 = scalar_select %p1326, %s1325, 31
        %s1328 = scalar_lea.vmem %s2, %s1327
        %p1329 = pneg %p101
        %p1330 = pneg %p98
        %s1331 = sand.u32 %s116, 1
        %s1332 = sand.u32 %s116, 1
        %s1333 = smul.addr %s1332, 2048
        %s1334 = scalar_lea.vmem [#allocation2], %s1333
        %p1335 = pneg %p129
        %p1336 = pneg %p126
        %s1337 = smul.u32 2, %s20
        %p1338 = scmp.lt.s32.totalorder %s1337, 3
        %s1339 = scalar_select %p1338, %s1337, 3
        %s1340 = scalar_lea.vmem %s4, %s1339
        %p1341 = pneg %p155
        %p1342 = pneg %p152
        %p1343 = pneg %p181
        %p1344 = pneg %p178
        %s1345 = smul.u32 2, %s20
        %p1346 = scmp.lt.s32.totalorder %s1345, 3
        %s1347 = scalar_select %p1346, %s1345, 3
        %s1348 = smul.addr %s1347, 2
        %s1349 = scalar_lea.vmem %s5, %s1348
        %s1350 = smul.u32 16, %s21
        %p1351 = scmp.lt.s32.totalorder %s1350, 31
        %s1352 = scalar_select %p1351, %s1350, 31
        %s1353 = smul.addr %s1352, 2
        %s1354 = scalar_lea.vmem %s0, %s1353
        %s1355 = smul.u32 16, %s21
        %s1356 = smul.u32 16, %s21
        %p1357 = scmp.lt.s32.totalorder %s1356, 31
        %s1358 = scalar_select %p1357, %s1356, 31
        %s1359 = scalar_lea.vmem %s1, %s1358
        %s1360 = smul.u32 16, %s21
        %s1361 = smul.u32 16, %s21
        %p1362 = scmp.lt.s32.totalorder %s1361, 31
        %s1363 = scalar_select %p1362, %s1361, 31
        %s1364 = scalar_lea.vmem %s2, %s1363
        %s1365 = smul.u32 16, %s21
        %s1366 = smul.u32 256, %s21
        %s1367 = smul.u32 2, %s20
        %s1368 = smul.u32 2, %s20
        %p1369 = scmp.lt.s32.totalorder %s1368, 3
        %s1370 = scalar_select %p1369, %s1368, 3
        %s1371 = scalar_lea.vmem %s4, %s1370
        %s1372 = smul.u32 2, %s20
        %s1373 = smul.u32 2, %s20
        %p1374 = scmp.lt.s32.totalorder %s1373, 3
        %s1375 = scalar_select %p1374, %s1373, 3
        %s1376 = smul.addr %s1375, 2
        %s1377 = scalar_lea.vmem %s5, %s1376
        %s1378 = smul.u32 2, %s20
        %p1379 = scmp.eq.s32.totalorder %s21, 0
        // Predicated region
        $region79: #{deepstn_pallas_forward.9} parent=73 // pred_check
          %p1380 = pneg %p1379
        $region80: #{deepstn_pallas_forward.9} parent=73 // pred_check_branch
          %1382 = sbr.rel (%p1380) target = $region82
        $region81: #{deepstn_pallas_forward.9} parent=73 // pred_region
          %v1383 = vld [vmem:[%s1371] sm:$0x3]
          %v1385 = vlaneseq
          %v1386 = vshrl.u32 %v1385, 7
          %v1387 = vsub.s32 0, %v1386
          %v1388 = vrot.slane %v1383, %v1387
          %v1389 = vlaneseq
          %v1390 = vshrl.u32 %v1389, 7
          %v1391 = vsub.s32 1, %v1390
          %v1392 = vrot.slane %v1383, %v1391
          %v1393 = vcombine.low %v1388, %v1392
          %v1395 = vunpack.c.l.s4 1983009808
          %v1396 = vunpack.c.0.s8 %v1395
          %v1397 = vlaneseq
          %v1398 = vshrl.u32 %v1397, 7
          %v1399 = vsub.s32 %v1396, %v1398
          %v1400 = vrot.slane %v1393, %v1399
          %1402 = vst [vmem:[%s1377] sm:$0xf] %v1400
        $region82: #{deepstn_pallas_forward.9} parent=73 // pred_fallthru
          _
        %v1403 = vld [vmem:[%s1354] sm:$0xff]
        %v1404 = vld [vmem:[%s1354 + $0x8] sm:$0xff]
        %v1405 = vld [vmem:[%s1354 + $0x10] sm:$0xff]
        %v1406 = vld [vmem:[%s1354 + $0x18] sm:$0xff]
        %v1407 = vmax.f32 %v1403, 0.0
        %v1408 = vmax.f32 %v1404, 0.0
        %v1409 = vmax.f32 %v1405, 0.0
        %v1410 = vmax.f32 %v1406, 0.0
        %v1411 = vld [vmem:[%s1359] sm:$0xff]
        %v1412 = vld [vmem:[%s1359 + $0x8] sm:$0xff]
        %v1415 = vlaneseq
        %v1416 = vshrl.u32 %v1415, 7
        %v1417 = vsub.s32 0, %v1416
        %v1418 = vrot.slane %v1411, %v1417
        %v1419 = vlaneseq
        %v1420 = vshrl.u32 %v1419, 7
        %v1421 = vsub.s32 1, %v1420
        %v1422 = vrot.slane %v1411, %v1421
        %v1423 = vlaneseq
        %v1424 = vshrl.u32 %v1423, 7
        %v1425 = vsub.s32 2, %v1424
        %v1426 = vrot.slane %v1411, %v1425
        %v1427 = vlaneseq
        %v1428 = vshrl.u32 %v1427, 7
        %v1429 = vsub.s32 3, %v1428
        %v1430 = vrot.slane %v1411, %v1429
        %v1431 = vlaneseq
        %v1432 = vshrl.u32 %v1431, 7
        %v1433 = vsub.s32 4, %v1432
        %v1434 = vrot.slane %v1411, %v1433
        %v1435 = vlaneseq
        %v1436 = vshrl.u32 %v1435, 7
        %v1437 = vsub.s32 5, %v1436
        %v1438 = vrot.slane %v1411, %v1437
        %v1439 = vlaneseq
        %v1440 = vshrl.u32 %v1439, 7
        %v1441 = vsub.s32 6, %v1440
        %v1442 = vrot.slane %v1411, %v1441
        %v1443 = vlaneseq
        %v1444 = vshrl.u32 %v1443, 7
        %v1445 = vsub.s32 7, %v1444
        %v1446 = vrot.slane %v1411, %v1445
        %v1447 = vlaneseq
        %v1448 = vshrl.u32 %v1447, 7
        %v1449 = vsub.s32 0, %v1448
        %v1450 = vrot.slane %v1412, %v1449
        %v1451 = vlaneseq
        %v1452 = vshrl.u32 %v1451, 7
        %v1453 = vsub.s32 1, %v1452
        %v1454 = vrot.slane %v1412, %v1453
        %v1455 = vlaneseq
        %v1456 = vshrl.u32 %v1455, 7
        %v1457 = vsub.s32 2, %v1456
        %v1458 = vrot.slane %v1412, %v1457
        %v1459 = vlaneseq
        %v1460 = vshrl.u32 %v1459, 7
        %v1461 = vsub.s32 3, %v1460
        %v1462 = vrot.slane %v1412, %v1461
        %v1463 = vlaneseq
        %v1464 = vshrl.u32 %v1463, 7
        %v1465 = vsub.s32 4, %v1464
        %v1466 = vrot.slane %v1412, %v1465
        %v1467 = vlaneseq
        %v1468 = vshrl.u32 %v1467, 7
        %v1469 = vsub.s32 5, %v1468
        %v1470 = vrot.slane %v1412, %v1469
        %v1471 = vlaneseq
        %v1472 = vshrl.u32 %v1471, 7
        %v1473 = vsub.s32 6, %v1472
        %v1474 = vrot.slane %v1412, %v1473
        %v1475 = vlaneseq
        %v1476 = vshrl.u32 %v1475, 7
        %v1477 = vsub.s32 7, %v1476
        %v1478 = vrot.slane %v1412, %v1477
        %v1479 = vcombine.low %v1418, %v1422
        %v1480 = vcombine.low %v1426, %v1430
        %v1482 = vunpack.c.l.s4 1983009808
        %v1483 = vunpack.c.0.s8 %v1482
        %v1484 = vlaneseq
        %v1485 = vshrl.u32 %v1484, 7
        %v1486 = vsub.s32 %v1483, %v1485
        %v1487 = vrot.slane %v1479, %v1486
        %v1489 = vunpack.c.l.s4 1983009808
        %v1490 = vunpack.c.0.s8 %v1489
        %v1491 = vlaneseq
        %v1492 = vshrl.u32 %v1491, 7
        %v1493 = vsub.s32 %v1490, %v1492
        %v1494 = vrot.slane %v1480, %v1493
        %v1495 = vcombine.low %v1487, %v1494
        %v1496 = vcombine.low %v1434, %v1438
        %v1497 = vcombine.low %v1442, %v1446
        %v1499 = vunpack.c.l.s4 1983009808
        %v1500 = vunpack.c.0.s8 %v1499
        %v1501 = vlaneseq
        %v1502 = vshrl.u32 %v1501, 7
        %v1503 = vsub.s32 %v1500, %v1502
        %v1504 = vrot.slane %v1496, %v1503
        %v1506 = vunpack.c.l.s4 1983009808
        %v1507 = vunpack.c.0.s8 %v1506
        %v1508 = vlaneseq
        %v1509 = vshrl.u32 %v1508, 7
        %v1510 = vsub.s32 %v1507, %v1509
        %v1511 = vrot.slane %v1497, %v1510
        %v1512 = vcombine.low %v1504, %v1511
        %v1513 = vcombine.low %v1450, %v1454
        %v1514 = vcombine.low %v1458, %v1462
        %v1516 = vunpack.c.l.s4 1983009808
        %v1517 = vunpack.c.0.s8 %v1516
        %v1518 = vlaneseq
        %v1519 = vshrl.u32 %v1518, 7
        %v1520 = vsub.s32 %v1517, %v1519
        %v1521 = vrot.slane %v1513, %v1520
        %v1523 = vunpack.c.l.s4 1983009808
        %v1524 = vunpack.c.0.s8 %v1523
        %v1525 = vlaneseq
        %v1526 = vshrl.u32 %v1525, 7
        %v1527 = vsub.s32 %v1524, %v1526
        %v1528 = vrot.slane %v1514, %v1527
        %v1529 = vcombine.low %v1521, %v1528
        %v1530 = vcombine.low %v1466, %v1470
        %v1531 = vcombine.low %v1474, %v1478
        %v1533 = vunpack.c.l.s4 1983009808
        %v1534 = vunpack.c.0.s8 %v1533
        %v1535 = vlaneseq
        %v1536 = vshrl.u32 %v1535, 7
        %v1537 = vsub.s32 %v1534, %v1536
        %v1538 = vrot.slane %v1530, %v1537
        %v1540 = vunpack.c.l.s4 1983009808
        %v1541 = vunpack.c.0.s8 %v1540
        %v1542 = vlaneseq
        %v1543 = vshrl.u32 %v1542, 7
        %v1544 = vsub.s32 %v1541, %v1543
        %v1545 = vrot.slane %v1531, %v1544
        %v1546 = vcombine.low %v1538, %v1545
        %v1551 = vmul.f32 %v1407, %v1495
        %v1552 = vmul.f32 %v1408, %v1512
        %v1553 = vmul.f32 %v1409, %v1529
        %v1554 = vmul.f32 %v1410, %v1546
        %v1555 = vld [vmem:[%s1364] sm:$0xff]
        %v1556 = vld [vmem:[%s1364 + $0x8] sm:$0xff]
        %v1559 = vlaneseq
        %v1560 = vshrl.u32 %v1559, 7
        %v1561 = vsub.s32 0, %v1560
        %v1562 = vrot.slane %v1555, %v1561
        %v1563 = vlaneseq
        %v1564 = vshrl.u32 %v1563, 7
        %v1565 = vsub.s32 1, %v1564
        %v1566 = vrot.slane %v1555, %v1565
        %v1567 = vlaneseq
        %v1568 = vshrl.u32 %v1567, 7
        %v1569 = vsub.s32 2, %v1568
        %v1570 = vrot.slane %v1555, %v1569
        %v1571 = vlaneseq
        %v1572 = vshrl.u32 %v1571, 7
        %v1573 = vsub.s32 3, %v1572
        %v1574 = vrot.slane %v1555, %v1573
        %v1575 = vlaneseq
        %v1576 = vshrl.u32 %v1575, 7
        %v1577 = vsub.s32 4, %v1576
        %v1578 = vrot.slane %v1555, %v1577
        %v1579 = vlaneseq
        %v1580 = vshrl.u32 %v1579, 7
        %v1581 = vsub.s32 5, %v1580
        %v1582 = vrot.slane %v1555, %v1581
        %v1583 = vlaneseq
        %v1584 = vshrl.u32 %v1583, 7
        %v1585 = vsub.s32 6, %v1584
        %v1586 = vrot.slane %v1555, %v1585
        %v1587 = vlaneseq
        %v1588 = vshrl.u32 %v1587, 7
        %v1589 = vsub.s32 7, %v1588
        %v1590 = vrot.slane %v1555, %v1589
        %v1591 = vlaneseq
        %v1592 = vshrl.u32 %v1591, 7
        %v1593 = vsub.s32 0, %v1592
        %v1594 = vrot.slane %v1556, %v1593
        %v1595 = vlaneseq
        %v1596 = vshrl.u32 %v1595, 7
        %v1597 = vsub.s32 1, %v1596
        %v1598 = vrot.slane %v1556, %v1597
        %v1599 = vlaneseq
        %v1600 = vshrl.u32 %v1599, 7
        %v1601 = vsub.s32 2, %v1600
        %v1602 = vrot.slane %v1556, %v1601
        %v1603 = vlaneseq
        %v1604 = vshrl.u32 %v1603, 7
        %v1605 = vsub.s32 3, %v1604
        %v1606 = vrot.slane %v1556, %v1605
        %v1607 = vlaneseq
        %v1608 = vshrl.u32 %v1607, 7
        %v1609 = vsub.s32 4, %v1608
        %v1610 = vrot.slane %v1556, %v1609
        %v1611 = vlaneseq
        %v1612 = vshrl.u32 %v1611, 7
        %v1613 = vsub.s32 5, %v1612
        %v1614 = vrot.slane %v1556, %v1613
        %v1615 = vlaneseq
        %v1616 = vshrl.u32 %v1615, 7
        %v1617 = vsub.s32 6, %v1616
        %v1618 = vrot.slane %v1556, %v1617
        %v1619 = vlaneseq
        %v1620 = vshrl.u32 %v1619, 7
        %v1621 = vsub.s32 7, %v1620
        %v1622 = vrot.slane %v1556, %v1621
        %v1623 = vcombine.low %v1562, %v1566
        %v1624 = vcombine.low %v1570, %v1574
        %v1626 = vunpack.c.l.s4 1983009808
        %v1627 = vunpack.c.0.s8 %v1626
        %v1628 = vlaneseq
        %v1629 = vshrl.u32 %v1628, 7
        %v1630 = vsub.s32 %v1627, %v1629
        %v1631 = vrot.slane %v1623, %v1630
        %v1633 = vunpack.c.l.s4 1983009808
        %v1634 = vunpack.c.0.s8 %v1633
        %v1635 = vlaneseq
        %v1636 = vshrl.u32 %v1635, 7
        %v1637 = vsub.s32 %v1634, %v1636
        %v1638 = vrot.slane %v1624, %v1637
        %v1639 = vcombine.low %v1631, %v1638
        %v1640 = vcombine.low %v1578, %v1582
        %v1641 = vcombine.low %v1586, %v1590
        %v1643 = vunpack.c.l.s4 1983009808
        %v1644 = vunpack.c.0.s8 %v1643
        %v1645 = vlaneseq
        %v1646 = vshrl.u32 %v1645, 7
        %v1647 = vsub.s32 %v1644, %v1646
        %v1648 = vrot.slane %v1640, %v1647
        %v1650 = vunpack.c.l.s4 1983009808
        %v1651 = vunpack.c.0.s8 %v1650
        %v1652 = vlaneseq
        %v1653 = vshrl.u32 %v1652, 7
        %v1654 = vsub.s32 %v1651, %v1653
        %v1655 = vrot.slane %v1641, %v1654
        %v1656 = vcombine.low %v1648, %v1655
        %v1657 = vcombine.low %v1594, %v1598
        %v1658 = vcombine.low %v1602, %v1606
        %v1660 = vunpack.c.l.s4 1983009808
        %v1661 = vunpack.c.0.s8 %v1660
        %v1662 = vlaneseq
        %v1663 = vshrl.u32 %v1662, 7
        %v1664 = vsub.s32 %v1661, %v1663
        %v1665 = vrot.slane %v1657, %v1664
        %v1667 = vunpack.c.l.s4 1983009808
        %v1668 = vunpack.c.0.s8 %v1667
        %v1669 = vlaneseq
        %v1670 = vshrl.u32 %v1669, 7
        %v1671 = vsub.s32 %v1668, %v1670
        %v1672 = vrot.slane %v1658, %v1671
        %v1673 = vcombine.low %v1665, %v1672
        %v1674 = vcombine.low %v1610, %v1614
        %v1675 = vcombine.low %v1618, %v1622
        %v1677 = vunpack.c.l.s4 1983009808
        %v1678 = vunpack.c.0.s8 %v1677
        %v1679 = vlaneseq
        %v1680 = vshrl.u32 %v1679, 7
        %v1681 = vsub.s32 %v1678, %v1680
        %v1682 = vrot.slane %v1674, %v1681
        %v1684 = vunpack.c.l.s4 1983009808
        %v1685 = vunpack.c.0.s8 %v1684
        %v1686 = vlaneseq
        %v1687 = vshrl.u32 %v1686, 7
        %v1688 = vsub.s32 %v1685, %v1687
        %v1689 = vrot.slane %v1675, %v1688
        %v1690 = vcombine.low %v1682, %v1689
        %v1695 = vadd.f32 %v1551, %v1639
        %v1696 = vadd.f32 %v1552, %v1656
        %v1697 = vadd.f32 %v1553, %v1673
        %v1698 = vadd.f32 %v1554, %v1690
        %v1699 = vld [vmem:[%s1377] sm:$0xf]
        %v1704 = vcombine.high %v1695, %v1695
        %v1706 = vunpack.c.l.s4 1983009808
        %v1707 = vunpack.c.0.s8 %v1706
        %v1708 = vlaneseq
        %v1709 = vshrl.u32 %v1708, 7
        %v1710 = vsub.s32 %v1707, %v1709
        %v1711 = vrot.slane %v1695, %v1710
        %v1713 = vunpack.c.l.s4 1983009808
        %v1714 = vunpack.c.0.s8 %v1713
        %v1715 = vlaneseq
        %v1716 = vshrl.u32 %v1715, 7
        %v1717 = vsub.s32 %v1714, %v1716
        %v1718 = vrot.slane %v1704, %v1717
        %v1719 = vcombine.high %v1711, %v1711
        %v1720 = vcombine.high %v1718, %v1718
        %v1721 = vcombine.high %v1696, %v1696
        %v1723 = vunpack.c.l.s4 1983009808
        %v1724 = vunpack.c.0.s8 %v1723
        %v1725 = vlaneseq
        %v1726 = vshrl.u32 %v1725, 7
        %v1727 = vsub.s32 %v1724, %v1726
        %v1728 = vrot.slane %v1696, %v1727
        %v1730 = vunpack.c.l.s4 1983009808
        %v1731 = vunpack.c.0.s8 %v1730
        %v1732 = vlaneseq
        %v1733 = vshrl.u32 %v1732, 7
        %v1734 = vsub.s32 %v1731, %v1733
        %v1735 = vrot.slane %v1721, %v1734
        %v1736 = vcombine.high %v1728, %v1728
        %v1737 = vcombine.high %v1735, %v1735
        %v1738 = vcombine.high %v1697, %v1697
        %v1740 = vunpack.c.l.s4 1983009808
        %v1741 = vunpack.c.0.s8 %v1740
        %v1742 = vlaneseq
        %v1743 = vshrl.u32 %v1742, 7
        %v1744 = vsub.s32 %v1741, %v1743
        %v1745 = vrot.slane %v1697, %v1744
        %v1747 = vunpack.c.l.s4 1983009808
        %v1748 = vunpack.c.0.s8 %v1747
        %v1749 = vlaneseq
        %v1750 = vshrl.u32 %v1749, 7
        %v1751 = vsub.s32 %v1748, %v1750
        %v1752 = vrot.slane %v1738, %v1751
        %v1753 = vcombine.high %v1745, %v1745
        %v1754 = vcombine.high %v1752, %v1752
        %v1755 = vcombine.high %v1698, %v1698
        %v1757 = vunpack.c.l.s4 1983009808
        %v1758 = vunpack.c.0.s8 %v1757
        %v1759 = vlaneseq
        %v1760 = vshrl.u32 %v1759, 7
        %v1761 = vsub.s32 %v1758, %v1760
        %v1762 = vrot.slane %v1698, %v1761
        %v1764 = vunpack.c.l.s4 1983009808
        %v1765 = vunpack.c.0.s8 %v1764
        %v1766 = vlaneseq
        %v1767 = vshrl.u32 %v1766, 7
        %v1768 = vsub.s32 %v1765, %v1767
        %v1769 = vrot.slane %v1755, %v1768
        %v1770 = vcombine.high %v1762, %v1762
        %v1771 = vcombine.high %v1769, %v1769
        %v1788 = vpack.c.bf16 %v1711, %v1711
        %v1789 = vpack.c.bf16 %v1719, %v1719
        %v1790 = vpack.c.bf16 %v1718, %v1718
        %v1791 = vpack.c.bf16 %v1720, %v1720
        %v1792 = vpack.c.bf16 %v1728, %v1728
        %v1793 = vpack.c.bf16 %v1736, %v1736
        %v1794 = vpack.c.bf16 %v1735, %v1735
        %v1795 = vpack.c.bf16 %v1737, %v1737
        %v1796 = vpack.c.bf16 %v1745, %v1745
        %v1797 = vpack.c.bf16 %v1753, %v1753
        %v1798 = vpack.c.bf16 %v1752, %v1752
        %v1799 = vpack.c.bf16 %v1754, %v1754
        %v1800 = vpack.c.bf16 %v1762, %v1762
        %v1801 = vpack.c.bf16 %v1770, %v1770
        %v1802 = vpack.c.bf16 %v1769, %v1769
        %v1803 = vpack.c.bf16 %v1771, %v1771
        %v1804 = vld [vmem:[%s1308] sm:$0xff]
        %v1805 = vld [vmem:[%s1308 + $0x8] sm:$0xff]
        %v1806 = vld [vmem:[%s1308 + $0x10] sm:$0xff]
        %v1807 = vld [vmem:[%s1308 + $0x18] sm:$0xff]
        %v1808 = vld [vmem:[%s1308 + $0x20] sm:$0xff]
        %v1809 = vld [vmem:[%s1308 + $0x28] sm:$0xff]
        %v1810 = vld [vmem:[%s1308 + $0x30] sm:$0xff]
        %v1811 = vld [vmem:[%s1308 + $0x38] sm:$0xff]
        %v1812 = vld [vmem:[%s1308 + $0x40] sm:$0xff]
        %v1813 = vld [vmem:[%s1308 + $0x48] sm:$0xff]
        %v1814 = vld [vmem:[%s1308 + $0x50] sm:$0xff]
        %v1815 = vld [vmem:[%s1308 + $0x58] sm:$0xff]
        %v1816 = vld [vmem:[%s1308 + $0x60] sm:$0xff]
        %v1817 = vld [vmem:[%s1308 + $0x68] sm:$0xff]
        %v1818 = vld [vmem:[%s1308 + $0x70] sm:$0xff]
        %v1819 = vld [vmem:[%s1308 + $0x78] sm:$0xff]
        %v1820 = vld [vmem:[%s1308 + $0x80] sm:$0xff]
        %v1821 = vld [vmem:[%s1308 + $0x88] sm:$0xff]
        %v1822 = vld [vmem:[%s1308 + $0x90] sm:$0xff]
        %v1823 = vld [vmem:[%s1308 + $0x98] sm:$0xff]
        %v1824 = vld [vmem:[%s1308 + $0xa0] sm:$0xff]
        %v1825 = vld [vmem:[%s1308 + $0xa8] sm:$0xff]
        %v1826 = vld [vmem:[%s1308 + $0xb0] sm:$0xff]
        %v1827 = vld [vmem:[%s1308 + $0xb8] sm:$0xff]
        %v1828 = vld [vmem:[%s1308 + $0xc0] sm:$0xff]
        %v1829 = vld [vmem:[%s1308 + $0xc8] sm:$0xff]
        %v1830 = vld [vmem:[%s1308 + $0xd0] sm:$0xff]
        %v1831 = vld [vmem:[%s1308 + $0xd8] sm:$0xff]
        %v1832 = vld [vmem:[%s1308 + $0xe0] sm:$0xff]
        %v1833 = vld [vmem:[%s1308 + $0xe8] sm:$0xff]
        %v1834 = vld [vmem:[%s1308 + $0xf0] sm:$0xff]
        %v1835 = vld [vmem:[%s1308 + $0xf8] sm:$0xff]
        %v1836 = vld [vmem:[%s1308 + $0x100] sm:$0xff]
        %v1837 = vld [vmem:[%s1308 + $0x108] sm:$0xff]
        %v1838 = vld [vmem:[%s1308 + $0x110] sm:$0xff]
        %v1839 = vld [vmem:[%s1308 + $0x118] sm:$0xff]
        %v1840 = vld [vmem:[%s1308 + $0x120] sm:$0xff]
        %v1841 = vld [vmem:[%s1308 + $0x128] sm:$0xff]
        %v1842 = vld [vmem:[%s1308 + $0x130] sm:$0xff]
        %v1843 = vld [vmem:[%s1308 + $0x138] sm:$0xff]
        %v1844 = vld [vmem:[%s1308 + $0x140] sm:$0xff]
        %v1845 = vld [vmem:[%s1308 + $0x148] sm:$0xff]
        %v1846 = vld [vmem:[%s1308 + $0x150] sm:$0xff]
        %v1847 = vld [vmem:[%s1308 + $0x158] sm:$0xff]
        %v1848 = vld [vmem:[%s1308 + $0x160] sm:$0xff]
        %v1849 = vld [vmem:[%s1308 + $0x168] sm:$0xff]
        %v1850 = vld [vmem:[%s1308 + $0x170] sm:$0xff]
        %v1851 = vld [vmem:[%s1308 + $0x178] sm:$0xff]
        %v1852 = vld [vmem:[%s1308 + $0x180] sm:$0xff]
        %v1853 = vld [vmem:[%s1308 + $0x188] sm:$0xff]
        %v1854 = vld [vmem:[%s1308 + $0x190] sm:$0xff]
        %v1855 = vld [vmem:[%s1308 + $0x198] sm:$0xff]
        %v1856 = vld [vmem:[%s1308 + $0x1a0] sm:$0xff]
        %v1857 = vld [vmem:[%s1308 + $0x1a8] sm:$0xff]
        %v1858 = vld [vmem:[%s1308 + $0x1b0] sm:$0xff]
        %v1859 = vld [vmem:[%s1308 + $0x1b8] sm:$0xff]
        %v1860 = vld [vmem:[%s1308 + $0x1c0] sm:$0xff]
        %v1861 = vld [vmem:[%s1308 + $0x1c8] sm:$0xff]
        %v1862 = vld [vmem:[%s1308 + $0x1d0] sm:$0xff]
        %v1863 = vld [vmem:[%s1308 + $0x1d8] sm:$0xff]
        %v1864 = vld [vmem:[%s1308 + $0x1e0] sm:$0xff]
        %v1865 = vld [vmem:[%s1308 + $0x1e8] sm:$0xff]
        %v1866 = vld [vmem:[%s1308 + $0x1f0] sm:$0xff]
        %v1867 = vld [vmem:[%s1308 + $0x1f8] sm:$0xff]
        %v1868 = vld [vmem:[%s1308 + $0x200] sm:$0xff]
        %v1869 = vld [vmem:[%s1308 + $0x208] sm:$0xff]
        %v1870 = vld [vmem:[%s1308 + $0x210] sm:$0xff]
        %v1871 = vld [vmem:[%s1308 + $0x218] sm:$0xff]
        %v1872 = vld [vmem:[%s1308 + $0x220] sm:$0xff]
        %v1873 = vld [vmem:[%s1308 + $0x228] sm:$0xff]
        %v1874 = vld [vmem:[%s1308 + $0x230] sm:$0xff]
        %v1875 = vld [vmem:[%s1308 + $0x238] sm:$0xff]
        %v1876 = vld [vmem:[%s1308 + $0x240] sm:$0xff]
        %v1877 = vld [vmem:[%s1308 + $0x248] sm:$0xff]
        %v1878 = vld [vmem:[%s1308 + $0x250] sm:$0xff]
        %v1879 = vld [vmem:[%s1308 + $0x258] sm:$0xff]
        %v1880 = vld [vmem:[%s1308 + $0x260] sm:$0xff]
        %v1881 = vld [vmem:[%s1308 + $0x268] sm:$0xff]
        %v1882 = vld [vmem:[%s1308 + $0x270] sm:$0xff]
        %v1883 = vld [vmem:[%s1308 + $0x278] sm:$0xff]
        %v1884 = vld [vmem:[%s1308 + $0x280] sm:$0xff]
        %v1885 = vld [vmem:[%s1308 + $0x288] sm:$0xff]
        %v1886 = vld [vmem:[%s1308 + $0x290] sm:$0xff]
        %v1887 = vld [vmem:[%s1308 + $0x298] sm:$0xff]
        %v1888 = vld [vmem:[%s1308 + $0x2a0] sm:$0xff]
        %v1889 = vld [vmem:[%s1308 + $0x2a8] sm:$0xff]
        %v1890 = vld [vmem:[%s1308 + $0x2b0] sm:$0xff]
        %v1891 = vld [vmem:[%s1308 + $0x2b8] sm:$0xff]
        %v1892 = vld [vmem:[%s1308 + $0x2c0] sm:$0xff]
        %v1893 = vld [vmem:[%s1308 + $0x2c8] sm:$0xff]
        %v1894 = vld [vmem:[%s1308 + $0x2d0] sm:$0xff]
        %v1895 = vld [vmem:[%s1308 + $0x2d8] sm:$0xff]
        %v1896 = vld [vmem:[%s1308 + $0x2e0] sm:$0xff]
        %v1897 = vld [vmem:[%s1308 + $0x2e8] sm:$0xff]
        %v1898 = vld [vmem:[%s1308 + $0x2f0] sm:$0xff]
        %v1899 = vld [vmem:[%s1308 + $0x2f8] sm:$0xff]
        %v1900 = vld [vmem:[%s1308 + $0x300] sm:$0xff]
        %v1901 = vld [vmem:[%s1308 + $0x308] sm:$0xff]
        %v1902 = vld [vmem:[%s1308 + $0x310] sm:$0xff]
        %v1903 = vld [vmem:[%s1308 + $0x318] sm:$0xff]
        %v1904 = vld [vmem:[%s1308 + $0x320] sm:$0xff]
        %v1905 = vld [vmem:[%s1308 + $0x328] sm:$0xff]
        %v1906 = vld [vmem:[%s1308 + $0x330] sm:$0xff]
        %v1907 = vld [vmem:[%s1308 + $0x338] sm:$0xff]
        %v1908 = vld [vmem:[%s1308 + $0x340] sm:$0xff]
        %v1909 = vld [vmem:[%s1308 + $0x348] sm:$0xff]
        %v1910 = vld [vmem:[%s1308 + $0x350] sm:$0xff]
        %v1911 = vld [vmem:[%s1308 + $0x358] sm:$0xff]
        %v1912 = vld [vmem:[%s1308 + $0x360] sm:$0xff]
        %v1913 = vld [vmem:[%s1308 + $0x368] sm:$0xff]
        %v1914 = vld [vmem:[%s1308 + $0x370] sm:$0xff]
        %v1915 = vld [vmem:[%s1308 + $0x378] sm:$0xff]
        %v1916 = vld [vmem:[%s1308 + $0x380] sm:$0xff]
        %v1917 = vld [vmem:[%s1308 + $0x388] sm:$0xff]
        %v1918 = vld [vmem:[%s1308 + $0x390] sm:$0xff]
        %v1919 = vld [vmem:[%s1308 + $0x398] sm:$0xff]
        %v1920 = vld [vmem:[%s1308 + $0x3a0] sm:$0xff]
        %v1921 = vld [vmem:[%s1308 + $0x3a8] sm:$0xff]
        %v1922 = vld [vmem:[%s1308 + $0x3b0] sm:$0xff]
        %v1923 = vld [vmem:[%s1308 + $0x3b8] sm:$0xff]
        %v1924 = vld [vmem:[%s1308 + $0x3c0] sm:$0xff]
        %v1925 = vld [vmem:[%s1308 + $0x3c8] sm:$0xff]
        %v1926 = vld [vmem:[%s1308 + $0x3d0] sm:$0xff]
        %v1927 = vld [vmem:[%s1308 + $0x3d8] sm:$0xff]
        %v1928 = vld [vmem:[%s1308 + $0x3e0] sm:$0xff]
        %v1929 = vld [vmem:[%s1308 + $0x3e8] sm:$0xff]
        %v1930 = vld [vmem:[%s1308 + $0x3f0] sm:$0xff]
        %v1931 = vld [vmem:[%s1308 + $0x3f8] sm:$0xff]
        %v1932 = vld [vmem:[%s1308 + $0x400] sm:$0xff]
        %v1933 = vld [vmem:[%s1308 + $0x408] sm:$0xff]
        %v1934 = vld [vmem:[%s1308 + $0x410] sm:$0xff]
        %v1935 = vld [vmem:[%s1308 + $0x418] sm:$0xff]
        %v1936 = vld [vmem:[%s1308 + $0x420] sm:$0xff]
        %v1937 = vld [vmem:[%s1308 + $0x428] sm:$0xff]
        %v1938 = vld [vmem:[%s1308 + $0x430] sm:$0xff]
        %v1939 = vld [vmem:[%s1308 + $0x438] sm:$0xff]
        %v1940 = vld [vmem:[%s1308 + $0x440] sm:$0xff]
        %v1941 = vld [vmem:[%s1308 + $0x448] sm:$0xff]
        %v1942 = vld [vmem:[%s1308 + $0x450] sm:$0xff]
        %v1943 = vld [vmem:[%s1308 + $0x458] sm:$0xff]
        %v1944 = vld [vmem:[%s1308 + $0x460] sm:$0xff]
        %v1945 = vld [vmem:[%s1308 + $0x468] sm:$0xff]
        %v1946 = vld [vmem:[%s1308 + $0x470] sm:$0xff]
        %v1947 = vld [vmem:[%s1308 + $0x478] sm:$0xff]
        %v1948 = vld [vmem:[%s1308 + $0x480] sm:$0xff]
        %v1949 = vld [vmem:[%s1308 + $0x488] sm:$0xff]
        %v1950 = vld [vmem:[%s1308 + $0x490] sm:$0xff]
        %v1951 = vld [vmem:[%s1308 + $0x498] sm:$0xff]
        %v1952 = vld [vmem:[%s1308 + $0x4a0] sm:$0xff]
        %v1953 = vld [vmem:[%s1308 + $0x4a8] sm:$0xff]
        %v1954 = vld [vmem:[%s1308 + $0x4b0] sm:$0xff]
        %v1955 = vld [vmem:[%s1308 + $0x4b8] sm:$0xff]
        %v1956 = vld [vmem:[%s1308 + $0x4c0] sm:$0xff]
        %v1957 = vld [vmem:[%s1308 + $0x4c8] sm:$0xff]
        %v1958 = vld [vmem:[%s1308 + $0x4d0] sm:$0xff]
        %v1959 = vld [vmem:[%s1308 + $0x4d8] sm:$0xff]
        %v1960 = vld [vmem:[%s1308 + $0x4e0] sm:$0xff]
        %v1961 = vld [vmem:[%s1308 + $0x4e8] sm:$0xff]
        %v1962 = vld [vmem:[%s1308 + $0x4f0] sm:$0xff]
        %v1963 = vld [vmem:[%s1308 + $0x4f8] sm:$0xff]
        %v1964 = vld [vmem:[%s1308 + $0x500] sm:$0xff]
        %v1965 = vld [vmem:[%s1308 + $0x508] sm:$0xff]
        %v1966 = vld [vmem:[%s1308 + $0x510] sm:$0xff]
        %v1967 = vld [vmem:[%s1308 + $0x518] sm:$0xff]
        %v1968 = vld [vmem:[%s1308 + $0x520] sm:$0xff]
        %v1969 = vld [vmem:[%s1308 + $0x528] sm:$0xff]
        %v1970 = vld [vmem:[%s1308 + $0x530] sm:$0xff]
        %v1971 = vld [vmem:[%s1308 + $0x538] sm:$0xff]
        %v1972 = vld [vmem:[%s1308 + $0x540] sm:$0xff]
        %v1973 = vld [vmem:[%s1308 + $0x548] sm:$0xff]
        %v1974 = vld [vmem:[%s1308 + $0x550] sm:$0xff]
        %v1975 = vld [vmem:[%s1308 + $0x558] sm:$0xff]
        %v1976 = vld [vmem:[%s1308 + $0x560] sm:$0xff]
        %v1977 = vld [vmem:[%s1308 + $0x568] sm:$0xff]
        %v1978 = vld [vmem:[%s1308 + $0x570] sm:$0xff]
        %v1979 = vld [vmem:[%s1308 + $0x578] sm:$0xff]
        %v1980 = vld [vmem:[%s1308 + $0x580] sm:$0xff]
        %v1981 = vld [vmem:[%s1308 + $0x588] sm:$0xff]
        %v1982 = vld [vmem:[%s1308 + $0x590] sm:$0xff]
        %v1983 = vld [vmem:[%s1308 + $0x598] sm:$0xff]
        %v1984 = vld [vmem:[%s1308 + $0x5a0] sm:$0xff]
        %v1985 = vld [vmem:[%s1308 + $0x5a8] sm:$0xff]
        %v1986 = vld [vmem:[%s1308 + $0x5b0] sm:$0xff]
        %v1987 = vld [vmem:[%s1308 + $0x5b8] sm:$0xff]
        %v1988 = vld [vmem:[%s1308 + $0x5c0] sm:$0xff]
        %v1989 = vld [vmem:[%s1308 + $0x5c8] sm:$0xff]
        %v1990 = vld [vmem:[%s1308 + $0x5d0] sm:$0xff]
        %v1991 = vld [vmem:[%s1308 + $0x5d8] sm:$0xff]
        %v1992 = vld [vmem:[%s1308 + $0x5e0] sm:$0xff]
        %v1993 = vld [vmem:[%s1308 + $0x5e8] sm:$0xff]
        %v1994 = vld [vmem:[%s1308 + $0x5f0] sm:$0xff]
        %v1995 = vld [vmem:[%s1308 + $0x5f8] sm:$0xff]
        %v1996 = vld [vmem:[%s1308 + $0x600] sm:$0xff]
        %v1997 = vld [vmem:[%s1308 + $0x608] sm:$0xff]
        %v1998 = vld [vmem:[%s1308 + $0x610] sm:$0xff]
        %v1999 = vld [vmem:[%s1308 + $0x618] sm:$0xff]
        %v2000 = vld [vmem:[%s1308 + $0x620] sm:$0xff]
        %v2001 = vld [vmem:[%s1308 + $0x628] sm:$0xff]
        %v2002 = vld [vmem:[%s1308 + $0x630] sm:$0xff]
        %v2003 = vld [vmem:[%s1308 + $0x638] sm:$0xff]
        %v2004 = vld [vmem:[%s1308 + $0x640] sm:$0xff]
        %v2005 = vld [vmem:[%s1308 + $0x648] sm:$0xff]
        %v2006 = vld [vmem:[%s1308 + $0x650] sm:$0xff]
        %v2007 = vld [vmem:[%s1308 + $0x658] sm:$0xff]
        %v2008 = vld [vmem:[%s1308 + $0x660] sm:$0xff]
        %v2009 = vld [vmem:[%s1308 + $0x668] sm:$0xff]
        %v2010 = vld [vmem:[%s1308 + $0x670] sm:$0xff]
        %v2011 = vld [vmem:[%s1308 + $0x678] sm:$0xff]
        %v2012 = vld [vmem:[%s1308 + $0x680] sm:$0xff]
        %v2013 = vld [vmem:[%s1308 + $0x688] sm:$0xff]
        %v2014 = vld [vmem:[%s1308 + $0x690] sm:$0xff]
        %v2015 = vld [vmem:[%s1308 + $0x698] sm:$0xff]
        %v2016 = vld [vmem:[%s1308 + $0x6a0] sm:$0xff]
        %v2017 = vld [vmem:[%s1308 + $0x6a8] sm:$0xff]
        %v2018 = vld [vmem:[%s1308 + $0x6b0] sm:$0xff]
        %v2019 = vld [vmem:[%s1308 + $0x6b8] sm:$0xff]
        %v2020 = vld [vmem:[%s1308 + $0x6c0] sm:$0xff]
        %v2021 = vld [vmem:[%s1308 + $0x6c8] sm:$0xff]
        %v2022 = vld [vmem:[%s1308 + $0x6d0] sm:$0xff]
        %v2023 = vld [vmem:[%s1308 + $0x6d8] sm:$0xff]
        %v2024 = vld [vmem:[%s1308 + $0x6e0] sm:$0xff]
        %v2025 = vld [vmem:[%s1308 + $0x6e8] sm:$0xff]
        %v2026 = vld [vmem:[%s1308 + $0x6f0] sm:$0xff]
        %v2027 = vld [vmem:[%s1308 + $0x6f8] sm:$0xff]
        %v2028 = vld [vmem:[%s1308 + $0x700] sm:$0xff]
        %v2029 = vld [vmem:[%s1308 + $0x708] sm:$0xff]
        %v2030 = vld [vmem:[%s1308 + $0x710] sm:$0xff]
        %v2031 = vld [vmem:[%s1308 + $0x718] sm:$0xff]
        %v2032 = vld [vmem:[%s1308 + $0x720] sm:$0xff]
        %v2033 = vld [vmem:[%s1308 + $0x728] sm:$0xff]
        %v2034 = vld [vmem:[%s1308 + $0x730] sm:$0xff]
        %v2035 = vld [vmem:[%s1308 + $0x738] sm:$0xff]
        %v2036 = vld [vmem:[%s1308 + $0x740] sm:$0xff]
        %v2037 = vld [vmem:[%s1308 + $0x748] sm:$0xff]
        %v2038 = vld [vmem:[%s1308 + $0x750] sm:$0xff]
        %v2039 = vld [vmem:[%s1308 + $0x758] sm:$0xff]
        %v2040 = vld [vmem:[%s1308 + $0x760] sm:$0xff]
        %v2041 = vld [vmem:[%s1308 + $0x768] sm:$0xff]
        %v2042 = vld [vmem:[%s1308 + $0x770] sm:$0xff]
        %v2043 = vld [vmem:[%s1308 + $0x778] sm:$0xff]
        %v2044 = vld [vmem:[%s1308 + $0x780] sm:$0xff]
        %v2045 = vld [vmem:[%s1308 + $0x788] sm:$0xff]
        %v2046 = vld [vmem:[%s1308 + $0x790] sm:$0xff]
        %v2047 = vld [vmem:[%s1308 + $0x798] sm:$0xff]
        %v2048 = vld [vmem:[%s1308 + $0x7a0] sm:$0xff]
        %v2049 = vld [vmem:[%s1308 + $0x7a8] sm:$0xff]
        %v2050 = vld [vmem:[%s1308 + $0x7b0] sm:$0xff]
        %v2051 = vld [vmem:[%s1308 + $0x7b8] sm:$0xff]
        %v2052 = vld [vmem:[%s1308 + $0x7c0] sm:$0xff]
        %v2053 = vld [vmem:[%s1308 + $0x7c8] sm:$0xff]
        %v2054 = vld [vmem:[%s1308 + $0x7d0] sm:$0xff]
        %v2055 = vld [vmem:[%s1308 + $0x7d8] sm:$0xff]
        %v2056 = vld [vmem:[%s1308 + $0x7e0] sm:$0xff]
        %v2057 = vld [vmem:[%s1308 + $0x7e8] sm:$0xff]
        %v2058 = vld [vmem:[%s1308 + $0x7f0] sm:$0xff]
        %v2059 = vld [vmem:[%s1308 + $0x7f8] sm:$0xff]
        %v2316 = vunpack.c.l.b16 %v1804
        %v2317 = vunpack.c.h.b16 %v1804
        %v2318 = vunpack.c.l.b16 %v1805
        %v2319 = vunpack.c.h.b16 %v1805
        %v2320 = vunpack.c.l.b16 %v1806
        %v2321 = vunpack.c.h.b16 %v1806
        %v2322 = vunpack.c.l.b16 %v1807
        %v2323 = vunpack.c.h.b16 %v1807
        %v2324 = vunpack.c.l.b16 %v1808
        %v2325 = vunpack.c.h.b16 %v1808
        %v2326 = vunpack.c.l.b16 %v1809
        %v2327 = vunpack.c.h.b16 %v1809
        %v2328 = vunpack.c.l.b16 %v1810
        %v2329 = vunpack.c.h.b16 %v1810
        %v2330 = vunpack.c.l.b16 %v1811
        %v2331 = vunpack.c.h.b16 %v1811
        %v2332 = vunpack.c.l.b16 %v1812
        %v2333 = vunpack.c.h.b16 %v1812
        %v2334 = vunpack.c.l.b16 %v1813
        %v2335 = vunpack.c.h.b16 %v1813
        %v2336 = vunpack.c.l.b16 %v1814
        %v2337 = vunpack.c.h.b16 %v1814
        %v2338 = vunpack.c.l.b16 %v1815
        %v2339 = vunpack.c.h.b16 %v1815
        %v2340 = vunpack.c.l.b16 %v1816
        %v2341 = vunpack.c.h.b16 %v1816
        %v2342 = vunpack.c.l.b16 %v1817
        %v2343 = vunpack.c.h.b16 %v1817
        %v2344 = vunpack.c.l.b16 %v1818
        %v2345 = vunpack.c.h.b16 %v1818
        %v2346 = vunpack.c.l.b16 %v1819
        %v2347 = vunpack.c.h.b16 %v1819
        %v2348 = vunpack.c.l.b16 %v1820
        %v2349 = vunpack.c.h.b16 %v1820
        %v2350 = vunpack.c.l.b16 %v1821
        %v2351 = vunpack.c.h.b16 %v1821
        %v2352 = vunpack.c.l.b16 %v1822
        %v2353 = vunpack.c.h.b16 %v1822
        %v2354 = vunpack.c.l.b16 %v1823
        %v2355 = vunpack.c.h.b16 %v1823
        %v2356 = vunpack.c.l.b16 %v1824
        %v2357 = vunpack.c.h.b16 %v1824
        %v2358 = vunpack.c.l.b16 %v1825
        %v2359 = vunpack.c.h.b16 %v1825
        %v2360 = vunpack.c.l.b16 %v1826
        %v2361 = vunpack.c.h.b16 %v1826
        %v2362 = vunpack.c.l.b16 %v1827
        %v2363 = vunpack.c.h.b16 %v1827
        %v2364 = vunpack.c.l.b16 %v1828
        %v2365 = vunpack.c.h.b16 %v1828
        %v2366 = vunpack.c.l.b16 %v1829
        %v2367 = vunpack.c.h.b16 %v1829
        %v2368 = vunpack.c.l.b16 %v1830
        %v2369 = vunpack.c.h.b16 %v1830
        %v2370 = vunpack.c.l.b16 %v1831
        %v2371 = vunpack.c.h.b16 %v1831
        %v2372 = vunpack.c.l.b16 %v1832
        %v2373 = vunpack.c.h.b16 %v1832
        %v2374 = vunpack.c.l.b16 %v1833
        %v2375 = vunpack.c.h.b16 %v1833
        %v2376 = vunpack.c.l.b16 %v1834
        %v2377 = vunpack.c.h.b16 %v1834
        %v2378 = vunpack.c.l.b16 %v1835
        %v2379 = vunpack.c.h.b16 %v1835
        %v2380 = vunpack.c.l.b16 %v1836
        %v2381 = vunpack.c.h.b16 %v1836
        %v2382 = vunpack.c.l.b16 %v1837
        %v2383 = vunpack.c.h.b16 %v1837
        %v2384 = vunpack.c.l.b16 %v1838
        %v2385 = vunpack.c.h.b16 %v1838
        %v2386 = vunpack.c.l.b16 %v1839
        %v2387 = vunpack.c.h.b16 %v1839
        %v2388 = vunpack.c.l.b16 %v1840
        %v2389 = vunpack.c.h.b16 %v1840
        %v2390 = vunpack.c.l.b16 %v1841
        %v2391 = vunpack.c.h.b16 %v1841
        %v2392 = vunpack.c.l.b16 %v1842
        %v2393 = vunpack.c.h.b16 %v1842
        %v2394 = vunpack.c.l.b16 %v1843
        %v2395 = vunpack.c.h.b16 %v1843
        %v2396 = vunpack.c.l.b16 %v1844
        %v2397 = vunpack.c.h.b16 %v1844
        %v2398 = vunpack.c.l.b16 %v1845
        %v2399 = vunpack.c.h.b16 %v1845
        %v2400 = vunpack.c.l.b16 %v1846
        %v2401 = vunpack.c.h.b16 %v1846
        %v2402 = vunpack.c.l.b16 %v1847
        %v2403 = vunpack.c.h.b16 %v1847
        %v2404 = vunpack.c.l.b16 %v1848
        %v2405 = vunpack.c.h.b16 %v1848
        %v2406 = vunpack.c.l.b16 %v1849
        %v2407 = vunpack.c.h.b16 %v1849
        %v2408 = vunpack.c.l.b16 %v1850
        %v2409 = vunpack.c.h.b16 %v1850
        %v2410 = vunpack.c.l.b16 %v1851
        %v2411 = vunpack.c.h.b16 %v1851
        %v2412 = vunpack.c.l.b16 %v1852
        %v2413 = vunpack.c.h.b16 %v1852
        %v2414 = vunpack.c.l.b16 %v1853
        %v2415 = vunpack.c.h.b16 %v1853
        %v2416 = vunpack.c.l.b16 %v1854
        %v2417 = vunpack.c.h.b16 %v1854
        %v2418 = vunpack.c.l.b16 %v1855
        %v2419 = vunpack.c.h.b16 %v1855
        %v2420 = vunpack.c.l.b16 %v1856
        %v2421 = vunpack.c.h.b16 %v1856
        %v2422 = vunpack.c.l.b16 %v1857
        %v2423 = vunpack.c.h.b16 %v1857
        %v2424 = vunpack.c.l.b16 %v1858
        %v2425 = vunpack.c.h.b16 %v1858
        %v2426 = vunpack.c.l.b16 %v1859
        %v2427 = vunpack.c.h.b16 %v1859
        %v2428 = vunpack.c.l.b16 %v1860
        %v2429 = vunpack.c.h.b16 %v1860
        %v2430 = vunpack.c.l.b16 %v1861
        %v2431 = vunpack.c.h.b16 %v1861
        %v2432 = vunpack.c.l.b16 %v1862
        %v2433 = vunpack.c.h.b16 %v1862
        %v2434 = vunpack.c.l.b16 %v1863
        %v2435 = vunpack.c.h.b16 %v1863
        %v2436 = vunpack.c.l.b16 %v1864
        %v2437 = vunpack.c.h.b16 %v1864
        %v2438 = vunpack.c.l.b16 %v1865
        %v2439 = vunpack.c.h.b16 %v1865
        %v2440 = vunpack.c.l.b16 %v1866
        %v2441 = vunpack.c.h.b16 %v1866
        %v2442 = vunpack.c.l.b16 %v1867
        %v2443 = vunpack.c.h.b16 %v1867
        %v2444 = vunpack.c.l.b16 %v1868
        %v2445 = vunpack.c.h.b16 %v1868
        %v2446 = vunpack.c.l.b16 %v1869
        %v2447 = vunpack.c.h.b16 %v1869
        %v2448 = vunpack.c.l.b16 %v1870
        %v2449 = vunpack.c.h.b16 %v1870
        %v2450 = vunpack.c.l.b16 %v1871
        %v2451 = vunpack.c.h.b16 %v1871
        %v2452 = vunpack.c.l.b16 %v1872
        %v2453 = vunpack.c.h.b16 %v1872
        %v2454 = vunpack.c.l.b16 %v1873
        %v2455 = vunpack.c.h.b16 %v1873
        %v2456 = vunpack.c.l.b16 %v1874
        %v2457 = vunpack.c.h.b16 %v1874
        %v2458 = vunpack.c.l.b16 %v1875
        %v2459 = vunpack.c.h.b16 %v1875
        %v2460 = vunpack.c.l.b16 %v1876
        %v2461 = vunpack.c.h.b16 %v1876
        %v2462 = vunpack.c.l.b16 %v1877
        %v2463 = vunpack.c.h.b16 %v1877
        %v2464 = vunpack.c.l.b16 %v1878
        %v2465 = vunpack.c.h.b16 %v1878
        %v2466 = vunpack.c.l.b16 %v1879
        %v2467 = vunpack.c.h.b16 %v1879
        %v2468 = vunpack.c.l.b16 %v1880
        %v2469 = vunpack.c.h.b16 %v1880
        %v2470 = vunpack.c.l.b16 %v1881
        %v2471 = vunpack.c.h.b16 %v1881
        %v2472 = vunpack.c.l.b16 %v1882
        %v2473 = vunpack.c.h.b16 %v1882
        %v2474 = vunpack.c.l.b16 %v1883
        %v2475 = vunpack.c.h.b16 %v1883
        %v2476 = vunpack.c.l.b16 %v1884
        %v2477 = vunpack.c.h.b16 %v1884
        %v2478 = vunpack.c.l.b16 %v1885
        %v2479 = vunpack.c.h.b16 %v1885
        %v2480 = vunpack.c.l.b16 %v1886
        %v2481 = vunpack.c.h.b16 %v1886
        %v2482 = vunpack.c.l.b16 %v1887
        %v2483 = vunpack.c.h.b16 %v1887
        %v2484 = vunpack.c.l.b16 %v1888
        %v2485 = vunpack.c.h.b16 %v1888
        %v2486 = vunpack.c.l.b16 %v1889
        %v2487 = vunpack.c.h.b16 %v1889
        %v2488 = vunpack.c.l.b16 %v1890
        %v2489 = vunpack.c.h.b16 %v1890
        %v2490 = vunpack.c.l.b16 %v1891
        %v2491 = vunpack.c.h.b16 %v1891
        %v2492 = vunpack.c.l.b16 %v1892
        %v2493 = vunpack.c.h.b16 %v1892
        %v2494 = vunpack.c.l.b16 %v1893
        %v2495 = vunpack.c.h.b16 %v1893
        %v2496 = vunpack.c.l.b16 %v1894
        %v2497 = vunpack.c.h.b16 %v1894
        %v2498 = vunpack.c.l.b16 %v1895
        %v2499 = vunpack.c.h.b16 %v1895
        %v2500 = vunpack.c.l.b16 %v1896
        %v2501 = vunpack.c.h.b16 %v1896
        %v2502 = vunpack.c.l.b16 %v1897
        %v2503 = vunpack.c.h.b16 %v1897
        %v2504 = vunpack.c.l.b16 %v1898
        %v2505 = vunpack.c.h.b16 %v1898
        %v2506 = vunpack.c.l.b16 %v1899
        %v2507 = vunpack.c.h.b16 %v1899
        %v2508 = vunpack.c.l.b16 %v1900
        %v2509 = vunpack.c.h.b16 %v1900
        %v2510 = vunpack.c.l.b16 %v1901
        %v2511 = vunpack.c.h.b16 %v1901
        %v2512 = vunpack.c.l.b16 %v1902
        %v2513 = vunpack.c.h.b16 %v1902
        %v2514 = vunpack.c.l.b16 %v1903
        %v2515 = vunpack.c.h.b16 %v1903
        %v2516 = vunpack.c.l.b16 %v1904
        %v2517 = vunpack.c.h.b16 %v1904
        %v2518 = vunpack.c.l.b16 %v1905
        %v2519 = vunpack.c.h.b16 %v1905
        %v2520 = vunpack.c.l.b16 %v1906
        %v2521 = vunpack.c.h.b16 %v1906
        %v2522 = vunpack.c.l.b16 %v1907
        %v2523 = vunpack.c.h.b16 %v1907
        %v2524 = vunpack.c.l.b16 %v1908
        %v2525 = vunpack.c.h.b16 %v1908
        %v2526 = vunpack.c.l.b16 %v1909
        %v2527 = vunpack.c.h.b16 %v1909
        %v2528 = vunpack.c.l.b16 %v1910
        %v2529 = vunpack.c.h.b16 %v1910
        %v2530 = vunpack.c.l.b16 %v1911
        %v2531 = vunpack.c.h.b16 %v1911
        %v2532 = vunpack.c.l.b16 %v1912
        %v2533 = vunpack.c.h.b16 %v1912
        %v2534 = vunpack.c.l.b16 %v1913
        %v2535 = vunpack.c.h.b16 %v1913
        %v2536 = vunpack.c.l.b16 %v1914
        %v2537 = vunpack.c.h.b16 %v1914
        %v2538 = vunpack.c.l.b16 %v1915
        %v2539 = vunpack.c.h.b16 %v1915
        %v2540 = vunpack.c.l.b16 %v1916
        %v2541 = vunpack.c.h.b16 %v1916
        %v2542 = vunpack.c.l.b16 %v1917
        %v2543 = vunpack.c.h.b16 %v1917
        %v2544 = vunpack.c.l.b16 %v1918
        %v2545 = vunpack.c.h.b16 %v1918
        %v2546 = vunpack.c.l.b16 %v1919
        %v2547 = vunpack.c.h.b16 %v1919
        %v2548 = vunpack.c.l.b16 %v1920
        %v2549 = vunpack.c.h.b16 %v1920
        %v2550 = vunpack.c.l.b16 %v1921
        %v2551 = vunpack.c.h.b16 %v1921
        %v2552 = vunpack.c.l.b16 %v1922
        %v2553 = vunpack.c.h.b16 %v1922
        %v2554 = vunpack.c.l.b16 %v1923
        %v2555 = vunpack.c.h.b16 %v1923
        %v2556 = vunpack.c.l.b16 %v1924
        %v2557 = vunpack.c.h.b16 %v1924
        %v2558 = vunpack.c.l.b16 %v1925
        %v2559 = vunpack.c.h.b16 %v1925
        %v2560 = vunpack.c.l.b16 %v1926
        %v2561 = vunpack.c.h.b16 %v1926
        %v2562 = vunpack.c.l.b16 %v1927
        %v2563 = vunpack.c.h.b16 %v1927
        %v2564 = vunpack.c.l.b16 %v1928
        %v2565 = vunpack.c.h.b16 %v1928
        %v2566 = vunpack.c.l.b16 %v1929
        %v2567 = vunpack.c.h.b16 %v1929
        %v2568 = vunpack.c.l.b16 %v1930
        %v2569 = vunpack.c.h.b16 %v1930
        %v2570 = vunpack.c.l.b16 %v1931
        %v2571 = vunpack.c.h.b16 %v1931
        %v2572 = vunpack.c.l.b16 %v1932
        %v2573 = vunpack.c.h.b16 %v1932
        %v2574 = vunpack.c.l.b16 %v1933
        %v2575 = vunpack.c.h.b16 %v1933
        %v2576 = vunpack.c.l.b16 %v1934
        %v2577 = vunpack.c.h.b16 %v1934
        %v2578 = vunpack.c.l.b16 %v1935
        %v2579 = vunpack.c.h.b16 %v1935
        %v2580 = vunpack.c.l.b16 %v1936
        %v2581 = vunpack.c.h.b16 %v1936
        %v2582 = vunpack.c.l.b16 %v1937
        %v2583 = vunpack.c.h.b16 %v1937
        %v2584 = vunpack.c.l.b16 %v1938
        %v2585 = vunpack.c.h.b16 %v1938
        %v2586 = vunpack.c.l.b16 %v1939
        %v2587 = vunpack.c.h.b16 %v1939
        %v2588 = vunpack.c.l.b16 %v1940
        %v2589 = vunpack.c.h.b16 %v1940
        %v2590 = vunpack.c.l.b16 %v1941
        %v2591 = vunpack.c.h.b16 %v1941
        %v2592 = vunpack.c.l.b16 %v1942
        %v2593 = vunpack.c.h.b16 %v1942
        %v2594 = vunpack.c.l.b16 %v1943
        %v2595 = vunpack.c.h.b16 %v1943
        %v2596 = vunpack.c.l.b16 %v1944
        %v2597 = vunpack.c.h.b16 %v1944
        %v2598 = vunpack.c.l.b16 %v1945
        %v2599 = vunpack.c.h.b16 %v1945
        %v2600 = vunpack.c.l.b16 %v1946
        %v2601 = vunpack.c.h.b16 %v1946
        %v2602 = vunpack.c.l.b16 %v1947
        %v2603 = vunpack.c.h.b16 %v1947
        %v2604 = vunpack.c.l.b16 %v1948
        %v2605 = vunpack.c.h.b16 %v1948
        %v2606 = vunpack.c.l.b16 %v1949
        %v2607 = vunpack.c.h.b16 %v1949
        %v2608 = vunpack.c.l.b16 %v1950
        %v2609 = vunpack.c.h.b16 %v1950
        %v2610 = vunpack.c.l.b16 %v1951
        %v2611 = vunpack.c.h.b16 %v1951
        %v2612 = vunpack.c.l.b16 %v1952
        %v2613 = vunpack.c.h.b16 %v1952
        %v2614 = vunpack.c.l.b16 %v1953
        %v2615 = vunpack.c.h.b16 %v1953
        %v2616 = vunpack.c.l.b16 %v1954
        %v2617 = vunpack.c.h.b16 %v1954
        %v2618 = vunpack.c.l.b16 %v1955
        %v2619 = vunpack.c.h.b16 %v1955
        %v2620 = vunpack.c.l.b16 %v1956
        %v2621 = vunpack.c.h.b16 %v1956
        %v2622 = vunpack.c.l.b16 %v1957
        %v2623 = vunpack.c.h.b16 %v1957
        %v2624 = vunpack.c.l.b16 %v1958
        %v2625 = vunpack.c.h.b16 %v1958
        %v2626 = vunpack.c.l.b16 %v1959
        %v2627 = vunpack.c.h.b16 %v1959
        %v2628 = vunpack.c.l.b16 %v1960
        %v2629 = vunpack.c.h.b16 %v1960
        %v2630 = vunpack.c.l.b16 %v1961
        %v2631 = vunpack.c.h.b16 %v1961
        %v2632 = vunpack.c.l.b16 %v1962
        %v2633 = vunpack.c.h.b16 %v1962
        %v2634 = vunpack.c.l.b16 %v1963
        %v2635 = vunpack.c.h.b16 %v1963
        %v2636 = vunpack.c.l.b16 %v1964
        %v2637 = vunpack.c.h.b16 %v1964
        %v2638 = vunpack.c.l.b16 %v1965
        %v2639 = vunpack.c.h.b16 %v1965
        %v2640 = vunpack.c.l.b16 %v1966
        %v2641 = vunpack.c.h.b16 %v1966
        %v2642 = vunpack.c.l.b16 %v1967
        %v2643 = vunpack.c.h.b16 %v1967
        %v2644 = vunpack.c.l.b16 %v1968
        %v2645 = vunpack.c.h.b16 %v1968
        %v2646 = vunpack.c.l.b16 %v1969
        %v2647 = vunpack.c.h.b16 %v1969
        %v2648 = vunpack.c.l.b16 %v1970
        %v2649 = vunpack.c.h.b16 %v1970
        %v2650 = vunpack.c.l.b16 %v1971
        %v2651 = vunpack.c.h.b16 %v1971
        %v2652 = vunpack.c.l.b16 %v1972
        %v2653 = vunpack.c.h.b16 %v1972
        %v2654 = vunpack.c.l.b16 %v1973
        %v2655 = vunpack.c.h.b16 %v1973
        %v2656 = vunpack.c.l.b16 %v1974
        %v2657 = vunpack.c.h.b16 %v1974
        %v2658 = vunpack.c.l.b16 %v1975
        %v2659 = vunpack.c.h.b16 %v1975
        %v2660 = vunpack.c.l.b16 %v1976
        %v2661 = vunpack.c.h.b16 %v1976
        %v2662 = vunpack.c.l.b16 %v1977
        %v2663 = vunpack.c.h.b16 %v1977
        %v2664 = vunpack.c.l.b16 %v1978
        %v2665 = vunpack.c.h.b16 %v1978
        %v2666 = vunpack.c.l.b16 %v1979
        %v2667 = vunpack.c.h.b16 %v1979
        %v2668 = vunpack.c.l.b16 %v1980
        %v2669 = vunpack.c.h.b16 %v1980
        %v2670 = vunpack.c.l.b16 %v1981
        %v2671 = vunpack.c.h.b16 %v1981
        %v2672 = vunpack.c.l.b16 %v1982
        %v2673 = vunpack.c.h.b16 %v1982
        %v2674 = vunpack.c.l.b16 %v1983
        %v2675 = vunpack.c.h.b16 %v1983
        %v2676 = vunpack.c.l.b16 %v1984
        %v2677 = vunpack.c.h.b16 %v1984
        %v2678 = vunpack.c.l.b16 %v1985
        %v2679 = vunpack.c.h.b16 %v1985
        %v2680 = vunpack.c.l.b16 %v1986
        %v2681 = vunpack.c.h.b16 %v1986
        %v2682 = vunpack.c.l.b16 %v1987
        %v2683 = vunpack.c.h.b16 %v1987
        %v2684 = vunpack.c.l.b16 %v1988
        %v2685 = vunpack.c.h.b16 %v1988
        %v2686 = vunpack.c.l.b16 %v1989
        %v2687 = vunpack.c.h.b16 %v1989
        %v2688 = vunpack.c.l.b16 %v1990
        %v2689 = vunpack.c.h.b16 %v1990
        %v2690 = vunpack.c.l.b16 %v1991
        %v2691 = vunpack.c.h.b16 %v1991
        %v2692 = vunpack.c.l.b16 %v1992
        %v2693 = vunpack.c.h.b16 %v1992
        %v2694 = vunpack.c.l.b16 %v1993
        %v2695 = vunpack.c.h.b16 %v1993
        %v2696 = vunpack.c.l.b16 %v1994
        %v2697 = vunpack.c.h.b16 %v1994
        %v2698 = vunpack.c.l.b16 %v1995
        %v2699 = vunpack.c.h.b16 %v1995
        %v2700 = vunpack.c.l.b16 %v1996
        %v2701 = vunpack.c.h.b16 %v1996
        %v2702 = vunpack.c.l.b16 %v1997
        %v2703 = vunpack.c.h.b16 %v1997
        %v2704 = vunpack.c.l.b16 %v1998
        %v2705 = vunpack.c.h.b16 %v1998
        %v2706 = vunpack.c.l.b16 %v1999
        %v2707 = vunpack.c.h.b16 %v1999
        %v2708 = vunpack.c.l.b16 %v2000
        %v2709 = vunpack.c.h.b16 %v2000
        %v2710 = vunpack.c.l.b16 %v2001
        %v2711 = vunpack.c.h.b16 %v2001
        %v2712 = vunpack.c.l.b16 %v2002
        %v2713 = vunpack.c.h.b16 %v2002
        %v2714 = vunpack.c.l.b16 %v2003
        %v2715 = vunpack.c.h.b16 %v2003
        %v2716 = vunpack.c.l.b16 %v2004
        %v2717 = vunpack.c.h.b16 %v2004
        %v2718 = vunpack.c.l.b16 %v2005
        %v2719 = vunpack.c.h.b16 %v2005
        %v2720 = vunpack.c.l.b16 %v2006
        %v2721 = vunpack.c.h.b16 %v2006
        %v2722 = vunpack.c.l.b16 %v2007
        %v2723 = vunpack.c.h.b16 %v2007
        %v2724 = vunpack.c.l.b16 %v2008
        %v2725 = vunpack.c.h.b16 %v2008
        %v2726 = vunpack.c.l.b16 %v2009
        %v2727 = vunpack.c.h.b16 %v2009
        %v2728 = vunpack.c.l.b16 %v2010
        %v2729 = vunpack.c.h.b16 %v2010
        %v2730 = vunpack.c.l.b16 %v2011
        %v2731 = vunpack.c.h.b16 %v2011
        %v2732 = vunpack.c.l.b16 %v2012
        %v2733 = vunpack.c.h.b16 %v2012
        %v2734 = vunpack.c.l.b16 %v2013
        %v2735 = vunpack.c.h.b16 %v2013
        %v2736 = vunpack.c.l.b16 %v2014
        %v2737 = vunpack.c.h.b16 %v2014
        %v2738 = vunpack.c.l.b16 %v2015
        %v2739 = vunpack.c.h.b16 %v2015
        %v2740 = vunpack.c.l.b16 %v2016
        %v2741 = vunpack.c.h.b16 %v2016
        %v2742 = vunpack.c.l.b16 %v2017
        %v2743 = vunpack.c.h.b16 %v2017
        %v2744 = vunpack.c.l.b16 %v2018
        %v2745 = vunpack.c.h.b16 %v2018
        %v2746 = vunpack.c.l.b16 %v2019
        %v2747 = vunpack.c.h.b16 %v2019
        %v2748 = vunpack.c.l.b16 %v2020
        %v2749 = vunpack.c.h.b16 %v2020
        %v2750 = vunpack.c.l.b16 %v2021
        %v2751 = vunpack.c.h.b16 %v2021
        %v2752 = vunpack.c.l.b16 %v2022
        %v2753 = vunpack.c.h.b16 %v2022
        %v2754 = vunpack.c.l.b16 %v2023
        %v2755 = vunpack.c.h.b16 %v2023
        %v2756 = vunpack.c.l.b16 %v2024
        %v2757 = vunpack.c.h.b16 %v2024
        %v2758 = vunpack.c.l.b16 %v2025
        %v2759 = vunpack.c.h.b16 %v2025
        %v2760 = vunpack.c.l.b16 %v2026
        %v2761 = vunpack.c.h.b16 %v2026
        %v2762 = vunpack.c.l.b16 %v2027
        %v2763 = vunpack.c.h.b16 %v2027
        %v2764 = vunpack.c.l.b16 %v2028
        %v2765 = vunpack.c.h.b16 %v2028
        %v2766 = vunpack.c.l.b16 %v2029
        %v2767 = vunpack.c.h.b16 %v2029
        %v2768 = vunpack.c.l.b16 %v2030
        %v2769 = vunpack.c.h.b16 %v2030
        %v2770 = vunpack.c.l.b16 %v2031
        %v2771 = vunpack.c.h.b16 %v2031
        %v2772 = vunpack.c.l.b16 %v2032
        %v2773 = vunpack.c.h.b16 %v2032
        %v2774 = vunpack.c.l.b16 %v2033
        %v2775 = vunpack.c.h.b16 %v2033
        %v2776 = vunpack.c.l.b16 %v2034
        %v2777 = vunpack.c.h.b16 %v2034
        %v2778 = vunpack.c.l.b16 %v2035
        %v2779 = vunpack.c.h.b16 %v2035
        %v2780 = vunpack.c.l.b16 %v2036
        %v2781 = vunpack.c.h.b16 %v2036
        %v2782 = vunpack.c.l.b16 %v2037
        %v2783 = vunpack.c.h.b16 %v2037
        %v2784 = vunpack.c.l.b16 %v2038
        %v2785 = vunpack.c.h.b16 %v2038
        %v2786 = vunpack.c.l.b16 %v2039
        %v2787 = vunpack.c.h.b16 %v2039
        %v2788 = vunpack.c.l.b16 %v2040
        %v2789 = vunpack.c.h.b16 %v2040
        %v2790 = vunpack.c.l.b16 %v2041
        %v2791 = vunpack.c.h.b16 %v2041
        %v2792 = vunpack.c.l.b16 %v2042
        %v2793 = vunpack.c.h.b16 %v2042
        %v2794 = vunpack.c.l.b16 %v2043
        %v2795 = vunpack.c.h.b16 %v2043
        %v2796 = vunpack.c.l.b16 %v2044
        %v2797 = vunpack.c.h.b16 %v2044
        %v2798 = vunpack.c.l.b16 %v2045
        %v2799 = vunpack.c.h.b16 %v2045
        %v2800 = vunpack.c.l.b16 %v2046
        %v2801 = vunpack.c.h.b16 %v2046
        %v2802 = vunpack.c.l.b16 %v2047
        %v2803 = vunpack.c.h.b16 %v2047
        %v2804 = vunpack.c.l.b16 %v2048
        %v2805 = vunpack.c.h.b16 %v2048
        %v2806 = vunpack.c.l.b16 %v2049
        %v2807 = vunpack.c.h.b16 %v2049
        %v2808 = vunpack.c.l.b16 %v2050
        %v2809 = vunpack.c.h.b16 %v2050
        %v2810 = vunpack.c.l.b16 %v2051
        %v2811 = vunpack.c.h.b16 %v2051
        %v2812 = vunpack.c.l.b16 %v2052
        %v2813 = vunpack.c.h.b16 %v2052
        %v2814 = vunpack.c.l.b16 %v2053
        %v2815 = vunpack.c.h.b16 %v2053
        %v2816 = vunpack.c.l.b16 %v2054
        %v2817 = vunpack.c.h.b16 %v2054
        %v2818 = vunpack.c.l.b16 %v2055
        %v2819 = vunpack.c.h.b16 %v2055
        %v2820 = vunpack.c.l.b16 %v2056
        %v2821 = vunpack.c.h.b16 %v2056
        %v2822 = vunpack.c.l.b16 %v2057
        %v2823 = vunpack.c.h.b16 %v2057
        %v2824 = vunpack.c.l.b16 %v2058
        %v2825 = vunpack.c.h.b16 %v2058
        %v2826 = vunpack.c.l.b16 %v2059
        %v2827 = vunpack.c.h.b16 %v2059
        %v2828 = vpack.c.b16 %v2318, %v2316
        %v2829 = vpack.c.b16 %v2319, %v2317
        %v2830 = vpack.c.b16 %v2322, %v2320
        %v2831 = vpack.c.b16 %v2323, %v2321
        %v2832 = vpack.c.b16 %v2326, %v2324
        %v2833 = vpack.c.b16 %v2327, %v2325
        %v2834 = vpack.c.b16 %v2330, %v2328
        %v2835 = vpack.c.b16 %v2331, %v2329
        %v2836 = vpack.c.b16 %v2334, %v2332
        %v2837 = vpack.c.b16 %v2335, %v2333
        %v2838 = vpack.c.b16 %v2338, %v2336
        %v2839 = vpack.c.b16 %v2339, %v2337
        %v2840 = vpack.c.b16 %v2342, %v2340
        %v2841 = vpack.c.b16 %v2343, %v2341
        %v2842 = vpack.c.b16 %v2346, %v2344
        %v2843 = vpack.c.b16 %v2347, %v2345
        %v2844 = vpack.c.b16 %v2350, %v2348
        %v2845 = vpack.c.b16 %v2351, %v2349
        %v2846 = vpack.c.b16 %v2354, %v2352
        %v2847 = vpack.c.b16 %v2355, %v2353
        %v2848 = vpack.c.b16 %v2358, %v2356
        %v2849 = vpack.c.b16 %v2359, %v2357
        %v2850 = vpack.c.b16 %v2362, %v2360
        %v2851 = vpack.c.b16 %v2363, %v2361
        %v2852 = vpack.c.b16 %v2366, %v2364
        %v2853 = vpack.c.b16 %v2367, %v2365
        %v2854 = vpack.c.b16 %v2370, %v2368
        %v2855 = vpack.c.b16 %v2371, %v2369
        %v2856 = vpack.c.b16 %v2374, %v2372
        %v2857 = vpack.c.b16 %v2375, %v2373
        %v2858 = vpack.c.b16 %v2378, %v2376
        %v2859 = vpack.c.b16 %v2379, %v2377
        %v2860 = vpack.c.b16 %v2382, %v2380
        %v2861 = vpack.c.b16 %v2383, %v2381
        %v2862 = vpack.c.b16 %v2386, %v2384
        %v2863 = vpack.c.b16 %v2387, %v2385
        %v2864 = vpack.c.b16 %v2390, %v2388
        %v2865 = vpack.c.b16 %v2391, %v2389
        %v2866 = vpack.c.b16 %v2394, %v2392
        %v2867 = vpack.c.b16 %v2395, %v2393
        %v2868 = vpack.c.b16 %v2398, %v2396
        %v2869 = vpack.c.b16 %v2399, %v2397
        %v2870 = vpack.c.b16 %v2402, %v2400
        %v2871 = vpack.c.b16 %v2403, %v2401
        %v2872 = vpack.c.b16 %v2406, %v2404
        %v2873 = vpack.c.b16 %v2407, %v2405
        %v2874 = vpack.c.b16 %v2410, %v2408
        %v2875 = vpack.c.b16 %v2411, %v2409
        %v2876 = vpack.c.b16 %v2414, %v2412
        %v2877 = vpack.c.b16 %v2415, %v2413
        %v2878 = vpack.c.b16 %v2418, %v2416
        %v2879 = vpack.c.b16 %v2419, %v2417
        %v2880 = vpack.c.b16 %v2422, %v2420
        %v2881 = vpack.c.b16 %v2423, %v2421
        %v2882 = vpack.c.b16 %v2426, %v2424
        %v2883 = vpack.c.b16 %v2427, %v2425
        %v2884 = vpack.c.b16 %v2430, %v2428
        %v2885 = vpack.c.b16 %v2431, %v2429
        %v2886 = vpack.c.b16 %v2434, %v2432
        %v2887 = vpack.c.b16 %v2435, %v2433
        %v2888 = vpack.c.b16 %v2438, %v2436
        %v2889 = vpack.c.b16 %v2439, %v2437
        %v2890 = vpack.c.b16 %v2442, %v2440
        %v2891 = vpack.c.b16 %v2443, %v2441
        %v2892 = vpack.c.b16 %v2446, %v2444
        %v2893 = vpack.c.b16 %v2447, %v2445
        %v2894 = vpack.c.b16 %v2450, %v2448
        %v2895 = vpack.c.b16 %v2451, %v2449
        %v2896 = vpack.c.b16 %v2454, %v2452
        %v2897 = vpack.c.b16 %v2455, %v2453
        %v2898 = vpack.c.b16 %v2458, %v2456
        %v2899 = vpack.c.b16 %v2459, %v2457
        %v2900 = vpack.c.b16 %v2462, %v2460
        %v2901 = vpack.c.b16 %v2463, %v2461
        %v2902 = vpack.c.b16 %v2466, %v2464
        %v2903 = vpack.c.b16 %v2467, %v2465
        %v2904 = vpack.c.b16 %v2470, %v2468
        %v2905 = vpack.c.b16 %v2471, %v2469
        %v2906 = vpack.c.b16 %v2474, %v2472
        %v2907 = vpack.c.b16 %v2475, %v2473
        %v2908 = vpack.c.b16 %v2478, %v2476
        %v2909 = vpack.c.b16 %v2479, %v2477
        %v2910 = vpack.c.b16 %v2482, %v2480
        %v2911 = vpack.c.b16 %v2483, %v2481
        %v2912 = vpack.c.b16 %v2486, %v2484
        %v2913 = vpack.c.b16 %v2487, %v2485
        %v2914 = vpack.c.b16 %v2490, %v2488
        %v2915 = vpack.c.b16 %v2491, %v2489
        %v2916 = vpack.c.b16 %v2494, %v2492
        %v2917 = vpack.c.b16 %v2495, %v2493
        %v2918 = vpack.c.b16 %v2498, %v2496
        %v2919 = vpack.c.b16 %v2499, %v2497
        %v2920 = vpack.c.b16 %v2502, %v2500
        %v2921 = vpack.c.b16 %v2503, %v2501
        %v2922 = vpack.c.b16 %v2506, %v2504
        %v2923 = vpack.c.b16 %v2507, %v2505
        %v2924 = vpack.c.b16 %v2510, %v2508
        %v2925 = vpack.c.b16 %v2511, %v2509
        %v2926 = vpack.c.b16 %v2514, %v2512
        %v2927 = vpack.c.b16 %v2515, %v2513
        %v2928 = vpack.c.b16 %v2518, %v2516
        %v2929 = vpack.c.b16 %v2519, %v2517
        %v2930 = vpack.c.b16 %v2522, %v2520
        %v2931 = vpack.c.b16 %v2523, %v2521
        %v2932 = vpack.c.b16 %v2526, %v2524
        %v2933 = vpack.c.b16 %v2527, %v2525
        %v2934 = vpack.c.b16 %v2530, %v2528
        %v2935 = vpack.c.b16 %v2531, %v2529
        %v2936 = vpack.c.b16 %v2534, %v2532
        %v2937 = vpack.c.b16 %v2535, %v2533
        %v2938 = vpack.c.b16 %v2538, %v2536
        %v2939 = vpack.c.b16 %v2539, %v2537
        %v2940 = vpack.c.b16 %v2542, %v2540
        %v2941 = vpack.c.b16 %v2543, %v2541
        %v2942 = vpack.c.b16 %v2546, %v2544
        %v2943 = vpack.c.b16 %v2547, %v2545
        %v2944 = vpack.c.b16 %v2550, %v2548
        %v2945 = vpack.c.b16 %v2551, %v2549
        %v2946 = vpack.c.b16 %v2554, %v2552
        %v2947 = vpack.c.b16 %v2555, %v2553
        %v2948 = vpack.c.b16 %v2558, %v2556
        %v2949 = vpack.c.b16 %v2559, %v2557
        %v2950 = vpack.c.b16 %v2562, %v2560
        %v2951 = vpack.c.b16 %v2563, %v2561
        %v2952 = vpack.c.b16 %v2566, %v2564
        %v2953 = vpack.c.b16 %v2567, %v2565
        %v2954 = vpack.c.b16 %v2570, %v2568
        %v2955 = vpack.c.b16 %v2571, %v2569
        %v2956 = vpack.c.b16 %v2574, %v2572
        %v2957 = vpack.c.b16 %v2575, %v2573
        %v2958 = vpack.c.b16 %v2578, %v2576
        %v2959 = vpack.c.b16 %v2579, %v2577
        %v2960 = vpack.c.b16 %v2582, %v2580
        %v2961 = vpack.c.b16 %v2583, %v2581
        %v2962 = vpack.c.b16 %v2586, %v2584
        %v2963 = vpack.c.b16 %v2587, %v2585
        %v2964 = vpack.c.b16 %v2590, %v2588
        %v2965 = vpack.c.b16 %v2591, %v2589
        %v2966 = vpack.c.b16 %v2594, %v2592
        %v2967 = vpack.c.b16 %v2595, %v2593
        %v2968 = vpack.c.b16 %v2598, %v2596
        %v2969 = vpack.c.b16 %v2599, %v2597
        %v2970 = vpack.c.b16 %v2602, %v2600
        %v2971 = vpack.c.b16 %v2603, %v2601
        %v2972 = vpack.c.b16 %v2606, %v2604
        %v2973 = vpack.c.b16 %v2607, %v2605
        %v2974 = vpack.c.b16 %v2610, %v2608
        %v2975 = vpack.c.b16 %v2611, %v2609
        %v2976 = vpack.c.b16 %v2614, %v2612
        %v2977 = vpack.c.b16 %v2615, %v2613
        %v2978 = vpack.c.b16 %v2618, %v2616
        %v2979 = vpack.c.b16 %v2619, %v2617
        %v2980 = vpack.c.b16 %v2622, %v2620
        %v2981 = vpack.c.b16 %v2623, %v2621
        %v2982 = vpack.c.b16 %v2626, %v2624
        %v2983 = vpack.c.b16 %v2627, %v2625
        %v2984 = vpack.c.b16 %v2630, %v2628
        %v2985 = vpack.c.b16 %v2631, %v2629
        %v2986 = vpack.c.b16 %v2634, %v2632
        %v2987 = vpack.c.b16 %v2635, %v2633
        %v2988 = vpack.c.b16 %v2638, %v2636
        %v2989 = vpack.c.b16 %v2639, %v2637
        %v2990 = vpack.c.b16 %v2642, %v2640
        %v2991 = vpack.c.b16 %v2643, %v2641
        %v2992 = vpack.c.b16 %v2646, %v2644
        %v2993 = vpack.c.b16 %v2647, %v2645
        %v2994 = vpack.c.b16 %v2650, %v2648
        %v2995 = vpack.c.b16 %v2651, %v2649
        %v2996 = vpack.c.b16 %v2654, %v2652
        %v2997 = vpack.c.b16 %v2655, %v2653
        %v2998 = vpack.c.b16 %v2658, %v2656
        %v2999 = vpack.c.b16 %v2659, %v2657
        %v3000 = vpack.c.b16 %v2662, %v2660
        %v3001 = vpack.c.b16 %v2663, %v2661
        %v3002 = vpack.c.b16 %v2666, %v2664
        %v3003 = vpack.c.b16 %v2667, %v2665
        %v3004 = vpack.c.b16 %v2670, %v2668
        %v3005 = vpack.c.b16 %v2671, %v2669
        %v3006 = vpack.c.b16 %v2674, %v2672
        %v3007 = vpack.c.b16 %v2675, %v2673
        %v3008 = vpack.c.b16 %v2678, %v2676
        %v3009 = vpack.c.b16 %v2679, %v2677
        %v3010 = vpack.c.b16 %v2682, %v2680
        %v3011 = vpack.c.b16 %v2683, %v2681
        %v3012 = vpack.c.b16 %v2686, %v2684
        %v3013 = vpack.c.b16 %v2687, %v2685
        %v3014 = vpack.c.b16 %v2690, %v2688
        %v3015 = vpack.c.b16 %v2691, %v2689
        %v3016 = vpack.c.b16 %v2694, %v2692
        %v3017 = vpack.c.b16 %v2695, %v2693
        %v3018 = vpack.c.b16 %v2698, %v2696
        %v3019 = vpack.c.b16 %v2699, %v2697
        %v3020 = vpack.c.b16 %v2702, %v2700
        %v3021 = vpack.c.b16 %v2703, %v2701
        %v3022 = vpack.c.b16 %v2706, %v2704
        %v3023 = vpack.c.b16 %v2707, %v2705
        %v3024 = vpack.c.b16 %v2710, %v2708
        %v3025 = vpack.c.b16 %v2711, %v2709
        %v3026 = vpack.c.b16 %v2714, %v2712
        %v3027 = vpack.c.b16 %v2715, %v2713
        %v3028 = vpack.c.b16 %v2718, %v2716
        %v3029 = vpack.c.b16 %v2719, %v2717
        %v3030 = vpack.c.b16 %v2722, %v2720
        %v3031 = vpack.c.b16 %v2723, %v2721
        %v3032 = vpack.c.b16 %v2726, %v2724
        %v3033 = vpack.c.b16 %v2727, %v2725
        %v3034 = vpack.c.b16 %v2730, %v2728
        %v3035 = vpack.c.b16 %v2731, %v2729
        %v3036 = vpack.c.b16 %v2734, %v2732
        %v3037 = vpack.c.b16 %v2735, %v2733
        %v3038 = vpack.c.b16 %v2738, %v2736
        %v3039 = vpack.c.b16 %v2739, %v2737
        %v3040 = vpack.c.b16 %v2742, %v2740
        %v3041 = vpack.c.b16 %v2743, %v2741
        %v3042 = vpack.c.b16 %v2746, %v2744
        %v3043 = vpack.c.b16 %v2747, %v2745
        %v3044 = vpack.c.b16 %v2750, %v2748
        %v3045 = vpack.c.b16 %v2751, %v2749
        %v3046 = vpack.c.b16 %v2754, %v2752
        %v3047 = vpack.c.b16 %v2755, %v2753
        %v3048 = vpack.c.b16 %v2758, %v2756
        %v3049 = vpack.c.b16 %v2759, %v2757
        %v3050 = vpack.c.b16 %v2762, %v2760
        %v3051 = vpack.c.b16 %v2763, %v2761
        %v3052 = vpack.c.b16 %v2766, %v2764
        %v3053 = vpack.c.b16 %v2767, %v2765
        %v3054 = vpack.c.b16 %v2770, %v2768
        %v3055 = vpack.c.b16 %v2771, %v2769
        %v3056 = vpack.c.b16 %v2774, %v2772
        %v3057 = vpack.c.b16 %v2775, %v2773
        %v3058 = vpack.c.b16 %v2778, %v2776
        %v3059 = vpack.c.b16 %v2779, %v2777
        %v3060 = vpack.c.b16 %v2782, %v2780
        %v3061 = vpack.c.b16 %v2783, %v2781
        %v3062 = vpack.c.b16 %v2786, %v2784
        %v3063 = vpack.c.b16 %v2787, %v2785
        %v3064 = vpack.c.b16 %v2790, %v2788
        %v3065 = vpack.c.b16 %v2791, %v2789
        %v3066 = vpack.c.b16 %v2794, %v2792
        %v3067 = vpack.c.b16 %v2795, %v2793
        %v3068 = vpack.c.b16 %v2798, %v2796
        %v3069 = vpack.c.b16 %v2799, %v2797
        %v3070 = vpack.c.b16 %v2802, %v2800
        %v3071 = vpack.c.b16 %v2803, %v2801
        %v3072 = vpack.c.b16 %v2806, %v2804
        %v3073 = vpack.c.b16 %v2807, %v2805
        %v3074 = vpack.c.b16 %v2810, %v2808
        %v3075 = vpack.c.b16 %v2811, %v2809
        %v3076 = vpack.c.b16 %v2814, %v2812
        %v3077 = vpack.c.b16 %v2815, %v2813
        %v3078 = vpack.c.b16 %v2818, %v2816
        %v3079 = vpack.c.b16 %v2819, %v2817
        %v3080 = vpack.c.b16 %v2822, %v2820
        %v3081 = vpack.c.b16 %v2823, %v2821
        %v3082 = vpack.c.b16 %v2826, %v2824
        %v3083 = vpack.c.b16 %v2827, %v2825
        %3340 = vmatprep.subr.bf16.mxu0 %v2829
        %3341 = vmatpush1.bf16.msra.mxu0 %v2828
        %3342 = vmatprep.subr.bf16.mxu0 %v2831
        %3343 = vmatpush1.bf16.msra.mxu0 %v2830
        %3344 = vmatprep.subr.bf16.mxu0 %v2833
        %3345 = vmatpush1.bf16.msra.mxu0 %v2832
        %3346 = vmatprep.subr.bf16.mxu0 %v2835
        %3347 = vmatpush1.bf16.msra.mxu0 %v2834
        %3348 = vmatprep.subr.bf16.mxu0 %v2837
        %3349 = vmatpush1.bf16.msra.mxu0 %v2836
        %3350 = vmatprep.subr.bf16.mxu0 %v2839
        %3351 = vmatpush1.bf16.msra.mxu0 %v2838
        %3352 = vmatprep.subr.bf16.mxu0 %v2841
        %3353 = vmatpush1.bf16.msra.mxu0 %v2840
        %3354 = vmatprep.subr.bf16.mxu0 %v2843
        %3355 = vmatpush1.bf16.msra.mxu0 %v2842
        %3356 = vmatprep.subr.bf16.mxu0 %v2845
        %3357 = vmatpush1.bf16.msra.mxu0 %v2844
        %3358 = vmatprep.subr.bf16.mxu0 %v2847
        %3359 = vmatpush1.bf16.msra.mxu0 %v2846
        %3360 = vmatprep.subr.bf16.mxu0 %v2849
        %3361 = vmatpush1.bf16.msra.mxu0 %v2848
        %3362 = vmatprep.subr.bf16.mxu0 %v2851
        %3363 = vmatpush1.bf16.msra.mxu0 %v2850
        %3364 = vmatprep.subr.bf16.mxu0 %v2853
        %3365 = vmatpush1.bf16.msra.mxu0 %v2852
        %3366 = vmatprep.subr.bf16.mxu0 %v2855
        %3367 = vmatpush1.bf16.msra.mxu0 %v2854
        %3368 = vmatprep.subr.bf16.mxu0 %v2857
        %3369 = vmatpush1.bf16.msra.mxu0 %v2856
        %3370 = vmatprep.subr.bf16.mxu0 %v2859
        %3371 = vmatpush1.bf16.msra.mxu0 %v2858
        %3372 = vmatprep.mubr.bf16.mxu0 %v1789
        %3373 = vmatmul.mubr.bf16.gmra.mrb[0].mxu0 %v1788
        %v3374 = vpop.f32.mrb[0].mxu0
        %v3375 = vadd.f32 0.0, %v3374
        %v3376 = vpop.f32.mrb[0].mxu0
        %v3377 = vadd.f32 0.0, %v3376
        %v3378 = vpop.f32.mrb[0].mxu0
        %v3379 = vpop.f32.mrb[0].mxu0
        %3380 = vdwg.mxu0
        %3381 = vmatprep.subr.bf16.mxu0 %v2861
        %3382 = vmatpush1.bf16.msra.mxu0 %v2860
        %3383 = vmatprep.subr.bf16.mxu0 %v2863
        %3384 = vmatpush1.bf16.msra.mxu0 %v2862
        %3385 = vmatprep.subr.bf16.mxu0 %v2865
        %3386 = vmatpush1.bf16.msra.mxu0 %v2864
        %3387 = vmatprep.subr.bf16.mxu0 %v2867
        %3388 = vmatpush1.bf16.msra.mxu0 %v2866
        %3389 = vmatprep.subr.bf16.mxu0 %v2869
        %3390 = vmatpush1.bf16.msra.mxu0 %v2868
        %3391 = vmatprep.subr.bf16.mxu0 %v2871
        %3392 = vmatpush1.bf16.msra.mxu0 %v2870
        %3393 = vmatprep.subr.bf16.mxu0 %v2873
        %3394 = vmatpush1.bf16.msra.mxu0 %v2872
        %3395 = vmatprep.subr.bf16.mxu0 %v2875
        %3396 = vmatpush1.bf16.msra.mxu0 %v2874
        %3397 = vmatprep.subr.bf16.mxu0 %v2877
        %3398 = vmatpush1.bf16.msra.mxu0 %v2876
        %3399 = vmatprep.subr.bf16.mxu0 %v2879
        %3400 = vmatpush1.bf16.msra.mxu0 %v2878
        %3401 = vmatprep.subr.bf16.mxu0 %v2881
        %3402 = vmatpush1.bf16.msra.mxu0 %v2880
        %3403 = vmatprep.subr.bf16.mxu0 %v2883
        %3404 = vmatpush1.bf16.msra.mxu0 %v2882
        %3405 = vmatprep.subr.bf16.mxu0 %v2885
        %3406 = vmatpush1.bf16.msra.mxu0 %v2884
        %3407 = vmatprep.subr.bf16.mxu0 %v2887
        %3408 = vmatpush1.bf16.msra.mxu0 %v2886
        %3409 = vmatprep.subr.bf16.mxu0 %v2889
        %3410 = vmatpush1.bf16.msra.mxu0 %v2888
        %3411 = vmatprep.subr.bf16.mxu0 %v2891
        %3412 = vmatpush1.bf16.msra.mxu0 %v2890
        %3413 = vmatprep.mubr.bf16.mxu0 %v1791
        %3414 = vmatmul.mubr.bf16.gmra.mrb[0].mxu0 %v1790
        %v3415 = vpop.f32.mrb[0].mxu0
        %v3416 = vadd.f32 %v3375, %v3415
        %v3417 = vpop.f32.mrb[0].mxu0
        %v3418 = vadd.f32 %v3377, %v3417
        %v3419 = vpop.f32.mrb[0].mxu0
        %v3420 = vpop.f32.mrb[0].mxu0
        %3421 = vdwg.mxu0
        %3422 = vmatprep.subr.bf16.mxu0 %v2893
        %3423 = vmatpush1.bf16.msra.mxu0 %v2892
        %3424 = vmatprep.subr.bf16.mxu0 %v2895
        %3425 = vmatpush1.bf16.msra.mxu0 %v2894
        %3426 = vmatprep.subr.bf16.mxu0 %v2897
        %3427 = vmatpush1.bf16.msra.mxu0 %v2896
        %3428 = vmatprep.subr.bf16.mxu0 %v2899
        %3429 = vmatpush1.bf16.msra.mxu0 %v2898
        %3430 = vmatprep.subr.bf16.mxu0 %v2901
        %3431 = vmatpush1.bf16.msra.mxu0 %v2900
        %3432 = vmatprep.subr.bf16.mxu0 %v2903
        %3433 = vmatpush1.bf16.msra.mxu0 %v2902
        %3434 = vmatprep.subr.bf16.mxu0 %v2905
        %3435 = vmatpush1.bf16.msra.mxu0 %v2904
        %3436 = vmatprep.subr.bf16.mxu0 %v2907
        %3437 = vmatpush1.bf16.msra.mxu0 %v2906
        %3438 = vmatprep.subr.bf16.mxu0 %v2909
        %3439 = vmatpush1.bf16.msra.mxu0 %v2908
        %3440 = vmatprep.subr.bf16.mxu0 %v2911
        %3441 = vmatpush1.bf16.msra.mxu0 %v2910
        %3442 = vmatprep.subr.bf16.mxu0 %v2913
        %3443 = vmatpush1.bf16.msra.mxu0 %v2912
        %3444 = vmatprep.subr.bf16.mxu0 %v2915
        %3445 = vmatpush1.bf16.msra.mxu0 %v2914
        %3446 = vmatprep.subr.bf16.mxu0 %v2917
        %3447 = vmatpush1.bf16.msra.mxu0 %v2916
        %3448 = vmatprep.subr.bf16.mxu0 %v2919
        %3449 = vmatpush1.bf16.msra.mxu0 %v2918
        %3450 = vmatprep.subr.bf16.mxu0 %v2921
        %3451 = vmatpush1.bf16.msra.mxu0 %v2920
        %3452 = vmatprep.subr.bf16.mxu0 %v2923
        %3453 = vmatpush1.bf16.msra.mxu0 %v2922
        %3454 = vmatprep.mubr.bf16.mxu0 %v1793
        %3455 = vmatmul.mubr.bf16.gmra.mrb[0].mxu0 %v1792
        %v3456 = vpop.f32.mrb[0].mxu0
        %v3457 = vadd.f32 %v3416, %v3456
        %v3458 = vpop.f32.mrb[0].mxu0
        %v3459 = vadd.f32 %v3418, %v3458
        %v3460 = vpop.f32.mrb[0].mxu0
        %v3461 = vpop.f32.mrb[0].mxu0
        %3462 = vdwg.mxu0
        %3463 = vmatprep.subr.bf16.mxu0 %v2925
        %3464 = vmatpush1.bf16.msra.mxu0 %v2924
        %3465 = vmatprep.subr.bf16.mxu0 %v2927
        %3466 = vmatpush1.bf16.msra.mxu0 %v2926
        %3467 = vmatprep.subr.bf16.mxu0 %v2929
        %3468 = vmatpush1.bf16.msra.mxu0 %v2928
        %3469 = vmatprep.subr.bf16.mxu0 %v2931
        %3470 = vmatpush1.bf16.msra.mxu0 %v2930
        %3471 = vmatprep.subr.bf16.mxu0 %v2933
        %3472 = vmatpush1.bf16.msra.mxu0 %v2932
        %3473 = vmatprep.subr.bf16.mxu0 %v2935
        %3474 = vmatpush1.bf16.msra.mxu0 %v2934
        %3475 = vmatprep.subr.bf16.mxu0 %v2937
        %3476 = vmatpush1.bf16.msra.mxu0 %v2936
        %3477 = vmatprep.subr.bf16.mxu0 %v2939
        %3478 = vmatpush1.bf16.msra.mxu0 %v2938
        %3479 = vmatprep.subr.bf16.mxu0 %v2941
        %3480 = vmatpush1.bf16.msra.mxu0 %v2940
        %3481 = vmatprep.subr.bf16.mxu0 %v2943
        %3482 = vmatpush1.bf16.msra.mxu0 %v2942
        %3483 = vmatprep.subr.bf16.mxu0 %v2945
        %3484 = vmatpush1.bf16.msra.mxu0 %v2944
        %3485 = vmatprep.subr.bf16.mxu0 %v2947
        %3486 = vmatpush1.bf16.msra.mxu0 %v2946
        %3487 = vmatprep.subr.bf16.mxu0 %v2949
        %3488 = vmatpush1.bf16.msra.mxu0 %v2948
        %3489 = vmatprep.subr.bf16.mxu0 %v2951
        %3490 = vmatpush1.bf16.msra.mxu0 %v2950
        %3491 = vmatprep.subr.bf16.mxu0 %v2953
        %3492 = vmatpush1.bf16.msra.mxu0 %v2952
        %3493 = vmatprep.subr.bf16.mxu0 %v2955
        %3494 = vmatpush1.bf16.msra.mxu0 %v2954
        %3495 = vmatprep.mubr.bf16.mxu0 %v1795
        %3496 = vmatmul.mubr.bf16.gmra.mrb[0].mxu0 %v1794
        %v3497 = vpop.f32.mrb[0].mxu0
        %v3498 = vadd.f32 %v3457, %v3497
        %v3499 = vpop.f32.mrb[0].mxu0
        %v3500 = vadd.f32 %v3459, %v3499
        %v3501 = vpop.f32.mrb[0].mxu0
        %v3502 = vpop.f32.mrb[0].mxu0
        %3503 = vdwg.mxu0
        %3504 = vmatprep.subr.bf16.mxu0 %v2957
        %3505 = vmatpush1.bf16.msra.mxu0 %v2956
        %3506 = vmatprep.subr.bf16.mxu0 %v2959
        %3507 = vmatpush1.bf16.msra.mxu0 %v2958
        %3508 = vmatprep.subr.bf16.mxu0 %v2961
        %3509 = vmatpush1.bf16.msra.mxu0 %v2960
        %3510 = vmatprep.subr.bf16.mxu0 %v2963
        %3511 = vmatpush1.bf16.msra.mxu0 %v2962
        %3512 = vmatprep.subr.bf16.mxu0 %v2965
        %3513 = vmatpush1.bf16.msra.mxu0 %v2964
        %3514 = vmatprep.subr.bf16.mxu0 %v2967
        %3515 = vmatpush1.bf16.msra.mxu0 %v2966
        %3516 = vmatprep.subr.bf16.mxu0 %v2969
        %3517 = vmatpush1.bf16.msra.mxu0 %v2968
        %3518 = vmatprep.subr.bf16.mxu0 %v2971
        %3519 = vmatpush1.bf16.msra.mxu0 %v2970
        %3520 = vmatprep.subr.bf16.mxu0 %v2973
        %3521 = vmatpush1.bf16.msra.mxu0 %v2972
        %3522 = vmatprep.subr.bf16.mxu0 %v2975
        %3523 = vmatpush1.bf16.msra.mxu0 %v2974
        %3524 = vmatprep.subr.bf16.mxu0 %v2977
        %3525 = vmatpush1.bf16.msra.mxu0 %v2976
        %3526 = vmatprep.subr.bf16.mxu0 %v2979
        %3527 = vmatpush1.bf16.msra.mxu0 %v2978
        %3528 = vmatprep.subr.bf16.mxu0 %v2981
        %3529 = vmatpush1.bf16.msra.mxu0 %v2980
        %3530 = vmatprep.subr.bf16.mxu0 %v2983
        %3531 = vmatpush1.bf16.msra.mxu0 %v2982
        %3532 = vmatprep.subr.bf16.mxu0 %v2985
        %3533 = vmatpush1.bf16.msra.mxu0 %v2984
        %3534 = vmatprep.subr.bf16.mxu0 %v2987
        %3535 = vmatpush1.bf16.msra.mxu0 %v2986
        %3536 = vmatprep.mubr.bf16.mxu0 %v1797
        %3537 = vmatmul.mubr.bf16.gmra.mrb[0].mxu0 %v1796
        %v3538 = vpop.f32.mrb[0].mxu0
        %v3539 = vadd.f32 %v3498, %v3538
        %v3540 = vpop.f32.mrb[0].mxu0
        %v3541 = vadd.f32 %v3500, %v3540
        %v3542 = vpop.f32.mrb[0].mxu0
        %v3543 = vpop.f32.mrb[0].mxu0
        %3544 = vdwg.mxu0
        %3545 = vmatprep.subr.bf16.mxu0 %v2989
        %3546 = vmatpush1.bf16.msra.mxu0 %v2988
        %3547 = vmatprep.subr.bf16.mxu0 %v2991
        %3548 = vmatpush1.bf16.msra.mxu0 %v2990
        %3549 = vmatprep.subr.bf16.mxu0 %v2993
        %3550 = vmatpush1.bf16.msra.mxu0 %v2992
        %3551 = vmatprep.subr.bf16.mxu0 %v2995
        %3552 = vmatpush1.bf16.msra.mxu0 %v2994
        %3553 = vmatprep.subr.bf16.mxu0 %v2997
        %3554 = vmatpush1.bf16.msra.mxu0 %v2996
        %3555 = vmatprep.subr.bf16.mxu0 %v2999
        %3556 = vmatpush1.bf16.msra.mxu0 %v2998
        %3557 = vmatprep.subr.bf16.mxu0 %v3001
        %3558 = vmatpush1.bf16.msra.mxu0 %v3000
        %3559 = vmatprep.subr.bf16.mxu0 %v3003
        %3560 = vmatpush1.bf16.msra.mxu0 %v3002
        %3561 = vmatprep.subr.bf16.mxu0 %v3005
        %3562 = vmatpush1.bf16.msra.mxu0 %v3004
        %3563 = vmatprep.subr.bf16.mxu0 %v3007
        %3564 = vmatpush1.bf16.msra.mxu0 %v3006
        %3565 = vmatprep.subr.bf16.mxu0 %v3009
        %3566 = vmatpush1.bf16.msra.mxu0 %v3008
        %3567 = vmatprep.subr.bf16.mxu0 %v3011
        %3568 = vmatpush1.bf16.msra.mxu0 %v3010
        %3569 = vmatprep.subr.bf16.mxu0 %v3013
        %3570 = vmatpush1.bf16.msra.mxu0 %v3012
        %3571 = vmatprep.subr.bf16.mxu0 %v3015
        %3572 = vmatpush1.bf16.msra.mxu0 %v3014
        %3573 = vmatprep.subr.bf16.mxu0 %v3017
        %3574 = vmatpush1.bf16.msra.mxu0 %v3016
        %3575 = vmatprep.subr.bf16.mxu0 %v3019
        %3576 = vmatpush1.bf16.msra.mxu0 %v3018
        %3577 = vmatprep.mubr.bf16.mxu0 %v1799
        %3578 = vmatmul.mubr.bf16.gmra.mrb[0].mxu0 %v1798
        %v3579 = vpop.f32.mrb[0].mxu0
        %v3580 = vadd.f32 %v3539, %v3579
        %v3581 = vpop.f32.mrb[0].mxu0
        %v3582 = vadd.f32 %v3541, %v3581
        %v3583 = vpop.f32.mrb[0].mxu0
        %v3584 = vpop.f32.mrb[0].mxu0
        %3585 = vdwg.mxu0
        %3586 = vmatprep.subr.bf16.mxu0 %v3021
        %3587 = vmatpush1.bf16.msra.mxu0 %v3020
        %3588 = vmatprep.subr.bf16.mxu0 %v3023
        %3589 = vmatpush1.bf16.msra.mxu0 %v3022
        %3590 = vmatprep.subr.bf16.mxu0 %v3025
        %3591 = vmatpush1.bf16.msra.mxu0 %v3024
        %3592 = vmatprep.subr.bf16.mxu0 %v3027
        %3593 = vmatpush1.bf16.msra.mxu0 %v3026
        %3594 = vmatprep.subr.bf16.mxu0 %v3029
        %3595 = vmatpush1.bf16.msra.mxu0 %v3028
        %3596 = vmatprep.subr.bf16.mxu0 %v3031
        %3597 = vmatpush1.bf16.msra.mxu0 %v3030
        %3598 = vmatprep.subr.bf16.mxu0 %v3033
        %3599 = vmatpush1.bf16.msra.mxu0 %v3032
        %3600 = vmatprep.subr.bf16.mxu0 %v3035
        %3601 = vmatpush1.bf16.msra.mxu0 %v3034
        %3602 = vmatprep.subr.bf16.mxu0 %v3037
        %3603 = vmatpush1.bf16.msra.mxu0 %v3036
        %3604 = vmatprep.subr.bf16.mxu0 %v3039
        %3605 = vmatpush1.bf16.msra.mxu0 %v3038
        %3606 = vmatprep.subr.bf16.mxu0 %v3041
        %3607 = vmatpush1.bf16.msra.mxu0 %v3040
        %3608 = vmatprep.subr.bf16.mxu0 %v3043
        %3609 = vmatpush1.bf16.msra.mxu0 %v3042
        %3610 = vmatprep.subr.bf16.mxu0 %v3045
        %3611 = vmatpush1.bf16.msra.mxu0 %v3044
        %3612 = vmatprep.subr.bf16.mxu0 %v3047
        %3613 = vmatpush1.bf16.msra.mxu0 %v3046
        %3614 = vmatprep.subr.bf16.mxu0 %v3049
        %3615 = vmatpush1.bf16.msra.mxu0 %v3048
        %3616 = vmatprep.subr.bf16.mxu0 %v3051
        %3617 = vmatpush1.bf16.msra.mxu0 %v3050
        %3618 = vmatprep.mubr.bf16.mxu0 %v1801
        %3619 = vmatmul.mubr.bf16.gmra.mrb[0].mxu0 %v1800
        %v3620 = vpop.f32.mrb[0].mxu0
        %v3621 = vadd.f32 %v3580, %v3620
        %v3622 = vpop.f32.mrb[0].mxu0
        %v3623 = vadd.f32 %v3582, %v3622
        %v3624 = vpop.f32.mrb[0].mxu0
        %v3625 = vpop.f32.mrb[0].mxu0
        %3626 = vdwg.mxu0
        %3627 = vmatprep.subr.bf16.mxu0 %v3053
        %3628 = vmatpush1.bf16.msra.mxu0 %v3052
        %3629 = vmatprep.subr.bf16.mxu0 %v3055
        %3630 = vmatpush1.bf16.msra.mxu0 %v3054
        %3631 = vmatprep.subr.bf16.mxu0 %v3057
        %3632 = vmatpush1.bf16.msra.mxu0 %v3056
        %3633 = vmatprep.subr.bf16.mxu0 %v3059
        %3634 = vmatpush1.bf16.msra.mxu0 %v3058
        %3635 = vmatprep.subr.bf16.mxu0 %v3061
        %3636 = vmatpush1.bf16.msra.mxu0 %v3060
        %3637 = vmatprep.subr.bf16.mxu0 %v3063
        %3638 = vmatpush1.bf16.msra.mxu0 %v3062
        %3639 = vmatprep.subr.bf16.mxu0 %v3065
        %3640 = vmatpush1.bf16.msra.mxu0 %v3064
        %3641 = vmatprep.subr.bf16.mxu0 %v3067
        %3642 = vmatpush1.bf16.msra.mxu0 %v3066
        %3643 = vmatprep.subr.bf16.mxu0 %v3069
        %3644 = vmatpush1.bf16.msra.mxu0 %v3068
        %3645 = vmatprep.subr.bf16.mxu0 %v3071
        %3646 = vmatpush1.bf16.msra.mxu0 %v3070
        %3647 = vmatprep.subr.bf16.mxu0 %v3073
        %3648 = vmatpush1.bf16.msra.mxu0 %v3072
        %3649 = vmatprep.subr.bf16.mxu0 %v3075
        %3650 = vmatpush1.bf16.msra.mxu0 %v3074
        %3651 = vmatprep.subr.bf16.mxu0 %v3077
        %3652 = vmatpush1.bf16.msra.mxu0 %v3076
        %3653 = vmatprep.subr.bf16.mxu0 %v3079
        %3654 = vmatpush1.bf16.msra.mxu0 %v3078
        %3655 = vmatprep.subr.bf16.mxu0 %v3081
        %3656 = vmatpush1.bf16.msra.mxu0 %v3080
        %3657 = vmatprep.subr.bf16.mxu0 %v3083
        %3658 = vmatpush1.bf16.msra.mxu0 %v3082
        %3659 = vmatprep.mubr.bf16.mxu0 %v1803
        %3660 = vmatmul.mubr.bf16.gmra.mrb[0].mxu0 %v1802
        %v3661 = vpop.f32.mrb[0].mxu0
        %v3662 = vadd.f32 %v3621, %v3661
        %v3663 = vpop.f32.mrb[0].mxu0
        %v3664 = vadd.f32 %v3623, %v3663
        %v3665 = vpop.f32.mrb[0].mxu0
        %v3666 = vpop.f32.mrb[0].mxu0
        %3667 = vdwg.mxu0
        %v3670 = vcombine.low %v3662, %v3664
        %v3672 = vunpack.c.l.s4 1983009808
        %v3673 = vunpack.c.0.s8 %v3672
        %v3674 = vlaneseq
        %v3675 = vshrl.u32 %v3674, 7
        %v3676 = vsub.s32 %v3673, %v3675
        %v3677 = vrot.slane %v3670, %v3676
        %v3679 = vadd.f32 %v1699, %v3677
        %3680 = vst [vmem:[%s1377] sm:$0xf] %v3679
        %s3681 = smul.u32 2, %s20
        %p3682 = scmp.lt.s32.totalorder %s3681, 3
        %s3683 = scalar_select %p3682, %s3681, 3
        %s3684 = smul.addr %s3683, 2
        %s3685 = scalar_lea.vmem %s5, %s3684
        // Predicated region
        $region83: #{deepstn_pallas_forward.9} parent=73 // pred_check
          %p3686 = pneg %p178
        $region84: #{deepstn_pallas_forward.9} parent=73 // pred_check_branch
          %3688 = sbr.rel (%p3686) target = $region86
        $region85: #{deepstn_pallas_forward.9} parent=73 // pred_region
          %s3689 = smul.u32 2, %s20
        $region86: #{deepstn_pallas_forward.9} parent=73 // pred_fallthru
          _
      $region74: #{deepstn_pallas_forward.9} parent=5 // pred_fallthru
        _
      %p3690 = scmp.le.s32.totalorder 2, %s11
      // Predicated region
      $region87: #{deepstn_pallas_forward.9} parent=5 // pred_check
        %p3691 = pneg %p3690
      $region88: #{deepstn_pallas_forward.9} parent=5 // pred_check_branch
        %3693 = sbr.rel (%p3691) target = $region90
      $region89: #{deepstn_pallas_forward.9} parent=5 // pred_region
        %s3694 = ssub.s32 %s11, 2
        // Predicated region
        $region91: #{deepstn_pallas_forward.9} parent=89 // pred_check
          %p3695 = pneg %p184
        $region92: #{deepstn_pallas_forward.9} parent=89 // pred_check_branch
          %3697 = sbr.rel (%p3695) target = $region94
        $region93: #{deepstn_pallas_forward.9} parent=89 // pred_region
          %s3698 = smul.u32 2, %s22
          %p3699 = scmp.lt.s32.totalorder %s3698, 3
          %s3700 = scalar_select %p3699, %s3698, 3
          %s3701 = smul.addr %s3700, 2
          %s3702 = scalar_lea.vmem %s5, %s3701
        $region94: #{deepstn_pallas_forward.9} parent=89 // pred_fallthru
          _
      $region90: #{deepstn_pallas_forward.9} parent=5 // pred_fallthru
        _
    $region6: #{deepstn_pallas_forward.9} parent=1 // loop_footer
      %s15 = sadd.s32 1, %s11
    $region7: #{deepstn_pallas_forward.9} parent=1 // loop_footer_branch
      %10 = sbr.rel target = $region3
    $region8: #{deepstn_pallas_forward.9} parent=1 // loop_exit
      _

</llo_original>
